<compile_context>
chip_gen: v7x
topology: tpu7x:2x2x1
jax: 0.10.0
libtpu: 0.0.40
codegen_flags: <defaults>
</compile_context>

<pallas_src>
import numpy as np

import jax
import jax.numpy as jnp
from jax import lax
from jax.experimental import pallas as pl
from jax.experimental.pallas import tpu as pltpu


# ------------------------------- fused kernel -------------------------------

def _make_inception_a_kernel(H, W):
    PW = W + 2            # padded image width
    HW = H * W            # compact pixel count
    HPW = H * PW          # rows in one tap-shifted slab

    def kernel(x_ref, w1_ref, s1_ref, b1_ref, w3_ref, s3_ref, b3_ref,
               mask_ref, o_ref, pad_ref):
        # ---------- fused 1x1 convs (c12 | c21 | c31 | c41) + BN + ReLU ------
        xf = x_ref[0]                                              # (HW, 384) bf16
        y = jnp.dot(xf, w1_ref[...], preferred_element_type=jnp.float32)
        y = jnp.maximum(y * s1_ref[...] + b1_ref[...], 0.0)        # (HW, 384) f32

        x12 = y[:, 0:192]        # branch-1 (c12) and branch-2 (c21) outputs
        t3 = y[:, 192:288]       # branch-3 1x1 output: 64 real ch + 32 zero ch
        t4 = y[:, 288:384]       # branch-4 1x1 output: 64 real ch + 32 zero ch

        def fill_pad_compact(src):
            # scatter compact (HW, 96) rows into the zeroed flat-padded image
            pad_ref[...] = jnp.zeros_like(pad_ref)
            for h in range(H):
                pad_ref[(h + 1) * PW + 1:(h + 1) * PW + 1 + W, :] = (
                    src[h * W:(h + 1) * W, :])

        def conv3x3(idx):
            # 9 shifted whole-image matmuls over the flat-padded scratch.
            # acc row r = h*PW + w holds conv(h, w); rows with w >= W are junk.
            acc = jnp.zeros((HPW, 96), jnp.float32)
            for kh in range(3):
                for kw in range(3):
                    off = kh * PW + kw
                    slab = pad_ref[off:off + HPW, :].astype(jnp.bfloat16)
                    acc = acc + jnp.dot(slab, w3_ref[idx, kh * 3 + kw],
                                        preferred_element_type=jnp.float32)
            return jnp.maximum(acc * s3_ref[idx] + b3_ref[idx], 0.0)

        # branch 3: c31 (1x1, above) -> c32 (3x3)
        fill_pad_compact(t3)
        x3 = conv3x3(0)                               # (HPW, 96) flat-row form

        # branch 4: c41 -> c42 -> c43
        fill_pad_compact(t4)
        a42 = conv3x3(1) * mask_ref[...]              # zero the 2 junk cols/row
        pad_ref[...] = jnp.zeros_like(pad_ref)
        pad_ref[PW + 1:PW + 1 + HPW, :] = a42         # re-pad for the second 3x3
        x4 = conv3x3(2)

        # ---------- lane-dense 384-wide output:  [x1 | x2 | x3 | x4] ----------
        x3c = jnp.concatenate([x3[h * PW:h * PW + W, :] for h in range(H)], axis=0)
        x4c = jnp.concatenate([x4[h * PW:h * PW + W, :] for h in range(H)], axis=0)
        o_ref[0] = jnp.concatenate([x12, x3c, x4c], axis=1).astype(o_ref.dtype)

    return kernel


# --------------------------- parameter generation ---------------------------

def make_conv_params(key, cin, cout, ksize):
    """Deterministic Conv2d + BatchNorm2d params, BN folded into (scale, bias)."""
    k1, k2, k3, k4, k5, k6 = jax.random.split(key, 6)
    if ksize == 1:
        w = jax.random.normal(k1, (cin, cout), jnp.float32) / jnp.sqrt(cin)
    else:
        w = jax.random.normal(k1, (3, 3, cin, cout), jnp.float32) / jnp.sqrt(9 * cin)
    conv_b = 0.1 * jax.random.normal(k2, (cout,), jnp.float32)
    gamma = 1.0 + 0.1 * jax.random.normal(k3, (cout,), jnp.float32)
    beta = 0.1 * jax.random.normal(k4, (cout,), jnp.float32)
    mean = 0.1 * jax.random.normal(k5, (cout,), jnp.float32)
    var = jnp.abs(jax.random.normal(k6, (cout,), jnp.float32)) + 0.5
    eps = 1e-5
    s = gamma / jnp.sqrt(var + eps)
    b = beta + s * (conv_b - mean)
    return (w, s, b)


def make_inception_a_params(key):
    keys = jax.random.split(key, 7)
    return {
        "c12": make_conv_params(keys[0], 384, 96, 1),
        "c21": make_conv_params(keys[1], 384, 96, 1),
        "c31": make_conv_params(keys[2], 384, 64, 1),
        "c32": make_conv_params(keys[3], 64, 96, 3),
        "c41": make_conv_params(keys[4], 384, 64, 1),
        "c42": make_conv_params(keys[5], 64, 96, 3),
        "c43": make_conv_params(keys[6], 96, 96, 3),
    }


def pack_inception_a_params(params):
    """Pack the 7 Conv+BN blocks into the fused, MXU-friendly layout."""
    w12, s12, b12 = params["c12"]
    w21, s21, b21 = params["c21"]
    w31, s31, b31 = params["c31"]
    w41, s41, b41 = params["c41"]
    w32, s32, b32 = params["c32"]
    w42, s42, b42 = params["c42"]
    w43, s43, b43 = params["c43"]

    def padc(a, n):  # zero-pad the trailing (channel) dim
        return jnp.pad(a, [(0, 0)] * (a.ndim - 1) + [(0, n)])

    # fused 1x1: columns [c12(96) | c21(96) | c31(64)+0(32) | c41(64)+0(32)]
    w1 = jnp.concatenate([w12, w21, padc(w31, 32), padc(w41, 32)], axis=1)
    s1 = jnp.concatenate([s12, s21, padc(s31, 32), padc(s41, 32)])[None, :]
    b1 = jnp.concatenate([b12, b21, padc(b31, 32), padc(b41, 32)])[None, :]

    def prep3(w, cin):  # (3,3,cin,96) -> (9, 96, 96) with zero-padded input chans
        w = w.reshape(9, cin, w.shape[-1])
        if cin < 96:
            w = jnp.pad(w, ((0, 0), (0, 96 - cin), (0, 0)))
        return w

    w3 = jnp.stack([prep3(w32, 64), prep3(w42, 64), prep3(w43, 96)], axis=0)
    s3 = jnp.stack([s32, s42, s43], axis=0)[:, None, :]
    b3 = jnp.stack([b32, b42, b43], axis=0)[:, None, :]

    return dict(w1=w1.astype(jnp.bfloat16), s1=s1, b1=b1,
                w3=w3.astype(jnp.bfloat16), s3=s3, b3=b3)


# -------------------------------- forward pass -------------------------------

def inception_a(x_nchw, params):
    N, C, H, W = x_nchw.shape
    assert C == 384, "Inception_A expects 384 input channels"
    PW, HW, HPW = W + 2, H * W, H * (W + 2)
    ALLOC = (H + 2) * PW + 8          # extra rows keep tap-shifted slabs in-bounds

    p = pack_inception_a_params(params)
    # NCHW -> (N, H*W, C) channels-last, bf16 for the MXU
    xf = jnp.transpose(x_nchw, (0, 2, 3, 1)).reshape(N, HW, C).astype(jnp.bfloat16)
    # rows r of a tap slab with (r mod (W+2)) >= W are junk -> mask them to zero
    mask = jnp.asarray(((np.arange(HPW) % PW) < W)
                       .astype(np.float32).reshape(HPW, 1))

    kernel = _make_inception_a_kernel(H, W)

    grid_spec = pltpu.PrefetchScalarGridSpec(
        num_scalar_prefetch=0,
        grid=(N,),
        in_specs=[
            pl.BlockSpec((1, HW, 384), lambda n: (n, 0, 0)),          # x
            pl.BlockSpec((384, 384), lambda n: (0, 0)),               # fused 1x1 w
            pl.BlockSpec((1, 384), lambda n: (0, 0)),                 # fused scale
            pl.BlockSpec((1, 384), lambda n: (0, 0)),                 # fused bias
            pl.BlockSpec((3, 9, 96, 96), lambda n: (0, 0, 0, 0)),     # 3x3 weights
            pl.BlockSpec((3, 1, 96), lambda n: (0, 0, 0)),            # 3x3 scales
            pl.BlockSpec((3, 1, 96), lambda n: (0, 0, 0)),            # 3x3 biases
            pl.BlockSpec((HPW, 1), lambda n: (0, 0)),                 # row mask
        ],
        out_specs=pl.BlockSpec((1, HW, 384), lambda n: (n, 0, 0)),
        scratch_shapes=[pltpu.VMEM((ALLOC, 96), jnp.float32)],        # padded image
    )

    out = pl.pallas_call(
        kernel,
        out_shape=jax.ShapeDtypeStruct((N, HW, 384), jnp.float32),
        grid_spec=grid_spec,
        compiler_params=pltpu.CompilerParams(
            dimension_semantics=("parallel",)),
    )(xf, p["w1"], p["s1"], p["b1"], p["w3"], p["s3"], p["b3"], mask)

    return jnp.transpose(out.reshape(N, H, W, 384), (0, 3, 1, 2))     # back to NCHW


# ------------------------------ pure-JAX reference ---------------------------

def _ref_conv(x_nhwc, w, s, b, ksize):
    # mirror the kernel's bf16 quantization of activations/weights, f32 math
    xq = x_nhwc.astype(jnp.bfloat16).astype(jnp.float32)
    wq = w.astype(jnp.bfloat16).astype(jnp.float32)
    w4 = wq.reshape(1, 1, *wq.shape) if ksize == 1 else wq
    pad = ((0, 0), (0, 0)) if ksize == 1 else ((1, 1), (1, 1))
    y = lax.conv_general_dilated(xq, w4, (1, 1), pad,
                                 dimension_numbers=("NHWC", "HWIO", "NHWC"))
    return jnp.maximum(y * s + b, 0.0)


def inception_a_ref(x_nchw, params):
    x = jnp.transpose(x_nchw, (0, 2, 3, 1)).astype(jnp.float32)
    x1 = _ref_conv(x, *params["c12"], 1)            # AvgPool(1,1) == identity
    x2 = _ref_conv(x, *params["c21"], 1)
    x3 = _ref_conv(_ref_conv(x, *params["c31"], 1), *params["c32"], 3)
    x4 = _ref_conv(
        _ref_conv(_ref_conv(x, *params["c41"], 1), *params["c42"], 3),
        *params["c43"], 3)
    out = jnp.concatenate([x1, x2, x3, x4], axis=-1)
    return jnp.transpose(out, (0, 3, 1, 2))


# ----------------------------------- main -------------------------------------

if __name__ == "__main__":
    root = jax.random.PRNGKey(0)
    kx, kp = jax.random.split(root)

    # small but module-consistent shape: Inception_A requires 384 input channels
    x = jax.random.normal(kx, (2, 384, 8, 8), jnp.float32)
    params = make_inception_a_params(kp)

    out = jax.block_until_ready(jax.jit(inception_a)(x, params))
    assert out.shape == (2, 384, 8, 8), out.shape

    ref = jax.block_until_ready(inception_a_ref(x, params))
    max_err = float(jnp.max(jnp.abs(out - ref)))
    assert jnp.allclose(out, ref, rtol=2e-2, atol=2e-2), max_err

    print("KERNEL_OK")
</pallas_src>

<mosaic_0001>
module attributes {stable_mosaic.version = 11 : i64} {
  func.func @kernel(%arg0: i32, %arg1: memref<1x64x384xbf16, #tpu.memory_space<vmem>>, %arg2: memref<384x384xbf16, #tpu.memory_space<vmem>>, %arg3: memref<1x384xf32, #tpu.memory_space<vmem>>, %arg4: memref<1x384xf32, #tpu.memory_space<vmem>>, %arg5: memref<3x9x96x96xbf16, #tpu.memory_space<vmem>>, %arg6: memref<3x1x96xf32, #tpu.memory_space<vmem>>, %arg7: memref<3x1x96xf32, #tpu.memory_space<vmem>>, %arg8: memref<80x1xf32, #tpu.memory_space<vmem>>, %arg9: memref<1x64x384xf32, #tpu.memory_space<vmem>>, %arg10: memref<108x96xf32, #tpu.memory_space<vmem>>) attributes {dimension_semantics = [#tpu.dimension_semantics<parallel>], iteration_bounds = array<i64: 2>, scalar_prefetch = 0 : i64, scratch_operands = 1 : i64, tpu.core_type = #tpu.core_type<tc>, window_params = [{transform_indices = @transform_0, window_bounds = array<i64: 1, 64, 384>}, {pipeline_mode = #tpu.pipeline_mode<synchronous>, transform_indices = @transform_1, window_bounds = array<i64: 384, 384>}, {pipeline_mode = #tpu.pipeline_mode<synchronous>, transform_indices = @transform_2, window_bounds = array<i64: 1, 384>}, {pipeline_mode = #tpu.pipeline_mode<synchronous>, transform_indices = @transform_3, window_bounds = array<i64: 1, 384>}, {pipeline_mode = #tpu.pipeline_mode<synchronous>, transform_indices = @transform_4, window_bounds = array<i64: 3, 9, 96, 96>}, {pipeline_mode = #tpu.pipeline_mode<synchronous>, transform_indices = @transform_5, window_bounds = array<i64: 3, 1, 96>}, {pipeline_mode = #tpu.pipeline_mode<synchronous>, transform_indices = @transform_6, window_bounds = array<i64: 3, 1, 96>}, {pipeline_mode = #tpu.pipeline_mode<synchronous>, transform_indices = @transform_7, window_bounds = array<i64: 80, 1>}, {transform_indices = @transform_8, window_bounds = array<i64: 1, 64, 384>}]} {
    %c0 = arith.constant 0 : index
    %c0_0 = arith.constant 0 : index
    %c0_1 = arith.constant 0 : index
    %0 = vector.load %arg1[%c0, %c0_0, %c0_1] : memref<1x64x384xbf16, #tpu.memory_space<vmem>>, vector<1x64x384xbf16>
    %1 = vector.shape_cast %0 : vector<1x64x384xbf16> to vector<64x384xbf16>
    %c0_2 = arith.constant 0 : index
    %c0_3 = arith.constant 0 : index
    %2 = vector.load %arg2[%c0_2, %c0_3] : memref<384x384xbf16, #tpu.memory_space<vmem>>, vector<384x384xbf16>
    %cst = arith.constant dense<0.000000e+00> : vector<64x384xf32>
    %3 = tpu.matmul %1, %2, %cst {dimension_numbers = #tpu.dot_dimension_numbers<[1], [0], [0], [1], [0, 0, 1, 1], [], []>} : vector<64x384xbf16>, vector<384x384xbf16>, vector<64x384xf32> -> vector<64x384xf32>
    %c0_4 = arith.constant 0 : index
    %c0_5 = arith.constant 0 : index
    %4 = vector.load %arg3[%c0_4, %c0_5] : memref<1x384xf32, #tpu.memory_space<vmem>>, vector<1x384xf32>
    %5 = vector.broadcast %4 : vector<1x384xf32> to vector<64x384xf32>
    %6 = arith.mulf %3, %5 : vector<64x384xf32>
    %c0_6 = arith.constant 0 : index
    %c0_7 = arith.constant 0 : index
    %7 = vector.load %arg4[%c0_6, %c0_7] : memref<1x384xf32, #tpu.memory_space<vmem>>, vector<1x384xf32>
    %8 = vector.broadcast %7 : vector<1x384xf32> to vector<64x384xf32>
    %9 = arith.addf %6, %8 : vector<64x384xf32>
    %cst_8 = arith.constant 0.000000e+00 : f32
    %10 = vector.broadcast %cst_8 : f32 to vector<64x384xf32>
    %11 = arith.maximumf %9, %10 : vector<64x384xf32>
    %12 = vector.extract_strided_slice %11 {offsets = [0, 0], sizes = [64, 192], strides = [1, 1]} : vector<64x384xf32> to vector<64x192xf32>
    %13 = vector.extract_strided_slice %11 {offsets = [0, 192], sizes = [64, 96], strides = [1, 1]} : vector<64x384xf32> to vector<64x96xf32>
    %14 = vector.extract_strided_slice %11 {offsets = [0, 288], sizes = [64, 96], strides = [1, 1]} : vector<64x384xf32> to vector<64x96xf32>
    %cst_9 = arith.constant 0.000000e+00 : f32
    %15 = vector.broadcast %cst_9 : f32 to vector<108x96xf32>
    %c0_10 = arith.constant 0 : index
    %c0_11 = arith.constant 0 : index
    %16 = vector.load %arg10[%c0_10, %c0_11] : memref<108x96xf32, #tpu.memory_space<vmem>>, vector<108x96xf32>
    tpu.vector_store %arg10[%c0_10, %c0_11], %15 {strides = array<i32>} : memref<108x96xf32, #tpu.memory_space<vmem>>, vector<108x96xf32>,
    %17 = vector.extract_strided_slice %13 {offsets = [0, 0], sizes = [8, 96], strides = [1, 1]} : vector<64x96xf32> to vector<8x96xf32>
    %c11 = arith.constant 11 : index
    %c0_12 = arith.constant 0 : index
    %18 = vector.load %arg10[%c11, %c0_12] : memref<108x96xf32, #tpu.memory_space<vmem>>, vector<8x96xf32>
    tpu.vector_store %arg10[%c11, %c0_12], %17 {strides = array<i32>} : memref<108x96xf32, #tpu.memory_space<vmem>>, vector<8x96xf32>,
    %19 = vector.extract_strided_slice %13 {offsets = [8, 0], sizes = [8, 96], strides = [1, 1]} : vector<64x96xf32> to vector<8x96xf32>
    %c21 = arith.constant 21 : index
    %c0_13 = arith.constant 0 : index
    %20 = vector.load %arg10[%c21, %c0_13] : memref<108x96xf32, #tpu.memory_space<vmem>>, vector<8x96xf32>
    tpu.vector_store %arg10[%c21, %c0_13], %19 {strides = array<i32>} : memref<108x96xf32, #tpu.memory_space<vmem>>, vector<8x96xf32>,
    %21 = vector.extract_strided_slice %13 {offsets = [16, 0], sizes = [8, 96], strides = [1, 1]} : vector<64x96xf32> to vector<8x96xf32>
    %c31 = arith.constant 31 : index
    %c0_14 = arith.constant 0 : index
    %22 = vector.load %arg10[%c31, %c0_14] : memref<108x96xf32, #tpu.memory_space<vmem>>, vector<8x96xf32>
    tpu.vector_store %arg10[%c31, %c0_14], %21 {strides = array<i32>} : memref<108x96xf32, #tpu.memory_space<vmem>>, vector<8x96xf32>,
    %23 = vector.extract_strided_slice %13 {offsets = [24, 0], sizes = [8, 96], strides = [1, 1]} : vector<64x96xf32> to vector<8x96xf32>
    %c41 = arith.constant 41 : index
    %c0_15 = arith.constant 0 : index
    %24 = vector.load %arg10[%c41, %c0_15] : memref<108x96xf32, #tpu.memory_space<vmem>>, vector<8x96xf32>
    tpu.vector_store %arg10[%c41, %c0_15], %23 {strides = array<i32>} : memref<108x96xf32, #tpu.memory_space<vmem>>, vector<8x96xf32>,
    %25 = vector.extract_strided_slice %13 {offsets = [32, 0], sizes = [8, 96], strides = [1, 1]} : vector<64x96xf32> to vector<8x96xf32>
    %c51 = arith.constant 51 : index
    %c0_16 = arith.constant 0 : index
    %26 = vector.load %arg10[%c51, %c0_16] : memref<108x96xf32, #tpu.memory_space<vmem>>, vector<8x96xf32>
    tpu.vector_store %arg10[%c51, %c0_16], %25 {strides = array<i32>} : memref<108x96xf32, #tpu.memory_space<vmem>>, vector<8x96xf32>,
    %27 = vector.extract_strided_slice %13 {offsets = [40, 0], sizes = [8, 96], strides = [1, 1]} : vector<64x96xf32> to vector<8x96xf32>
    %c61 = arith.constant 61 : index
    %c0_17 = arith.constant 0 : index
    %28 = vector.load %arg10[%c61, %c0_17] : memref<108x96xf32, #tpu.memory_space<vmem>>, vector<8x96xf32>
    tpu.vector_store %arg10[%c61, %c0_17], %27 {strides = array<i32>} : memref<108x96xf32, #tpu.memory_space<vmem>>, vector<8x96xf32>,
    %29 = vector.extract_strided_slice %13 {offsets = [48, 0], sizes = [8, 96], strides = [1, 1]} : vector<64x96xf32> to vector<8x96xf32>
    %c71 = arith.constant 71 : index
    %c0_18 = arith.constant 0 : index
    %30 = vector.load %arg10[%c71, %c0_18] : memref<108x96xf32, #tpu.memory_space<vmem>>, vector<8x96xf32>
    tpu.vector_store %arg10[%c71, %c0_18], %29 {strides = array<i32>} : memref<108x96xf32, #tpu.memory_space<vmem>>, vector<8x96xf32>,
    %31 = vector.extract_strided_slice %13 {offsets = [56, 0], sizes = [8, 96], strides = [1, 1]} : vector<64x96xf32> to vector<8x96xf32>
    %c81 = arith.constant 81 : index
    %c0_19 = arith.constant 0 : index
    %32 = vector.load %arg10[%c81, %c0_19] : memref<108x96xf32, #tpu.memory_space<vmem>>, vector<8x96xf32>
    tpu.vector_store %arg10[%c81, %c0_19], %31 {strides = array<i32>} : memref<108x96xf32, #tpu.memory_space<vmem>>, vector<8x96xf32>,
    %cst_20 = arith.constant 0.000000e+00 : f32
    %33 = vector.broadcast %cst_20 : f32 to vector<80x96xf32>
    %c0_21 = arith.constant 0 : index
    %c0_22 = arith.constant 0 : index
    %34 = vector.load %arg10[%c0_21, %c0_22] : memref<108x96xf32, #tpu.memory_space<vmem>>, vector<80x96xf32>
    %35 = arith.truncf %34 : vector<80x96xf32> to vector<80x96xbf16>
    %c0_23 = arith.constant 0 : index
    %c0_24 = arith.constant 0 : index
    %c0_25 = arith.constant 0 : index
    %c0_26 = arith.constant 0 : index
    %36 = vector.load %arg5[%c0_23, %c0_24, %c0_25, %c0_26] : memref<3x9x96x96xbf16, #tpu.memory_space<vmem>>, vector<1x1x96x96xbf16>
    %37 = vector.shape_cast %36 : vector<1x1x96x96xbf16> to vector<96x96xbf16>
    %cst_27 = arith.constant dense<0.000000e+00> : vector<80x96xf32>
    %38 = tpu.matmul %35, %37, %cst_27 {dimension_numbers = #tpu.dot_dimension_numbers<[1], [0], [0], [1], [0, 0, 1, 1], [], []>} : vector<80x96xbf16>, vector<96x96xbf16>, vector<80x96xf32> -> vector<80x96xf32>
    %39 = arith.addf %33, %38 : vector<80x96xf32>
    %c1 = arith.constant 1 : index
    %c0_28 = arith.constant 0 : index
    %40 = vector.load %arg10[%c1, %c0_28] : memref<108x96xf32, #tpu.memory_space<vmem>>, vector<80x96xf32>
    %41 = arith.truncf %40 : vector<80x96xf32> to vector<80x96xbf16>
    %c0_29 = arith.constant 0 : index
    %c1_30 = arith.constant 1 : index
    %c0_31 = arith.constant 0 : index
    %c0_32 = arith.constant 0 : index
    %42 = vector.load %arg5[%c0_29, %c1_30, %c0_31, %c0_32] : memref<3x9x96x96xbf16, #tpu.memory_space<vmem>>, vector<1x1x96x96xbf16>
    %43 = vector.shape_cast %42 : vector<1x1x96x96xbf16> to vector<96x96xbf16>
    %cst_33 = arith.constant dense<0.000000e+00> : vector<80x96xf32>
    %44 = tpu.matmul %41, %43, %cst_33 {dimension_numbers = #tpu.dot_dimension_numbers<[1], [0], [0], [1], [0, 0, 1, 1], [], []>} : vector<80x96xbf16>, vector<96x96xbf16>, vector<80x96xf32> -> vector<80x96xf32>
    %45 = arith.addf %39, %44 : vector<80x96xf32>
    %c2 = arith.constant 2 : index
    %c0_34 = arith.constant 0 : index
    %46 = vector.load %arg10[%c2, %c0_34] : memref<108x96xf32, #tpu.memory_space<vmem>>, vector<80x96xf32>
    %47 = arith.truncf %46 : vector<80x96xf32> to vector<80x96xbf16>
    %c0_35 = arith.constant 0 : index
    %c2_36 = arith.constant 2 : index
    %c0_37 = arith.constant 0 : index
    %c0_38 = arith.constant 0 : index
    %48 = vector.load %arg5[%c0_35, %c2_36, %c0_37, %c0_38] : memref<3x9x96x96xbf16, #tpu.memory_space<vmem>>, vector<1x1x96x96xbf16>
    %49 = vector.shape_cast %48 : vector<1x1x96x96xbf16> to vector<96x96xbf16>
    %cst_39 = arith.constant dense<0.000000e+00> : vector<80x96xf32>
    %50 = tpu.matmul %47, %49, %cst_39 {dimension_numbers = #tpu.dot_dimension_numbers<[1], [0], [0], [1], [0, 0, 1, 1], [], []>} : vector<80x96xbf16>, vector<96x96xbf16>, vector<80x96xf32> -> vector<80x96xf32>
    %51 = arith.addf %45, %50 : vector<80x96xf32>
    %c10 = arith.constant 10 : index
    %c0_40 = arith.constant 0 : index
    %52 = vector.load %arg10[%c10, %c0_40] : memref<108x96xf32, #tpu.memory_space<vmem>>, vector<80x96xf32>
    %53 = arith.truncf %52 : vector<80x96xf32> to vector<80x96xbf16>
    %c0_41 = arith.constant 0 : index
    %c3 = arith.constant 3 : index
    %c0_42 = arith.constant 0 : index
    %c0_43 = arith.constant 0 : index
    %54 = vector.load %arg5[%c0_41, %c3, %c0_42, %c0_43] : memref<3x9x96x96xbf16, #tpu.memory_space<vmem>>, vector<1x1x96x96xbf16>
    %55 = vector.shape_cast %54 : vector<1x1x96x96xbf16> to vector<96x96xbf16>
    %cst_44 = arith.constant dense<0.000000e+00> : vector<80x96xf32>
    %56 = tpu.matmul %53, %55, %cst_44 {dimension_numbers = #tpu.dot_dimension_numbers<[1], [0], [0], [1], [0, 0, 1, 1], [], []>} : vector<80x96xbf16>, vector<96x96xbf16>, vector<80x96xf32> -> vector<80x96xf32>
    %57 = arith.addf %51, %56 : vector<80x96xf32>
    %c11_45 = arith.constant 11 : index
    %c0_46 = arith.constant 0 : index
    %58 = vector.load %arg10[%c11_45, %c0_46] : memref<108x96xf32, #tpu.memory_space<vmem>>, vector<80x96xf32>
    %59 = arith.truncf %58 : vector<80x96xf32> to vector<80x96xbf16>
    %c0_47 = arith.constant 0 : index
    %c4 = arith.constant 4 : index
    %c0_48 = arith.constant 0 : index
    %c0_49 = arith.constant 0 : index
    %60 = vector.load %arg5[%c0_47, %c4, %c0_48, %c0_49] : memref<3x9x96x96xbf16, #tpu.memory_space<vmem>>, vector<1x1x96x96xbf16>
    %61 = vector.shape_cast %60 : vector<1x1x96x96xbf16> to vector<96x96xbf16>
    %cst_50 = arith.constant dense<0.000000e+00> : vector<80x96xf32>
    %62 = tpu.matmul %59, %61, %cst_50 {dimension_numbers = #tpu.dot_dimension_numbers<[1], [0], [0], [1], [0, 0, 1, 1], [], []>} : vector<80x96xbf16>, vector<96x96xbf16>, vector<80x96xf32> -> vector<80x96xf32>
    %63 = arith.addf %57, %62 : vector<80x96xf32>
    %c12 = arith.constant 12 : index
    %c0_51 = arith.constant 0 : index
    %64 = vector.load %arg10[%c12, %c0_51] : memref<108x96xf32, #tpu.memory_space<vmem>>, vector<80x96xf32>
    %65 = arith.truncf %64 : vector<80x96xf32> to vector<80x96xbf16>
    %c0_52 = arith.constant 0 : index
    %c5 = arith.constant 5 : index
    %c0_53 = arith.constant 0 : index
    %c0_54 = arith.constant 0 : index
    %66 = vector.load %arg5[%c0_52, %c5, %c0_53, %c0_54] : memref<3x9x96x96xbf16, #tpu.memory_space<vmem>>, vector<1x1x96x96xbf16>
    %67 = vector.shape_cast %66 : vector<1x1x96x96xbf16> to vector<96x96xbf16>
    %cst_55 = arith.constant dense<0.000000e+00> : vector<80x96xf32>
    %68 = tpu.matmul %65, %67, %cst_55 {dimension_numbers = #tpu.dot_dimension_numbers<[1], [0], [0], [1], [0, 0, 1, 1], [], []>} : vector<80x96xbf16>, vector<96x96xbf16>, vector<80x96xf32> -> vector<80x96xf32>
    %69 = arith.addf %63, %68 : vector<80x96xf32>
    %c20 = arith.constant 20 : index
    %c0_56 = arith.constant 0 : index
    %70 = vector.load %arg10[%c20, %c0_56] : memref<108x96xf32, #tpu.memory_space<vmem>>, vector<80x96xf32>
    %71 = arith.truncf %70 : vector<80x96xf32> to vector<80x96xbf16>
    %c0_57 = arith.constant 0 : index
    %c6 = arith.constant 6 : index
    %c0_58 = arith.constant 0 : index
    %c0_59 = arith.constant 0 : index
    %72 = vector.load %arg5[%c0_57, %c6, %c0_58, %c0_59] : memref<3x9x96x96xbf16, #tpu.memory_space<vmem>>, vector<1x1x96x96xbf16>
    %73 = vector.shape_cast %72 : vector<1x1x96x96xbf16> to vector<96x96xbf16>
    %cst_60 = arith.constant dense<0.000000e+00> : vector<80x96xf32>
    %74 = tpu.matmul %71, %73, %cst_60 {dimension_numbers = #tpu.dot_dimension_numbers<[1], [0], [0], [1], [0, 0, 1, 1], [], []>} : vector<80x96xbf16>, vector<96x96xbf16>, vector<80x96xf32> -> vector<80x96xf32>
    %75 = arith.addf %69, %74 : vector<80x96xf32>
    %c21_61 = arith.constant 21 : index
    %c0_62 = arith.constant 0 : index
    %76 = vector.load %arg10[%c21_61, %c0_62] : memref<108x96xf32, #tpu.memory_space<vmem>>, vector<80x96xf32>
    %77 = arith.truncf %76 : vector<80x96xf32> to vector<80x96xbf16>
    %c0_63 = arith.constant 0 : index
    %c7 = arith.constant 7 : index
    %c0_64 = arith.constant 0 : index
    %c0_65 = arith.constant 0 : index
    %78 = vector.load %arg5[%c0_63, %c7, %c0_64, %c0_65] : memref<3x9x96x96xbf16, #tpu.memory_space<vmem>>, vector<1x1x96x96xbf16>
    %79 = vector.shape_cast %78 : vector<1x1x96x96xbf16> to vector<96x96xbf16>
    %cst_66 = arith.constant dense<0.000000e+00> : vector<80x96xf32>
    %80 = tpu.matmul %77, %79, %cst_66 {dimension_numbers = #tpu.dot_dimension_numbers<[1], [0], [0], [1], [0, 0, 1, 1], [], []>} : vector<80x96xbf16>, vector<96x96xbf16>, vector<80x96xf32> -> vector<80x96xf32>
    %81 = arith.addf %75, %80 : vector<80x96xf32>
    %c22 = arith.constant 22 : index
    %c0_67 = arith.constant 0 : index
    %82 = vector.load %arg10[%c22, %c0_67] : memref<108x96xf32, #tpu.memory_space<vmem>>, vector<80x96xf32>
    %83 = arith.truncf %82 : vector<80x96xf32> to vector<80x96xbf16>
    %c0_68 = arith.constant 0 : index
    %c8 = arith.constant 8 : index
    %c0_69 = arith.constant 0 : index
    %c0_70 = arith.constant 0 : index
    %84 = vector.load %arg5[%c0_68, %c8, %c0_69, %c0_70] : memref<3x9x96x96xbf16, #tpu.memory_space<vmem>>, vector<1x1x96x96xbf16>
    %85 = vector.shape_cast %84 : vector<1x1x96x96xbf16> to vector<96x96xbf16>
    %cst_71 = arith.constant dense<0.000000e+00> : vector<80x96xf32>
    %86 = tpu.matmul %83, %85, %cst_71 {dimension_numbers = #tpu.dot_dimension_numbers<[1], [0], [0], [1], [0, 0, 1, 1], [], []>} : vector<80x96xbf16>, vector<96x96xbf16>, vector<80x96xf32> -> vector<80x96xf32>
    %87 = arith.addf %81, %86 : vector<80x96xf32>
    %c0_72 = arith.constant 0 : index
    %c0_73 = arith.constant 0 : index
    %c0_74 = arith.constant 0 : index
    %88 = vector.load %arg6[%c0_72, %c0_73, %c0_74] : memref<3x1x96xf32, #tpu.memory_space<vmem>>, vector<1x1x96xf32>
    %89 = vector.shape_cast %88 : vector<1x1x96xf32> to vector<1x96xf32>
    %90 = vector.broadcast %89 : vector<1x96xf32> to vector<80x96xf32>
    %91 = arith.mulf %87, %90 : vector<80x96xf32>
    %c0_75 = arith.constant 0 : index
    %c0_76 = arith.constant 0 : index
    %c0_77 = arith.constant 0 : index
    %92 = vector.load %arg7[%c0_75, %c0_76, %c0_77] : memref<3x1x96xf32, #tpu.memory_space<vmem>>, vector<1x1x96xf32>
    %93 = vector.shape_cast %92 : vector<1x1x96xf32> to vector<1x96xf32>
    %94 = vector.broadcast %93 : vector<1x96xf32> to vector<80x96xf32>
    %95 = arith.addf %91, %94 : vector<80x96xf32>
    %cst_78 = arith.constant 0.000000e+00 : f32
    %96 = vector.broadcast %cst_78 : f32 to vector<80x96xf32>
    %97 = arith.maximumf %95, %96 : vector<80x96xf32>
    %cst_79 = arith.constant 0.000000e+00 : f32
    %98 = vector.broadcast %cst_79 : f32 to vector<108x96xf32>
    %c0_80 = arith.constant 0 : index
    %c0_81 = arith.constant 0 : index
    %99 = vector.load %arg10[%c0_80, %c0_81] : memref<108x96xf32, #tpu.memory_space<vmem>>, vector<108x96xf32>
    tpu.vector_store %arg10[%c0_80, %c0_81], %98 {strides = array<i32>} : memref<108x96xf32, #tpu.memory_space<vmem>>, vector<108x96xf32>,
    %100 = vector.extract_strided_slice %14 {offsets = [0, 0], sizes = [8, 96], strides = [1, 1]} : vector<64x96xf32> to vector<8x96xf32>
    %c11_82 = arith.constant 11 : index
    %c0_83 = arith.constant 0 : index
    %101 = vector.load %arg10[%c11_82, %c0_83] : memref<108x96xf32, #tpu.memory_space<vmem>>, vector<8x96xf32>
    tpu.vector_store %arg10[%c11_82, %c0_83], %100 {strides = array<i32>} : memref<108x96xf32, #tpu.memory_space<vmem>>, vector<8x96xf32>,
    %102 = vector.extract_strided_slice %14 {offsets = [8, 0], sizes = [8, 96], strides = [1, 1]} : vector<64x96xf32> to vector<8x96xf32>
    %c21_84 = arith.constant 21 : index
    %c0_85 = arith.constant 0 : index
    %103 = vector.load %arg10[%c21_84, %c0_85] : memref<108x96xf32, #tpu.memory_space<vmem>>, vector<8x96xf32>
    tpu.vector_store %arg10[%c21_84, %c0_85], %102 {strides = array<i32>} : memref<108x96xf32, #tpu.memory_space<vmem>>, vector<8x96xf32>,
    %104 = vector.extract_strided_slice %14 {offsets = [16, 0], sizes = [8, 96], strides = [1, 1]} : vector<64x96xf32> to vector<8x96xf32>
    %c31_86 = arith.constant 31 : index
    %c0_87 = arith.constant 0 : index
    %105 = vector.load %arg10[%c31_86, %c0_87] : memref<108x96xf32, #tpu.memory_space<vmem>>, vector<8x96xf32>
    tpu.vector_store %arg10[%c31_86, %c0_87], %104 {strides = array<i32>} : memref<108x96xf32, #tpu.memory_space<vmem>>, vector<8x96xf32>,
    %106 = vector.extract_strided_slice %14 {offsets = [24, 0], sizes = [8, 96], strides = [1, 1]} : vector<64x96xf32> to vector<8x96xf32>
    %c41_88 = arith.constant 41 : index
    %c0_89 = arith.constant 0 : index
    %107 = vector.load %arg10[%c41_88, %c0_89] : memref<108x96xf32, #tpu.memory_space<vmem>>, vector<8x96xf32>
    tpu.vector_store %arg10[%c41_88, %c0_89], %106 {strides = array<i32>} : memref<108x96xf32, #tpu.memory_space<vmem>>, vector<8x96xf32>,
    %108 = vector.extract_strided_slice %14 {offsets = [32, 0], sizes = [8, 96], strides = [1, 1]} : vector<64x96xf32> to vector<8x96xf32>
    %c51_90 = arith.constant 51 : index
    %c0_91 = arith.constant 0 : index
    %109 = vector.load %arg10[%c51_90, %c0_91] : memref<108x96xf32, #tpu.memory_space<vmem>>, vector<8x96xf32>
    tpu.vector_store %arg10[%c51_90, %c0_91], %108 {strides = array<i32>} : memref<108x96xf32, #tpu.memory_space<vmem>>, vector<8x96xf32>,
    %110 = vector.extract_strided_slice %14 {offsets = [40, 0], sizes = [8, 96], strides = [1, 1]} : vector<64x96xf32> to vector<8x96xf32>
    %c61_92 = arith.constant 61 : index
    %c0_93 = arith.constant 0 : index
    %111 = vector.load %arg10[%c61_92, %c0_93] : memref<108x96xf32, #tpu.memory_space<vmem>>, vector<8x96xf32>
    tpu.vector_store %arg10[%c61_92, %c0_93], %110 {strides = array<i32>} : memref<108x96xf32, #tpu.memory_space<vmem>>, vector<8x96xf32>,
    %112 = vector.extract_strided_slice %14 {offsets = [48, 0], sizes = [8, 96], strides = [1, 1]} : vector<64x96xf32> to vector<8x96xf32>
    %c71_94 = arith.constant 71 : index
    %c0_95 = arith.constant 0 : index
    %113 = vector.load %arg10[%c71_94, %c0_95] : memref<108x96xf32, #tpu.memory_space<vmem>>, vector<8x96xf32>
    tpu.vector_store %arg10[%c71_94, %c0_95], %112 {strides = array<i32>} : memref<108x96xf32, #tpu.memory_space<vmem>>, vector<8x96xf32>,
    %114 = vector.extract_strided_slice %14 {offsets = [56, 0], sizes = [8, 96], strides = [1, 1]} : vector<64x96xf32> to vector<8x96xf32>
    %c81_96 = arith.constant 81 : index
    %c0_97 = arith.constant 0 : index
    %115 = vector.load %arg10[%c81_96, %c0_97] : memref<108x96xf32, #tpu.memory_space<vmem>>, vector<8x96xf32>
    tpu.vector_store %arg10[%c81_96, %c0_97], %114 {strides = array<i32>} : memref<108x96xf32, #tpu.memory_space<vmem>>, vector<8x96xf32>,
    %cst_98 = arith.constant 0.000000e+00 : f32
    %116 = vector.broadcast %cst_98 : f32 to vector<80x96xf32>
    %c0_99 = arith.constant 0 : index
    %c0_100 = arith.constant 0 : index
    %117 = vector.load %arg10[%c0_99, %c0_100] : memref<108x96xf32, #tpu.memory_space<vmem>>, vector<80x96xf32>
    %118 = arith.truncf %117 : vector<80x96xf32> to vector<80x96xbf16>
    %c1_101 = arith.constant 1 : index
    %c0_102 = arith.constant 0 : index
    %c0_103 = arith.constant 0 : index
    %c0_104 = arith.constant 0 : index
    %119 = vector.load %arg5[%c1_101, %c0_102, %c0_103, %c0_104] : memref<3x9x96x96xbf16, #tpu.memory_space<vmem>>, vector<1x1x96x96xbf16>
    %120 = vector.shape_cast %119 : vector<1x1x96x96xbf16> to vector<96x96xbf16>
    %cst_105 = arith.constant dense<0.000000e+00> : vector<80x96xf32>
    %121 = tpu.matmul %118, %120, %cst_105 {dimension_numbers = #tpu.dot_dimension_numbers<[1], [0], [0], [1], [0, 0, 1, 1], [], []>} : vector<80x96xbf16>, vector<96x96xbf16>, vector<80x96xf32> -> vector<80x96xf32>
    %122 = arith.addf %116, %121 : vector<80x96xf32>
    %c1_106 = arith.constant 1 : index
    %c0_107 = arith.constant 0 : index
    %123 = vector.load %arg10[%c1_106, %c0_107] : memref<108x96xf32, #tpu.memory_space<vmem>>, vector<80x96xf32>
    %124 = arith.truncf %123 : vector<80x96xf32> to vector<80x96xbf16>
    %c1_108 = arith.constant 1 : index
    %c1_109 = arith.constant 1 : index
    %c0_110 = arith.constant 0 : index
    %c0_111 = arith.constant 0 : index
    %125 = vector.load %arg5[%c1_108, %c1_109, %c0_110, %c0_111] : memref<3x9x96x96xbf16, #tpu.memory_space<vmem>>, vector<1x1x96x96xbf16>
    %126 = vector.shape_cast %125 : vector<1x1x96x96xbf16> to vector<96x96xbf16>
    %cst_112 = arith.constant dense<0.000000e+00> : vector<80x96xf32>
    %127 = tpu.matmul %124, %126, %cst_112 {dimension_numbers = #tpu.dot_dimension_numbers<[1], [0], [0], [1], [0, 0, 1, 1], [], []>} : vector<80x96xbf16>, vector<96x96xbf16>, vector<80x96xf32> -> vector<80x96xf32>
    %128 = arith.addf %122, %127 : vector<80x96xf32>
    %c2_113 = arith.constant 2 : index
    %c0_114 = arith.constant 0 : index
    %129 = vector.load %arg10[%c2_113, %c0_114] : memref<108x96xf32, #tpu.memory_space<vmem>>, vector<80x96xf32>
    %130 = arith.truncf %129 : vector<80x96xf32> to vector<80x96xbf16>
    %c1_115 = arith.constant 1 : index
    %c2_116 = arith.constant 2 : index
    %c0_117 = arith.constant 0 : index
    %c0_118 = arith.constant 0 : index
    %131 = vector.load %arg5[%c1_115, %c2_116, %c0_117, %c0_118] : memref<3x9x96x96xbf16, #tpu.memory_space<vmem>>, vector<1x1x96x96xbf16>
    %132 = vector.shape_cast %131 : vector<1x1x96x96xbf16> to vector<96x96xbf16>
    %cst_119 = arith.constant dense<0.000000e+00> : vector<80x96xf32>
    %133 = tpu.matmul %130, %132, %cst_119 {dimension_numbers = #tpu.dot_dimension_numbers<[1], [0], [0], [1], [0, 0, 1, 1], [], []>} : vector<80x96xbf16>, vector<96x96xbf16>, vector<80x96xf32> -> vector<80x96xf32>
    %134 = arith.addf %128, %133 : vector<80x96xf32>
    %c10_120 = arith.constant 10 : index
    %c0_121 = arith.constant 0 : index
    %135 = vector.load %arg10[%c10_120, %c0_121] : memref<108x96xf32, #tpu.memory_space<vmem>>, vector<80x96xf32>
    %136 = arith.truncf %135 : vector<80x96xf32> to vector<80x96xbf16>
    %c1_122 = arith.constant 1 : index
    %c3_123 = arith.constant 3 : index
    %c0_124 = arith.constant 0 : index
    %c0_125 = arith.constant 0 : index
    %137 = vector.load %arg5[%c1_122, %c3_123, %c0_124, %c0_125] : memref<3x9x96x96xbf16, #tpu.memory_space<vmem>>, vector<1x1x96x96xbf16>
    %138 = vector.shape_cast %137 : vector<1x1x96x96xbf16> to vector<96x96xbf16>
    %cst_126 = arith.constant dense<0.000000e+00> : vector<80x96xf32>
    %139 = tpu.matmul %136, %138, %cst_126 {dimension_numbers = #tpu.dot_dimension_numbers<[1], [0], [0], [1], [0, 0, 1, 1], [], []>} : vector<80x96xbf16>, vector<96x96xbf16>, vector<80x96xf32> -> vector<80x96xf32>
    %140 = arith.addf %134, %139 : vector<80x96xf32>
    %c11_127 = arith.constant 11 : index
    %c0_128 = arith.constant 0 : index
    %141 = vector.load %arg10[%c11_127, %c0_128] : memref<108x96xf32, #tpu.memory_space<vmem>>, vector<80x96xf32>
    %142 = arith.truncf %141 : vector<80x96xf32> to vector<80x96xbf16>
    %c1_129 = arith.constant 1 : index
    %c4_130 = arith.constant 4 : index
    %c0_131 = arith.constant 0 : index
    %c0_132 = arith.constant 0 : index
    %143 = vector.load %arg5[%c1_129, %c4_130, %c0_131, %c0_132] : memref<3x9x96x96xbf16, #tpu.memory_space<vmem>>, vector<1x1x96x96xbf16>
    %144 = vector.shape_cast %143 : vector<1x1x96x96xbf16> to vector<96x96xbf16>
    %cst_133 = arith.constant dense<0.000000e+00> : vector<80x96xf32>
    %145 = tpu.matmul %142, %144, %cst_133 {dimension_numbers = #tpu.dot_dimension_numbers<[1], [0], [0], [1], [0, 0, 1, 1], [], []>} : vector<80x96xbf16>, vector<96x96xbf16>, vector<80x96xf32> -> vector<80x96xf32>
    %146 = arith.addf %140, %145 : vector<80x96xf32>
    %c12_134 = arith.constant 12 : index
    %c0_135 = arith.constant 0 : index
    %147 = vector.load %arg10[%c12_134, %c0_135] : memref<108x96xf32, #tpu.memory_space<vmem>>, vector<80x96xf32>
    %148 = arith.truncf %147 : vector<80x96xf32> to vector<80x96xbf16>
    %c1_136 = arith.constant 1 : index
    %c5_137 = arith.constant 5 : index
    %c0_138 = arith.constant 0 : index
    %c0_139 = arith.constant 0 : index
    %149 = vector.load %arg5[%c1_136, %c5_137, %c0_138, %c0_139] : memref<3x9x96x96xbf16, #tpu.memory_space<vmem>>, vector<1x1x96x96xbf16>
    %150 = vector.shape_cast %149 : vector<1x1x96x96xbf16> to vector<96x96xbf16>
    %cst_140 = arith.constant dense<0.000000e+00> : vector<80x96xf32>
    %151 = tpu.matmul %148, %150, %cst_140 {dimension_numbers = #tpu.dot_dimension_numbers<[1], [0], [0], [1], [0, 0, 1, 1], [], []>} : vector<80x96xbf16>, vector<96x96xbf16>, vector<80x96xf32> -> vector<80x96xf32>
    %152 = arith.addf %146, %151 : vector<80x96xf32>
    %c20_141 = arith.constant 20 : index
    %c0_142 = arith.constant 0 : index
    %153 = vector.load %arg10[%c20_141, %c0_142] : memref<108x96xf32, #tpu.memory_space<vmem>>, vector<80x96xf32>
    %154 = arith.truncf %153 : vector<80x96xf32> to vector<80x96xbf16>
    %c1_143 = arith.constant 1 : index
    %c6_144 = arith.constant 6 : index
    %c0_145 = arith.constant 0 : index
    %c0_146 = arith.constant 0 : index
    %155 = vector.load %arg5[%c1_143, %c6_144, %c0_145, %c0_146] : memref<3x9x96x96xbf16, #tpu.memory_space<vmem>>, vector<1x1x96x96xbf16>
    %156 = vector.shape_cast %155 : vector<1x1x96x96xbf16> to vector<96x96xbf16>
    %cst_147 = arith.constant dense<0.000000e+00> : vector<80x96xf32>
    %157 = tpu.matmul %154, %156, %cst_147 {dimension_numbers = #tpu.dot_dimension_numbers<[1], [0], [0], [1], [0, 0, 1, 1], [], []>} : vector<80x96xbf16>, vector<96x96xbf16>, vector<80x96xf32> -> vector<80x96xf32>
    %158 = arith.addf %152, %157 : vector<80x96xf32>
    %c21_148 = arith.constant 21 : index
    %c0_149 = arith.constant 0 : index
    %159 = vector.load %arg10[%c21_148, %c0_149] : memref<108x96xf32, #tpu.memory_space<vmem>>, vector<80x96xf32>
    %160 = arith.truncf %159 : vector<80x96xf32> to vector<80x96xbf16>
    %c1_150 = arith.constant 1 : index
    %c7_151 = arith.constant 7 : index
    %c0_152 = arith.constant 0 : index
    %c0_153 = arith.constant 0 : index
    %161 = vector.load %arg5[%c1_150, %c7_151, %c0_152, %c0_153] : memref<3x9x96x96xbf16, #tpu.memory_space<vmem>>, vector<1x1x96x96xbf16>
    %162 = vector.shape_cast %161 : vector<1x1x96x96xbf16> to vector<96x96xbf16>
    %cst_154 = arith.constant dense<0.000000e+00> : vector<80x96xf32>
    %163 = tpu.matmul %160, %162, %cst_154 {dimension_numbers = #tpu.dot_dimension_numbers<[1], [0], [0], [1], [0, 0, 1, 1], [], []>} : vector<80x96xbf16>, vector<96x96xbf16>, vector<80x96xf32> -> vector<80x96xf32>
    %164 = arith.addf %158, %163 : vector<80x96xf32>
    %c22_155 = arith.constant 22 : index
    %c0_156 = arith.constant 0 : index
    %165 = vector.load %arg10[%c22_155, %c0_156] : memref<108x96xf32, #tpu.memory_space<vmem>>, vector<80x96xf32>
    %166 = arith.truncf %165 : vector<80x96xf32> to vector<80x96xbf16>
    %c1_157 = arith.constant 1 : index
    %c8_158 = arith.constant 8 : index
    %c0_159 = arith.constant 0 : index
    %c0_160 = arith.constant 0 : index
    %167 = vector.load %arg5[%c1_157, %c8_158, %c0_159, %c0_160] : memref<3x9x96x96xbf16, #tpu.memory_space<vmem>>, vector<1x1x96x96xbf16>
    %168 = vector.shape_cast %167 : vector<1x1x96x96xbf16> to vector<96x96xbf16>
    %cst_161 = arith.constant dense<0.000000e+00> : vector<80x96xf32>
    %169 = tpu.matmul %166, %168, %cst_161 {dimension_numbers = #tpu.dot_dimension_numbers<[1], [0], [0], [1], [0, 0, 1, 1], [], []>} : vector<80x96xbf16>, vector<96x96xbf16>, vector<80x96xf32> -> vector<80x96xf32>
    %170 = arith.addf %164, %169 : vector<80x96xf32>
    %c1_162 = arith.constant 1 : index
    %c0_163 = arith.constant 0 : index
    %c0_164 = arith.constant 0 : index
    %171 = vector.load %arg6[%c1_162, %c0_163, %c0_164] : memref<3x1x96xf32, #tpu.memory_space<vmem>>, vector<1x1x96xf32>
    %172 = vector.shape_cast %171 : vector<1x1x96xf32> to vector<1x96xf32>
    %173 = vector.broadcast %172 : vector<1x96xf32> to vector<80x96xf32>
    %174 = arith.mulf %170, %173 : vector<80x96xf32>
    %c1_165 = arith.constant 1 : index
    %c0_166 = arith.constant 0 : index
    %c0_167 = arith.constant 0 : index
    %175 = vector.load %arg7[%c1_165, %c0_166, %c0_167] : memref<3x1x96xf32, #tpu.memory_space<vmem>>, vector<1x1x96xf32>
    %176 = vector.shape_cast %175 : vector<1x1x96xf32> to vector<1x96xf32>
    %177 = vector.broadcast %176 : vector<1x96xf32> to vector<80x96xf32>
    %178 = arith.addf %174, %177 : vector<80x96xf32>
    %cst_168 = arith.constant 0.000000e+00 : f32
    %179 = vector.broadcast %cst_168 : f32 to vector<80x96xf32>
    %180 = arith.maximumf %178, %179 : vector<80x96xf32>
    %c0_169 = arith.constant 0 : index
    %c0_170 = arith.constant 0 : index
    %181 = vector.load %arg8[%c0_169, %c0_170] : memref<80x1xf32, #tpu.memory_space<vmem>>, vector<80x1xf32>
    %182 = vector.broadcast %181 : vector<80x1xf32> to vector<80x96xf32>
    %183 = arith.mulf %180, %182 : vector<80x96xf32>
    %cst_171 = arith.constant 0.000000e+00 : f32
    %184 = vector.broadcast %cst_171 : f32 to vector<108x96xf32>
    %c0_172 = arith.constant 0 : index
    %c0_173 = arith.constant 0 : index
    %185 = vector.load %arg10[%c0_172, %c0_173] : memref<108x96xf32, #tpu.memory_space<vmem>>, vector<108x96xf32>
    tpu.vector_store %arg10[%c0_172, %c0_173], %184 {strides = array<i32>} : memref<108x96xf32, #tpu.memory_space<vmem>>, vector<108x96xf32>,
    %c11_174 = arith.constant 11 : index
    %c0_175 = arith.constant 0 : index
    %186 = vector.load %arg10[%c11_174, %c0_175] : memref<108x96xf32, #tpu.memory_space<vmem>>, vector<80x96xf32>
    tpu.vector_store %arg10[%c11_174, %c0_175], %183 {strides = array<i32>} : memref<108x96xf32, #tpu.memory_space<vmem>>, vector<80x96xf32>,
    %cst_176 = arith.constant 0.000000e+00 : f32
    %187 = vector.broadcast %cst_176 : f32 to vector<80x96xf32>
    %c0_177 = arith.constant 0 : index
    %c0_178 = arith.constant 0 : index
    %188 = vector.load %arg10[%c0_177, %c0_178] : memref<108x96xf32, #tpu.memory_space<vmem>>, vector<80x96xf32>
    %189 = arith.truncf %188 : vector<80x96xf32> to vector<80x96xbf16>
    %c2_179 = arith.constant 2 : index
    %c0_180 = arith.constant 0 : index
    %c0_181 = arith.constant 0 : index
    %c0_182 = arith.constant 0 : index
    %190 = vector.load %arg5[%c2_179, %c0_180, %c0_181, %c0_182] : memref<3x9x96x96xbf16, #tpu.memory_space<vmem>>, vector<1x1x96x96xbf16>
    %191 = vector.shape_cast %190 : vector<1x1x96x96xbf16> to vector<96x96xbf16>
    %cst_183 = arith.constant dense<0.000000e+00> : vector<80x96xf32>
    %192 = tpu.matmul %189, %191, %cst_183 {dimension_numbers = #tpu.dot_dimension_numbers<[1], [0], [0], [1], [0, 0, 1, 1], [], []>} : vector<80x96xbf16>, vector<96x96xbf16>, vector<80x96xf32> -> vector<80x96xf32>
    %193 = arith.addf %187, %192 : vector<80x96xf32>
    %c1_184 = arith.constant 1 : index
    %c0_185 = arith.constant 0 : index
    %194 = vector.load %arg10[%c1_184, %c0_185] : memref<108x96xf32, #tpu.memory_space<vmem>>, vector<80x96xf32>
    %195 = arith.truncf %194 : vector<80x96xf32> to vector<80x96xbf16>
    %c2_186 = arith.constant 2 : index
    %c1_187 = arith.constant 1 : index
    %c0_188 = arith.constant 0 : index
    %c0_189 = arith.constant 0 : index
    %196 = vector.load %arg5[%c2_186, %c1_187, %c0_188, %c0_189] : memref<3x9x96x96xbf16, #tpu.memory_space<vmem>>, vector<1x1x96x96xbf16>
    %197 = vector.shape_cast %196 : vector<1x1x96x96xbf16> to vector<96x96xbf16>
    %cst_190 = arith.constant dense<0.000000e+00> : vector<80x96xf32>
    %198 = tpu.matmul %195, %197, %cst_190 {dimension_numbers = #tpu.dot_dimension_numbers<[1], [0], [0], [1], [0, 0, 1, 1], [], []>} : vector<80x96xbf16>, vector<96x96xbf16>, vector<80x96xf32> -> vector<80x96xf32>
    %199 = arith.addf %193, %198 : vector<80x96xf32>
    %c2_191 = arith.constant 2 : index
    %c0_192 = arith.constant 0 : index
    %200 = vector.load %arg10[%c2_191, %c0_192] : memref<108x96xf32, #tpu.memory_space<vmem>>, vector<80x96xf32>
    %201 = arith.truncf %200 : vector<80x96xf32> to vector<80x96xbf16>
    %c2_193 = arith.constant 2 : index
    %c2_194 = arith.constant 2 : index
    %c0_195 = arith.constant 0 : index
    %c0_196 = arith.constant 0 : index
    %202 = vector.load %arg5[%c2_193, %c2_194, %c0_195, %c0_196] : memref<3x9x96x96xbf16, #tpu.memory_space<vmem>>, vector<1x1x96x96xbf16>
    %203 = vector.shape_cast %202 : vector<1x1x96x96xbf16> to vector<96x96xbf16>
    %cst_197 = arith.constant dense<0.000000e+00> : vector<80x96xf32>
    %204 = tpu.matmul %201, %203, %cst_197 {dimension_numbers = #tpu.dot_dimension_numbers<[1], [0], [0], [1], [0, 0, 1, 1], [], []>} : vector<80x96xbf16>, vector<96x96xbf16>, vector<80x96xf32> -> vector<80x96xf32>
    %205 = arith.addf %199, %204 : vector<80x96xf32>
    %c10_198 = arith.constant 10 : index
    %c0_199 = arith.constant 0 : index
    %206 = vector.load %arg10[%c10_198, %c0_199] : memref<108x96xf32, #tpu.memory_space<vmem>>, vector<80x96xf32>
    %207 = arith.truncf %206 : vector<80x96xf32> to vector<80x96xbf16>
    %c2_200 = arith.constant 2 : index
    %c3_201 = arith.constant 3 : index
    %c0_202 = arith.constant 0 : index
    %c0_203 = arith.constant 0 : index
    %208 = vector.load %arg5[%c2_200, %c3_201, %c0_202, %c0_203] : memref<3x9x96x96xbf16, #tpu.memory_space<vmem>>, vector<1x1x96x96xbf16>
    %209 = vector.shape_cast %208 : vector<1x1x96x96xbf16> to vector<96x96xbf16>
    %cst_204 = arith.constant dense<0.000000e+00> : vector<80x96xf32>
    %210 = tpu.matmul %207, %209, %cst_204 {dimension_numbers = #tpu.dot_dimension_numbers<[1], [0], [0], [1], [0, 0, 1, 1], [], []>} : vector<80x96xbf16>, vector<96x96xbf16>, vector<80x96xf32> -> vector<80x96xf32>
    %211 = arith.addf %205, %210 : vector<80x96xf32>
    %c11_205 = arith.constant 11 : index
    %c0_206 = arith.constant 0 : index
    %212 = vector.load %arg10[%c11_205, %c0_206] : memref<108x96xf32, #tpu.memory_space<vmem>>, vector<80x96xf32>
    %213 = arith.truncf %212 : vector<80x96xf32> to vector<80x96xbf16>
    %c2_207 = arith.constant 2 : index
    %c4_208 = arith.constant 4 : index
    %c0_209 = arith.constant 0 : index
    %c0_210 = arith.constant 0 : index
    %214 = vector.load %arg5[%c2_207, %c4_208, %c0_209, %c0_210] : memref<3x9x96x96xbf16, #tpu.memory_space<vmem>>, vector<1x1x96x96xbf16>
    %215 = vector.shape_cast %214 : vector<1x1x96x96xbf16> to vector<96x96xbf16>
    %cst_211 = arith.constant dense<0.000000e+00> : vector<80x96xf32>
    %216 = tpu.matmul %213, %215, %cst_211 {dimension_numbers = #tpu.dot_dimension_numbers<[1], [0], [0], [1], [0, 0, 1, 1], [], []>} : vector<80x96xbf16>, vector<96x96xbf16>, vector<80x96xf32> -> vector<80x96xf32>
    %217 = arith.addf %211, %216 : vector<80x96xf32>
    %c12_212 = arith.constant 12 : index
    %c0_213 = arith.constant 0 : index
    %218 = vector.load %arg10[%c12_212, %c0_213] : memref<108x96xf32, #tpu.memory_space<vmem>>, vector<80x96xf32>
    %219 = arith.truncf %218 : vector<80x96xf32> to vector<80x96xbf16>
    %c2_214 = arith.constant 2 : index
    %c5_215 = arith.constant 5 : index
    %c0_216 = arith.constant 0 : index
    %c0_217 = arith.constant 0 : index
    %220 = vector.load %arg5[%c2_214, %c5_215, %c0_216, %c0_217] : memref<3x9x96x96xbf16, #tpu.memory_space<vmem>>, vector<1x1x96x96xbf16>
    %221 = vector.shape_cast %220 : vector<1x1x96x96xbf16> to vector<96x96xbf16>
    %cst_218 = arith.constant dense<0.000000e+00> : vector<80x96xf32>
    %222 = tpu.matmul %219, %221, %cst_218 {dimension_numbers = #tpu.dot_dimension_numbers<[1], [0], [0], [1], [0, 0, 1, 1], [], []>} : vector<80x96xbf16>, vector<96x96xbf16>, vector<80x96xf32> -> vector<80x96xf32>
    %223 = arith.addf %217, %222 : vector<80x96xf32>
    %c20_219 = arith.constant 20 : index
    %c0_220 = arith.constant 0 : index
    %224 = vector.load %arg10[%c20_219, %c0_220] : memref<108x96xf32, #tpu.memory_space<vmem>>, vector<80x96xf32>
    %225 = arith.truncf %224 : vector<80x96xf32> to vector<80x96xbf16>
    %c2_221 = arith.constant 2 : index
    %c6_222 = arith.constant 6 : index
    %c0_223 = arith.constant 0 : index
    %c0_224 = arith.constant 0 : index
    %226 = vector.load %arg5[%c2_221, %c6_222, %c0_223, %c0_224] : memref<3x9x96x96xbf16, #tpu.memory_space<vmem>>, vector<1x1x96x96xbf16>
    %227 = vector.shape_cast %226 : vector<1x1x96x96xbf16> to vector<96x96xbf16>
    %cst_225 = arith.constant dense<0.000000e+00> : vector<80x96xf32>
    %228 = tpu.matmul %225, %227, %cst_225 {dimension_numbers = #tpu.dot_dimension_numbers<[1], [0], [0], [1], [0, 0, 1, 1], [], []>} : vector<80x96xbf16>, vector<96x96xbf16>, vector<80x96xf32> -> vector<80x96xf32>
    %229 = arith.addf %223, %228 : vector<80x96xf32>
    %c21_226 = arith.constant 21 : index
    %c0_227 = arith.constant 0 : index
    %230 = vector.load %arg10[%c21_226, %c0_227] : memref<108x96xf32, #tpu.memory_space<vmem>>, vector<80x96xf32>
    %231 = arith.truncf %230 : vector<80x96xf32> to vector<80x96xbf16>
    %c2_228 = arith.constant 2 : index
    %c7_229 = arith.constant 7 : index
    %c0_230 = arith.constant 0 : index
    %c0_231 = arith.constant 0 : index
    %232 = vector.load %arg5[%c2_228, %c7_229, %c0_230, %c0_231] : memref<3x9x96x96xbf16, #tpu.memory_space<vmem>>, vector<1x1x96x96xbf16>
    %233 = vector.shape_cast %232 : vector<1x1x96x96xbf16> to vector<96x96xbf16>
    %cst_232 = arith.constant dense<0.000000e+00> : vector<80x96xf32>
    %234 = tpu.matmul %231, %233, %cst_232 {dimension_numbers = #tpu.dot_dimension_numbers<[1], [0], [0], [1], [0, 0, 1, 1], [], []>} : vector<80x96xbf16>, vector<96x96xbf16>, vector<80x96xf32> -> vector<80x96xf32>
    %235 = arith.addf %229, %234 : vector<80x96xf32>
    %c22_233 = arith.constant 22 : index
    %c0_234 = arith.constant 0 : index
    %236 = vector.load %arg10[%c22_233, %c0_234] : memref<108x96xf32, #tpu.memory_space<vmem>>, vector<80x96xf32>
    %237 = arith.truncf %236 : vector<80x96xf32> to vector<80x96xbf16>
    %c2_235 = arith.constant 2 : index
    %c8_236 = arith.constant 8 : index
    %c0_237 = arith.constant 0 : index
    %c0_238 = arith.constant 0 : index
    %238 = vector.load %arg5[%c2_235, %c8_236, %c0_237, %c0_238] : memref<3x9x96x96xbf16, #tpu.memory_space<vmem>>, vector<1x1x96x96xbf16>
    %239 = vector.shape_cast %238 : vector<1x1x96x96xbf16> to vector<96x96xbf16>
    %cst_239 = arith.constant dense<0.000000e+00> : vector<80x96xf32>
    %240 = tpu.matmul %237, %239, %cst_239 {dimension_numbers = #tpu.dot_dimension_numbers<[1], [0], [0], [1], [0, 0, 1, 1], [], []>} : vector<80x96xbf16>, vector<96x96xbf16>, vector<80x96xf32> -> vector<80x96xf32>
    %241 = arith.addf %235, %240 : vector<80x96xf32>
    %c2_240 = arith.constant 2 : index
    %c0_241 = arith.constant 0 : index
    %c0_242 = arith.constant 0 : index
    %242 = vector.load %arg6[%c2_240, %c0_241, %c0_242] : memref<3x1x96xf32, #tpu.memory_space<vmem>>, vector<1x1x96xf32>
    %243 = vector.shape_cast %242 : vector<1x1x96xf32> to vector<1x96xf32>
    %244 = vector.broadcast %243 : vector<1x96xf32> to vector<80x96xf32>
    %245 = arith.mulf %241, %244 : vector<80x96xf32>
    %c2_243 = arith.constant 2 : index
    %c0_244 = arith.constant 0 : index
    %c0_245 = arith.constant 0 : index
    %246 = vector.load %arg7[%c2_243, %c0_244, %c0_245] : memref<3x1x96xf32, #tpu.memory_space<vmem>>, vector<1x1x96xf32>
    %247 = vector.shape_cast %246 : vector<1x1x96xf32> to vector<1x96xf32>
    %248 = vector.broadcast %247 : vector<1x96xf32> to vector<80x96xf32>
    %249 = arith.addf %245, %248 : vector<80x96xf32>
    %cst_246 = arith.constant 0.000000e+00 : f32
    %250 = vector.broadcast %cst_246 : f32 to vector<80x96xf32>
    %251 = arith.maximumf %249, %250 : vector<80x96xf32>
    %252 = vector.extract_strided_slice %97 {offsets = [0, 0], sizes = [8, 96], strides = [1, 1]} : vector<80x96xf32> to vector<8x96xf32>
    %253 = vector.extract_strided_slice %97 {offsets = [10, 0], sizes = [8, 96], strides = [1, 1]} : vector<80x96xf32> to vector<8x96xf32>
    %254 = vector.extract_strided_slice %97 {offsets = [20, 0], sizes = [8, 96], strides = [1, 1]} : vector<80x96xf32> to vector<8x96xf32>
    %255 = vector.extract_strided_slice %97 {offsets = [30, 0], sizes = [8, 96], strides = [1, 1]} : vector<80x96xf32> to vector<8x96xf32>
    %256 = vector.extract_strided_slice %97 {offsets = [40, 0], sizes = [8, 96], strides = [1, 1]} : vector<80x96xf32> to vector<8x96xf32>
    %257 = vector.extract_strided_slice %97 {offsets = [50, 0], sizes = [8, 96], strides = [1, 1]} : vector<80x96xf32> to vector<8x96xf32>
    %258 = vector.extract_strided_slice %97 {offsets = [60, 0], sizes = [8, 96], strides = [1, 1]} : vector<80x96xf32> to vector<8x96xf32>
    %259 = vector.extract_strided_slice %97 {offsets = [70, 0], sizes = [8, 96], strides = [1, 1]} : vector<80x96xf32> to vector<8x96xf32>
    %260 = tpu.concatenate %252, %253, %254, %255, %256, %257, %258, %259 in 0 : vector<8x96xf32>, vector<8x96xf32>, vector<8x96xf32>, vector<8x96xf32>, vector<8x96xf32>, vector<8x96xf32>, vector<8x96xf32>, vector<8x96xf32> -> vector<64x96xf32>
    %261 = vector.extract_strided_slice %251 {offsets = [0, 0], sizes = [8, 96], strides = [1, 1]} : vector<80x96xf32> to vector<8x96xf32>
    %262 = vector.extract_strided_slice %251 {offsets = [10, 0], sizes = [8, 96], strides = [1, 1]} : vector<80x96xf32> to vector<8x96xf32>
    %263 = vector.extract_strided_slice %251 {offsets = [20, 0], sizes = [8, 96], strides = [1, 1]} : vector<80x96xf32> to vector<8x96xf32>
    %264 = vector.extract_strided_slice %251 {offsets = [30, 0], sizes = [8, 96], strides = [1, 1]} : vector<80x96xf32> to vector<8x96xf32>
    %265 = vector.extract_strided_slice %251 {offsets = [40, 0], sizes = [8, 96], strides = [1, 1]} : vector<80x96xf32> to vector<8x96xf32>
    %266 = vector.extract_strided_slice %251 {offsets = [50, 0], sizes = [8, 96], strides = [1, 1]} : vector<80x96xf32> to vector<8x96xf32>
    %267 = vector.extract_strided_slice %251 {offsets = [60, 0], sizes = [8, 96], strides = [1, 1]} : vector<80x96xf32> to vector<8x96xf32>
    %268 = vector.extract_strided_slice %251 {offsets = [70, 0], sizes = [8, 96], strides = [1, 1]} : vector<80x96xf32> to vector<8x96xf32>
    %269 = tpu.concatenate %261, %262, %263, %264, %265, %266, %267, %268 in 0 : vector<8x96xf32>, vector<8x96xf32>, vector<8x96xf32>, vector<8x96xf32>, vector<8x96xf32>, vector<8x96xf32>, vector<8x96xf32>, vector<8x96xf32> -> vector<64x96xf32>
    %270 = tpu.concatenate %12, %260, %269 in 1 : vector<64x192xf32>, vector<64x96xf32>, vector<64x96xf32> -> vector<64x384xf32>
    %c0_247 = arith.constant 0 : index
    %c0_248 = arith.constant 0 : index
    %c0_249 = arith.constant 0 : index
    %271 = vector.load %arg9[%c0_247, %c0_248, %c0_249] : memref<1x64x384xf32, #tpu.memory_space<vmem>>, vector<1x64x384xf32>
    %272 = vector.shape_cast %271 : vector<1x64x384xf32> to vector<64x384xf32>
    %273 = vector.shape_cast %270 : vector<64x384xf32> to vector<1x64x384xf32>
    tpu.vector_store %arg9[%c0_247, %c0_248, %c0_249], %273 {strides = array<i32>} : memref<1x64x384xf32, #tpu.memory_space<vmem>>, vector<1x64x384xf32>,
    return
  }
  func.func @transform_0(%arg0: i32) -> (i32, i32, i32) {
    %c0_i32 = arith.constant 0 : i32
    %c0_i32_0 = arith.constant 0 : i32
    %c0_i32_1 = arith.constant 0 : i32
    return %arg0, %c0_i32, %c0_i32_0 : i32, i32, i32
  }
  func.func @transform_1(%arg0: i32) -> (i32, i32) {
    %c0_i32 = arith.constant 0 : i32
    %c0_i32_0 = arith.constant 0 : i32
    %c0_i32_1 = arith.constant 0 : i32
    return %c0_i32, %c0_i32_0 : i32, i32
  }
  func.func @transform_2(%arg0: i32) -> (i32, i32) {
    %c0_i32 = arith.constant 0 : i32
    %c0_i32_0 = arith.constant 0 : i32
    %c0_i32_1 = arith.constant 0 : i32
    return %c0_i32, %c0_i32_0 : i32, i32
  }
  func.func @transform_3(%arg0: i32) -> (i32, i32) {
    %c0_i32 = arith.constant 0 : i32
    %c0_i32_0 = arith.constant 0 : i32
    %c0_i32_1 = arith.constant 0 : i32
    return %c0_i32, %c0_i32_0 : i32, i32
  }
  func.func @transform_4(%arg0: i32) -> (i32, i32, i32, i32) {
    %c0_i32 = arith.constant 0 : i32
    %c0_i32_0 = arith.constant 0 : i32
    %c0_i32_1 = arith.constant 0 : i32
    %c0_i32_2 = arith.constant 0 : i32
    %c0_i32_3 = arith.constant 0 : i32
    return %c0_i32, %c0_i32_0, %c0_i32_1, %c0_i32_2 : i32, i32, i32, i32
  }
  func.func @transform_5(%arg0: i32) -> (i32, i32, i32) {
    %c0_i32 = arith.constant 0 : i32
    %c0_i32_0 = arith.constant 0 : i32
    %c0_i32_1 = arith.constant 0 : i32
    %c0_i32_2 = arith.constant 0 : i32
    return %c0_i32, %c0_i32_0, %c0_i32_1 : i32, i32, i32
  }
  func.func @transform_6(%arg0: i32) -> (i32, i32, i32) {
    %c0_i32 = arith.constant 0 : i32
    %c0_i32_0 = arith.constant 0 : i32
    %c0_i32_1 = arith.constant 0 : i32
    %c0_i32_2 = arith.constant 0 : i32
    return %c0_i32, %c0_i32_0, %c0_i32_1 : i32, i32, i32
  }
  func.func @transform_7(%arg0: i32) -> (i32, i32) {
    %c0_i32 = arith.constant 0 : i32
    %c0_i32_0 = arith.constant 0 : i32
    %c0_i32_1 = arith.constant 0 : i32
    return %c0_i32, %c0_i32_0 : i32, i32
  }
  func.func @transform_8(%arg0: i32) -> (i32, i32, i32) {
    %c0_i32 = arith.constant 0 : i32
    %c0_i32_0 = arith.constant 0 : i32
    %c0_i32_1 = arith.constant 0 : i32
    return %arg0, %c0_i32, %c0_i32_0 : i32, i32, i32
  }
}

</mosaic_0001>

<llo_original>
// kernel: inception_a.1
$region0: #{inception_a.1}
  #allocation0 [shape = 'u32[]', space=smem, size = 0x4, offset = 0x4, fixed_abs, tag = 'smem constant byte address 0x4 - core index']
  #allocation1 [shape = 'u32[144,128]{1,0:T(1,128)}', space=vmem, size = 0x12000, scoped, tag = 'internal scratch']
  #allocation2 [shape = 'f32[108,96]{1,0:T(8,128)}', space=vmem, size = 0xe000, scoped, tag = 'scratch operand']
  %s0 = inlined_call_operand.vmem [shape: bf16[2,64,384], index: 0, kind: input, shape index: {}]
  %s1 = inlined_call_operand.vmem [shape: bf16[384,384], index: 1, kind: input, shape index: {}]
  %s2 = inlined_call_operand.vmem [shape: f32[1,384], index: 2, kind: input, shape index: {}]
  %s3 = inlined_call_operand.vmem [shape: f32[1,384], index: 3, kind: input, shape index: {}]
  %s4 = inlined_call_operand.vmem [shape: bf16[3,9,96,96], index: 4, kind: input, shape index: {}]
  %s5 = inlined_call_operand.vmem [shape: f32[3,1,96], index: 5, kind: input, shape index: {}]
  %s6 = inlined_call_operand.vmem [shape: f32[3,1,96], index: 6, kind: input, shape index: {}]
  %s7 = inlined_call_operand.vmem [shape: f32[80,1], index: 7, kind: input, shape index: {}]
  %s8 = inlined_call_operand.hbm [shape: f32[2,64,384], index: 8, kind: output, shape index: {}]
  %s9 = sld [smem:[#allocation0]]
  $region65: #{inception_a.1} parent=0
    _
  %s11 = ssub.s32 1, %s9
  %s12 = scalar_select 0, %s11, %s9
  $region1: #{inception_a.1} parent=0
    #allocation3 [shape = 'u8[196608]{0}', space=vmem, size = 0x30000, scoped, tag = 'output window, operand 0']
    #allocation4 [shape = 's32[2]{0}', space=sflag, size = 0x8, scoped, tag = 'scoped memory for inception_a.1']
    %13 = vsyncpa [#allocation4], 0
    %s14 = scalar_lea.sflag [#allocation4], 1
    %15 = vsyncpa %s14, 0
    loop: start=0, step=1, limit=4
    $region2: #{inception_a.1} parent=1 // loop_pre_header
      _
    $region3: #{inception_a.1} parent=1 // loop_header
      %s17 = sphi 0, %s21
      %p18 = scmp.ge.s32.totalorder %s17, 4
      %s27 = sphi 0, %s29
      %s30 = sphi 0, %s27
      %s31 = sphi 0, %s30
      %s47 = sphi 0, %s31
      %s51 = sphi 0, %s51
      %s53 = sphi 0, %s51
      %s54 = sphi 0, %s53
      %s68 = sphi 0, %s54
      %s72 = sphi 0, %s72
      %s74 = sphi 0, %s72
      %s75 = sphi 0, %s74
      %s89 = sphi 0, %s75
      %s93 = sphi 0, %s93
      %s95 = sphi 0, %s93
      %s96 = sphi 0, %s95
      %s110 = sphi 0, %s96
      %s114 = sphi 0, %s114
      %s116 = sphi 0, %s114
      %s117 = sphi 0, %s116
      %s131 = sphi 0, %s117
      %s135 = sphi 0, %s135
      %s137 = sphi 0, %s135
      %s138 = sphi 0, %s137
      %s152 = sphi 0, %s138
      %s156 = sphi 0, %s156
      %s158 = sphi 0, %s156
      %s159 = sphi 0, %s158
      %s173 = sphi 0, %s159
      %s177 = sphi 0, %s177
      %s179 = sphi 0, %s177
      %s180 = sphi 0, %s179
      %s194 = sphi 0, %s180
      %s200 = sphi 0, %s202
      %s203 = sphi 0, %s200
      %s204 = sphi 0, %s203
      %s220 = sphi 0, %s204
    $region4: #{inception_a.1} parent=1 // loop_header_branch
      %20 = sbr.rel (%p18) target = $region8
    $region5: #{inception_a.1} parent=1 // loop_body
      %s22 = ssub.s32 %s17, 1
      %s23 = ssub.s32 %s17, 2
      %s24 = sadd.s32 %s17, 1
      %s25 = ssub.s32 %s17, %s24
      %p26 = scmp.eq.s32.totalorder %s25, 0
      %s28 = sadd.s32 %s27, 1
      %s29 = scalar_select %p26, %s27, %s28
      %p32 = pneg %p26
      %p33 = scmp.eq.s32.totalorder %s17, 1
      %p34 = por %p32, %p33
      %p35 = scmp.ne.s32.totalorder %s27, %s30
      %p36 = scmp.eq.s32.totalorder %s17, 0
      %p37 = por %p35, %p36
      %p38 = scmp.ne.s32.totalorder %s27, %s30
      %p39 = scmp.eq.s32.totalorder %s22, 1
      %p40 = por %p38, %p39
      %p41 = scmp.ne.s32.totalorder %s30, %s31
      %p42 = scmp.eq.s32.totalorder %s22, 0
      %p43 = por %p41, %p42
      %p44 = scmp.ne.s32.totalorder %s30, %s31
      %p45 = scmp.eq.s32.totalorder %s23, 1
      %p46 = por %p44, %p45
      %p48 = scmp.ne.s32.totalorder %s31, %s47
      %p49 = scmp.eq.s32.totalorder %s23, 0
      %p50 = por %p48, %p49
      %s52 = sadd.s32 %s51, 1
      %p55 = scmp.eq.s32.totalorder %s17, 1
      %p56 = scmp.ne.s32.totalorder %s51, %s53
      %p57 = scmp.eq.s32.totalorder %s17, 0
      %p58 = por %p56, %p57
      %p59 = scmp.ne.s32.totalorder %s51, %s53
      %p60 = scmp.eq.s32.totalorder %s22, 1
      %p61 = por %p59, %p60
      %p62 = scmp.ne.s32.totalorder %s53, %s54
      %p63 = scmp.eq.s32.totalorder %s22, 0
      %p64 = por %p62, %p63
      %p65 = scmp.ne.s32.totalorder %s53, %s54
      %p66 = scmp.eq.s32.totalorder %s23, 1
      %p67 = por %p65, %p66
      %p69 = scmp.ne.s32.totalorder %s54, %s68
      %p70 = scmp.eq.s32.totalorder %s23, 0
      %p71 = por %p69, %p70
      %s73 = sadd.s32 %s72, 1
      %p76 = scmp.eq.s32.totalorder %s17, 1
      %p77 = scmp.ne.s32.totalorder %s72, %s74
      %p78 = scmp.eq.s32.totalorder %s17, 0
      %p79 = por %p77, %p78
      %p80 = scmp.ne.s32.totalorder %s72, %s74
      %p81 = scmp.eq.s32.totalorder %s22, 1
      %p82 = por %p80, %p81
      %p83 = scmp.ne.s32.totalorder %s74, %s75
      %p84 = scmp.eq.s32.totalorder %s22, 0
      %p85 = por %p83, %p84
      %p86 = scmp.ne.s32.totalorder %s74, %s75
      %p87 = scmp.eq.s32.totalorder %s23, 1
      %p88 = por %p86, %p87
      %p90 = scmp.ne.s32.totalorder %s75, %s89
      %p91 = scmp.eq.s32.totalorder %s23, 0
      %p92 = por %p90, %p91
      %s94 = sadd.s32 %s93, 1
      %p97 = scmp.eq.s32.totalorder %s17, 1
      %p98 = scmp.ne.s32.totalorder %s93, %s95
      %p99 = scmp.eq.s32.totalorder %s17, 0
      %p100 = por %p98, %p99
      %p101 = scmp.ne.s32.totalorder %s93, %s95
      %p102 = scmp.eq.s32.totalorder %s22, 1
      %p103 = por %p101, %p102
      %p104 = scmp.ne.s32.totalorder %s95, %s96
      %p105 = scmp.eq.s32.totalorder %s22, 0
      %p106 = por %p104, %p105
      %p107 = scmp.ne.s32.totalorder %s95, %s96
      %p108 = scmp.eq.s32.totalorder %s23, 1
      %p109 = por %p107, %p108
      %p111 = scmp.ne.s32.totalorder %s96, %s110
      %p112 = scmp.eq.s32.totalorder %s23, 0
      %p113 = por %p111, %p112
      %s115 = sadd.s32 %s114, 1
      %p118 = scmp.eq.s32.totalorder %s17, 1
      %p119 = scmp.ne.s32.totalorder %s114, %s116
      %p120 = scmp.eq.s32.totalorder %s17, 0
      %p121 = por %p119, %p120
      %p122 = scmp.ne.s32.totalorder %s114, %s116
      %p123 = scmp.eq.s32.totalorder %s22, 1
      %p124 = por %p122, %p123
      %p125 = scmp.ne.s32.totalorder %s116, %s117
      %p126 = scmp.eq.s32.totalorder %s22, 0
      %p127 = por %p125, %p126
      %p128 = scmp.ne.s32.totalorder %s116, %s117
      %p129 = scmp.eq.s32.totalorder %s23, 1
      %p130 = por %p128, %p129
      %p132 = scmp.ne.s32.totalorder %s117, %s131
      %p133 = scmp.eq.s32.totalorder %s23, 0
      %p134 = por %p132, %p133
      %s136 = sadd.s32 %s135, 1
      %p139 = scmp.eq.s32.totalorder %s17, 1
      %p140 = scmp.ne.s32.totalorder %s135, %s137
      %p141 = scmp.eq.s32.totalorder %s17, 0
      %p142 = por %p140, %p141
      %p143 = scmp.ne.s32.totalorder %s135, %s137
      %p144 = scmp.eq.s32.totalorder %s22, 1
      %p145 = por %p143, %p144
      %p146 = scmp.ne.s32.totalorder %s137, %s138
      %p147 = scmp.eq.s32.totalorder %s22, 0
      %p148 = por %p146, %p147
      %p149 = scmp.ne.s32.totalorder %s137, %s138
      %p150 = scmp.eq.s32.totalorder %s23, 1
      %p151 = por %p149, %p150
      %p153 = scmp.ne.s32.totalorder %s138, %s152
      %p154 = scmp.eq.s32.totalorder %s23, 0
      %p155 = por %p153, %p154
      %s157 = sadd.s32 %s156, 1
      %p160 = scmp.eq.s32.totalorder %s17, 1
      %p161 = scmp.ne.s32.totalorder %s156, %s158
      %p162 = scmp.eq.s32.totalorder %s17, 0
      %p163 = por %p161, %p162
      %p164 = scmp.ne.s32.totalorder %s156, %s158
      %p165 = scmp.eq.s32.totalorder %s22, 1
      %p166 = por %p164, %p165
      %p167 = scmp.ne.s32.totalorder %s158, %s159
      %p168 = scmp.eq.s32.totalorder %s22, 0
      %p169 = por %p167, %p168
      %p170 = scmp.ne.s32.totalorder %s158, %s159
      %p171 = scmp.eq.s32.totalorder %s23, 1
      %p172 = por %p170, %p171
      %p174 = scmp.ne.s32.totalorder %s159, %s173
      %p175 = scmp.eq.s32.totalorder %s23, 0
      %p176 = por %p174, %p175
      %s178 = sadd.s32 %s177, 1
      %p181 = scmp.eq.s32.totalorder %s17, 1
      %p182 = scmp.ne.s32.totalorder %s177, %s179
      %p183 = scmp.eq.s32.totalorder %s17, 0
      %p184 = por %p182, %p183
      %p185 = scmp.ne.s32.totalorder %s177, %s179
      %p186 = scmp.eq.s32.totalorder %s22, 1
      %p187 = por %p185, %p186
      %p188 = scmp.ne.s32.totalorder %s179, %s180
      %p189 = scmp.eq.s32.totalorder %s22, 0
      %p190 = por %p188, %p189
      %p191 = scmp.ne.s32.totalorder %s179, %s180
      %p192 = scmp.eq.s32.totalorder %s23, 1
      %p193 = por %p191, %p192
      %p195 = scmp.ne.s32.totalorder %s180, %s194
      %p196 = scmp.eq.s32.totalorder %s23, 0
      %p197 = por %p195, %p196
      %s198 = ssub.s32 %s17, %s24
      %p199 = scmp.eq.s32.totalorder %s198, 0
      %s201 = sadd.s32 %s200, 1
      %s202 = scalar_select %p199, %s200, %s201
      %p205 = pneg %p199
      %p206 = scmp.eq.s32.totalorder %s17, 1
      %p207 = por %p205, %p206
      %p208 = scmp.ne.s32.totalorder %s200, %s203
      %p209 = scmp.eq.s32.totalorder %s17, 0
      %p210 = por %p208, %p209
      %p211 = scmp.ne.s32.totalorder %s200, %s203
      %p212 = scmp.eq.s32.totalorder %s22, 1
      %p213 = por %p211, %p212
      %p214 = scmp.ne.s32.totalorder %s203, %s204
      %p215 = scmp.eq.s32.totalorder %s22, 0
      %p216 = por %p214, %p215
      %p217 = scmp.ne.s32.totalorder %s203, %s204
      %p218 = scmp.eq.s32.totalorder %s23, 1
      %p219 = por %p217, %p218
      %p221 = scmp.ne.s32.totalorder %s204, %s220
      %p222 = scmp.eq.s32.totalorder %s23, 0
      %p223 = por %p221, %p222
      %p224 = scmp.le.s32.totalorder 1, %s17
      %p225 = scmp.lt.s32.totalorder %s17, 3
      %p226 = pnand %p224, %p225
      %p227 = pneg %p226
      // Predicated region
      $region9: #{inception_a.1} parent=5 // pred_check
        _
      $region10: #{inception_a.1} parent=5 // pred_check_branch
        %229 = sbr.rel (%p226) target = $region12
      $region11: #{inception_a.1} parent=5 // pred_region
        %s230 = ssub.s32 %s17, 1
        // Predicated region
        $region13: #{inception_a.1} parent=11 // pred_check
          %p231 = pneg %p64
        $region14: #{inception_a.1} parent=11 // pred_check_branch
          %233 = sbr.rel (%p231) target = $region16
        $region15: #{inception_a.1} parent=11 // pred_region
          _
        $region16: #{inception_a.1} parent=11 // pred_fallthru
          _
        // Predicated region
        $region17: #{inception_a.1} parent=11 // pred_check
          %p234 = pneg %p85
        $region18: #{inception_a.1} parent=11 // pred_check_branch
          %236 = sbr.rel (%p234) target = $region20
        $region19: #{inception_a.1} parent=11 // pred_region
          _
        $region20: #{inception_a.1} parent=11 // pred_fallthru
          _
        // Predicated region
        $region21: #{inception_a.1} parent=11 // pred_check
          %p237 = pneg %p106
        $region22: #{inception_a.1} parent=11 // pred_check_branch
          %239 = sbr.rel (%p237) target = $region24
        $region23: #{inception_a.1} parent=11 // pred_region
          _
        $region24: #{inception_a.1} parent=11 // pred_fallthru
          _
        // Predicated region
        $region25: #{inception_a.1} parent=11 // pred_check
          %p240 = pneg %p127
        $region26: #{inception_a.1} parent=11 // pred_check_branch
          %242 = sbr.rel (%p240) target = $region28
        $region27: #{inception_a.1} parent=11 // pred_region
          _
        $region28: #{inception_a.1} parent=11 // pred_fallthru
          _
        // Predicated region
        $region29: #{inception_a.1} parent=11 // pred_check
          %p243 = pneg %p148
        $region30: #{inception_a.1} parent=11 // pred_check_branch
          %245 = sbr.rel (%p243) target = $region32
        $region31: #{inception_a.1} parent=11 // pred_region
          _
        $region32: #{inception_a.1} parent=11 // pred_fallthru
          _
        // Predicated region
        $region33: #{inception_a.1} parent=11 // pred_check
          %p246 = pneg %p169
        $region34: #{inception_a.1} parent=11 // pred_check_branch
          %248 = sbr.rel (%p246) target = $region36
        $region35: #{inception_a.1} parent=11 // pred_region
          _
        $region36: #{inception_a.1} parent=11 // pred_fallthru
          _
        // Predicated region
        $region37: #{inception_a.1} parent=11 // pred_check
          %p249 = pneg %p190
        $region38: #{inception_a.1} parent=11 // pred_check_branch
          %251 = sbr.rel (%p249) target = $region40
        $region39: #{inception_a.1} parent=11 // pred_region
          _
        $region40: #{inception_a.1} parent=11 // pred_fallthru
          _
      $region12: #{inception_a.1} parent=5 // pred_fallthru
        _
      %p252 = scmp.lt.s32.totalorder %s17, 2
      // Predicated region
      $region41: #{inception_a.1} parent=5 // pred_check
        %p253 = pneg %p252
      $region42: #{inception_a.1} parent=5 // pred_check_branch
        %255 = sbr.rel (%p253) target = $region44
      $region43: #{inception_a.1} parent=5 // pred_region
        // Predicated region
        $region45: #{inception_a.1} parent=43 // pred_check
          %p256 = pneg %p37
        $region46: #{inception_a.1} parent=43 // pred_check_branch
          %258 = sbr.rel (%p256) target = $region48
        $region47: #{inception_a.1} parent=43 // pred_region
          %p259 = scmp.lt.s32.totalorder %s17, 1
          %s260 = scalar_select %p259, %s17, 1
          %s261 = smul.addr %s260, 24
          %s262 = smul.addr %s261, 4
          %s263 = scalar_lea.vmem %s0, %s262
        $region48: #{inception_a.1} parent=43 // pred_fallthru
          _
      $region44: #{inception_a.1} parent=5 // pred_fallthru
        _
      %p264 = scmp.le.s32.totalorder 1, %s17
      %p265 = scmp.lt.s32.totalorder %s17, 3
      %p266 = pnand %p264, %p265
      %p267 = pneg %p266
      // Predicated region
      $region49: #{inception_a.1} parent=5 // pred_check
        _
      $region50: #{inception_a.1} parent=5 // pred_check_branch
        %269 = sbr.rel (%p266) target = $region52
      $region51: #{inception_a.1} parent=5 // pred_region
        %s270 = ssub.s32 %s17, 1
        %p271 = scmp.lt.s32.totalorder %s22, 1
        %s272 = scalar_select %p271, %s22, 1
        %s273 = smul.addr %s272, 24
        %s274 = smul.addr %s273, 4
        %s275 = scalar_lea.vmem %s0, %s274
        %p276 = pneg %p43
        %p277 = pneg %p40
        %p278 = pneg %p64
        %p279 = pneg %p61
        %p280 = pneg %p85
        %p281 = pneg %p82
        %p282 = pneg %p106
        %p283 = pneg %p103
        %p284 = pneg %p127
        %p285 = pneg %p124
        %p286 = pneg %p148
        %p287 = pneg %p145
        %p288 = pneg %p169
        %p289 = pneg %p166
        %p290 = pneg %p190
        %p291 = pneg %p187
        %p292 = pneg %p216
        %p293 = pneg %p213
        %s294 = sand.u32 %s203, 1
        %s295 = scalar_lea.sflag [#allocation4], %s294
        %s296 = sand.u32 %s203, 1
        %s297 = smul.addr %s296, 192
        %s298 = scalar_lea.vmem [#allocation3], %s297
        %p299 = scmp.lt.s32.totalorder %s22, 1
        %s300 = scalar_select %p299, %s22, 1
        %s301 = smul.addr %s300, 24
        %s302 = smul.addr %s301, 4
        %s303 = scalar_lea.vmem %s0, %s302
        %v305 = vld [vmem:[%s303] sm:$0xff]
        %v306 = vld [vmem:[%s303 + $0x8] sm:$0xf]
        %v307 = vld [vmem:[%s303 + $0xc] sm:$0xff]
        %v308 = vld [vmem:[%s303 + $0x14] sm:$0xf]
        %v309 = vld [vmem:[%s303 + $0x18] sm:$0xff]
        %v310 = vld [vmem:[%s303 + $0x20] sm:$0xf]
        %v311 = vld [vmem:[%s303 + $0x24] sm:$0xff]
        %v312 = vld [vmem:[%s303 + $0x2c] sm:$0xf]
        %v313 = vld [vmem:[%s303 + $0x30] sm:$0xff]
        %v314 = vld [vmem:[%s303 + $0x38] sm:$0xf]
        %v315 = vld [vmem:[%s303 + $0x3c] sm:$0xff]
        %v316 = vld [vmem:[%s303 + $0x44] sm:$0xf]
        %v317 = vld [vmem:[%s303 + $0x48] sm:$0xff]
        %v318 = vld [vmem:[%s303 + $0x50] sm:$0xf]
        %v319 = vld [vmem:[%s303 + $0x54] sm:$0xff]
        %v320 = vld [vmem:[%s303 + $0x5c] sm:$0xf]
        %v321 = vld [vmem:[%s1] sm:$0xff]
        %v322 = vld [vmem:[%s1 + $0x8] sm:$0xf]
        %v323 = vld [vmem:[%s1 + $0xc] sm:$0xff]
        %v324 = vld [vmem:[%s1 + $0x14] sm:$0xf]
        %v325 = vld [vmem:[%s1 + $0x18] sm:$0xff]
        %v326 = vld [vmem:[%s1 + $0x20] sm:$0xf]
        %v327 = vld [vmem:[%s1 + $0x24] sm:$0xff]
        %v328 = vld [vmem:[%s1 + $0x2c] sm:$0xf]
        %v329 = vld [vmem:[%s1 + $0x30] sm:$0xff]
        %v330 = vld [vmem:[%s1 + $0x38] sm:$0xf]
        %v331 = vld [vmem:[%s1 + $0x3c] sm:$0xff]
        %v332 = vld [vmem:[%s1 + $0x44] sm:$0xf]
        %v333 = vld [vmem:[%s1 + $0x48] sm:$0xff]
        %v334 = vld [vmem:[%s1 + $0x50] sm:$0xf]
        %v335 = vld [vmem:[%s1 + $0x54] sm:$0xff]
        %v336 = vld [vmem:[%s1 + $0x5c] sm:$0xf]
        %v337 = vld [vmem:[%s1 + $0x60] sm:$0xff]
        %v338 = vld [vmem:[%s1 + $0x68] sm:$0xf]
        %v339 = vld [vmem:[%s1 + $0x6c] sm:$0xff]
        %v340 = vld [vmem:[%s1 + $0x74] sm:$0xf]
        %v341 = vld [vmem:[%s1 + $0x78] sm:$0xff]
        %v342 = vld [vmem:[%s1 + $0x80] sm:$0xf]
        %v343 = vld [vmem:[%s1 + $0x84] sm:$0xff]
        %v344 = vld [vmem:[%s1 + $0x8c] sm:$0xf]
        %v345 = vld [vmem:[%s1 + $0x90] sm:$0xff]
        %v346 = vld [vmem:[%s1 + $0x98] sm:$0xf]
        %v347 = vld [vmem:[%s1 + $0x9c] sm:$0xff]
        %v348 = vld [vmem:[%s1 + $0xa4] sm:$0xf]
        %v349 = vld [vmem:[%s1 + $0xa8] sm:$0xff]
        %v350 = vld [vmem:[%s1 + $0xb0] sm:$0xf]
        %v351 = vld [vmem:[%s1 + $0xb4] sm:$0xff]
        %v352 = vld [vmem:[%s1 + $0xbc] sm:$0xf]
        %v353 = vld [vmem:[%s1 + $0xc0] sm:$0xff]
        %v354 = vld [vmem:[%s1 + $0xc8] sm:$0xf]
        %v355 = vld [vmem:[%s1 + $0xcc] sm:$0xff]
        %v356 = vld [vmem:[%s1 + $0xd4] sm:$0xf]
        %v357 = vld [vmem:[%s1 + $0xd8] sm:$0xff]
        %v358 = vld [vmem:[%s1 + $0xe0] sm:$0xf]
        %v359 = vld [vmem:[%s1 + $0xe4] sm:$0xff]
        %v360 = vld [vmem:[%s1 + $0xec] sm:$0xf]
        %v361 = vld [vmem:[%s1 + $0xf0] sm:$0xff]
        %v362 = vld [vmem:[%s1 + $0xf8] sm:$0xf]
        %v363 = vld [vmem:[%s1 + $0xfc] sm:$0xff]
        %v364 = vld [vmem:[%s1 + $0x104] sm:$0xf]
        %v365 = vld [vmem:[%s1 + $0x108] sm:$0xff]
        %v366 = vld [vmem:[%s1 + $0x110] sm:$0xf]
        %v367 = vld [vmem:[%s1 + $0x114] sm:$0xff]
        %v368 = vld [vmem:[%s1 + $0x11c] sm:$0xf]
        %v369 = vld [vmem:[%s1 + $0x120] sm:$0xff]
        %v370 = vld [vmem:[%s1 + $0x128] sm:$0xf]
        %v371 = vld [vmem:[%s1 + $0x12c] sm:$0xff]
        %v372 = vld [vmem:[%s1 + $0x134] sm:$0xf]
        %v373 = vld [vmem:[%s1 + $0x138] sm:$0xff]
        %v374 = vld [vmem:[%s1 + $0x140] sm:$0xf]
        %v375 = vld [vmem:[%s1 + $0x144] sm:$0xff]
        %v376 = vld [vmem:[%s1 + $0x14c] sm:$0xf]
        %v377 = vld [vmem:[%s1 + $0x150] sm:$0xff]
        %v378 = vld [vmem:[%s1 + $0x158] sm:$0xf]
        %v379 = vld [vmem:[%s1 + $0x15c] sm:$0xff]
        %v380 = vld [vmem:[%s1 + $0x164] sm:$0xf]
        %v381 = vld [vmem:[%s1 + $0x168] sm:$0xff]
        %v382 = vld [vmem:[%s1 + $0x170] sm:$0xf]
        %v383 = vld [vmem:[%s1 + $0x174] sm:$0xff]
        %v384 = vld [vmem:[%s1 + $0x17c] sm:$0xf]
        %v385 = vld [vmem:[%s1 + $0x180] sm:$0xff]
        %v386 = vld [vmem:[%s1 + $0x188] sm:$0xf]
        %v387 = vld [vmem:[%s1 + $0x18c] sm:$0xff]
        %v388 = vld [vmem:[%s1 + $0x194] sm:$0xf]
        %v389 = vld [vmem:[%s1 + $0x198] sm:$0xff]
        %v390 = vld [vmem:[%s1 + $0x1a0] sm:$0xf]
        %v391 = vld [vmem:[%s1 + $0x1a4] sm:$0xff]
        %v392 = vld [vmem:[%s1 + $0x1ac] sm:$0xf]
        %v393 = vld [vmem:[%s1 + $0x1b0] sm:$0xff]
        %v394 = vld [vmem:[%s1 + $0x1b8] sm:$0xf]
        %v395 = vld [vmem:[%s1 + $0x1bc] sm:$0xff]
        %v396 = vld [vmem:[%s1 + $0x1c4] sm:$0xf]
        %v397 = vld [vmem:[%s1 + $0x1c8] sm:$0xff]
        %v398 = vld [vmem:[%s1 + $0x1d0] sm:$0xf]
        %v399 = vld [vmem:[%s1 + $0x1d4] sm:$0xff]
        %v400 = vld [vmem:[%s1 + $0x1dc] sm:$0xf]
        %v401 = vld [vmem:[%s1 + $0x1e0] sm:$0xff]
        %v402 = vld [vmem:[%s1 + $0x1e8] sm:$0xf]
        %v403 = vld [vmem:[%s1 + $0x1ec] sm:$0xff]
        %v404 = vld [vmem:[%s1 + $0x1f4] sm:$0xf]
        %v405 = vld [vmem:[%s1 + $0x1f8] sm:$0xff]
        %v406 = vld [vmem:[%s1 + $0x200] sm:$0xf]
        %v407 = vld [vmem:[%s1 + $0x204] sm:$0xff]
        %v408 = vld [vmem:[%s1 + $0x20c] sm:$0xf]
        %v409 = vld [vmem:[%s1 + $0x210] sm:$0xff]
        %v410 = vld [vmem:[%s1 + $0x218] sm:$0xf]
        %v411 = vld [vmem:[%s1 + $0x21c] sm:$0xff]
        %v412 = vld [vmem:[%s1 + $0x224] sm:$0xf]
        %v413 = vld [vmem:[%s1 + $0x228] sm:$0xff]
        %v414 = vld [vmem:[%s1 + $0x230] sm:$0xf]
        %v415 = vld [vmem:[%s1 + $0x234] sm:$0xff]
        %v416 = vld [vmem:[%s1 + $0x23c] sm:$0xf]
        %v433 = vunpack.c.l.b16 %v305
        %v434 = vunpack.c.h.b16 %v305
        %v435 = vunpack.c.l.b16 %v306
        %v436 = vunpack.c.l.b16 %v307
        %v437 = vunpack.c.h.b16 %v307
        %v438 = vunpack.c.l.b16 %v308
        %v439 = vunpack.c.l.b16 %v309
        %v440 = vunpack.c.h.b16 %v309
        %v441 = vunpack.c.l.b16 %v310
        %v442 = vunpack.c.l.b16 %v311
        %v443 = vunpack.c.h.b16 %v311
        %v444 = vunpack.c.l.b16 %v312
        %v445 = vunpack.c.l.b16 %v313
        %v446 = vunpack.c.h.b16 %v313
        %v447 = vunpack.c.l.b16 %v314
        %v448 = vunpack.c.l.b16 %v315
        %v449 = vunpack.c.h.b16 %v315
        %v450 = vunpack.c.l.b16 %v316
        %v451 = vunpack.c.l.b16 %v317
        %v452 = vunpack.c.h.b16 %v317
        %v453 = vunpack.c.l.b16 %v318
        %v454 = vunpack.c.l.b16 %v319
        %v455 = vunpack.c.h.b16 %v319
        %v456 = vunpack.c.l.b16 %v320
        %v457 = vpack.c.b16 %v436, %v433
        %v458 = vpack.c.b16 %v437, %v434
        %v459 = vpack.c.b16 %v438, %v435
        %v460 = vpack.c.b16 %v442, %v439
        %v461 = vpack.c.b16 %v443, %v440
        %v462 = vpack.c.b16 %v444, %v441
        %v463 = vpack.c.b16 %v448, %v445
        %v464 = vpack.c.b16 %v449, %v446
        %v465 = vpack.c.b16 %v450, %v447
        %v466 = vpack.c.b16 %v454, %v451
        %v467 = vpack.c.b16 %v455, %v452
        %v468 = vpack.c.b16 %v456, %v453
        %v577 = vunpack.c.l.b16 %v321
        %v578 = vunpack.c.h.b16 %v321
        %v579 = vunpack.c.l.b16 %v322
        %v580 = vunpack.c.l.b16 %v323
        %v581 = vunpack.c.h.b16 %v323
        %v582 = vunpack.c.l.b16 %v324
        %v583 = vunpack.c.l.b16 %v325
        %v584 = vunpack.c.h.b16 %v325
        %v585 = vunpack.c.l.b16 %v326
        %v586 = vunpack.c.l.b16 %v327
        %v587 = vunpack.c.h.b16 %v327
        %v588 = vunpack.c.l.b16 %v328
        %v589 = vunpack.c.l.b16 %v329
        %v590 = vunpack.c.h.b16 %v329
        %v591 = vunpack.c.l.b16 %v330
        %v592 = vunpack.c.l.b16 %v331
        %v593 = vunpack.c.h.b16 %v331
        %v594 = vunpack.c.l.b16 %v332
        %v595 = vunpack.c.l.b16 %v333
        %v596 = vunpack.c.h.b16 %v333
        %v597 = vunpack.c.l.b16 %v334
        %v598 = vunpack.c.l.b16 %v335
        %v599 = vunpack.c.h.b16 %v335
        %v600 = vunpack.c.l.b16 %v336
        %v601 = vunpack.c.l.b16 %v337
        %v602 = vunpack.c.h.b16 %v337
        %v603 = vunpack.c.l.b16 %v338
        %v604 = vunpack.c.l.b16 %v339
        %v605 = vunpack.c.h.b16 %v339
        %v606 = vunpack.c.l.b16 %v340
        %v607 = vunpack.c.l.b16 %v341
        %v608 = vunpack.c.h.b16 %v341
        %v609 = vunpack.c.l.b16 %v342
        %v610 = vunpack.c.l.b16 %v343
        %v611 = vunpack.c.h.b16 %v343
        %v612 = vunpack.c.l.b16 %v344
        %v613 = vunpack.c.l.b16 %v345
        %v614 = vunpack.c.h.b16 %v345
        %v615 = vunpack.c.l.b16 %v346
        %v616 = vunpack.c.l.b16 %v347
        %v617 = vunpack.c.h.b16 %v347
        %v618 = vunpack.c.l.b16 %v348
        %v619 = vunpack.c.l.b16 %v349
        %v620 = vunpack.c.h.b16 %v349
        %v621 = vunpack.c.l.b16 %v350
        %v622 = vunpack.c.l.b16 %v351
        %v623 = vunpack.c.h.b16 %v351
        %v624 = vunpack.c.l.b16 %v352
        %v625 = vunpack.c.l.b16 %v353
        %v626 = vunpack.c.h.b16 %v353
        %v627 = vunpack.c.l.b16 %v354
        %v628 = vunpack.c.l.b16 %v355
        %v629 = vunpack.c.h.b16 %v355
        %v630 = vunpack.c.l.b16 %v356
        %v631 = vunpack.c.l.b16 %v357
        %v632 = vunpack.c.h.b16 %v357
        %v633 = vunpack.c.l.b16 %v358
        %v634 = vunpack.c.l.b16 %v359
        %v635 = vunpack.c.h.b16 %v359
        %v636 = vunpack.c.l.b16 %v360
        %v637 = vunpack.c.l.b16 %v361
        %v638 = vunpack.c.h.b16 %v361
        %v639 = vunpack.c.l.b16 %v362
        %v640 = vunpack.c.l.b16 %v363
        %v641 = vunpack.c.h.b16 %v363
        %v642 = vunpack.c.l.b16 %v364
        %v643 = vunpack.c.l.b16 %v365
        %v644 = vunpack.c.h.b16 %v365
        %v645 = vunpack.c.l.b16 %v366
        %v646 = vunpack.c.l.b16 %v367
        %v647 = vunpack.c.h.b16 %v367
        %v648 = vunpack.c.l.b16 %v368
        %v649 = vunpack.c.l.b16 %v369
        %v650 = vunpack.c.h.b16 %v369
        %v651 = vunpack.c.l.b16 %v370
        %v652 = vunpack.c.l.b16 %v371
        %v653 = vunpack.c.h.b16 %v371
        %v654 = vunpack.c.l.b16 %v372
        %v655 = vunpack.c.l.b16 %v373
        %v656 = vunpack.c.h.b16 %v373
        %v657 = vunpack.c.l.b16 %v374
        %v658 = vunpack.c.l.b16 %v375
        %v659 = vunpack.c.h.b16 %v375
        %v660 = vunpack.c.l.b16 %v376
        %v661 = vunpack.c.l.b16 %v377
        %v662 = vunpack.c.h.b16 %v377
        %v663 = vunpack.c.l.b16 %v378
        %v664 = vunpack.c.l.b16 %v379
        %v665 = vunpack.c.h.b16 %v379
        %v666 = vunpack.c.l.b16 %v380
        %v667 = vunpack.c.l.b16 %v381
        %v668 = vunpack.c.h.b16 %v381
        %v669 = vunpack.c.l.b16 %v382
        %v670 = vunpack.c.l.b16 %v383
        %v671 = vunpack.c.h.b16 %v383
        %v672 = vunpack.c.l.b16 %v384
        %v673 = vunpack.c.l.b16 %v385
        %v674 = vunpack.c.h.b16 %v385
        %v675 = vunpack.c.l.b16 %v386
        %v676 = vunpack.c.l.b16 %v387
        %v677 = vunpack.c.h.b16 %v387
        %v678 = vunpack.c.l.b16 %v388
        %v679 = vunpack.c.l.b16 %v389
        %v680 = vunpack.c.h.b16 %v389
        %v681 = vunpack.c.l.b16 %v390
        %v682 = vunpack.c.l.b16 %v391
        %v683 = vunpack.c.h.b16 %v391
        %v684 = vunpack.c.l.b16 %v392
        %v685 = vunpack.c.l.b16 %v393
        %v686 = vunpack.c.h.b16 %v393
        %v687 = vunpack.c.l.b16 %v394
        %v688 = vunpack.c.l.b16 %v395
        %v689 = vunpack.c.h.b16 %v395
        %v690 = vunpack.c.l.b16 %v396
        %v691 = vunpack.c.l.b16 %v397
        %v692 = vunpack.c.h.b16 %v397
        %v693 = vunpack.c.l.b16 %v398
        %v694 = vunpack.c.l.b16 %v399
        %v695 = vunpack.c.h.b16 %v399
        %v696 = vunpack.c.l.b16 %v400
        %v697 = vunpack.c.l.b16 %v401
        %v698 = vunpack.c.h.b16 %v401
        %v699 = vunpack.c.l.b16 %v402
        %v700 = vunpack.c.l.b16 %v403
        %v701 = vunpack.c.h.b16 %v403
        %v702 = vunpack.c.l.b16 %v404
        %v703 = vunpack.c.l.b16 %v405
        %v704 = vunpack.c.h.b16 %v405
        %v705 = vunpack.c.l.b16 %v406
        %v706 = vunpack.c.l.b16 %v407
        %v707 = vunpack.c.h.b16 %v407
        %v708 = vunpack.c.l.b16 %v408
        %v709 = vunpack.c.l.b16 %v409
        %v710 = vunpack.c.h.b16 %v409
        %v711 = vunpack.c.l.b16 %v410
        %v712 = vunpack.c.l.b16 %v411
        %v713 = vunpack.c.h.b16 %v411
        %v714 = vunpack.c.l.b16 %v412
        %v715 = vunpack.c.l.b16 %v413
        %v716 = vunpack.c.h.b16 %v413
        %v717 = vunpack.c.l.b16 %v414
        %v718 = vunpack.c.l.b16 %v415
        %v719 = vunpack.c.h.b16 %v415
        %v720 = vunpack.c.l.b16 %v416
        %v721 = vpack.c.b16 %v580, %v577
        %v722 = vpack.c.b16 %v581, %v578
        %v723 = vpack.c.b16 %v582, %v579
        %v724 = vpack.c.b16 %v586, %v583
        %v725 = vpack.c.b16 %v587, %v584
        %v726 = vpack.c.b16 %v588, %v585
        %v727 = vpack.c.b16 %v592, %v589
        %v728 = vpack.c.b16 %v593, %v590
        %v729 = vpack.c.b16 %v594, %v591
        %v730 = vpack.c.b16 %v598, %v595
        %v731 = vpack.c.b16 %v599, %v596
        %v732 = vpack.c.b16 %v600, %v597
        %v733 = vpack.c.b16 %v604, %v601
        %v734 = vpack.c.b16 %v605, %v602
        %v735 = vpack.c.b16 %v606, %v603
        %v736 = vpack.c.b16 %v610, %v607
        %v737 = vpack.c.b16 %v611, %v608
        %v738 = vpack.c.b16 %v612, %v609
        %v739 = vpack.c.b16 %v616, %v613
        %v740 = vpack.c.b16 %v617, %v614
        %v741 = vpack.c.b16 %v618, %v615
        %v742 = vpack.c.b16 %v622, %v619
        %v743 = vpack.c.b16 %v623, %v620
        %v744 = vpack.c.b16 %v624, %v621
        %v745 = vpack.c.b16 %v628, %v625
        %v746 = vpack.c.b16 %v629, %v626
        %v747 = vpack.c.b16 %v630, %v627
        %v748 = vpack.c.b16 %v634, %v631
        %v749 = vpack.c.b16 %v635, %v632
        %v750 = vpack.c.b16 %v636, %v633
        %v751 = vpack.c.b16 %v640, %v637
        %v752 = vpack.c.b16 %v641, %v638
        %v753 = vpack.c.b16 %v642, %v639
        %v754 = vpack.c.b16 %v646, %v643
        %v755 = vpack.c.b16 %v647, %v644
        %v756 = vpack.c.b16 %v648, %v645
        %v757 = vpack.c.b16 %v652, %v649
        %v758 = vpack.c.b16 %v653, %v650
        %v759 = vpack.c.b16 %v654, %v651
        %v760 = vpack.c.b16 %v658, %v655
        %v761 = vpack.c.b16 %v659, %v656
        %v762 = vpack.c.b16 %v660, %v657
        %v763 = vpack.c.b16 %v664, %v661
        %v764 = vpack.c.b16 %v665, %v662
        %v765 = vpack.c.b16 %v666, %v663
        %v766 = vpack.c.b16 %v670, %v667
        %v767 = vpack.c.b16 %v671, %v668
        %v768 = vpack.c.b16 %v672, %v669
        %v769 = vpack.c.b16 %v676, %v673
        %v770 = vpack.c.b16 %v677, %v674
        %v771 = vpack.c.b16 %v678, %v675
        %v772 = vpack.c.b16 %v682, %v679
        %v773 = vpack.c.b16 %v683, %v680
        %v774 = vpack.c.b16 %v684, %v681
        %v775 = vpack.c.b16 %v688, %v685
        %v776 = vpack.c.b16 %v689, %v686
        %v777 = vpack.c.b16 %v690, %v687
        %v778 = vpack.c.b16 %v694, %v691
        %v779 = vpack.c.b16 %v695, %v692
        %v780 = vpack.c.b16 %v696, %v693
        %v781 = vpack.c.b16 %v700, %v697
        %v782 = vpack.c.b16 %v701, %v698
        %v783 = vpack.c.b16 %v702, %v699
        %v784 = vpack.c.b16 %v706, %v703
        %v785 = vpack.c.b16 %v707, %v704
        %v786 = vpack.c.b16 %v708, %v705
        %v787 = vpack.c.b16 %v712, %v709
        %v788 = vpack.c.b16 %v713, %v710
        %v789 = vpack.c.b16 %v714, %v711
        %v790 = vpack.c.b16 %v718, %v715
        %v791 = vpack.c.b16 %v719, %v716
        %v792 = vpack.c.b16 %v720, %v717
        %865 = vmatprep.subr.bf16.mxu0 %v722
        %866 = vmatpush1.bf16.msra.mxu0 %v721
        %867 = vmatprep.subr.bf16.mxu0 %v725
        %868 = vmatpush1.bf16.msra.mxu0 %v724
        %869 = vmatprep.subr.bf16.mxu0 %v728
        %870 = vmatpush1.bf16.msra.mxu0 %v727
        %871 = vmatprep.subr.bf16.mxu0 %v731
        %872 = vmatpush1.bf16.msra.mxu0 %v730
        %873 = vmatprep.subr.bf16.mxu0 %v734
        %874 = vmatpush1.bf16.msra.mxu0 %v733
        %875 = vmatprep.subr.bf16.mxu0 %v737
        %876 = vmatpush1.bf16.msra.mxu0 %v736
        %877 = vmatprep.subr.bf16.mxu0 %v740
        %878 = vmatpush1.bf16.msra.mxu0 %v739
        %879 = vmatprep.subr.bf16.mxu0 %v743
        %880 = vmatpush1.bf16.msra.mxu0 %v742
        %881 = vmatprep.subr.bf16.mxu0 %v746
        %882 = vmatpush1.bf16.msra.mxu0 %v745
        %883 = vmatprep.subr.bf16.mxu0 %v749
        %884 = vmatpush1.bf16.msra.mxu0 %v748
        %885 = vmatprep.subr.bf16.mxu0 %v752
        %886 = vmatpush1.bf16.msra.mxu0 %v751
        %887 = vmatprep.subr.bf16.mxu0 %v755
        %888 = vmatpush1.bf16.msra.mxu0 %v754
        %889 = vmatprep.subr.bf16.mxu0 %v758
        %890 = vmatpush1.bf16.msra.mxu0 %v757
        %891 = vmatprep.subr.bf16.mxu0 %v761
        %892 = vmatpush1.bf16.msra.mxu0 %v760
        %893 = vmatprep.subr.bf16.mxu0 %v764
        %894 = vmatpush1.bf16.msra.mxu0 %v763
        %895 = vmatprep.subr.bf16.mxu0 %v767
        %896 = vmatpush1.bf16.msra.mxu0 %v766
        %897 = vmatprep.mubr.bf16.mxu0 %v458
        %898 = vmatmul.mubr.bf16.gmra.mrb[0].mxu0 %v457
        %v899 = vpop.f32.mrb[0].mxu0
        %v900 = vadd.f32 0.0, %v899
        %v901 = vpop.f32.mrb[0].mxu0
        %v902 = vadd.f32 0.0, %v901
        %v903 = vpop.f32.mrb[0].mxu0
        %v904 = vadd.f32 0.0, %v903
        %v905 = vpop.f32.mrb[0].mxu0
        %v906 = vadd.f32 0.0, %v905
        %907 = vmatprep.mubr.bf16.mxu0 %v461
        %908 = vmatmul.mubr.bf16.gmra.mrb[0].mxu0 %v460
        %v909 = vpop.f32.mrb[0].mxu0
        %v910 = vadd.f32 0.0, %v909
        %v911 = vpop.f32.mrb[0].mxu0
        %v912 = vadd.f32 0.0, %v911
        %v913 = vpop.f32.mrb[0].mxu0
        %v914 = vadd.f32 0.0, %v913
        %v915 = vpop.f32.mrb[0].mxu0
        %v916 = vadd.f32 0.0, %v915
        %917 = vmatprep.mubr.bf16.mxu0 %v464
        %918 = vmatmul.mubr.bf16.gmra.mrb[0].mxu0 %v463
        %v919 = vpop.f32.mrb[0].mxu0
        %v920 = vadd.f32 0.0, %v919
        %v921 = vpop.f32.mrb[0].mxu0
        %v922 = vadd.f32 0.0, %v921
        %v923 = vpop.f32.mrb[0].mxu0
        %v924 = vadd.f32 0.0, %v923
        %v925 = vpop.f32.mrb[0].mxu0
        %v926 = vadd.f32 0.0, %v925
        %927 = vmatprep.mubr.bf16.mxu0 %v467
        %928 = vmatmul.mubr.bf16.gmra.mrb[0].mxu0 %v466
        %v929 = vpop.f32.mrb[0].mxu0
        %v930 = vadd.f32 0.0, %v929
        %v931 = vpop.f32.mrb[0].mxu0
        %v932 = vadd.f32 0.0, %v931
        %v933 = vpop.f32.mrb[0].mxu0
        %v934 = vadd.f32 0.0, %v933
        %v935 = vpop.f32.mrb[0].mxu0
        %v936 = vadd.f32 0.0, %v935
        %937 = vdwg.mxu0
        %938 = vmatprep.subr.bf16.mxu0 %v770
        %939 = vmatpush1.bf16.msra.mxu0 %v769
        %940 = vmatprep.subr.bf16.mxu0 %v773
        %941 = vmatpush1.bf16.msra.mxu0 %v772
        %942 = vmatprep.subr.bf16.mxu0 %v776
        %943 = vmatpush1.bf16.msra.mxu0 %v775
        %944 = vmatprep.subr.bf16.mxu0 %v779
        %945 = vmatpush1.bf16.msra.mxu0 %v778
        %946 = vmatprep.subr.bf16.mxu0 %v782
        %947 = vmatpush1.bf16.msra.mxu0 %v781
        %948 = vmatprep.subr.bf16.mxu0 %v785
        %949 = vmatpush1.bf16.msra.mxu0 %v784
        %950 = vmatprep.subr.bf16.mxu0 %v788
        %951 = vmatpush1.bf16.msra.mxu0 %v787
        %952 = vmatprep.subr.bf16.mxu0 %v791
        %953 = vmatpush1.bf16.msra.mxu0 %v790
        %954 = vmatprep.subr.bf16.mxu0 0
        %955 = vmatpush1.bf16.msra.mxu0 0
        %956 = vmatprep.subr.bf16.mxu0 0
        %957 = vmatpush1.bf16.msra.mxu0 0
        %958 = vmatprep.subr.bf16.mxu0 0
        %959 = vmatpush1.bf16.msra.mxu0 0
        %960 = vmatprep.subr.bf16.mxu0 0
        %961 = vmatpush1.bf16.msra.mxu0 0
        %962 = vmatprep.subr.bf16.mxu0 0
        %963 = vmatpush1.bf16.msra.mxu0 0
        %964 = vmatprep.subr.bf16.mxu0 0
        %965 = vmatpush1.bf16.msra.mxu0 0
        %966 = vmatprep.subr.bf16.mxu0 0
        %967 = vmatpush1.bf16.msra.mxu0 0
        %968 = vmatprep.subr.bf16.mxu0 0
        %969 = vmatpush1.bf16.msra.mxu0 0
        %970 = vmatprep.mubr.bf16.mxu0 0
        %971 = vmatmul.mubr.bf16.gmra.mrb[0].mxu0 %v459
        %v972 = vpop.f32.mrb[0].mxu0
        %v973 = vadd.f32 %v900, %v972
        %v974 = vpop.f32.mrb[0].mxu0
        %v975 = vadd.f32 %v902, %v974
        %v976 = vpop.f32.mrb[0].mxu0
        %v977 = vadd.f32 %v904, %v976
        %v978 = vpop.f32.mrb[0].mxu0
        %v979 = vadd.f32 %v906, %v978
        %980 = vmatprep.mubr.bf16.mxu0 0
        %981 = vmatmul.mubr.bf16.gmra.mrb[0].mxu0 %v462
        %v982 = vpop.f32.mrb[0].mxu0
        %v983 = vadd.f32 %v910, %v982
        %v984 = vpop.f32.mrb[0].mxu0
        %v985 = vadd.f32 %v912, %v984
        %v986 = vpop.f32.mrb[0].mxu0
        %v987 = vadd.f32 %v914, %v986
        %v988 = vpop.f32.mrb[0].mxu0
        %v989 = vadd.f32 %v916, %v988
        %990 = vmatprep.mubr.bf16.mxu0 0
        %991 = vmatmul.mubr.bf16.gmra.mrb[0].mxu0 %v465
        %v992 = vpop.f32.mrb[0].mxu0
        %v993 = vadd.f32 %v920, %v992
        %v994 = vpop.f32.mrb[0].mxu0
        %v995 = vadd.f32 %v922, %v994
        %v996 = vpop.f32.mrb[0].mxu0
        %v997 = vadd.f32 %v924, %v996
        %v998 = vpop.f32.mrb[0].mxu0
        %v999 = vadd.f32 %v926, %v998
        %1000 = vmatprep.mubr.bf16.mxu0 0
        %1001 = vmatmul.mubr.bf16.gmra.mrb[0].mxu0 %v468
        %v1002 = vpop.f32.mrb[0].mxu0
        %v1003 = vadd.f32 %v930, %v1002
        %v1004 = vpop.f32.mrb[0].mxu0
        %v1005 = vadd.f32 %v932, %v1004
        %v1006 = vpop.f32.mrb[0].mxu0
        %v1007 = vadd.f32 %v934, %v1006
        %v1008 = vpop.f32.mrb[0].mxu0
        %v1009 = vadd.f32 %v936, %v1008
        %1010 = vdwg.mxu0
        %1011 = vmatprep.subr.bf16.mxu0 0
        %1012 = vmatpush1.bf16.msra.mxu0 %v723
        %1013 = vmatprep.subr.bf16.mxu0 0
        %1014 = vmatpush1.bf16.msra.mxu0 %v726
        %1015 = vmatprep.subr.bf16.mxu0 0
        %1016 = vmatpush1.bf16.msra.mxu0 %v729
        %1017 = vmatprep.subr.bf16.mxu0 0
        %1018 = vmatpush1.bf16.msra.mxu0 %v732
        %1019 = vmatprep.subr.bf16.mxu0 0
        %1020 = vmatpush1.bf16.msra.mxu0 %v735
        %1021 = vmatprep.subr.bf16.mxu0 0
        %1022 = vmatpush1.bf16.msra.mxu0 %v738
        %1023 = vmatprep.subr.bf16.mxu0 0
        %1024 = vmatpush1.bf16.msra.mxu0 %v741
        %1025 = vmatprep.subr.bf16.mxu0 0
        %1026 = vmatpush1.bf16.msra.mxu0 %v744
        %1027 = vmatprep.subr.bf16.mxu0 0
        %1028 = vmatpush1.bf16.msra.mxu0 %v747
        %1029 = vmatprep.subr.bf16.mxu0 0
        %1030 = vmatpush1.bf16.msra.mxu0 %v750
        %1031 = vmatprep.subr.bf16.mxu0 0
        %1032 = vmatpush1.bf16.msra.mxu0 %v753
        %1033 = vmatprep.subr.bf16.mxu0 0
        %1034 = vmatpush1.bf16.msra.mxu0 %v756
        %1035 = vmatprep.subr.bf16.mxu0 0
        %1036 = vmatpush1.bf16.msra.mxu0 %v759
        %1037 = vmatprep.subr.bf16.mxu0 0
        %1038 = vmatpush1.bf16.msra.mxu0 %v762
        %1039 = vmatprep.subr.bf16.mxu0 0
        %1040 = vmatpush1.bf16.msra.mxu0 %v765
        %1041 = vmatprep.subr.bf16.mxu0 0
        %1042 = vmatpush1.bf16.msra.mxu0 %v768
        %1043 = vmatprep.mubr.bf16.mxu0 %v458
        %1044 = vmatmul.mubr.bf16.gmra.mrb[0].mxu0 %v457
        %v1045 = vpop.f32.mrb[0].mxu0
        %v1046 = vadd.f32 0.0, %v1045
        %v1047 = vpop.f32.mrb[0].mxu0
        %v1048 = vpop.f32.mrb[0].mxu0
        %v1049 = vadd.f32 0.0, %v1048
        %v1050 = vpop.f32.mrb[0].mxu0
        %1051 = vmatprep.mubr.bf16.mxu0 %v461
        %1052 = vmatmul.mubr.bf16.gmra.mrb[0].mxu0 %v460
        %v1053 = vpop.f32.mrb[0].mxu0
        %v1054 = vadd.f32 0.0, %v1053
        %v1055 = vpop.f32.mrb[0].mxu0
        %v1056 = vpop.f32.mrb[0].mxu0
        %v1057 = vadd.f32 0.0, %v1056
        %v1058 = vpop.f32.mrb[0].mxu0
        %1059 = vmatprep.mubr.bf16.mxu0 %v464
        %1060 = vmatmul.mubr.bf16.gmra.mrb[0].mxu0 %v463
        %v1061 = vpop.f32.mrb[0].mxu0
        %v1062 = vadd.f32 0.0, %v1061
        %v1063 = vpop.f32.mrb[0].mxu0
        %v1064 = vpop.f32.mrb[0].mxu0
        %v1065 = vadd.f32 0.0, %v1064
        %v1066 = vpop.f32.mrb[0].mxu0
        %1067 = vmatprep.mubr.bf16.mxu0 %v467
        %1068 = vmatmul.mubr.bf16.gmra.mrb[0].mxu0 %v466
        %v1069 = vpop.f32.mrb[0].mxu0
        %v1070 = vadd.f32 0.0, %v1069
        %v1071 = vpop.f32.mrb[0].mxu0
        %v1072 = vpop.f32.mrb[0].mxu0
        %v1073 = vadd.f32 0.0, %v1072
        %v1074 = vpop.f32.mrb[0].mxu0
        %1075 = vdwg.mxu0
        %1076 = vmatprep.subr.bf16.mxu0 0
        %1077 = vmatpush1.bf16.msra.mxu0 %v771
        %1078 = vmatprep.subr.bf16.mxu0 0
        %1079 = vmatpush1.bf16.msra.mxu0 %v774
        %1080 = vmatprep.subr.bf16.mxu0 0
        %1081 = vmatpush1.bf16.msra.mxu0 %v777
        %1082 = vmatprep.subr.bf16.mxu0 0
        %1083 = vmatpush1.bf16.msra.mxu0 %v780
        %1084 = vmatprep.subr.bf16.mxu0 0
        %1085 = vmatpush1.bf16.msra.mxu0 %v783
        %1086 = vmatprep.subr.bf16.mxu0 0
        %1087 = vmatpush1.bf16.msra.mxu0 %v786
        %1088 = vmatprep.subr.bf16.mxu0 0
        %1089 = vmatpush1.bf16.msra.mxu0 %v789
        %1090 = vmatprep.subr.bf16.mxu0 0
        %1091 = vmatpush1.bf16.msra.mxu0 %v792
        %1092 = vmatprep.subr.bf16.mxu0 0
        %1093 = vmatpush1.bf16.msra.mxu0 0
        %1094 = vmatprep.subr.bf16.mxu0 0
        %1095 = vmatpush1.bf16.msra.mxu0 0
        %1096 = vmatprep.subr.bf16.mxu0 0
        %1097 = vmatpush1.bf16.msra.mxu0 0
        %1098 = vmatprep.subr.bf16.mxu0 0
        %1099 = vmatpush1.bf16.msra.mxu0 0
        %1100 = vmatprep.subr.bf16.mxu0 0
        %1101 = vmatpush1.bf16.msra.mxu0 0
        %1102 = vmatprep.subr.bf16.mxu0 0
        %1103 = vmatpush1.bf16.msra.mxu0 0
        %1104 = vmatprep.subr.bf16.mxu0 0
        %1105 = vmatpush1.bf16.msra.mxu0 0
        %1106 = vmatprep.subr.bf16.mxu0 0
        %1107 = vmatpush1.bf16.msra.mxu0 0
        %1108 = vmatprep.mubr.bf16.mxu0 0
        %1109 = vmatmul.mubr.bf16.gmra.mrb[0].mxu0 %v459
        %v1110 = vpop.f32.mrb[0].mxu0
        %v1111 = vadd.f32 %v1046, %v1110
        %v1112 = vpop.f32.mrb[0].mxu0
        %v1113 = vpop.f32.mrb[0].mxu0
        %v1114 = vadd.f32 %v1049, %v1113
        %v1115 = vpop.f32.mrb[0].mxu0
        %1116 = vmatprep.mubr.bf16.mxu0 0
        %1117 = vmatmul.mubr.bf16.gmra.mrb[0].mxu0 %v462
        %v1118 = vpop.f32.mrb[0].mxu0
        %v1119 = vadd.f32 %v1054, %v1118
        %v1120 = vpop.f32.mrb[0].mxu0
        %v1121 = vpop.f32.mrb[0].mxu0
        %v1122 = vadd.f32 %v1057, %v1121
        %v1123 = vpop.f32.mrb[0].mxu0
        %1124 = vmatprep.mubr.bf16.mxu0 0
        %1125 = vmatmul.mubr.bf16.gmra.mrb[0].mxu0 %v465
        %v1126 = vpop.f32.mrb[0].mxu0
        %v1127 = vadd.f32 %v1062, %v1126
        %v1128 = vpop.f32.mrb[0].mxu0
        %v1129 = vpop.f32.mrb[0].mxu0
        %v1130 = vadd.f32 %v1065, %v1129
        %v1131 = vpop.f32.mrb[0].mxu0
        %1132 = vmatprep.mubr.bf16.mxu0 0
        %1133 = vmatmul.mubr.bf16.gmra.mrb[0].mxu0 %v468
        %v1134 = vpop.f32.mrb[0].mxu0
        %v1135 = vadd.f32 %v1070, %v1134
        %v1136 = vpop.f32.mrb[0].mxu0
        %v1137 = vpop.f32.mrb[0].mxu0
        %v1138 = vadd.f32 %v1073, %v1137
        %v1139 = vpop.f32.mrb[0].mxu0
        %1140 = vdwg.mxu0
        %v1141 = vld [vmem:[%s2] sm:$0x7]
        %v1143 = vlaneseq
        %v1144 = vshrl.u32 %v1143, 7
        %v1145 = vsub.s32 0, %v1144
        %v1146 = vrot.slane %v1141, %v1145
        %v1147 = vlaneseq
        %v1148 = vshrl.u32 %v1147, 7
        %v1149 = vsub.s32 1, %v1148
        %v1150 = vrot.slane %v1141, %v1149
        %v1151 = vlaneseq
        %v1152 = vshrl.u32 %v1151, 7
        %v1153 = vsub.s32 2, %v1152
        %v1154 = vrot.slane %v1141, %v1153
        %v1158 = vmul.f32 %v973, %v1146
        %v1159 = vmul.f32 %v975, %v1150
        %v1160 = vmul.f32 %v1111, %v1154
        %v1161 = vmul.f32 %v977, %v1146
        %v1162 = vmul.f32 %v979, %v1150
        %v1163 = vmul.f32 %v1114, %v1154
        %v1164 = vmul.f32 %v983, %v1146
        %v1165 = vmul.f32 %v985, %v1150
        %v1166 = vmul.f32 %v1119, %v1154
        %v1167 = vmul.f32 %v987, %v1146
        %v1168 = vmul.f32 %v989, %v1150
        %v1169 = vmul.f32 %v1122, %v1154
        %v1170 = vmul.f32 %v993, %v1146
        %v1171 = vmul.f32 %v995, %v1150
        %v1172 = vmul.f32 %v1127, %v1154
        %v1173 = vmul.f32 %v997, %v1146
        %v1174 = vmul.f32 %v999, %v1150
        %v1175 = vmul.f32 %v1130, %v1154
        %v1176 = vmul.f32 %v1003, %v1146
        %v1177 = vmul.f32 %v1005, %v1150
        %v1178 = vmul.f32 %v1135, %v1154
        %v1179 = vmul.f32 %v1007, %v1146
        %v1180 = vmul.f32 %v1009, %v1150
        %v1181 = vmul.f32 %v1138, %v1154
        %v1182 = vld [vmem:[%s3] sm:$0x7]
        %v1184 = vlaneseq
        %v1185 = vshrl.u32 %v1184, 7
        %v1186 = vsub.s32 0, %v1185
        %v1187 = vrot.slane %v1182, %v1186
        %v1188 = vlaneseq
        %v1189 = vshrl.u32 %v1188, 7
        %v1190 = vsub.s32 1, %v1189
        %v1191 = vrot.slane %v1182, %v1190
        %v1192 = vlaneseq
        %v1193 = vshrl.u32 %v1192, 7
        %v1194 = vsub.s32 2, %v1193
        %v1195 = vrot.slane %v1182, %v1194
        %v1199 = vadd.f32 %v1158, %v1187
        %v1200 = vadd.f32 %v1159, %v1191
        %v1201 = vadd.f32 %v1160, %v1195
        %v1202 = vadd.f32 %v1161, %v1187
        %v1203 = vadd.f32 %v1162, %v1191
        %v1204 = vadd.f32 %v1163, %v1195
        %v1205 = vadd.f32 %v1164, %v1187
        %v1206 = vadd.f32 %v1165, %v1191
        %v1207 = vadd.f32 %v1166, %v1195
        %v1208 = vadd.f32 %v1167, %v1187
        %v1209 = vadd.f32 %v1168, %v1191
        %v1210 = vadd.f32 %v1169, %v1195
        %v1211 = vadd.f32 %v1170, %v1187
        %v1212 = vadd.f32 %v1171, %v1191
        %v1213 = vadd.f32 %v1172, %v1195
        %v1214 = vadd.f32 %v1173, %v1187
        %v1215 = vadd.f32 %v1174, %v1191
        %v1216 = vadd.f32 %v1175, %v1195
        %v1217 = vadd.f32 %v1176, %v1187
        %v1218 = vadd.f32 %v1177, %v1191
        %v1219 = vadd.f32 %v1178, %v1195
        %v1220 = vadd.f32 %v1179, %v1187
        %v1221 = vadd.f32 %v1180, %v1191
        %v1222 = vadd.f32 %v1181, %v1195
        %v1223 = vmax.f32 %v1199, 0.0
        %v1224 = vmax.f32 %v1200, 0.0
        %v1225 = vmax.f32 %v1201, 0.0
        %v1226 = vmax.f32 %v1202, 0.0
        %v1227 = vmax.f32 %v1203, 0.0
        %v1228 = vmax.f32 %v1204, 0.0
        %v1229 = vmax.f32 %v1205, 0.0
        %v1230 = vmax.f32 %v1206, 0.0
        %v1231 = vmax.f32 %v1207, 0.0
        %v1232 = vmax.f32 %v1208, 0.0
        %v1233 = vmax.f32 %v1209, 0.0
        %v1234 = vmax.f32 %v1210, 0.0
        %v1235 = vmax.f32 %v1211, 0.0
        %v1236 = vmax.f32 %v1212, 0.0
        %v1237 = vmax.f32 %v1213, 0.0
        %v1238 = vmax.f32 %v1214, 0.0
        %v1239 = vmax.f32 %v1215, 0.0
        %v1240 = vmax.f32 %v1216, 0.0
        %v1241 = vmax.f32 %v1217, 0.0
        %v1242 = vmax.f32 %v1218, 0.0
        %v1243 = vmax.f32 %v1219, 0.0
        %v1244 = vmax.f32 %v1220, 0.0
        %v1245 = vmax.f32 %v1221, 0.0
        %v1246 = vmax.f32 %v1222, 0.0
        %vm1247 = vcmask 785408
        %1248 = vst.msk [vmem:[#allocation2] sm:$0xff] %vm1247, 0.0
        %1249 = vst.msk [vmem:[#allocation2 + $0x8] sm:$0xff] %vm1247, 0.0
        %1250 = vst.msk [vmem:[#allocation2 + $0x10] sm:$0xff] %vm1247, 0.0
        %1251 = vst.msk [vmem:[#allocation2 + $0x18] sm:$0xff] %vm1247, 0.0
        %1252 = vst.msk [vmem:[#allocation2 + $0x20] sm:$0xff] %vm1247, 0.0
        %1253 = vst.msk [vmem:[#allocation2 + $0x28] sm:$0xff] %vm1247, 0.0
        %1254 = vst.msk [vmem:[#allocation2 + $0x30] sm:$0xff] %vm1247, 0.0
        %1255 = vst.msk [vmem:[#allocation2 + $0x38] sm:$0xff] %vm1247, 0.0
        %1256 = vst.msk [vmem:[#allocation2 + $0x40] sm:$0xff] %vm1247, 0.0
        %1257 = vst.msk [vmem:[#allocation2 + $0x48] sm:$0xff] %vm1247, 0.0
        %1258 = vst.msk [vmem:[#allocation2 + $0x50] sm:$0xff] %vm1247, 0.0
        %1259 = vst.msk [vmem:[#allocation2 + $0x58] sm:$0xff] %vm1247, 0.0
        %1260 = vst.msk [vmem:[#allocation2 + $0x60] sm:$0xff] %vm1247, 0.0
        %vm1261 = vcmask 781312
        %1262 = vst.msk [vmem:[#allocation2 + $0x68] sm:$0xf] %vm1261, 0.0
        %1265 = vrot.lane.b32.xlu0 %v1224, 64
        %v1266 = vpop.permute.xlu0 %1265
        %1267 = vrot.lane.b32.xlu0 %v1225, 64
        %v1268 = vpop.permute.xlu0 %1267
        %vm1269 = vcmask 523264
        %v1270 = vsel %vm1269, %v1266, %v1268
        %1272 = vst.msk [vmem:[#allocation2 + $0xb] sm:$0xff] %vm1247, %v1270
        %1275 = vrot.lane.b32.xlu0 %v1227, 64
        %v1276 = vpop.permute.xlu0 %1275
        %1277 = vrot.lane.b32.xlu0 %v1228, 64
        %v1278 = vpop.permute.xlu0 %1277
        %v1279 = vsel %vm1269, %v1276, %v1278
        %1281 = vst.msk [vmem:[#allocation2 + $0x15] sm:$0xff] %vm1247, %v1279
        %1284 = vrot.lane.b32.xlu0 %v1230, 64
        %v1285 = vpop.permute.xlu0 %1284
        %1286 = vrot.lane.b32.xlu0 %v1231, 64
        %v1287 = vpop.permute.xlu0 %1286
        %v1288 = vsel %vm1269, %v1285, %v1287
        %1290 = vst.msk [vmem:[#allocation2 + $0x1f] sm:$0xff] %vm1247, %v1288
        %1293 = vrot.lane.b32.xlu0 %v1233, 64
        %v1294 = vpop.permute.xlu0 %1293
        %1295 = vrot.lane.b32.xlu0 %v1234, 64
        %v1296 = vpop.permute.xlu0 %1295
        %v1297 = vsel %vm1269, %v1294, %v1296
        %1299 = vst.msk [vmem:[#allocation2 + $0x29] sm:$0xff] %vm1247, %v1297
        %1302 = vrot.lane.b32.xlu0 %v1236, 64
        %v1303 = vpop.permute.xlu0 %1302
        %1304 = vrot.lane.b32.xlu0 %v1237, 64
        %v1305 = vpop.permute.xlu0 %1304
        %v1306 = vsel %vm1269, %v1303, %v1305
        %1308 = vst.msk [vmem:[#allocation2 + $0x33] sm:$0xff] %vm1247, %v1306
        %1311 = vrot.lane.b32.xlu0 %v1239, 64
        %v1312 = vpop.permute.xlu0 %1311
        %1313 = vrot.lane.b32.xlu0 %v1240, 64
        %v1314 = vpop.permute.xlu0 %1313
        %v1315 = vsel %vm1269, %v1312, %v1314
        %1317 = vst.msk [vmem:[#allocation2 + $0x3d] sm:$0xff] %vm1247, %v1315
        %1320 = vrot.lane.b32.xlu0 %v1242, 64
        %v1321 = vpop.permute.xlu0 %1320
        %1322 = vrot.lane.b32.xlu0 %v1243, 64
        %v1323 = vpop.permute.xlu0 %1322
        %v1324 = vsel %vm1269, %v1321, %v1323
        %1326 = vst.msk [vmem:[#allocation2 + $0x47] sm:$0xff] %vm1247, %v1324
        %1329 = vrot.lane.b32.xlu0 %v1245, 64
        %v1330 = vpop.permute.xlu0 %1329
        %1331 = vrot.lane.b32.xlu0 %v1246, 64
        %v1332 = vpop.permute.xlu0 %1331
        %v1333 = vsel %vm1269, %v1330, %v1332
        %1335 = vst.msk [vmem:[#allocation2 + $0x51] sm:$0xff] %vm1247, %v1333
        %v1336 = vld [vmem:[#allocation2] sm:$0xff]
        %v1337 = vld [vmem:[#allocation2 + $0x8] sm:$0xff]
        %v1338 = vld [vmem:[#allocation2 + $0x10] sm:$0xff]
        %v1339 = vld [vmem:[#allocation2 + $0x18] sm:$0xff]
        %v1340 = vld [vmem:[#allocation2 + $0x20] sm:$0xff]
        %v1341 = vld [vmem:[#allocation2 + $0x28] sm:$0xff]
        %v1342 = vld [vmem:[#allocation2 + $0x30] sm:$0xff]
        %v1343 = vld [vmem:[#allocation2 + $0x38] sm:$0xff]
        %v1344 = vld [vmem:[#allocation2 + $0x40] sm:$0xff]
        %v1345 = vld [vmem:[#allocation2 + $0x48] sm:$0xff]
        %v1346 = vpack.c.bf16 %v1337, %v1336
        %v1347 = vpack.c.bf16 %v1339, %v1338
        %v1348 = vpack.c.bf16 %v1341, %v1340
        %v1349 = vpack.c.bf16 %v1343, %v1342
        %v1350 = vpack.c.bf16 %v1345, %v1344
        %v1351 = vld [vmem:[%s4] sm:$0xf]
        %v1352 = vld [vmem:[%s4 + $0x4] sm:$0xf]
        %v1353 = vld [vmem:[%s4 + $0x8] sm:$0xf]
        %v1354 = vld [vmem:[%s4 + $0xc] sm:$0xf]
        %v1355 = vld [vmem:[%s4 + $0x10] sm:$0xf]
        %v1356 = vld [vmem:[%s4 + $0x14] sm:$0xf]
        %v1357 = vld [vmem:[%s4 + $0x18] sm:$0xf]
        %v1358 = vld [vmem:[%s4 + $0x1c] sm:$0xf]
        %v1359 = vld [vmem:[%s4 + $0x20] sm:$0xf]
        %v1360 = vld [vmem:[%s4 + $0x24] sm:$0xf]
        %v1361 = vld [vmem:[%s4 + $0x28] sm:$0xf]
        %v1362 = vld [vmem:[%s4 + $0x2c] sm:$0xf]
        %v1363 = vld [vmem:[#allocation2 + $0x1] sm:$0xff]
        %v1364 = vld [vmem:[#allocation2 + $0x9] sm:$0xff]
        %v1365 = vld [vmem:[#allocation2 + $0x11] sm:$0xff]
        %v1366 = vld [vmem:[#allocation2 + $0x19] sm:$0xff]
        %v1367 = vld [vmem:[#allocation2 + $0x21] sm:$0xff]
        %v1368 = vld [vmem:[#allocation2 + $0x29] sm:$0xff]
        %v1369 = vld [vmem:[#allocation2 + $0x31] sm:$0xff]
        %v1370 = vld [vmem:[#allocation2 + $0x39] sm:$0xff]
        %v1371 = vld [vmem:[#allocation2 + $0x41] sm:$0xff]
        %v1372 = vld [vmem:[#allocation2 + $0x49] sm:$0xff]
        %v1373 = vpack.c.bf16 %v1364, %v1363
        %v1374 = vpack.c.bf16 %v1366, %v1365
        %v1375 = vpack.c.bf16 %v1368, %v1367
        %v1376 = vpack.c.bf16 %v1370, %v1369
        %v1377 = vpack.c.bf16 %v1372, %v1371
        %s1378 = scalar_lea.vmem %s4, 48
        %v1379 = vld [vmem:[%s1378] sm:$0xf]
        %v1380 = vld [vmem:[%s1378 + $0x4] sm:$0xf]
        %v1381 = vld [vmem:[%s1378 + $0x8] sm:$0xf]
        %v1382 = vld [vmem:[%s1378 + $0xc] sm:$0xf]
        %v1383 = vld [vmem:[%s1378 + $0x10] sm:$0xf]
        %v1384 = vld [vmem:[%s1378 + $0x14] sm:$0xf]
        %v1385 = vld [vmem:[%s1378 + $0x18] sm:$0xf]
        %v1386 = vld [vmem:[%s1378 + $0x1c] sm:$0xf]
        %v1387 = vld [vmem:[%s1378 + $0x20] sm:$0xf]
        %v1388 = vld [vmem:[%s1378 + $0x24] sm:$0xf]
        %v1389 = vld [vmem:[%s1378 + $0x28] sm:$0xf]
        %v1390 = vld [vmem:[%s1378 + $0x2c] sm:$0xf]
        %v1403 = vunpack.c.l.b16 %v1379
        %v1404 = vunpack.c.l.b16 %v1380
        %v1405 = vunpack.c.l.b16 %v1381
        %v1406 = vunpack.c.l.b16 %v1382
        %v1407 = vunpack.c.l.b16 %v1383
        %v1408 = vunpack.c.l.b16 %v1384
        %v1409 = vunpack.c.l.b16 %v1385
        %v1410 = vunpack.c.l.b16 %v1386
        %v1411 = vunpack.c.l.b16 %v1387
        %v1412 = vunpack.c.l.b16 %v1388
        %v1413 = vunpack.c.l.b16 %v1389
        %v1414 = vunpack.c.l.b16 %v1390
        %v1415 = vpack.c.b16 %v1404, %v1403
        %v1416 = vpack.c.b16 %v1406, %v1405
        %v1417 = vpack.c.b16 %v1408, %v1407
        %v1418 = vpack.c.b16 %v1410, %v1409
        %v1419 = vpack.c.b16 %v1412, %v1411
        %v1420 = vpack.c.b16 %v1414, %v1413
        %v1428 = vsel %vm1247, %v1373, 0
        %v1431 = vsel %vm1247, %v1374, 0
        %v1434 = vsel %vm1247, %v1375, 0
        %v1437 = vsel %vm1247, %v1376, 0
        %v1440 = vsel %vm1247, %v1377, 0
        %1442 = vmatprep.subr.bf16.mxu0 0
        %1443 = vmatpush1.bf16.msra.mxu0 %v1415
        %1444 = vmatprep.subr.bf16.mxu0 0
        %1445 = vmatpush1.bf16.msra.mxu0 %v1416
        %1446 = vmatprep.subr.bf16.mxu0 0
        %1447 = vmatpush1.bf16.msra.mxu0 %v1417
        %1448 = vmatprep.subr.bf16.mxu0 0
        %1449 = vmatpush1.bf16.msra.mxu0 %v1418
        %1450 = vmatprep.subr.bf16.mxu0 0
        %1451 = vmatpush1.bf16.msra.mxu0 %v1419
        %1452 = vmatprep.subr.bf16.mxu0 0
        %1453 = vmatpush1.bf16.msra.mxu0 %v1420
        %1454 = vmatprep.subr.bf16.mxu0 0
        %1455 = vmatpush1.bf16.msra.mxu0 0
        %1456 = vmatprep.subr.bf16.mxu0 0
        %1457 = vmatpush1.bf16.msra.mxu0 0
        %1458 = vmatprep.subr.bf16.mxu0 0
        %1459 = vmatpush1.bf16.msra.mxu0 0
        %1460 = vmatprep.subr.bf16.mxu0 0
        %1461 = vmatpush1.bf16.msra.mxu0 0
        %1462 = vmatprep.subr.bf16.mxu0 0
        %1463 = vmatpush1.bf16.msra.mxu0 0
        %1464 = vmatprep.subr.bf16.mxu0 0
        %1465 = vmatpush1.bf16.msra.mxu0 0
        %1466 = vmatprep.subr.bf16.mxu0 0
        %1467 = vmatpush1.bf16.msra.mxu0 0
        %1468 = vmatprep.subr.bf16.mxu0 0
        %1469 = vmatpush1.bf16.msra.mxu0 0
        %1470 = vmatprep.subr.bf16.mxu0 0
        %1471 = vmatpush1.bf16.msra.mxu0 0
        %1472 = vmatprep.subr.bf16.mxu0 0
        %1473 = vmatpush1.bf16.msra.mxu0 0
        %1474 = vmatprep.mubr.bf16.mxu0 0
        %1475 = vmatmul.mubr.bf16.gmra.mrb[0].mxu0 %v1428
        %v1476 = vpop.f32.mrb[0].mxu0
        %v1477 = vadd.f32 0.0, %v1476
        %v1478 = vpop.f32.mrb[0].mxu0
        %v1479 = vpop.f32.mrb[0].mxu0
        %v1480 = vadd.f32 0.0, %v1479
        %v1481 = vpop.f32.mrb[0].mxu0
        %1482 = vmatprep.mubr.bf16.mxu0 0
        %1483 = vmatmul.mubr.bf16.gmra.mrb[0].mxu0 %v1431
        %v1484 = vpop.f32.mrb[0].mxu0
        %v1485 = vadd.f32 0.0, %v1484
        %v1486 = vpop.f32.mrb[0].mxu0
        %v1487 = vpop.f32.mrb[0].mxu0
        %v1488 = vadd.f32 0.0, %v1487
        %v1489 = vpop.f32.mrb[0].mxu0
        %1490 = vmatprep.mubr.bf16.mxu0 0
        %1491 = vmatmul.mubr.bf16.gmra.mrb[0].mxu0 %v1434
        %v1492 = vpop.f32.mrb[0].mxu0
        %v1493 = vadd.f32 0.0, %v1492
        %v1494 = vpop.f32.mrb[0].mxu0
        %v1495 = vpop.f32.mrb[0].mxu0
        %v1496 = vadd.f32 0.0, %v1495
        %v1497 = vpop.f32.mrb[0].mxu0
        %1498 = vmatprep.mubr.bf16.mxu0 0
        %1499 = vmatmul.mubr.bf16.gmra.mrb[0].mxu0 %v1437
        %v1500 = vpop.f32.mrb[0].mxu0
        %v1501 = vadd.f32 0.0, %v1500
        %v1502 = vpop.f32.mrb[0].mxu0
        %v1503 = vpop.f32.mrb[0].mxu0
        %v1504 = vadd.f32 0.0, %v1503
        %v1505 = vpop.f32.mrb[0].mxu0
        %1506 = vmatprep.mubr.bf16.mxu0 0
        %1507 = vmatmul.mubr.bf16.gmra.mrb[0].mxu0 %v1440
        %v1508 = vpop.f32.mrb[0].mxu0
        %v1509 = vadd.f32 0.0, %v1508
        %v1510 = vpop.f32.mrb[0].mxu0
        %v1511 = vpop.f32.mrb[0].mxu0
        %v1512 = vadd.f32 0.0, %v1511
        %v1513 = vpop.f32.mrb[0].mxu0
        %1514 = vdwg.mxu0
        %v1527 = vunpack.c.l.b16 %v1351
        %v1528 = vunpack.c.l.b16 %v1352
        %v1529 = vunpack.c.l.b16 %v1353
        %v1530 = vunpack.c.l.b16 %v1354
        %v1531 = vunpack.c.l.b16 %v1355
        %v1532 = vunpack.c.l.b16 %v1356
        %v1533 = vunpack.c.l.b16 %v1357
        %v1534 = vunpack.c.l.b16 %v1358
        %v1535 = vunpack.c.l.b16 %v1359
        %v1536 = vunpack.c.l.b16 %v1360
        %v1537 = vunpack.c.l.b16 %v1361
        %v1538 = vunpack.c.l.b16 %v1362
        %v1539 = vpack.c.b16 %v1528, %v1527
        %v1540 = vpack.c.b16 %v1530, %v1529
        %v1541 = vpack.c.b16 %v1532, %v1531
        %v1542 = vpack.c.b16 %v1534, %v1533
        %v1543 = vpack.c.b16 %v1536, %v1535
        %v1544 = vpack.c.b16 %v1538, %v1537
        %v1552 = vsel %vm1247, %v1346, 0
        %v1555 = vsel %vm1247, %v1347, 0
        %v1558 = vsel %vm1247, %v1348, 0
        %v1561 = vsel %vm1247, %v1349, 0
        %v1564 = vsel %vm1247, %v1350, 0
        %1566 = vmatprep.subr.bf16.mxu0 0
        %1567 = vmatpush1.bf16.msra.mxu0 %v1539
        %1568 = vmatprep.subr.bf16.mxu0 0
        %1569 = vmatpush1.bf16.msra.mxu0 %v1540
        %1570 = vmatprep.subr.bf16.mxu0 0
        %1571 = vmatpush1.bf16.msra.mxu0 %v1541
        %1572 = vmatprep.subr.bf16.mxu0 0
        %1573 = vmatpush1.bf16.msra.mxu0 %v1542
        %1574 = vmatprep.subr.bf16.mxu0 0
        %1575 = vmatpush1.bf16.msra.mxu0 %v1543
        %1576 = vmatprep.subr.bf16.mxu0 0
        %1577 = vmatpush1.bf16.msra.mxu0 %v1544
        %1578 = vmatprep.subr.bf16.mxu0 0
        %1579 = vmatpush1.bf16.msra.mxu0 0
        %1580 = vmatprep.subr.bf16.mxu0 0
        %1581 = vmatpush1.bf16.msra.mxu0 0
        %1582 = vmatprep.subr.bf16.mxu0 0
        %1583 = vmatpush1.bf16.msra.mxu0 0
        %1584 = vmatprep.subr.bf16.mxu0 0
        %1585 = vmatpush1.bf16.msra.mxu0 0
        %1586 = vmatprep.subr.bf16.mxu0 0
        %1587 = vmatpush1.bf16.msra.mxu0 0
        %1588 = vmatprep.subr.bf16.mxu0 0
        %1589 = vmatpush1.bf16.msra.mxu0 0
        %1590 = vmatprep.subr.bf16.mxu0 0
        %1591 = vmatpush1.bf16.msra.mxu0 0
        %1592 = vmatprep.subr.bf16.mxu0 0
        %1593 = vmatpush1.bf16.msra.mxu0 0
        %1594 = vmatprep.subr.bf16.mxu0 0
        %1595 = vmatpush1.bf16.msra.mxu0 0
        %1596 = vmatprep.subr.bf16.mxu0 0
        %1597 = vmatpush1.bf16.msra.mxu0 0
        %1598 = vmatprep.mubr.bf16.mxu0 0
        %1599 = vmatmul.mubr.bf16.gmra.mrb[0].mxu0 %v1552
        %v1600 = vpop.f32.mrb[0].mxu0
        %v1601 = vadd.f32 %v1477, %v1600
        %v1602 = vpop.f32.mrb[0].mxu0
        %v1603 = vpop.f32.mrb[0].mxu0
        %v1604 = vadd.f32 %v1480, %v1603
        %v1605 = vpop.f32.mrb[0].mxu0
        %1606 = vmatprep.mubr.bf16.mxu0 0
        %1607 = vmatmul.mubr.bf16.gmra.mrb[0].mxu0 %v1555
        %v1608 = vpop.f32.mrb[0].mxu0
        %v1609 = vadd.f32 %v1485, %v1608
        %v1610 = vpop.f32.mrb[0].mxu0
        %v1611 = vpop.f32.mrb[0].mxu0
        %v1612 = vadd.f32 %v1488, %v1611
        %v1613 = vpop.f32.mrb[0].mxu0
        %1614 = vmatprep.mubr.bf16.mxu0 0
        %1615 = vmatmul.mubr.bf16.gmra.mrb[0].mxu0 %v1558
        %v1616 = vpop.f32.mrb[0].mxu0
        %v1617 = vadd.f32 %v1493, %v1616
        %v1618 = vpop.f32.mrb[0].mxu0
        %v1619 = vpop.f32.mrb[0].mxu0
        %v1620 = vadd.f32 %v1496, %v1619
        %v1621 = vpop.f32.mrb[0].mxu0
        %1622 = vmatprep.mubr.bf16.mxu0 0
        %1623 = vmatmul.mubr.bf16.gmra.mrb[0].mxu0 %v1561
        %v1624 = vpop.f32.mrb[0].mxu0
        %v1625 = vadd.f32 %v1501, %v1624
        %v1626 = vpop.f32.mrb[0].mxu0
        %v1627 = vpop.f32.mrb[0].mxu0
        %v1628 = vadd.f32 %v1504, %v1627
        %v1629 = vpop.f32.mrb[0].mxu0
        %1630 = vmatprep.mubr.bf16.mxu0 0
        %1631 = vmatmul.mubr.bf16.gmra.mrb[0].mxu0 %v1564
        %v1632 = vpop.f32.mrb[0].mxu0
        %v1633 = vadd.f32 %v1509, %v1632
        %v1634 = vpop.f32.mrb[0].mxu0
        %v1635 = vpop.f32.mrb[0].mxu0
        %v1636 = vadd.f32 %v1512, %v1635
        %v1637 = vpop.f32.mrb[0].mxu0
        %1638 = vdwg.mxu0
        %v1639 = vld [vmem:[#allocation2 + $0x2] sm:$0xff]
        %v1640 = vld [vmem:[#allocation2 + $0xa] sm:$0xff]
        %v1641 = vld [vmem:[#allocation2 + $0x12] sm:$0xff]
        %v1642 = vld [vmem:[#allocation2 + $0x1a] sm:$0xff]
        %v1643 = vld [vmem:[#allocation2 + $0x22] sm:$0xff]
        %v1644 = vld [vmem:[#allocation2 + $0x2a] sm:$0xff]
        %v1645 = vld [vmem:[#allocation2 + $0x32] sm:$0xff]
        %v1646 = vld [vmem:[#allocation2 + $0x3a] sm:$0xff]
        %v1647 = vld [vmem:[#allocation2 + $0x42] sm:$0xff]
        %v1648 = vld [vmem:[#allocation2 + $0x4a] sm:$0xff]
        %v1649 = vpack.c.bf16 %v1640, %v1639
        %v1650 = vpack.c.bf16 %v1642, %v1641
        %v1651 = vpack.c.bf16 %v1644, %v1643
        %v1652 = vpack.c.bf16 %v1646, %v1645
        %v1653 = vpack.c.bf16 %v1648, %v1647
        %s1654 = scalar_lea.vmem %s4, 96
        %v1655 = vld [vmem:[%s1654] sm:$0xf]
        %v1656 = vld [vmem:[%s1654 + $0x4] sm:$0xf]
        %v1657 = vld [vmem:[%s1654 + $0x8] sm:$0xf]
        %v1658 = vld [vmem:[%s1654 + $0xc] sm:$0xf]
        %v1659 = vld [vmem:[%s1654 + $0x10] sm:$0xf]
        %v1660 = vld [vmem:[%s1654 + $0x14] sm:$0xf]
        %v1661 = vld [vmem:[%s1654 + $0x18] sm:$0xf]
        %v1662 = vld [vmem:[%s1654 + $0x1c] sm:$0xf]
        %v1663 = vld [vmem:[%s1654 + $0x20] sm:$0xf]
        %v1664 = vld [vmem:[%s1654 + $0x24] sm:$0xf]
        %v1665 = vld [vmem:[%s1654 + $0x28] sm:$0xf]
        %v1666 = vld [vmem:[%s1654 + $0x2c] sm:$0xf]
        %v1679 = vunpack.c.l.b16 %v1655
        %v1680 = vunpack.c.l.b16 %v1656
        %v1681 = vunpack.c.l.b16 %v1657
        %v1682 = vunpack.c.l.b16 %v1658
        %v1683 = vunpack.c.l.b16 %v1659
        %v1684 = vunpack.c.l.b16 %v1660
        %v1685 = vunpack.c.l.b16 %v1661
        %v1686 = vunpack.c.l.b16 %v1662
        %v1687 = vunpack.c.l.b16 %v1663
        %v1688 = vunpack.c.l.b16 %v1664
        %v1689 = vunpack.c.l.b16 %v1665
        %v1690 = vunpack.c.l.b16 %v1666
        %v1691 = vpack.c.b16 %v1680, %v1679
        %v1692 = vpack.c.b16 %v1682, %v1681
        %v1693 = vpack.c.b16 %v1684, %v1683
        %v1694 = vpack.c.b16 %v1686, %v1685
        %v1695 = vpack.c.b16 %v1688, %v1687
        %v1696 = vpack.c.b16 %v1690, %v1689
        %v1704 = vsel %vm1247, %v1649, 0
        %v1707 = vsel %vm1247, %v1650, 0
        %v1710 = vsel %vm1247, %v1651, 0
        %v1713 = vsel %vm1247, %v1652, 0
        %v1716 = vsel %vm1247, %v1653, 0
        %1718 = vmatprep.subr.bf16.mxu0 0
        %1719 = vmatpush1.bf16.msra.mxu0 %v1691
        %1720 = vmatprep.subr.bf16.mxu0 0
        %1721 = vmatpush1.bf16.msra.mxu0 %v1692
        %1722 = vmatprep.subr.bf16.mxu0 0
        %1723 = vmatpush1.bf16.msra.mxu0 %v1693
        %1724 = vmatprep.subr.bf16.mxu0 0
        %1725 = vmatpush1.bf16.msra.mxu0 %v1694
        %1726 = vmatprep.subr.bf16.mxu0 0
        %1727 = vmatpush1.bf16.msra.mxu0 %v1695
        %1728 = vmatprep.subr.bf16.mxu0 0
        %1729 = vmatpush1.bf16.msra.mxu0 %v1696
        %1730 = vmatprep.subr.bf16.mxu0 0
        %1731 = vmatpush1.bf16.msra.mxu0 0
        %1732 = vmatprep.subr.bf16.mxu0 0
        %1733 = vmatpush1.bf16.msra.mxu0 0
        %1734 = vmatprep.subr.bf16.mxu0 0
        %1735 = vmatpush1.bf16.msra.mxu0 0
        %1736 = vmatprep.subr.bf16.mxu0 0
        %1737 = vmatpush1.bf16.msra.mxu0 0
        %1738 = vmatprep.subr.bf16.mxu0 0
        %1739 = vmatpush1.bf16.msra.mxu0 0
        %1740 = vmatprep.subr.bf16.mxu0 0
        %1741 = vmatpush1.bf16.msra.mxu0 0
        %1742 = vmatprep.subr.bf16.mxu0 0
        %1743 = vmatpush1.bf16.msra.mxu0 0
        %1744 = vmatprep.subr.bf16.mxu0 0
        %1745 = vmatpush1.bf16.msra.mxu0 0
        %1746 = vmatprep.subr.bf16.mxu0 0
        %1747 = vmatpush1.bf16.msra.mxu0 0
        %1748 = vmatprep.subr.bf16.mxu0 0
        %1749 = vmatpush1.bf16.msra.mxu0 0
        %1750 = vmatprep.mubr.bf16.mxu0 0
        %1751 = vmatmul.mubr.bf16.gmra.mrb[0].mxu0 %v1704
        %v1752 = vpop.f32.mrb[0].mxu0
        %v1753 = vadd.f32 0.0, %v1752
        %v1754 = vpop.f32.mrb[0].mxu0
        %v1755 = vpop.f32.mrb[0].mxu0
        %v1756 = vadd.f32 0.0, %v1755
        %v1757 = vpop.f32.mrb[0].mxu0
        %1758 = vmatprep.mubr.bf16.mxu0 0
        %1759 = vmatmul.mubr.bf16.gmra.mrb[0].mxu0 %v1707
        %v1760 = vpop.f32.mrb[0].mxu0
        %v1761 = vadd.f32 0.0, %v1760
        %v1762 = vpop.f32.mrb[0].mxu0
        %v1763 = vpop.f32.mrb[0].mxu0
        %v1764 = vadd.f32 0.0, %v1763
        %v1765 = vpop.f32.mrb[0].mxu0
        %1766 = vmatprep.mubr.bf16.mxu0 0
        %1767 = vmatmul.mubr.bf16.gmra.mrb[0].mxu0 %v1710
        %v1768 = vpop.f32.mrb[0].mxu0
        %v1769 = vadd.f32 0.0, %v1768
        %v1770 = vpop.f32.mrb[0].mxu0
        %v1771 = vpop.f32.mrb[0].mxu0
        %v1772 = vadd.f32 0.0, %v1771
        %v1773 = vpop.f32.mrb[0].mxu0
        %1774 = vmatprep.mubr.bf16.mxu0 0
        %1775 = vmatmul.mubr.bf16.gmra.mrb[0].mxu0 %v1713
        %v1776 = vpop.f32.mrb[0].mxu0
        %v1777 = vadd.f32 0.0, %v1776
        %v1778 = vpop.f32.mrb[0].mxu0
        %v1779 = vpop.f32.mrb[0].mxu0
        %v1780 = vadd.f32 0.0, %v1779
        %v1781 = vpop.f32.mrb[0].mxu0
        %1782 = vmatprep.mubr.bf16.mxu0 0
        %1783 = vmatmul.mubr.bf16.gmra.mrb[0].mxu0 %v1716
        %v1784 = vpop.f32.mrb[0].mxu0
        %v1785 = vadd.f32 0.0, %v1784
        %v1786 = vpop.f32.mrb[0].mxu0
        %v1787 = vpop.f32.mrb[0].mxu0
        %v1788 = vadd.f32 0.0, %v1787
        %v1789 = vpop.f32.mrb[0].mxu0
        %1790 = vdwg.mxu0
        %v1791 = vadd.f32 %v1601, %v1753
        %v1792 = vadd.f32 %v1604, %v1756
        %v1793 = vadd.f32 %v1609, %v1761
        %v1794 = vadd.f32 %v1612, %v1764
        %v1795 = vadd.f32 %v1617, %v1769
        %v1796 = vadd.f32 %v1620, %v1772
        %v1797 = vadd.f32 %v1625, %v1777
        %v1798 = vadd.f32 %v1628, %v1780
        %v1799 = vadd.f32 %v1633, %v1785
        %v1800 = vadd.f32 %v1636, %v1788
        %v1801 = vld [vmem:[#allocation2 + $0xa] sm:$0xff]
        %v1802 = vld [vmem:[#allocation2 + $0x12] sm:$0xff]
        %v1803 = vld [vmem:[#allocation2 + $0x1a] sm:$0xff]
        %v1804 = vld [vmem:[#allocation2 + $0x22] sm:$0xff]
        %v1805 = vld [vmem:[#allocation2 + $0x2a] sm:$0xff]
        %v1806 = vld [vmem:[#allocation2 + $0x32] sm:$0xff]
        %v1807 = vld [vmem:[#allocation2 + $0x3a] sm:$0xff]
        %v1808 = vld [vmem:[#allocation2 + $0x42] sm:$0xff]
        %v1809 = vld [vmem:[#allocation2 + $0x4a] sm:$0xff]
        %v1810 = vld [vmem:[#allocation2 + $0x52] sm:$0xff]
        %v1811 = vpack.c.bf16 %v1802, %v1801
        %v1812 = vpack.c.bf16 %v1804, %v1803
        %v1813 = vpack.c.bf16 %v1806, %v1805
        %v1814 = vpack.c.bf16 %v1808, %v1807
        %v1815 = vpack.c.bf16 %v1810, %v1809
        %s1816 = scalar_lea.vmem %s4, 144
        %v1817 = vld [vmem:[%s1816] sm:$0xf]
        %v1818 = vld [vmem:[%s1816 + $0x4] sm:$0xf]
        %v1819 = vld [vmem:[%s1816 + $0x8] sm:$0xf]
        %v1820 = vld [vmem:[%s1816 + $0xc] sm:$0xf]
        %v1821 = vld [vmem:[%s1816 + $0x10] sm:$0xf]
        %v1822 = vld [vmem:[%s1816 + $0x14] sm:$0xf]
        %v1823 = vld [vmem:[%s1816 + $0x18] sm:$0xf]
        %v1824 = vld [vmem:[%s1816 + $0x1c] sm:$0xf]
        %v1825 = vld [vmem:[%s1816 + $0x20] sm:$0xf]
        %v1826 = vld [vmem:[%s1816 + $0x24] sm:$0xf]
        %v1827 = vld [vmem:[%s1816 + $0x28] sm:$0xf]
        %v1828 = vld [vmem:[%s1816 + $0x2c] sm:$0xf]
        %v1841 = vunpack.c.l.b16 %v1817
        %v1842 = vunpack.c.l.b16 %v1818
        %v1843 = vunpack.c.l.b16 %v1819
        %v1844 = vunpack.c.l.b16 %v1820
        %v1845 = vunpack.c.l.b16 %v1821
        %v1846 = vunpack.c.l.b16 %v1822
        %v1847 = vunpack.c.l.b16 %v1823
        %v1848 = vunpack.c.l.b16 %v1824
        %v1849 = vunpack.c.l.b16 %v1825
        %v1850 = vunpack.c.l.b16 %v1826
        %v1851 = vunpack.c.l.b16 %v1827
        %v1852 = vunpack.c.l.b16 %v1828
        %v1853 = vpack.c.b16 %v1842, %v1841
        %v1854 = vpack.c.b16 %v1844, %v1843
        %v1855 = vpack.c.b16 %v1846, %v1845
        %v1856 = vpack.c.b16 %v1848, %v1847
        %v1857 = vpack.c.b16 %v1850, %v1849
        %v1858 = vpack.c.b16 %v1852, %v1851
        %v1866 = vsel %vm1247, %v1811, 0
        %v1869 = vsel %vm1247, %v1812, 0
        %v1872 = vsel %vm1247, %v1813, 0
        %v1875 = vsel %vm1247, %v1814, 0
        %v1878 = vsel %vm1247, %v1815, 0
        %1880 = vmatprep.subr.bf16.mxu0 0
        %1881 = vmatpush1.bf16.msra.mxu0 %v1853
        %1882 = vmatprep.subr.bf16.mxu0 0
        %1883 = vmatpush1.bf16.msra.mxu0 %v1854
        %1884 = vmatprep.subr.bf16.mxu0 0
        %1885 = vmatpush1.bf16.msra.mxu0 %v1855
        %1886 = vmatprep.subr.bf16.mxu0 0
        %1887 = vmatpush1.bf16.msra.mxu0 %v1856
        %1888 = vmatprep.subr.bf16.mxu0 0
        %1889 = vmatpush1.bf16.msra.mxu0 %v1857
        %1890 = vmatprep.subr.bf16.mxu0 0
        %1891 = vmatpush1.bf16.msra.mxu0 %v1858
        %1892 = vmatprep.subr.bf16.mxu0 0
        %1893 = vmatpush1.bf16.msra.mxu0 0
        %1894 = vmatprep.subr.bf16.mxu0 0
        %1895 = vmatpush1.bf16.msra.mxu0 0
        %1896 = vmatprep.subr.bf16.mxu0 0
        %1897 = vmatpush1.bf16.msra.mxu0 0
        %1898 = vmatprep.subr.bf16.mxu0 0
        %1899 = vmatpush1.bf16.msra.mxu0 0
        %1900 = vmatprep.subr.bf16.mxu0 0
        %1901 = vmatpush1.bf16.msra.mxu0 0
        %1902 = vmatprep.subr.bf16.mxu0 0
        %1903 = vmatpush1.bf16.msra.mxu0 0
        %1904 = vmatprep.subr.bf16.mxu0 0
        %1905 = vmatpush1.bf16.msra.mxu0 0
        %1906 = vmatprep.subr.bf16.mxu0 0
        %1907 = vmatpush1.bf16.msra.mxu0 0
        %1908 = vmatprep.subr.bf16.mxu0 0
        %1909 = vmatpush1.bf16.msra.mxu0 0
        %1910 = vmatprep.subr.bf16.mxu0 0
        %1911 = vmatpush1.bf16.msra.mxu0 0
        %1912 = vmatprep.mubr.bf16.mxu0 0
        %1913 = vmatmul.mubr.bf16.gmra.mrb[0].mxu0 %v1866
        %v1914 = vpop.f32.mrb[0].mxu0
        %v1915 = vadd.f32 0.0, %v1914
        %v1916 = vpop.f32.mrb[0].mxu0
        %v1917 = vpop.f32.mrb[0].mxu0
        %v1918 = vadd.f32 0.0, %v1917
        %v1919 = vpop.f32.mrb[0].mxu0
        %1920 = vmatprep.mubr.bf16.mxu0 0
        %1921 = vmatmul.mubr.bf16.gmra.mrb[0].mxu0 %v1869
        %v1922 = vpop.f32.mrb[0].mxu0
        %v1923 = vadd.f32 0.0, %v1922
        %v1924 = vpop.f32.mrb[0].mxu0
        %v1925 = vpop.f32.mrb[0].mxu0
        %v1926 = vadd.f32 0.0, %v1925
        %v1927 = vpop.f32.mrb[0].mxu0
        %1928 = vmatprep.mubr.bf16.mxu0 0
        %1929 = vmatmul.mubr.bf16.gmra.mrb[0].mxu0 %v1872
        %v1930 = vpop.f32.mrb[0].mxu0
        %v1931 = vadd.f32 0.0, %v1930
        %v1932 = vpop.f32.mrb[0].mxu0
        %v1933 = vpop.f32.mrb[0].mxu0
        %v1934 = vadd.f32 0.0, %v1933
        %v1935 = vpop.f32.mrb[0].mxu0
        %1936 = vmatprep.mubr.bf16.mxu0 0
        %1937 = vmatmul.mubr.bf16.gmra.mrb[0].mxu0 %v1875
        %v1938 = vpop.f32.mrb[0].mxu0
        %v1939 = vadd.f32 0.0, %v1938
        %v1940 = vpop.f32.mrb[0].mxu0
        %v1941 = vpop.f32.mrb[0].mxu0
        %v1942 = vadd.f32 0.0, %v1941
        %v1943 = vpop.f32.mrb[0].mxu0
        %1944 = vmatprep.mubr.bf16.mxu0 0
        %1945 = vmatmul.mubr.bf16.gmra.mrb[0].mxu0 %v1878
        %v1946 = vpop.f32.mrb[0].mxu0
        %v1947 = vadd.f32 0.0, %v1946
        %v1948 = vpop.f32.mrb[0].mxu0
        %v1949 = vpop.f32.mrb[0].mxu0
        %v1950 = vadd.f32 0.0, %v1949
        %v1951 = vpop.f32.mrb[0].mxu0
        %1952 = vdwg.mxu0
        %v1953 = vadd.f32 %v1791, %v1915
        %v1954 = vadd.f32 %v1792, %v1918
        %v1955 = vadd.f32 %v1793, %v1923
        %v1956 = vadd.f32 %v1794, %v1926
        %v1957 = vadd.f32 %v1795, %v1931
        %v1958 = vadd.f32 %v1796, %v1934
        %v1959 = vadd.f32 %v1797, %v1939
        %v1960 = vadd.f32 %v1798, %v1942
        %v1961 = vadd.f32 %v1799, %v1947
        %v1962 = vadd.f32 %v1800, %v1950
        %v1963 = vld [vmem:[#allocation2 + $0xb] sm:$0xff]
        %v1964 = vld [vmem:[#allocation2 + $0x13] sm:$0xff]
        %v1965 = vld [vmem:[#allocation2 + $0x1b] sm:$0xff]
        %v1966 = vld [vmem:[#allocation2 + $0x23] sm:$0xff]
        %v1967 = vld [vmem:[#allocation2 + $0x2b] sm:$0xff]
        %v1968 = vld [vmem:[#allocation2 + $0x33] sm:$0xff]
        %v1969 = vld [vmem:[#allocation2 + $0x3b] sm:$0xff]
        %v1970 = vld [vmem:[#allocation2 + $0x43] sm:$0xff]
        %v1971 = vld [vmem:[#allocation2 + $0x4b] sm:$0xff]
        %v1972 = vld [vmem:[#allocation2 + $0x53] sm:$0xff]
        %v1973 = vpack.c.bf16 %v1964, %v1963
        %v1974 = vpack.c.bf16 %v1966, %v1965
        %v1975 = vpack.c.bf16 %v1968, %v1967
        %v1976 = vpack.c.bf16 %v1970, %v1969
        %v1977 = vpack.c.bf16 %v1972, %v1971
        %s1978 = scalar_lea.vmem %s4, 192
        %v1979 = vld [vmem:[%s1978] sm:$0xf]
        %v1980 = vld [vmem:[%s1978 + $0x4] sm:$0xf]
        %v1981 = vld [vmem:[%s1978 + $0x8] sm:$0xf]
        %v1982 = vld [vmem:[%s1978 + $0xc] sm:$0xf]
        %v1983 = vld [vmem:[%s1978 + $0x10] sm:$0xf]
        %v1984 = vld [vmem:[%s1978 + $0x14] sm:$0xf]
        %v1985 = vld [vmem:[%s1978 + $0x18] sm:$0xf]
        %v1986 = vld [vmem:[%s1978 + $0x1c] sm:$0xf]
        %v1987 = vld [vmem:[%s1978 + $0x20] sm:$0xf]
        %v1988 = vld [vmem:[%s1978 + $0x24] sm:$0xf]
        %v1989 = vld [vmem:[%s1978 + $0x28] sm:$0xf]
        %v1990 = vld [vmem:[%s1978 + $0x2c] sm:$0xf]
        %v2003 = vunpack.c.l.b16 %v1979
        %v2004 = vunpack.c.l.b16 %v1980
        %v2005 = vunpack.c.l.b16 %v1981
        %v2006 = vunpack.c.l.b16 %v1982
        %v2007 = vunpack.c.l.b16 %v1983
        %v2008 = vunpack.c.l.b16 %v1984
        %v2009 = vunpack.c.l.b16 %v1985
        %v2010 = vunpack.c.l.b16 %v1986
        %v2011 = vunpack.c.l.b16 %v1987
        %v2012 = vunpack.c.l.b16 %v1988
        %v2013 = vunpack.c.l.b16 %v1989
        %v2014 = vunpack.c.l.b16 %v1990
        %v2015 = vpack.c.b16 %v2004, %v2003
        %v2016 = vpack.c.b16 %v2006, %v2005
        %v2017 = vpack.c.b16 %v2008, %v2007
        %v2018 = vpack.c.b16 %v2010, %v2009
        %v2019 = vpack.c.b16 %v2012, %v2011
        %v2020 = vpack.c.b16 %v2014, %v2013
        %v2028 = vsel %vm1247, %v1973, 0
        %v2031 = vsel %vm1247, %v1974, 0
        %v2034 = vsel %vm1247, %v1975, 0
        %v2037 = vsel %vm1247, %v1976, 0
        %v2040 = vsel %vm1247, %v1977, 0
        %2042 = vmatprep.subr.bf16.mxu0 0
        %2043 = vmatpush1.bf16.msra.mxu0 %v2015
        %2044 = vmatprep.subr.bf16.mxu0 0
        %2045 = vmatpush1.bf16.msra.mxu0 %v2016
        %2046 = vmatprep.subr.bf16.mxu0 0
        %2047 = vmatpush1.bf16.msra.mxu0 %v2017
        %2048 = vmatprep.subr.bf16.mxu0 0
        %2049 = vmatpush1.bf16.msra.mxu0 %v2018
        %2050 = vmatprep.subr.bf16.mxu0 0
        %2051 = vmatpush1.bf16.msra.mxu0 %v2019
        %2052 = vmatprep.subr.bf16.mxu0 0
        %2053 = vmatpush1.bf16.msra.mxu0 %v2020
        %2054 = vmatprep.subr.bf16.mxu0 0
        %2055 = vmatpush1.bf16.msra.mxu0 0
        %2056 = vmatprep.subr.bf16.mxu0 0
        %2057 = vmatpush1.bf16.msra.mxu0 0
        %2058 = vmatprep.subr.bf16.mxu0 0
        %2059 = vmatpush1.bf16.msra.mxu0 0
        %2060 = vmatprep.subr.bf16.mxu0 0
        %2061 = vmatpush1.bf16.msra.mxu0 0
        %2062 = vmatprep.subr.bf16.mxu0 0
        %2063 = vmatpush1.bf16.msra.mxu0 0
        %2064 = vmatprep.subr.bf16.mxu0 0
        %2065 = vmatpush1.bf16.msra.mxu0 0
        %2066 = vmatprep.subr.bf16.mxu0 0
        %2067 = vmatpush1.bf16.msra.mxu0 0
        %2068 = vmatprep.subr.bf16.mxu0 0
        %2069 = vmatpush1.bf16.msra.mxu0 0
        %2070 = vmatprep.subr.bf16.mxu0 0
        %2071 = vmatpush1.bf16.msra.mxu0 0
        %2072 = vmatprep.subr.bf16.mxu0 0
        %2073 = vmatpush1.bf16.msra.mxu0 0
        %2074 = vmatprep.mubr.bf16.mxu0 0
        %2075 = vmatmul.mubr.bf16.gmra.mrb[0].mxu0 %v2028
        %v2076 = vpop.f32.mrb[0].mxu0
        %v2077 = vadd.f32 0.0, %v2076
        %v2078 = vpop.f32.mrb[0].mxu0
        %v2079 = vpop.f32.mrb[0].mxu0
        %v2080 = vadd.f32 0.0, %v2079
        %v2081 = vpop.f32.mrb[0].mxu0
        %2082 = vmatprep.mubr.bf16.mxu0 0
        %2083 = vmatmul.mubr.bf16.gmra.mrb[0].mxu0 %v2031
        %v2084 = vpop.f32.mrb[0].mxu0
        %v2085 = vadd.f32 0.0, %v2084
        %v2086 = vpop.f32.mrb[0].mxu0
        %v2087 = vpop.f32.mrb[0].mxu0
        %v2088 = vadd.f32 0.0, %v2087
        %v2089 = vpop.f32.mrb[0].mxu0
        %2090 = vmatprep.mubr.bf16.mxu0 0
        %2091 = vmatmul.mubr.bf16.gmra.mrb[0].mxu0 %v2034
        %v2092 = vpop.f32.mrb[0].mxu0
        %v2093 = vadd.f32 0.0, %v2092
        %v2094 = vpop.f32.mrb[0].mxu0
        %v2095 = vpop.f32.mrb[0].mxu0
        %v2096 = vadd.f32 0.0, %v2095
        %v2097 = vpop.f32.mrb[0].mxu0
        %2098 = vmatprep.mubr.bf16.mxu0 0
        %2099 = vmatmul.mubr.bf16.gmra.mrb[0].mxu0 %v2037
        %v2100 = vpop.f32.mrb[0].mxu0
        %v2101 = vadd.f32 0.0, %v2100
        %v2102 = vpop.f32.mrb[0].mxu0
        %v2103 = vpop.f32.mrb[0].mxu0
        %v2104 = vadd.f32 0.0, %v2103
        %v2105 = vpop.f32.mrb[0].mxu0
        %2106 = vmatprep.mubr.bf16.mxu0 0
        %2107 = vmatmul.mubr.bf16.gmra.mrb[0].mxu0 %v2040
        %v2108 = vpop.f32.mrb[0].mxu0
        %v2109 = vadd.f32 0.0, %v2108
        %v2110 = vpop.f32.mrb[0].mxu0
        %v2111 = vpop.f32.mrb[0].mxu0
        %v2112 = vadd.f32 0.0, %v2111
        %v2113 = vpop.f32.mrb[0].mxu0
        %2114 = vdwg.mxu0
        %v2115 = vadd.f32 %v1953, %v2077
        %v2116 = vadd.f32 %v1954, %v2080
        %v2117 = vadd.f32 %v1955, %v2085
        %v2118 = vadd.f32 %v1956, %v2088
        %v2119 = vadd.f32 %v1957, %v2093
        %v2120 = vadd.f32 %v1958, %v2096
        %v2121 = vadd.f32 %v1959, %v2101
        %v2122 = vadd.f32 %v1960, %v2104
        %v2123 = vadd.f32 %v1961, %v2109
        %v2124 = vadd.f32 %v1962, %v2112
        %v2125 = vld [vmem:[#allocation2 + $0xc] sm:$0xff]
        %v2126 = vld [vmem:[#allocation2 + $0x14] sm:$0xff]
        %v2127 = vld [vmem:[#allocation2 + $0x1c] sm:$0xff]
        %v2128 = vld [vmem:[#allocation2 + $0x24] sm:$0xff]
        %v2129 = vld [vmem:[#allocation2 + $0x2c] sm:$0xff]
        %v2130 = vld [vmem:[#allocation2 + $0x34] sm:$0xff]
        %v2131 = vld [vmem:[#allocation2 + $0x3c] sm:$0xff]
        %v2132 = vld [vmem:[#allocation2 + $0x44] sm:$0xff]
        %v2133 = vld [vmem:[#allocation2 + $0x4c] sm:$0xff]
        %v2134 = vld [vmem:[#allocation2 + $0x54] sm:$0xff]
        %v2135 = vpack.c.bf16 %v2126, %v2125
        %v2136 = vpack.c.bf16 %v2128, %v2127
        %v2137 = vpack.c.bf16 %v2130, %v2129
        %v2138 = vpack.c.bf16 %v2132, %v2131
        %v2139 = vpack.c.bf16 %v2134, %v2133
        %s2140 = scalar_lea.vmem %s4, 240
        %v2141 = vld [vmem:[%s2140] sm:$0xf]
        %v2142 = vld [vmem:[%s2140 + $0x4] sm:$0xf]
        %v2143 = vld [vmem:[%s2140 + $0x8] sm:$0xf]
        %v2144 = vld [vmem:[%s2140 + $0xc] sm:$0xf]
        %v2145 = vld [vmem:[%s2140 + $0x10] sm:$0xf]
        %v2146 = vld [vmem:[%s2140 + $0x14] sm:$0xf]
        %v2147 = vld [vmem:[%s2140 + $0x18] sm:$0xf]
        %v2148 = vld [vmem:[%s2140 + $0x1c] sm:$0xf]
        %v2149 = vld [vmem:[%s2140 + $0x20] sm:$0xf]
        %v2150 = vld [vmem:[%s2140 + $0x24] sm:$0xf]
        %v2151 = vld [vmem:[%s2140 + $0x28] sm:$0xf]
        %v2152 = vld [vmem:[%s2140 + $0x2c] sm:$0xf]
        %v2165 = vunpack.c.l.b16 %v2141
        %v2166 = vunpack.c.l.b16 %v2142
        %v2167 = vunpack.c.l.b16 %v2143
        %v2168 = vunpack.c.l.b16 %v2144
        %v2169 = vunpack.c.l.b16 %v2145
        %v2170 = vunpack.c.l.b16 %v2146
        %v2171 = vunpack.c.l.b16 %v2147
        %v2172 = vunpack.c.l.b16 %v2148
        %v2173 = vunpack.c.l.b16 %v2149
        %v2174 = vunpack.c.l.b16 %v2150
        %v2175 = vunpack.c.l.b16 %v2151
        %v2176 = vunpack.c.l.b16 %v2152
        %v2177 = vpack.c.b16 %v2166, %v2165
        %v2178 = vpack.c.b16 %v2168, %v2167
        %v2179 = vpack.c.b16 %v2170, %v2169
        %v2180 = vpack.c.b16 %v2172, %v2171
        %v2181 = vpack.c.b16 %v2174, %v2173
        %v2182 = vpack.c.b16 %v2176, %v2175
        %v2190 = vsel %vm1247, %v2135, 0
        %v2193 = vsel %vm1247, %v2136, 0
        %v2196 = vsel %vm1247, %v2137, 0
        %v2199 = vsel %vm1247, %v2138, 0
        %v2202 = vsel %vm1247, %v2139, 0
        %2204 = vmatprep.subr.bf16.mxu0 0
        %2205 = vmatpush1.bf16.msra.mxu0 %v2177
        %2206 = vmatprep.subr.bf16.mxu0 0
        %2207 = vmatpush1.bf16.msra.mxu0 %v2178
        %2208 = vmatprep.subr.bf16.mxu0 0
        %2209 = vmatpush1.bf16.msra.mxu0 %v2179
        %2210 = vmatprep.subr.bf16.mxu0 0
        %2211 = vmatpush1.bf16.msra.mxu0 %v2180
        %2212 = vmatprep.subr.bf16.mxu0 0
        %2213 = vmatpush1.bf16.msra.mxu0 %v2181
        %2214 = vmatprep.subr.bf16.mxu0 0
        %2215 = vmatpush1.bf16.msra.mxu0 %v2182
        %2216 = vmatprep.subr.bf16.mxu0 0
        %2217 = vmatpush1.bf16.msra.mxu0 0
        %2218 = vmatprep.subr.bf16.mxu0 0
        %2219 = vmatpush1.bf16.msra.mxu0 0
        %2220 = vmatprep.subr.bf16.mxu0 0
        %2221 = vmatpush1.bf16.msra.mxu0 0
        %2222 = vmatprep.subr.bf16.mxu0 0
        %2223 = vmatpush1.bf16.msra.mxu0 0
        %2224 = vmatprep.subr.bf16.mxu0 0
        %2225 = vmatpush1.bf16.msra.mxu0 0
        %2226 = vmatprep.subr.bf16.mxu0 0
        %2227 = vmatpush1.bf16.msra.mxu0 0
        %2228 = vmatprep.subr.bf16.mxu0 0
        %2229 = vmatpush1.bf16.msra.mxu0 0
        %2230 = vmatprep.subr.bf16.mxu0 0
        %2231 = vmatpush1.bf16.msra.mxu0 0
        %2232 = vmatprep.subr.bf16.mxu0 0
        %2233 = vmatpush1.bf16.msra.mxu0 0
        %2234 = vmatprep.subr.bf16.mxu0 0
        %2235 = vmatpush1.bf16.msra.mxu0 0
        %2236 = vmatprep.mubr.bf16.mxu0 0
        %2237 = vmatmul.mubr.bf16.gmra.mrb[0].mxu0 %v2190
        %v2238 = vpop.f32.mrb[0].mxu0
        %v2239 = vadd.f32 0.0, %v2238
        %v2240 = vpop.f32.mrb[0].mxu0
        %v2241 = vpop.f32.mrb[0].mxu0
        %v2242 = vadd.f32 0.0, %v2241
        %v2243 = vpop.f32.mrb[0].mxu0
        %2244 = vmatprep.mubr.bf16.mxu0 0
        %2245 = vmatmul.mubr.bf16.gmra.mrb[0].mxu0 %v2193
        %v2246 = vpop.f32.mrb[0].mxu0
        %v2247 = vadd.f32 0.0, %v2246
        %v2248 = vpop.f32.mrb[0].mxu0
        %v2249 = vpop.f32.mrb[0].mxu0
        %v2250 = vadd.f32 0.0, %v2249
        %v2251 = vpop.f32.mrb[0].mxu0
        %2252 = vmatprep.mubr.bf16.mxu0 0
        %2253 = vmatmul.mubr.bf16.gmra.mrb[0].mxu0 %v2196
        %v2254 = vpop.f32.mrb[0].mxu0
        %v2255 = vadd.f32 0.0, %v2254
        %v2256 = vpop.f32.mrb[0].mxu0
        %v2257 = vpop.f32.mrb[0].mxu0
        %v2258 = vadd.f32 0.0, %v2257
        %v2259 = vpop.f32.mrb[0].mxu0
        %2260 = vmatprep.mubr.bf16.mxu0 0
        %2261 = vmatmul.mubr.bf16.gmra.mrb[0].mxu0 %v2199
        %v2262 = vpop.f32.mrb[0].mxu0
        %v2263 = vadd.f32 0.0, %v2262
        %v2264 = vpop.f32.mrb[0].mxu0
        %v2265 = vpop.f32.mrb[0].mxu0
        %v2266 = vadd.f32 0.0, %v2265
        %v2267 = vpop.f32.mrb[0].mxu0
        %2268 = vmatprep.mubr.bf16.mxu0 0
        %2269 = vmatmul.mubr.bf16.gmra.mrb[0].mxu0 %v2202
        %v2270 = vpop.f32.mrb[0].mxu0
        %v2271 = vadd.f32 0.0, %v2270
        %v2272 = vpop.f32.mrb[0].mxu0
        %v2273 = vpop.f32.mrb[0].mxu0
        %v2274 = vadd.f32 0.0, %v2273
        %v2275 = vpop.f32.mrb[0].mxu0
        %2276 = vdwg.mxu0
        %v2277 = vadd.f32 %v2115, %v2239
        %v2278 = vadd.f32 %v2116, %v2242
        %v2279 = vadd.f32 %v2117, %v2247
        %v2280 = vadd.f32 %v2118, %v2250
        %v2281 = vadd.f32 %v2119, %v2255
        %v2282 = vadd.f32 %v2120, %v2258
        %v2283 = vadd.f32 %v2121, %v2263
        %v2284 = vadd.f32 %v2122, %v2266
        %v2285 = vadd.f32 %v2123, %v2271
        %v2286 = vadd.f32 %v2124, %v2274
        %v2287 = vld [vmem:[#allocation2 + $0x14] sm:$0xff]
        %v2288 = vld [vmem:[#allocation2 + $0x1c] sm:$0xff]
        %v2289 = vld [vmem:[#allocation2 + $0x24] sm:$0xff]
        %v2290 = vld [vmem:[#allocation2 + $0x2c] sm:$0xff]
        %v2291 = vld [vmem:[#allocation2 + $0x34] sm:$0xff]
        %v2292 = vld [vmem:[#allocation2 + $0x3c] sm:$0xff]
        %v2293 = vld [vmem:[#allocation2 + $0x44] sm:$0xff]
        %v2294 = vld [vmem:[#allocation2 + $0x4c] sm:$0xff]
        %v2295 = vld [vmem:[#allocation2 + $0x54] sm:$0xff]
        %v2296 = vld [vmem:[#allocation2 + $0x5c] sm:$0xff]
        %v2297 = vpack.c.bf16 %v2288, %v2287
        %v2298 = vpack.c.bf16 %v2290, %v2289
        %v2299 = vpack.c.bf16 %v2292, %v2291
        %v2300 = vpack.c.bf16 %v2294, %v2293
        %v2301 = vpack.c.bf16 %v2296, %v2295
        %s2302 = scalar_lea.vmem %s4, 288
        %v2303 = vld [vmem:[%s2302] sm:$0xf]
        %v2304 = vld [vmem:[%s2302 + $0x4] sm:$0xf]
        %v2305 = vld [vmem:[%s2302 + $0x8] sm:$0xf]
        %v2306 = vld [vmem:[%s2302 + $0xc] sm:$0xf]
        %v2307 = vld [vmem:[%s2302 + $0x10] sm:$0xf]
        %v2308 = vld [vmem:[%s2302 + $0x14] sm:$0xf]
        %v2309 = vld [vmem:[%s2302 + $0x18] sm:$0xf]
        %v2310 = vld [vmem:[%s2302 + $0x1c] sm:$0xf]
        %v2311 = vld [vmem:[%s2302 + $0x20] sm:$0xf]
        %v2312 = vld [vmem:[%s2302 + $0x24] sm:$0xf]
        %v2313 = vld [vmem:[%s2302 + $0x28] sm:$0xf]
        %v2314 = vld [vmem:[%s2302 + $0x2c] sm:$0xf]
        %v2327 = vunpack.c.l.b16 %v2303
        %v2328 = vunpack.c.l.b16 %v2304
        %v2329 = vunpack.c.l.b16 %v2305
        %v2330 = vunpack.c.l.b16 %v2306
        %v2331 = vunpack.c.l.b16 %v2307
        %v2332 = vunpack.c.l.b16 %v2308
        %v2333 = vunpack.c.l.b16 %v2309
        %v2334 = vunpack.c.l.b16 %v2310
        %v2335 = vunpack.c.l.b16 %v2311
        %v2336 = vunpack.c.l.b16 %v2312
        %v2337 = vunpack.c.l.b16 %v2313
        %v2338 = vunpack.c.l.b16 %v2314
        %v2339 = vpack.c.b16 %v2328, %v2327
        %v2340 = vpack.c.b16 %v2330, %v2329
        %v2341 = vpack.c.b16 %v2332, %v2331
        %v2342 = vpack.c.b16 %v2334, %v2333
        %v2343 = vpack.c.b16 %v2336, %v2335
        %v2344 = vpack.c.b16 %v2338, %v2337
        %v2352 = vsel %vm1247, %v2297, 0
        %v2355 = vsel %vm1247, %v2298, 0
        %v2358 = vsel %vm1247, %v2299, 0
        %v2361 = vsel %vm1247, %v2300, 0
        %v2364 = vsel %vm1247, %v2301, 0
        %2366 = vmatprep.subr.bf16.mxu0 0
        %2367 = vmatpush1.bf16.msra.mxu0 %v2339
        %2368 = vmatprep.subr.bf16.mxu0 0
        %2369 = vmatpush1.bf16.msra.mxu0 %v2340
        %2370 = vmatprep.subr.bf16.mxu0 0
        %2371 = vmatpush1.bf16.msra.mxu0 %v2341
        %2372 = vmatprep.subr.bf16.mxu0 0
        %2373 = vmatpush1.bf16.msra.mxu0 %v2342
        %2374 = vmatprep.subr.bf16.mxu0 0
        %2375 = vmatpush1.bf16.msra.mxu0 %v2343
        %2376 = vmatprep.subr.bf16.mxu0 0
        %2377 = vmatpush1.bf16.msra.mxu0 %v2344
        %2378 = vmatprep.subr.bf16.mxu0 0
        %2379 = vmatpush1.bf16.msra.mxu0 0
        %2380 = vmatprep.subr.bf16.mxu0 0
        %2381 = vmatpush1.bf16.msra.mxu0 0
        %2382 = vmatprep.subr.bf16.mxu0 0
        %2383 = vmatpush1.bf16.msra.mxu0 0
        %2384 = vmatprep.subr.bf16.mxu0 0
        %2385 = vmatpush1.bf16.msra.mxu0 0
        %2386 = vmatprep.subr.bf16.mxu0 0
        %2387 = vmatpush1.bf16.msra.mxu0 0
        %2388 = vmatprep.subr.bf16.mxu0 0
        %2389 = vmatpush1.bf16.msra.mxu0 0
        %2390 = vmatprep.subr.bf16.mxu0 0
        %2391 = vmatpush1.bf16.msra.mxu0 0
        %2392 = vmatprep.subr.bf16.mxu0 0
        %2393 = vmatpush1.bf16.msra.mxu0 0
        %2394 = vmatprep.subr.bf16.mxu0 0
        %2395 = vmatpush1.bf16.msra.mxu0 0
        %2396 = vmatprep.subr.bf16.mxu0 0
        %2397 = vmatpush1.bf16.msra.mxu0 0
        %2398 = vmatprep.mubr.bf16.mxu0 0
        %2399 = vmatmul.mubr.bf16.gmra.mrb[0].mxu0 %v2352
        %v2400 = vpop.f32.mrb[0].mxu0
        %v2401 = vadd.f32 0.0, %v2400
        %v2402 = vpop.f32.mrb[0].mxu0
        %v2403 = vpop.f32.mrb[0].mxu0
        %v2404 = vadd.f32 0.0, %v2403
        %v2405 = vpop.f32.mrb[0].mxu0
        %2406 = vmatprep.mubr.bf16.mxu0 0
        %2407 = vmatmul.mubr.bf16.gmra.mrb[0].mxu0 %v2355
        %v2408 = vpop.f32.mrb[0].mxu0
        %v2409 = vadd.f32 0.0, %v2408
        %v2410 = vpop.f32.mrb[0].mxu0
        %v2411 = vpop.f32.mrb[0].mxu0
        %v2412 = vadd.f32 0.0, %v2411
        %v2413 = vpop.f32.mrb[0].mxu0
        %2414 = vmatprep.mubr.bf16.mxu0 0
        %2415 = vmatmul.mubr.bf16.gmra.mrb[0].mxu0 %v2358
        %v2416 = vpop.f32.mrb[0].mxu0
        %v2417 = vadd.f32 0.0, %v2416
        %v2418 = vpop.f32.mrb[0].mxu0
        %v2419 = vpop.f32.mrb[0].mxu0
        %v2420 = vadd.f32 0.0, %v2419
        %v2421 = vpop.f32.mrb[0].mxu0
        %2422 = vmatprep.mubr.bf16.mxu0 0
        %2423 = vmatmul.mubr.bf16.gmra.mrb[0].mxu0 %v2361
        %v2424 = vpop.f32.mrb[0].mxu0
        %v2425 = vadd.f32 0.0, %v2424
        %v2426 = vpop.f32.mrb[0].mxu0
        %v2427 = vpop.f32.mrb[0].mxu0
        %v2428 = vadd.f32 0.0, %v2427
        %v2429 = vpop.f32.mrb[0].mxu0
        %2430 = vmatprep.mubr.bf16.mxu0 0
        %2431 = vmatmul.mubr.bf16.gmra.mrb[0].mxu0 %v2364
        %v2432 = vpop.f32.mrb[0].mxu0
        %v2433 = vadd.f32 0.0, %v2432
        %v2434 = vpop.f32.mrb[0].mxu0
        %v2435 = vpop.f32.mrb[0].mxu0
        %v2436 = vadd.f32 0.0, %v2435
        %v2437 = vpop.f32.mrb[0].mxu0
        %2438 = vdwg.mxu0
        %v2439 = vadd.f32 %v2277, %v2401
        %v2440 = vadd.f32 %v2278, %v2404
        %v2441 = vadd.f32 %v2279, %v2409
        %v2442 = vadd.f32 %v2280, %v2412
        %v2443 = vadd.f32 %v2281, %v2417
        %v2444 = vadd.f32 %v2282, %v2420
        %v2445 = vadd.f32 %v2283, %v2425
        %v2446 = vadd.f32 %v2284, %v2428
        %v2447 = vadd.f32 %v2285, %v2433
        %v2448 = vadd.f32 %v2286, %v2436
        %v2449 = vld [vmem:[#allocation2 + $0x15] sm:$0xff]
        %v2450 = vld [vmem:[#allocation2 + $0x1d] sm:$0xff]
        %v2451 = vld [vmem:[#allocation2 + $0x25] sm:$0xff]
        %v2452 = vld [vmem:[#allocation2 + $0x2d] sm:$0xff]
        %v2453 = vld [vmem:[#allocation2 + $0x35] sm:$0xff]
        %v2454 = vld [vmem:[#allocation2 + $0x3d] sm:$0xff]
        %v2455 = vld [vmem:[#allocation2 + $0x45] sm:$0xff]
        %v2456 = vld [vmem:[#allocation2 + $0x4d] sm:$0xff]
        %v2457 = vld [vmem:[#allocation2 + $0x55] sm:$0xff]
        %v2458 = vld [vmem:[#allocation2 + $0x5d] sm:$0xff]
        %v2459 = vpack.c.bf16 %v2450, %v2449
        %v2460 = vpack.c.bf16 %v2452, %v2451
        %v2461 = vpack.c.bf16 %v2454, %v2453
        %v2462 = vpack.c.bf16 %v2456, %v2455
        %v2463 = vpack.c.bf16 %v2458, %v2457
        %s2464 = scalar_lea.vmem %s4, 336
        %v2465 = vld [vmem:[%s2464] sm:$0xf]
        %v2466 = vld [vmem:[%s2464 + $0x4] sm:$0xf]
        %v2467 = vld [vmem:[%s2464 + $0x8] sm:$0xf]
        %v2468 = vld [vmem:[%s2464 + $0xc] sm:$0xf]
        %v2469 = vld [vmem:[%s2464 + $0x10] sm:$0xf]
        %v2470 = vld [vmem:[%s2464 + $0x14] sm:$0xf]
        %v2471 = vld [vmem:[%s2464 + $0x18] sm:$0xf]
        %v2472 = vld [vmem:[%s2464 + $0x1c] sm:$0xf]
        %v2473 = vld [vmem:[%s2464 + $0x20] sm:$0xf]
        %v2474 = vld [vmem:[%s2464 + $0x24] sm:$0xf]
        %v2475 = vld [vmem:[%s2464 + $0x28] sm:$0xf]
        %v2476 = vld [vmem:[%s2464 + $0x2c] sm:$0xf]
        %v2489 = vunpack.c.l.b16 %v2465
        %v2490 = vunpack.c.l.b16 %v2466
        %v2491 = vunpack.c.l.b16 %v2467
        %v2492 = vunpack.c.l.b16 %v2468
        %v2493 = vunpack.c.l.b16 %v2469
        %v2494 = vunpack.c.l.b16 %v2470
        %v2495 = vunpack.c.l.b16 %v2471
        %v2496 = vunpack.c.l.b16 %v2472
        %v2497 = vunpack.c.l.b16 %v2473
        %v2498 = vunpack.c.l.b16 %v2474
        %v2499 = vunpack.c.l.b16 %v2475
        %v2500 = vunpack.c.l.b16 %v2476
        %v2501 = vpack.c.b16 %v2490, %v2489
        %v2502 = vpack.c.b16 %v2492, %v2491
        %v2503 = vpack.c.b16 %v2494, %v2493
        %v2504 = vpack.c.b16 %v2496, %v2495
        %v2505 = vpack.c.b16 %v2498, %v2497
        %v2506 = vpack.c.b16 %v2500, %v2499
        %v2514 = vsel %vm1247, %v2459, 0
        %v2517 = vsel %vm1247, %v2460, 0
        %v2520 = vsel %vm1247, %v2461, 0
        %v2523 = vsel %vm1247, %v2462, 0
        %v2526 = vsel %vm1247, %v2463, 0
        %2528 = vmatprep.subr.bf16.mxu0 0
        %2529 = vmatpush1.bf16.msra.mxu0 %v2501
        %2530 = vmatprep.subr.bf16.mxu0 0
        %2531 = vmatpush1.bf16.msra.mxu0 %v2502
        %2532 = vmatprep.subr.bf16.mxu0 0
        %2533 = vmatpush1.bf16.msra.mxu0 %v2503
        %2534 = vmatprep.subr.bf16.mxu0 0
        %2535 = vmatpush1.bf16.msra.mxu0 %v2504
        %2536 = vmatprep.subr.bf16.mxu0 0
        %2537 = vmatpush1.bf16.msra.mxu0 %v2505
        %2538 = vmatprep.subr.bf16.mxu0 0
        %2539 = vmatpush1.bf16.msra.mxu0 %v2506
        %2540 = vmatprep.subr.bf16.mxu0 0
        %2541 = vmatpush1.bf16.msra.mxu0 0
        %2542 = vmatprep.subr.bf16.mxu0 0
        %2543 = vmatpush1.bf16.msra.mxu0 0
        %2544 = vmatprep.subr.bf16.mxu0 0
        %2545 = vmatpush1.bf16.msra.mxu0 0
        %2546 = vmatprep.subr.bf16.mxu0 0
        %2547 = vmatpush1.bf16.msra.mxu0 0
        %2548 = vmatprep.subr.bf16.mxu0 0
        %2549 = vmatpush1.bf16.msra.mxu0 0
        %2550 = vmatprep.subr.bf16.mxu0 0
        %2551 = vmatpush1.bf16.msra.mxu0 0
        %2552 = vmatprep.subr.bf16.mxu0 0
        %2553 = vmatpush1.bf16.msra.mxu0 0
        %2554 = vmatprep.subr.bf16.mxu0 0
        %2555 = vmatpush1.bf16.msra.mxu0 0
        %2556 = vmatprep.subr.bf16.mxu0 0
        %2557 = vmatpush1.bf16.msra.mxu0 0
        %2558 = vmatprep.subr.bf16.mxu0 0
        %2559 = vmatpush1.bf16.msra.mxu0 0
        %2560 = vmatprep.mubr.bf16.mxu0 0
        %2561 = vmatmul.mubr.bf16.gmra.mrb[0].mxu0 %v2514
        %v2562 = vpop.f32.mrb[0].mxu0
        %v2563 = vadd.f32 0.0, %v2562
        %v2564 = vpop.f32.mrb[0].mxu0
        %v2565 = vpop.f32.mrb[0].mxu0
        %v2566 = vadd.f32 0.0, %v2565
        %v2567 = vpop.f32.mrb[0].mxu0
        %2568 = vmatprep.mubr.bf16.mxu0 0
        %2569 = vmatmul.mubr.bf16.gmra.mrb[0].mxu0 %v2517
        %v2570 = vpop.f32.mrb[0].mxu0
        %v2571 = vadd.f32 0.0, %v2570
        %v2572 = vpop.f32.mrb[0].mxu0
        %v2573 = vpop.f32.mrb[0].mxu0
        %v2574 = vadd.f32 0.0, %v2573
        %v2575 = vpop.f32.mrb[0].mxu0
        %2576 = vmatprep.mubr.bf16.mxu0 0
        %2577 = vmatmul.mubr.bf16.gmra.mrb[0].mxu0 %v2520
        %v2578 = vpop.f32.mrb[0].mxu0
        %v2579 = vadd.f32 0.0, %v2578
        %v2580 = vpop.f32.mrb[0].mxu0
        %v2581 = vpop.f32.mrb[0].mxu0
        %v2582 = vadd.f32 0.0, %v2581
        %v2583 = vpop.f32.mrb[0].mxu0
        %2584 = vmatprep.mubr.bf16.mxu0 0
        %2585 = vmatmul.mubr.bf16.gmra.mrb[0].mxu0 %v2523
        %v2586 = vpop.f32.mrb[0].mxu0
        %v2587 = vadd.f32 0.0, %v2586
        %v2588 = vpop.f32.mrb[0].mxu0
        %v2589 = vpop.f32.mrb[0].mxu0
        %v2590 = vadd.f32 0.0, %v2589
        %v2591 = vpop.f32.mrb[0].mxu0
        %2592 = vmatprep.mubr.bf16.mxu0 0
        %2593 = vmatmul.mubr.bf16.gmra.mrb[0].mxu0 %v2526
        %v2594 = vpop.f32.mrb[0].mxu0
        %v2595 = vadd.f32 0.0, %v2594
        %v2596 = vpop.f32.mrb[0].mxu0
        %v2597 = vpop.f32.mrb[0].mxu0
        %v2598 = vadd.f32 0.0, %v2597
        %v2599 = vpop.f32.mrb[0].mxu0
        %2600 = vdwg.mxu0
        %v2601 = vadd.f32 %v2439, %v2563
        %v2602 = vadd.f32 %v2440, %v2566
        %v2603 = vadd.f32 %v2441, %v2571
        %v2604 = vadd.f32 %v2442, %v2574
        %v2605 = vadd.f32 %v2443, %v2579
        %v2606 = vadd.f32 %v2444, %v2582
        %v2607 = vadd.f32 %v2445, %v2587
        %v2608 = vadd.f32 %v2446, %v2590
        %v2609 = vadd.f32 %v2447, %v2595
        %v2610 = vadd.f32 %v2448, %v2598
        %v2611 = vld [vmem:[#allocation2 + $0x16] sm:$0xff]
        %v2612 = vld [vmem:[#allocation2 + $0x1e] sm:$0xff]
        %v2613 = vld [vmem:[#allocation2 + $0x26] sm:$0xff]
        %v2614 = vld [vmem:[#allocation2 + $0x2e] sm:$0xff]
        %v2615 = vld [vmem:[#allocation2 + $0x36] sm:$0xff]
        %v2616 = vld [vmem:[#allocation2 + $0x3e] sm:$0xff]
        %v2617 = vld [vmem:[#allocation2 + $0x46] sm:$0xff]
        %v2618 = vld [vmem:[#allocation2 + $0x4e] sm:$0xff]
        %v2619 = vld [vmem:[#allocation2 + $0x56] sm:$0xff]
        %v2620 = vld [vmem:[#allocation2 + $0x5e] sm:$0xff]
        %v2621 = vpack.c.bf16 %v2612, %v2611
        %v2622 = vpack.c.bf16 %v2614, %v2613
        %v2623 = vpack.c.bf16 %v2616, %v2615
        %v2624 = vpack.c.bf16 %v2618, %v2617
        %v2625 = vpack.c.bf16 %v2620, %v2619
        %s2626 = scalar_lea.vmem %s4, 384
        %v2627 = vld [vmem:[%s2626] sm:$0xf]
        %v2628 = vld [vmem:[%s2626 + $0x4] sm:$0xf]
        %v2629 = vld [vmem:[%s2626 + $0x8] sm:$0xf]
        %v2630 = vld [vmem:[%s2626 + $0xc] sm:$0xf]
        %v2631 = vld [vmem:[%s2626 + $0x10] sm:$0xf]
        %v2632 = vld [vmem:[%s2626 + $0x14] sm:$0xf]
        %v2633 = vld [vmem:[%s2626 + $0x18] sm:$0xf]
        %v2634 = vld [vmem:[%s2626 + $0x1c] sm:$0xf]
        %v2635 = vld [vmem:[%s2626 + $0x20] sm:$0xf]
        %v2636 = vld [vmem:[%s2626 + $0x24] sm:$0xf]
        %v2637 = vld [vmem:[%s2626 + $0x28] sm:$0xf]
        %v2638 = vld [vmem:[%s2626 + $0x2c] sm:$0xf]
        %v2651 = vunpack.c.l.b16 %v2627
        %v2652 = vunpack.c.l.b16 %v2628
        %v2653 = vunpack.c.l.b16 %v2629
        %v2654 = vunpack.c.l.b16 %v2630
        %v2655 = vunpack.c.l.b16 %v2631
        %v2656 = vunpack.c.l.b16 %v2632
        %v2657 = vunpack.c.l.b16 %v2633
        %v2658 = vunpack.c.l.b16 %v2634
        %v2659 = vunpack.c.l.b16 %v2635
        %v2660 = vunpack.c.l.b16 %v2636
        %v2661 = vunpack.c.l.b16 %v2637
        %v2662 = vunpack.c.l.b16 %v2638
        %v2663 = vpack.c.b16 %v2652, %v2651
        %v2664 = vpack.c.b16 %v2654, %v2653
        %v2665 = vpack.c.b16 %v2656, %v2655
        %v2666 = vpack.c.b16 %v2658, %v2657
        %v2667 = vpack.c.b16 %v2660, %v2659
        %v2668 = vpack.c.b16 %v2662, %v2661
        %v2676 = vsel %vm1247, %v2621, 0
        %v2679 = vsel %vm1247, %v2622, 0
        %v2682 = vsel %vm1247, %v2623, 0
        %v2685 = vsel %vm1247, %v2624, 0
        %v2688 = vsel %vm1247, %v2625, 0
        %2690 = vmatprep.subr.bf16.mxu0 0
        %2691 = vmatpush1.bf16.msra.mxu0 %v2663
        %2692 = vmatprep.subr.bf16.mxu0 0
        %2693 = vmatpush1.bf16.msra.mxu0 %v2664
        %2694 = vmatprep.subr.bf16.mxu0 0
        %2695 = vmatpush1.bf16.msra.mxu0 %v2665
        %2696 = vmatprep.subr.bf16.mxu0 0
        %2697 = vmatpush1.bf16.msra.mxu0 %v2666
        %2698 = vmatprep.subr.bf16.mxu0 0
        %2699 = vmatpush1.bf16.msra.mxu0 %v2667
        %2700 = vmatprep.subr.bf16.mxu0 0
        %2701 = vmatpush1.bf16.msra.mxu0 %v2668
        %2702 = vmatprep.subr.bf16.mxu0 0
        %2703 = vmatpush1.bf16.msra.mxu0 0
        %2704 = vmatprep.subr.bf16.mxu0 0
        %2705 = vmatpush1.bf16.msra.mxu0 0
        %2706 = vmatprep.subr.bf16.mxu0 0
        %2707 = vmatpush1.bf16.msra.mxu0 0
        %2708 = vmatprep.subr.bf16.mxu0 0
        %2709 = vmatpush1.bf16.msra.mxu0 0
        %2710 = vmatprep.subr.bf16.mxu0 0
        %2711 = vmatpush1.bf16.msra.mxu0 0
        %2712 = vmatprep.subr.bf16.mxu0 0
        %2713 = vmatpush1.bf16.msra.mxu0 0
        %2714 = vmatprep.subr.bf16.mxu0 0
        %2715 = vmatpush1.bf16.msra.mxu0 0
        %2716 = vmatprep.subr.bf16.mxu0 0
        %2717 = vmatpush1.bf16.msra.mxu0 0
        %2718 = vmatprep.subr.bf16.mxu0 0
        %2719 = vmatpush1.bf16.msra.mxu0 0
        %2720 = vmatprep.subr.bf16.mxu0 0
        %2721 = vmatpush1.bf16.msra.mxu0 0
        %2722 = vmatprep.mubr.bf16.mxu0 0
        %2723 = vmatmul.mubr.bf16.gmra.mrb[0].mxu0 %v2676
        %v2724 = vpop.f32.mrb[0].mxu0
        %v2725 = vadd.f32 0.0, %v2724
        %v2726 = vpop.f32.mrb[0].mxu0
        %v2727 = vpop.f32.mrb[0].mxu0
        %v2728 = vadd.f32 0.0, %v2727
        %v2729 = vpop.f32.mrb[0].mxu0
        %2730 = vmatprep.mubr.bf16.mxu0 0
        %2731 = vmatmul.mubr.bf16.gmra.mrb[0].mxu0 %v2679
        %v2732 = vpop.f32.mrb[0].mxu0
        %v2733 = vadd.f32 0.0, %v2732
        %v2734 = vpop.f32.mrb[0].mxu0
        %v2735 = vpop.f32.mrb[0].mxu0
        %v2736 = vadd.f32 0.0, %v2735
        %v2737 = vpop.f32.mrb[0].mxu0
        %2738 = vmatprep.mubr.bf16.mxu0 0
        %2739 = vmatmul.mubr.bf16.gmra.mrb[0].mxu0 %v2682
        %v2740 = vpop.f32.mrb[0].mxu0
        %v2741 = vadd.f32 0.0, %v2740
        %v2742 = vpop.f32.mrb[0].mxu0
        %v2743 = vpop.f32.mrb[0].mxu0
        %v2744 = vadd.f32 0.0, %v2743
        %v2745 = vpop.f32.mrb[0].mxu0
        %2746 = vmatprep.mubr.bf16.mxu0 0
        %2747 = vmatmul.mubr.bf16.gmra.mrb[0].mxu0 %v2685
        %v2748 = vpop.f32.mrb[0].mxu0
        %v2749 = vadd.f32 0.0, %v2748
        %v2750 = vpop.f32.mrb[0].mxu0
        %v2751 = vpop.f32.mrb[0].mxu0
        %v2752 = vadd.f32 0.0, %v2751
        %v2753 = vpop.f32.mrb[0].mxu0
        %2754 = vmatprep.mubr.bf16.mxu0 0
        %2755 = vmatmul.mubr.bf16.gmra.mrb[0].mxu0 %v2688
        %v2756 = vpop.f32.mrb[0].mxu0
        %v2757 = vadd.f32 0.0, %v2756
        %v2758 = vpop.f32.mrb[0].mxu0
        %v2759 = vpop.f32.mrb[0].mxu0
        %v2760 = vadd.f32 0.0, %v2759
        %v2761 = vpop.f32.mrb[0].mxu0
        %2762 = vdwg.mxu0
        %v2763 = vadd.f32 %v2601, %v2725
        %v2764 = vadd.f32 %v2602, %v2728
        %v2765 = vadd.f32 %v2603, %v2733
        %v2766 = vadd.f32 %v2604, %v2736
        %v2767 = vadd.f32 %v2605, %v2741
        %v2768 = vadd.f32 %v2606, %v2744
        %v2769 = vadd.f32 %v2607, %v2749
        %v2770 = vadd.f32 %v2608, %v2752
        %v2771 = vadd.f32 %v2609, %v2757
        %v2772 = vadd.f32 %v2610, %v2760
        %v2773 = vld [vmem:[%s5] sm:$0x1]
        %v2775 = vlaneseq
        %v2776 = vshrl.u32 %v2775, 7
        %v2777 = vsub.s32 0, %v2776
        %v2778 = vrot.slane %v2773, %v2777
        %v2780 = vmul.f32 %v2763, %v2778
        %v2781 = vmul.f32 %v2764, %v2778
        %v2782 = vmul.f32 %v2765, %v2778
        %v2783 = vmul.f32 %v2766, %v2778
        %v2784 = vmul.f32 %v2767, %v2778
        %v2785 = vmul.f32 %v2768, %v2778
        %v2786 = vmul.f32 %v2769, %v2778
        %v2787 = vmul.f32 %v2770, %v2778
        %v2788 = vmul.f32 %v2771, %v2778
        %v2789 = vmul.f32 %v2772, %v2778
        %v2790 = vld [vmem:[%s6] sm:$0x1]
        %v2792 = vlaneseq
        %v2793 = vshrl.u32 %v2792, 7
        %v2794 = vsub.s32 0, %v2793
        %v2795 = vrot.slane %v2790, %v2794
        %v2797 = vadd.f32 %v2780, %v2795
        %v2798 = vadd.f32 %v2781, %v2795
        %v2799 = vadd.f32 %v2782, %v2795
        %v2800 = vadd.f32 %v2783, %v2795
        %v2801 = vadd.f32 %v2784, %v2795
        %v2802 = vadd.f32 %v2785, %v2795
        %v2803 = vadd.f32 %v2786, %v2795
        %v2804 = vadd.f32 %v2787, %v2795
        %v2805 = vadd.f32 %v2788, %v2795
        %v2806 = vadd.f32 %v2789, %v2795
        %v2807 = vmax.f32 %v2797, 0.0
        %v2808 = vmax.f32 %v2798, 0.0
        %v2809 = vmax.f32 %v2799, 0.0
        %v2810 = vmax.f32 %v2800, 0.0
        %v2811 = vmax.f32 %v2801, 0.0
        %v2812 = vmax.f32 %v2802, 0.0
        %v2813 = vmax.f32 %v2803, 0.0
        %v2814 = vmax.f32 %v2804, 0.0
        %v2815 = vmax.f32 %v2805, 0.0
        %v2816 = vmax.f32 %v2806, 0.0
        %2817 = vst.msk [vmem:[#allocation2] sm:$0xff] %vm1247, 0.0
        %2818 = vst.msk [vmem:[#allocation2 + $0x8] sm:$0xff] %vm1247, 0.0
        %2819 = vst.msk [vmem:[#allocation2 + $0x10] sm:$0xff] %vm1247, 0.0
        %2820 = vst.msk [vmem:[#allocation2 + $0x18] sm:$0xff] %vm1247, 0.0
        %2821 = vst.msk [vmem:[#allocation2 + $0x20] sm:$0xff] %vm1247, 0.0
        %2822 = vst.msk [vmem:[#allocation2 + $0x28] sm:$0xff] %vm1247, 0.0
        %2823 = vst.msk [vmem:[#allocation2 + $0x30] sm:$0xff] %vm1247, 0.0
        %2824 = vst.msk [vmem:[#allocation2 + $0x38] sm:$0xff] %vm1247, 0.0
        %2825 = vst.msk [vmem:[#allocation2 + $0x40] sm:$0xff] %vm1247, 0.0
        %2826 = vst.msk [vmem:[#allocation2 + $0x48] sm:$0xff] %vm1247, 0.0
        %2827 = vst.msk [vmem:[#allocation2 + $0x50] sm:$0xff] %vm1247, 0.0
        %2828 = vst.msk [vmem:[#allocation2 + $0x58] sm:$0xff] %vm1247, 0.0
        %2829 = vst.msk [vmem:[#allocation2 + $0x60] sm:$0xff] %vm1247, 0.0
        %2830 = vst.msk [vmem:[#allocation2 + $0x68] sm:$0xf] %vm1261, 0.0
        %2831 = vrot.lane.b32.xlu0 %v1225, 96
        %v2832 = vpop.permute.xlu0 %2831
        %2834 = vst.msk [vmem:[#allocation2 + $0xb] sm:$0xff] %vm1247, %v2832
        %2835 = vrot.lane.b32.xlu0 %v1228, 96
        %v2836 = vpop.permute.xlu0 %2835
        %2838 = vst.msk [vmem:[#allocation2 + $0x15] sm:$0xff] %vm1247, %v2836
        %2839 = vrot.lane.b32.xlu0 %v1231, 96
        %v2840 = vpop.permute.xlu0 %2839
        %2842 = vst.msk [vmem:[#allocation2 + $0x1f] sm:$0xff] %vm1247, %v2840
        %2843 = vrot.lane.b32.xlu0 %v1234, 96
        %v2844 = vpop.permute.xlu0 %2843
        %2846 = vst.msk [vmem:[#allocation2 + $0x29] sm:$0xff] %vm1247, %v2844
        %2847 = vrot.lane.b32.xlu0 %v1237, 96
        %v2848 = vpop.permute.xlu0 %2847
        %2850 = vst.msk [vmem:[#allocation2 + $0x33] sm:$0xff] %vm1247, %v2848
        %2851 = vrot.lane.b32.xlu0 %v1240, 96
        %v2852 = vpop.permute.xlu0 %2851
        %2854 = vst.msk [vmem:[#allocation2 + $0x3d] sm:$0xff] %vm1247, %v2852
        %2855 = vrot.lane.b32.xlu0 %v1243, 96
        %v2856 = vpop.permute.xlu0 %2855
        %2858 = vst.msk [vmem:[#allocation2 + $0x47] sm:$0xff] %vm1247, %v2856
        %2859 = vrot.lane.b32.xlu0 %v1246, 96
        %v2860 = vpop.permute.xlu0 %2859
        %2862 = vst.msk [vmem:[#allocation2 + $0x51] sm:$0xff] %vm1247, %v2860
        %v2863 = vld [vmem:[#allocation2] sm:$0xff]
        %v2864 = vld [vmem:[#allocation2 + $0x8] sm:$0xff]
        %v2865 = vld [vmem:[#allocation2 + $0x10] sm:$0xff]
        %v2866 = vld [vmem:[#allocation2 + $0x18] sm:$0xff]
        %v2867 = vld [vmem:[#allocation2 + $0x20] sm:$0xff]
        %v2868 = vld [vmem:[#allocation2 + $0x28] sm:$0xff]
        %v2869 = vld [vmem:[#allocation2 + $0x30] sm:$0xff]
        %v2870 = vld [vmem:[#allocation2 + $0x38] sm:$0xff]
        %v2871 = vld [vmem:[#allocation2 + $0x40] sm:$0xff]
        %v2872 = vld [vmem:[#allocation2 + $0x48] sm:$0xff]
        %v2873 = vpack.c.bf16 %v2864, %v2863
        %v2874 = vpack.c.bf16 %v2866, %v2865
        %v2875 = vpack.c.bf16 %v2868, %v2867
        %v2876 = vpack.c.bf16 %v2870, %v2869
        %v2877 = vpack.c.bf16 %v2872, %v2871
        %s2878 = scalar_lea.vmem %s4, 432
        %v2879 = vld [vmem:[%s2878] sm:$0xf]
        %v2880 = vld [vmem:[%s2878 + $0x4] sm:$0xf]
        %v2881 = vld [vmem:[%s2878 + $0x8] sm:$0xf]
        %v2882 = vld [vmem:[%s2878 + $0xc] sm:$0xf]
        %v2883 = vld [vmem:[%s2878 + $0x10] sm:$0xf]
        %v2884 = vld [vmem:[%s2878 + $0x14] sm:$0xf]
        %v2885 = vld [vmem:[%s2878 + $0x18] sm:$0xf]
        %v2886 = vld [vmem:[%s2878 + $0x1c] sm:$0xf]
        %v2887 = vld [vmem:[%s2878 + $0x20] sm:$0xf]
        %v2888 = vld [vmem:[%s2878 + $0x24] sm:$0xf]
        %v2889 = vld [vmem:[%s2878 + $0x28] sm:$0xf]
        %v2890 = vld [vmem:[%s2878 + $0x2c] sm:$0xf]
        %v2891 = vld [vmem:[#allocation2 + $0x1] sm:$0xff]
        %v2892 = vld [vmem:[#allocation2 + $0x9] sm:$0xff]
        %v2893 = vld [vmem:[#allocation2 + $0x11] sm:$0xff]
        %v2894 = vld [vmem:[#allocation2 + $0x19] sm:$0xff]
        %v2895 = vld [vmem:[#allocation2 + $0x21] sm:$0xff]
        %v2896 = vld [vmem:[#allocation2 + $0x29] sm:$0xff]
        %v2897 = vld [vmem:[#allocation2 + $0x31] sm:$0xff]
        %v2898 = vld [vmem:[#allocation2 + $0x39] sm:$0xff]
        %v2899 = vld [vmem:[#allocation2 + $0x41] sm:$0xff]
        %v2900 = vld [vmem:[#allocation2 + $0x49] sm:$0xff]
        %v2901 = vpack.c.bf16 %v2892, %v2891
        %v2902 = vpack.c.bf16 %v2894, %v2893
        %v2903 = vpack.c.bf16 %v2896, %v2895
        %v2904 = vpack.c.bf16 %v2898, %v2897
        %v2905 = vpack.c.bf16 %v2900, %v2899
        %s2906 = scalar_lea.vmem %s4, 480
        %v2907 = vld [vmem:[%s2906] sm:$0xf]
        %v2908 = vld [vmem:[%s2906 + $0x4] sm:$0xf]
        %v2909 = vld [vmem:[%s2906 + $0x8] sm:$0xf]
        %v2910 = vld [vmem:[%s2906 + $0xc] sm:$0xf]
        %v2911 = vld [vmem:[%s2906 + $0x10] sm:$0xf]
        %v2912 = vld [vmem:[%s2906 + $0x14] sm:$0xf]
        %v2913 = vld [vmem:[%s2906 + $0x18] sm:$0xf]
        %v2914 = vld [vmem:[%s2906 + $0x1c] sm:$0xf]
        %v2915 = vld [vmem:[%s2906 + $0x20] sm:$0xf]
        %v2916 = vld [vmem:[%s2906 + $0x24] sm:$0xf]
        %v2917 = vld [vmem:[%s2906 + $0x28] sm:$0xf]
        %v2918 = vld [vmem:[%s2906 + $0x2c] sm:$0xf]
        %v2931 = vunpack.c.l.b16 %v2907
        %v2932 = vunpack.c.l.b16 %v2908
        %v2933 = vunpack.c.l.b16 %v2909
        %v2934 = vunpack.c.l.b16 %v2910
        %v2935 = vunpack.c.l.b16 %v2911
        %v2936 = vunpack.c.l.b16 %v2912
        %v2937 = vunpack.c.l.b16 %v2913
        %v2938 = vunpack.c.l.b16 %v2914
        %v2939 = vunpack.c.l.b16 %v2915
        %v2940 = vunpack.c.l.b16 %v2916
        %v2941 = vunpack.c.l.b16 %v2917
        %v2942 = vunpack.c.l.b16 %v2918
        %v2943 = vpack.c.b16 %v2932, %v2931
        %v2944 = vpack.c.b16 %v2934, %v2933
        %v2945 = vpack.c.b16 %v2936, %v2935
        %v2946 = vpack.c.b16 %v2938, %v2937
        %v2947 = vpack.c.b16 %v2940, %v2939
        %v2948 = vpack.c.b16 %v2942, %v2941
        %v2956 = vsel %vm1247, %v2901, 0
        %v2959 = vsel %vm1247, %v2902, 0
        %v2962 = vsel %vm1247, %v2903, 0
        %v2965 = vsel %vm1247, %v2904, 0
        %v2968 = vsel %vm1247, %v2905, 0
        %2970 = vmatprep.subr.bf16.mxu0 0
        %2971 = vmatpush1.bf16.msra.mxu0 %v2943
        %2972 = vmatprep.subr.bf16.mxu0 0
        %2973 = vmatpush1.bf16.msra.mxu0 %v2944
        %2974 = vmatprep.subr.bf16.mxu0 0
        %2975 = vmatpush1.bf16.msra.mxu0 %v2945
        %2976 = vmatprep.subr.bf16.mxu0 0
        %2977 = vmatpush1.bf16.msra.mxu0 %v2946
        %2978 = vmatprep.subr.bf16.mxu0 0
        %2979 = vmatpush1.bf16.msra.mxu0 %v2947
        %2980 = vmatprep.subr.bf16.mxu0 0
        %2981 = vmatpush1.bf16.msra.mxu0 %v2948
        %2982 = vmatprep.subr.bf16.mxu0 0
        %2983 = vmatpush1.bf16.msra.mxu0 0
        %2984 = vmatprep.subr.bf16.mxu0 0
        %2985 = vmatpush1.bf16.msra.mxu0 0
        %2986 = vmatprep.subr.bf16.mxu0 0
        %2987 = vmatpush1.bf16.msra.mxu0 0
        %2988 = vmatprep.subr.bf16.mxu0 0
        %2989 = vmatpush1.bf16.msra.mxu0 0
        %2990 = vmatprep.subr.bf16.mxu0 0
        %2991 = vmatpush1.bf16.msra.mxu0 0
        %2992 = vmatprep.subr.bf16.mxu0 0
        %2993 = vmatpush1.bf16.msra.mxu0 0
        %2994 = vmatprep.subr.bf16.mxu0 0
        %2995 = vmatpush1.bf16.msra.mxu0 0
        %2996 = vmatprep.subr.bf16.mxu0 0
        %2997 = vmatpush1.bf16.msra.mxu0 0
        %2998 = vmatprep.subr.bf16.mxu0 0
        %2999 = vmatpush1.bf16.msra.mxu0 0
        %3000 = vmatprep.subr.bf16.mxu0 0
        %3001 = vmatpush1.bf16.msra.mxu0 0
        %3002 = vmatprep.mubr.bf16.mxu0 0
        %3003 = vmatmul.mubr.bf16.gmra.mrb[0].mxu0 %v2956
        %v3004 = vpop.f32.mrb[0].mxu0
        %v3005 = vadd.f32 0.0, %v3004
        %v3006 = vpop.f32.mrb[0].mxu0
        %v3007 = vpop.f32.mrb[0].mxu0
        %v3008 = vadd.f32 0.0, %v3007
        %v3009 = vpop.f32.mrb[0].mxu0
        %3010 = vmatprep.mubr.bf16.mxu0 0
        %3011 = vmatmul.mubr.bf16.gmra.mrb[0].mxu0 %v2959
        %v3012 = vpop.f32.mrb[0].mxu0
        %v3013 = vadd.f32 0.0, %v3012
        %v3014 = vpop.f32.mrb[0].mxu0
        %v3015 = vpop.f32.mrb[0].mxu0
        %v3016 = vadd.f32 0.0, %v3015
        %v3017 = vpop.f32.mrb[0].mxu0
        %3018 = vmatprep.mubr.bf16.mxu0 0
        %3019 = vmatmul.mubr.bf16.gmra.mrb[0].mxu0 %v2962
        %v3020 = vpop.f32.mrb[0].mxu0
        %v3021 = vadd.f32 0.0, %v3020
        %v3022 = vpop.f32.mrb[0].mxu0
        %v3023 = vpop.f32.mrb[0].mxu0
        %v3024 = vadd.f32 0.0, %v3023
        %v3025 = vpop.f32.mrb[0].mxu0
        %3026 = vmatprep.mubr.bf16.mxu0 0
        %3027 = vmatmul.mubr.bf16.gmra.mrb[0].mxu0 %v2965
        %v3028 = vpop.f32.mrb[0].mxu0
        %v3029 = vadd.f32 0.0, %v3028
        %v3030 = vpop.f32.mrb[0].mxu0
        %v3031 = vpop.f32.mrb[0].mxu0
        %v3032 = vadd.f32 0.0, %v3031
        %v3033 = vpop.f32.mrb[0].mxu0
        %3034 = vmatprep.mubr.bf16.mxu0 0
        %3035 = vmatmul.mubr.bf16.gmra.mrb[0].mxu0 %v2968
        %v3036 = vpop.f32.mrb[0].mxu0
        %v3037 = vadd.f32 0.0, %v3036
        %v3038 = vpop.f32.mrb[0].mxu0
        %v3039 = vpop.f32.mrb[0].mxu0
        %v3040 = vadd.f32 0.0, %v3039
        %v3041 = vpop.f32.mrb[0].mxu0
        %3042 = vdwg.mxu0
        %v3055 = vunpack.c.l.b16 %v2879
        %v3056 = vunpack.c.l.b16 %v2880
        %v3057 = vunpack.c.l.b16 %v2881
        %v3058 = vunpack.c.l.b16 %v2882
        %v3059 = vunpack.c.l.b16 %v2883
        %v3060 = vunpack.c.l.b16 %v2884
        %v3061 = vunpack.c.l.b16 %v2885
        %v3062 = vunpack.c.l.b16 %v2886
        %v3063 = vunpack.c.l.b16 %v2887
        %v3064 = vunpack.c.l.b16 %v2888
        %v3065 = vunpack.c.l.b16 %v2889
        %v3066 = vunpack.c.l.b16 %v2890
        %v3067 = vpack.c.b16 %v3056, %v3055
        %v3068 = vpack.c.b16 %v3058, %v3057
        %v3069 = vpack.c.b16 %v3060, %v3059
        %v3070 = vpack.c.b16 %v3062, %v3061
        %v3071 = vpack.c.b16 %v3064, %v3063
        %v3072 = vpack.c.b16 %v3066, %v3065
        %v3080 = vsel %vm1247, %v2873, 0
        %v3083 = vsel %vm1247, %v2874, 0
        %v3086 = vsel %vm1247, %v2875, 0
        %v3089 = vsel %vm1247, %v2876, 0
        %v3092 = vsel %vm1247, %v2877, 0
        %3094 = vmatprep.subr.bf16.mxu0 0
        %3095 = vmatpush1.bf16.msra.mxu0 %v3067
        %3096 = vmatprep.subr.bf16.mxu0 0
        %3097 = vmatpush1.bf16.msra.mxu0 %v3068
        %3098 = vmatprep.subr.bf16.mxu0 0
        %3099 = vmatpush1.bf16.msra.mxu0 %v3069
        %3100 = vmatprep.subr.bf16.mxu0 0
        %3101 = vmatpush1.bf16.msra.mxu0 %v3070
        %3102 = vmatprep.subr.bf16.mxu0 0
        %3103 = vmatpush1.bf16.msra.mxu0 %v3071
        %3104 = vmatprep.subr.bf16.mxu0 0
        %3105 = vmatpush1.bf16.msra.mxu0 %v3072
        %3106 = vmatprep.subr.bf16.mxu0 0
        %3107 = vmatpush1.bf16.msra.mxu0 0
        %3108 = vmatprep.subr.bf16.mxu0 0
        %3109 = vmatpush1.bf16.msra.mxu0 0
        %3110 = vmatprep.subr.bf16.mxu0 0
        %3111 = vmatpush1.bf16.msra.mxu0 0
        %3112 = vmatprep.subr.bf16.mxu0 0
        %3113 = vmatpush1.bf16.msra.mxu0 0
        %3114 = vmatprep.subr.bf16.mxu0 0
        %3115 = vmatpush1.bf16.msra.mxu0 0
        %3116 = vmatprep.subr.bf16.mxu0 0
        %3117 = vmatpush1.bf16.msra.mxu0 0
        %3118 = vmatprep.subr.bf16.mxu0 0
        %3119 = vmatpush1.bf16.msra.mxu0 0
        %3120 = vmatprep.subr.bf16.mxu0 0
        %3121 = vmatpush1.bf16.msra.mxu0 0
        %3122 = vmatprep.subr.bf16.mxu0 0
        %3123 = vmatpush1.bf16.msra.mxu0 0
        %3124 = vmatprep.subr.bf16.mxu0 0
        %3125 = vmatpush1.bf16.msra.mxu0 0
        %3126 = vmatprep.mubr.bf16.mxu0 0
        %3127 = vmatmul.mubr.bf16.gmra.mrb[0].mxu0 %v3080
        %v3128 = vpop.f32.mrb[0].mxu0
        %v3129 = vadd.f32 %v3005, %v3128
        %v3130 = vpop.f32.mrb[0].mxu0
        %v3131 = vpop.f32.mrb[0].mxu0
        %v3132 = vadd.f32 %v3008, %v3131
        %v3133 = vpop.f32.mrb[0].mxu0
        %3134 = vmatprep.mubr.bf16.mxu0 0
        %3135 = vmatmul.mubr.bf16.gmra.mrb[0].mxu0 %v3083
        %v3136 = vpop.f32.mrb[0].mxu0
        %v3137 = vadd.f32 %v3013, %v3136
        %v3138 = vpop.f32.mrb[0].mxu0
        %v3139 = vpop.f32.mrb[0].mxu0
        %v3140 = vadd.f32 %v3016, %v3139
        %v3141 = vpop.f32.mrb[0].mxu0
        %3142 = vmatprep.mubr.bf16.mxu0 0
        %3143 = vmatmul.mubr.bf16.gmra.mrb[0].mxu0 %v3086
        %v3144 = vpop.f32.mrb[0].mxu0
        %v3145 = vadd.f32 %v3021, %v3144
        %v3146 = vpop.f32.mrb[0].mxu0
        %v3147 = vpop.f32.mrb[0].mxu0
        %v3148 = vadd.f32 %v3024, %v3147
        %v3149 = vpop.f32.mrb[0].mxu0
        %3150 = vmatprep.mubr.bf16.mxu0 0
        %3151 = vmatmul.mubr.bf16.gmra.mrb[0].mxu0 %v3089
        %v3152 = vpop.f32.mrb[0].mxu0
        %v3153 = vadd.f32 %v3029, %v3152
        %v3154 = vpop.f32.mrb[0].mxu0
        %v3155 = vpop.f32.mrb[0].mxu0
        %v3156 = vadd.f32 %v3032, %v3155
        %v3157 = vpop.f32.mrb[0].mxu0
        %3158 = vmatprep.mubr.bf16.mxu0 0
        %3159 = vmatmul.mubr.bf16.gmra.mrb[0].mxu0 %v3092
        %v3160 = vpop.f32.mrb[0].mxu0
        %v3161 = vadd.f32 %v3037, %v3160
        %v3162 = vpop.f32.mrb[0].mxu0
        %v3163 = vpop.f32.mrb[0].mxu0
        %v3164 = vadd.f32 %v3040, %v3163
        %v3165 = vpop.f32.mrb[0].mxu0
        %3166 = vdwg.mxu0
        %v3167 = vld [vmem:[#allocation2 + $0x2] sm:$0xff]
        %v3168 = vld [vmem:[#allocation2 + $0xa] sm:$0xff]
        %v3169 = vld [vmem:[#allocation2 + $0x12] sm:$0xff]
        %v3170 = vld [vmem:[#allocation2 + $0x1a] sm:$0xff]
        %v3171 = vld [vmem:[#allocation2 + $0x22] sm:$0xff]
        %v3172 = vld [vmem:[#allocation2 + $0x2a] sm:$0xff]
        %v3173 = vld [vmem:[#allocation2 + $0x32] sm:$0xff]
        %v3174 = vld [vmem:[#allocation2 + $0x3a] sm:$0xff]
        %v3175 = vld [vmem:[#allocation2 + $0x42] sm:$0xff]
        %v3176 = vld [vmem:[#allocation2 + $0x4a] sm:$0xff]
        %v3177 = vpack.c.bf16 %v3168, %v3167
        %v3178 = vpack.c.bf16 %v3170, %v3169
        %v3179 = vpack.c.bf16 %v3172, %v3171
        %v3180 = vpack.c.bf16 %v3174, %v3173
        %v3181 = vpack.c.bf16 %v3176, %v3175
        %s3182 = scalar_lea.vmem %s4, 528
        %v3183 = vld [vmem:[%s3182] sm:$0xf]
        %v3184 = vld [vmem:[%s3182 + $0x4] sm:$0xf]
        %v3185 = vld [vmem:[%s3182 + $0x8] sm:$0xf]
        %v3186 = vld [vmem:[%s3182 + $0xc] sm:$0xf]
        %v3187 = vld [vmem:[%s3182 + $0x10] sm:$0xf]
        %v3188 = vld [vmem:[%s3182 + $0x14] sm:$0xf]
        %v3189 = vld [vmem:[%s3182 + $0x18] sm:$0xf]
        %v3190 = vld [vmem:[%s3182 + $0x1c] sm:$0xf]
        %v3191 = vld [vmem:[%s3182 + $0x20] sm:$0xf]
        %v3192 = vld [vmem:[%s3182 + $0x24] sm:$0xf]
        %v3193 = vld [vmem:[%s3182 + $0x28] sm:$0xf]
        %v3194 = vld [vmem:[%s3182 + $0x2c] sm:$0xf]
        %v3207 = vunpack.c.l.b16 %v3183
        %v3208 = vunpack.c.l.b16 %v3184
        %v3209 = vunpack.c.l.b16 %v3185
        %v3210 = vunpack.c.l.b16 %v3186
        %v3211 = vunpack.c.l.b16 %v3187
        %v3212 = vunpack.c.l.b16 %v3188
        %v3213 = vunpack.c.l.b16 %v3189
        %v3214 = vunpack.c.l.b16 %v3190
        %v3215 = vunpack.c.l.b16 %v3191
        %v3216 = vunpack.c.l.b16 %v3192
        %v3217 = vunpack.c.l.b16 %v3193
        %v3218 = vunpack.c.l.b16 %v3194
        %v3219 = vpack.c.b16 %v3208, %v3207
        %v3220 = vpack.c.b16 %v3210, %v3209
        %v3221 = vpack.c.b16 %v3212, %v3211
        %v3222 = vpack.c.b16 %v3214, %v3213
        %v3223 = vpack.c.b16 %v3216, %v3215
        %v3224 = vpack.c.b16 %v3218, %v3217
        %v3232 = vsel %vm1247, %v3177, 0
        %v3235 = vsel %vm1247, %v3178, 0
        %v3238 = vsel %vm1247, %v3179, 0
        %v3241 = vsel %vm1247, %v3180, 0
        %v3244 = vsel %vm1247, %v3181, 0
        %3246 = vmatprep.subr.bf16.mxu0 0
        %3247 = vmatpush1.bf16.msra.mxu0 %v3219
        %3248 = vmatprep.subr.bf16.mxu0 0
        %3249 = vmatpush1.bf16.msra.mxu0 %v3220
        %3250 = vmatprep.subr.bf16.mxu0 0
        %3251 = vmatpush1.bf16.msra.mxu0 %v3221
        %3252 = vmatprep.subr.bf16.mxu0 0
        %3253 = vmatpush1.bf16.msra.mxu0 %v3222
        %3254 = vmatprep.subr.bf16.mxu0 0
        %3255 = vmatpush1.bf16.msra.mxu0 %v3223
        %3256 = vmatprep.subr.bf16.mxu0 0
        %3257 = vmatpush1.bf16.msra.mxu0 %v3224
        %3258 = vmatprep.subr.bf16.mxu0 0
        %3259 = vmatpush1.bf16.msra.mxu0 0
        %3260 = vmatprep.subr.bf16.mxu0 0
        %3261 = vmatpush1.bf16.msra.mxu0 0
        %3262 = vmatprep.subr.bf16.mxu0 0
        %3263 = vmatpush1.bf16.msra.mxu0 0
        %3264 = vmatprep.subr.bf16.mxu0 0
        %3265 = vmatpush1.bf16.msra.mxu0 0
        %3266 = vmatprep.subr.bf16.mxu0 0
        %3267 = vmatpush1.bf16.msra.mxu0 0
        %3268 = vmatprep.subr.bf16.mxu0 0
        %3269 = vmatpush1.bf16.msra.mxu0 0
        %3270 = vmatprep.subr.bf16.mxu0 0
        %3271 = vmatpush1.bf16.msra.mxu0 0
        %3272 = vmatprep.subr.bf16.mxu0 0
        %3273 = vmatpush1.bf16.msra.mxu0 0
        %3274 = vmatprep.subr.bf16.mxu0 0
        %3275 = vmatpush1.bf16.msra.mxu0 0
        %3276 = vmatprep.subr.bf16.mxu0 0
        %3277 = vmatpush1.bf16.msra.mxu0 0
        %3278 = vmatprep.mubr.bf16.mxu0 0
        %3279 = vmatmul.mubr.bf16.gmra.mrb[0].mxu0 %v3232
        %v3280 = vpop.f32.mrb[0].mxu0
        %v3281 = vadd.f32 0.0, %v3280
        %v3282 = vpop.f32.mrb[0].mxu0
        %v3283 = vpop.f32.mrb[0].mxu0
        %v3284 = vadd.f32 0.0, %v3283
        %v3285 = vpop.f32.mrb[0].mxu0
        %3286 = vmatprep.mubr.bf16.mxu0 0
        %3287 = vmatmul.mubr.bf16.gmra.mrb[0].mxu0 %v3235
        %v3288 = vpop.f32.mrb[0].mxu0
        %v3289 = vadd.f32 0.0, %v3288
        %v3290 = vpop.f32.mrb[0].mxu0
        %v3291 = vpop.f32.mrb[0].mxu0
        %v3292 = vadd.f32 0.0, %v3291
        %v3293 = vpop.f32.mrb[0].mxu0
        %3294 = vmatprep.mubr.bf16.mxu0 0
        %3295 = vmatmul.mubr.bf16.gmra.mrb[0].mxu0 %v3238
        %v3296 = vpop.f32.mrb[0].mxu0
        %v3297 = vadd.f32 0.0, %v3296
        %v3298 = vpop.f32.mrb[0].mxu0
        %v3299 = vpop.f32.mrb[0].mxu0
        %v3300 = vadd.f32 0.0, %v3299
        %v3301 = vpop.f32.mrb[0].mxu0
        %3302 = vmatprep.mubr.bf16.mxu0 0
        %3303 = vmatmul.mubr.bf16.gmra.mrb[0].mxu0 %v3241
        %v3304 = vpop.f32.mrb[0].mxu0
        %v3305 = vadd.f32 0.0, %v3304
        %v3306 = vpop.f32.mrb[0].mxu0
        %v3307 = vpop.f32.mrb[0].mxu0
        %v3308 = vadd.f32 0.0, %v3307
        %v3309 = vpop.f32.mrb[0].mxu0
        %3310 = vmatprep.mubr.bf16.mxu0 0
        %3311 = vmatmul.mubr.bf16.gmra.mrb[0].mxu0 %v3244
        %v3312 = vpop.f32.mrb[0].mxu0
        %v3313 = vadd.f32 0.0, %v3312
        %v3314 = vpop.f32.mrb[0].mxu0
        %v3315 = vpop.f32.mrb[0].mxu0
        %v3316 = vadd.f32 0.0, %v3315
        %v3317 = vpop.f32.mrb[0].mxu0
        %3318 = vdwg.mxu0
        %v3319 = vadd.f32 %v3129, %v3281
        %v3320 = vadd.f32 %v3132, %v3284
        %v3321 = vadd.f32 %v3137, %v3289
        %v3322 = vadd.f32 %v3140, %v3292
        %v3323 = vadd.f32 %v3145, %v3297
        %v3324 = vadd.f32 %v3148, %v3300
        %v3325 = vadd.f32 %v3153, %v3305
        %v3326 = vadd.f32 %v3156, %v3308
        %v3327 = vadd.f32 %v3161, %v3313
        %v3328 = vadd.f32 %v3164, %v3316
        %v3329 = vld [vmem:[#allocation2 + $0xa] sm:$0xff]
        %v3330 = vld [vmem:[#allocation2 + $0x12] sm:$0xff]
        %v3331 = vld [vmem:[#allocation2 + $0x1a] sm:$0xff]
        %v3332 = vld [vmem:[#allocation2 + $0x22] sm:$0xff]
        %v3333 = vld [vmem:[#allocation2 + $0x2a] sm:$0xff]
        %v3334 = vld [vmem:[#allocation2 + $0x32] sm:$0xff]
        %v3335 = vld [vmem:[#allocation2 + $0x3a] sm:$0xff]
        %v3336 = vld [vmem:[#allocation2 + $0x42] sm:$0xff]
        %v3337 = vld [vmem:[#allocation2 + $0x4a] sm:$0xff]
        %v3338 = vld [vmem:[#allocation2 + $0x52] sm:$0xff]
        %v3339 = vpack.c.bf16 %v3330, %v3329
        %v3340 = vpack.c.bf16 %v3332, %v3331
        %v3341 = vpack.c.bf16 %v3334, %v3333
        %v3342 = vpack.c.bf16 %v3336, %v3335
        %v3343 = vpack.c.bf16 %v3338, %v3337
        %s3344 = scalar_lea.vmem %s4, 576
        %v3345 = vld [vmem:[%s3344] sm:$0xf]
        %v3346 = vld [vmem:[%s3344 + $0x4] sm:$0xf]
        %v3347 = vld [vmem:[%s3344 + $0x8] sm:$0xf]
        %v3348 = vld [vmem:[%s3344 + $0xc] sm:$0xf]
        %v3349 = vld [vmem:[%s3344 + $0x10] sm:$0xf]
        %v3350 = vld [vmem:[%s3344 + $0x14] sm:$0xf]
        %v3351 = vld [vmem:[%s3344 + $0x18] sm:$0xf]
        %v3352 = vld [vmem:[%s3344 + $0x1c] sm:$0xf]
        %v3353 = vld [vmem:[%s3344 + $0x20] sm:$0xf]
        %v3354 = vld [vmem:[%s3344 + $0x24] sm:$0xf]
        %v3355 = vld [vmem:[%s3344 + $0x28] sm:$0xf]
        %v3356 = vld [vmem:[%s3344 + $0x2c] sm:$0xf]
        %v3369 = vunpack.c.l.b16 %v3345
        %v3370 = vunpack.c.l.b16 %v3346
        %v3371 = vunpack.c.l.b16 %v3347
        %v3372 = vunpack.c.l.b16 %v3348
        %v3373 = vunpack.c.l.b16 %v3349
        %v3374 = vunpack.c.l.b16 %v3350
        %v3375 = vunpack.c.l.b16 %v3351
        %v3376 = vunpack.c.l.b16 %v3352
        %v3377 = vunpack.c.l.b16 %v3353
        %v3378 = vunpack.c.l.b16 %v3354
        %v3379 = vunpack.c.l.b16 %v3355
        %v3380 = vunpack.c.l.b16 %v3356
        %v3381 = vpack.c.b16 %v3370, %v3369
        %v3382 = vpack.c.b16 %v3372, %v3371
        %v3383 = vpack.c.b16 %v3374, %v3373
        %v3384 = vpack.c.b16 %v3376, %v3375
        %v3385 = vpack.c.b16 %v3378, %v3377
        %v3386 = vpack.c.b16 %v3380, %v3379
        %v3394 = vsel %vm1247, %v3339, 0
        %v3397 = vsel %vm1247, %v3340, 0
        %v3400 = vsel %vm1247, %v3341, 0
        %v3403 = vsel %vm1247, %v3342, 0
        %v3406 = vsel %vm1247, %v3343, 0
        %3408 = vmatprep.subr.bf16.mxu0 0
        %3409 = vmatpush1.bf16.msra.mxu0 %v3381
        %3410 = vmatprep.subr.bf16.mxu0 0
        %3411 = vmatpush1.bf16.msra.mxu0 %v3382
        %3412 = vmatprep.subr.bf16.mxu0 0
        %3413 = vmatpush1.bf16.msra.mxu0 %v3383
        %3414 = vmatprep.subr.bf16.mxu0 0
        %3415 = vmatpush1.bf16.msra.mxu0 %v3384
        %3416 = vmatprep.subr.bf16.mxu0 0
        %3417 = vmatpush1.bf16.msra.mxu0 %v3385
        %3418 = vmatprep.subr.bf16.mxu0 0
        %3419 = vmatpush1.bf16.msra.mxu0 %v3386
        %3420 = vmatprep.subr.bf16.mxu0 0
        %3421 = vmatpush1.bf16.msra.mxu0 0
        %3422 = vmatprep.subr.bf16.mxu0 0
        %3423 = vmatpush1.bf16.msra.mxu0 0
        %3424 = vmatprep.subr.bf16.mxu0 0
        %3425 = vmatpush1.bf16.msra.mxu0 0
        %3426 = vmatprep.subr.bf16.mxu0 0
        %3427 = vmatpush1.bf16.msra.mxu0 0
        %3428 = vmatprep.subr.bf16.mxu0 0
        %3429 = vmatpush1.bf16.msra.mxu0 0
        %3430 = vmatprep.subr.bf16.mxu0 0
        %3431 = vmatpush1.bf16.msra.mxu0 0
        %3432 = vmatprep.subr.bf16.mxu0 0
        %3433 = vmatpush1.bf16.msra.mxu0 0
        %3434 = vmatprep.subr.bf16.mxu0 0
        %3435 = vmatpush1.bf16.msra.mxu0 0
        %3436 = vmatprep.subr.bf16.mxu0 0
        %3437 = vmatpush1.bf16.msra.mxu0 0
        %3438 = vmatprep.subr.bf16.mxu0 0
        %3439 = vmatpush1.bf16.msra.mxu0 0
        %3440 = vmatprep.mubr.bf16.mxu0 0
        %3441 = vmatmul.mubr.bf16.gmra.mrb[0].mxu0 %v3394
        %v3442 = vpop.f32.mrb[0].mxu0
        %v3443 = vadd.f32 0.0, %v3442
        %v3444 = vpop.f32.mrb[0].mxu0
        %v3445 = vpop.f32.mrb[0].mxu0
        %v3446 = vadd.f32 0.0, %v3445
        %v3447 = vpop.f32.mrb[0].mxu0
        %3448 = vmatprep.mubr.bf16.mxu0 0
        %3449 = vmatmul.mubr.bf16.gmra.mrb[0].mxu0 %v3397
        %v3450 = vpop.f32.mrb[0].mxu0
        %v3451 = vadd.f32 0.0, %v3450
        %v3452 = vpop.f32.mrb[0].mxu0
        %v3453 = vpop.f32.mrb[0].mxu0
        %v3454 = vadd.f32 0.0, %v3453
        %v3455 = vpop.f32.mrb[0].mxu0
        %3456 = vmatprep.mubr.bf16.mxu0 0
        %3457 = vmatmul.mubr.bf16.gmra.mrb[0].mxu0 %v3400
        %v3458 = vpop.f32.mrb[0].mxu0
        %v3459 = vadd.f32 0.0, %v3458
        %v3460 = vpop.f32.mrb[0].mxu0
        %v3461 = vpop.f32.mrb[0].mxu0
        %v3462 = vadd.f32 0.0, %v3461
        %v3463 = vpop.f32.mrb[0].mxu0
        %3464 = vmatprep.mubr.bf16.mxu0 0
        %3465 = vmatmul.mubr.bf16.gmra.mrb[0].mxu0 %v3403
        %v3466 = vpop.f32.mrb[0].mxu0
        %v3467 = vadd.f32 0.0, %v3466
        %v3468 = vpop.f32.mrb[0].mxu0
        %v3469 = vpop.f32.mrb[0].mxu0
        %v3470 = vadd.f32 0.0, %v3469
        %v3471 = vpop.f32.mrb[0].mxu0
        %3472 = vmatprep.mubr.bf16.mxu0 0
        %3473 = vmatmul.mubr.bf16.gmra.mrb[0].mxu0 %v3406
        %v3474 = vpop.f32.mrb[0].mxu0
        %v3475 = vadd.f32 0.0, %v3474
        %v3476 = vpop.f32.mrb[0].mxu0
        %v3477 = vpop.f32.mrb[0].mxu0
        %v3478 = vadd.f32 0.0, %v3477
        %v3479 = vpop.f32.mrb[0].mxu0
        %3480 = vdwg.mxu0
        %v3481 = vadd.f32 %v3319, %v3443
        %v3482 = vadd.f32 %v3320, %v3446
        %v3483 = vadd.f32 %v3321, %v3451
        %v3484 = vadd.f32 %v3322, %v3454
        %v3485 = vadd.f32 %v3323, %v3459
        %v3486 = vadd.f32 %v3324, %v3462
        %v3487 = vadd.f32 %v3325, %v3467
        %v3488 = vadd.f32 %v3326, %v3470
        %v3489 = vadd.f32 %v3327, %v3475
        %v3490 = vadd.f32 %v3328, %v3478
        %v3491 = vld [vmem:[#allocation2 + $0xb] sm:$0xff]
        %v3492 = vld [vmem:[#allocation2 + $0x13] sm:$0xff]
        %v3493 = vld [vmem:[#allocation2 + $0x1b] sm:$0xff]
        %v3494 = vld [vmem:[#allocation2 + $0x23] sm:$0xff]
        %v3495 = vld [vmem:[#allocation2 + $0x2b] sm:$0xff]
        %v3496 = vld [vmem:[#allocation2 + $0x33] sm:$0xff]
        %v3497 = vld [vmem:[#allocation2 + $0x3b] sm:$0xff]
        %v3498 = vld [vmem:[#allocation2 + $0x43] sm:$0xff]
        %v3499 = vld [vmem:[#allocation2 + $0x4b] sm:$0xff]
        %v3500 = vld [vmem:[#allocation2 + $0x53] sm:$0xff]
        %v3501 = vpack.c.bf16 %v3492, %v3491
        %v3502 = vpack.c.bf16 %v3494, %v3493
        %v3503 = vpack.c.bf16 %v3496, %v3495
        %v3504 = vpack.c.bf16 %v3498, %v3497
        %v3505 = vpack.c.bf16 %v3500, %v3499
        %s3506 = scalar_lea.vmem %s4, 624
        %v3507 = vld [vmem:[%s3506] sm:$0xf]
        %v3508 = vld [vmem:[%s3506 + $0x4] sm:$0xf]
        %v3509 = vld [vmem:[%s3506 + $0x8] sm:$0xf]
        %v3510 = vld [vmem:[%s3506 + $0xc] sm:$0xf]
        %v3511 = vld [vmem:[%s3506 + $0x10] sm:$0xf]
        %v3512 = vld [vmem:[%s3506 + $0x14] sm:$0xf]
        %v3513 = vld [vmem:[%s3506 + $0x18] sm:$0xf]
        %v3514 = vld [vmem:[%s3506 + $0x1c] sm:$0xf]
        %v3515 = vld [vmem:[%s3506 + $0x20] sm:$0xf]
        %v3516 = vld [vmem:[%s3506 + $0x24] sm:$0xf]
        %v3517 = vld [vmem:[%s3506 + $0x28] sm:$0xf]
        %v3518 = vld [vmem:[%s3506 + $0x2c] sm:$0xf]
        %v3531 = vunpack.c.l.b16 %v3507
        %v3532 = vunpack.c.l.b16 %v3508
        %v3533 = vunpack.c.l.b16 %v3509
        %v3534 = vunpack.c.l.b16 %v3510
        %v3535 = vunpack.c.l.b16 %v3511
        %v3536 = vunpack.c.l.b16 %v3512
        %v3537 = vunpack.c.l.b16 %v3513
        %v3538 = vunpack.c.l.b16 %v3514
        %v3539 = vunpack.c.l.b16 %v3515
        %v3540 = vunpack.c.l.b16 %v3516
        %v3541 = vunpack.c.l.b16 %v3517
        %v3542 = vunpack.c.l.b16 %v3518
        %v3543 = vpack.c.b16 %v3532, %v3531
        %v3544 = vpack.c.b16 %v3534, %v3533
        %v3545 = vpack.c.b16 %v3536, %v3535
        %v3546 = vpack.c.b16 %v3538, %v3537
        %v3547 = vpack.c.b16 %v3540, %v3539
        %v3548 = vpack.c.b16 %v3542, %v3541
        %v3556 = vsel %vm1247, %v3501, 0
        %v3559 = vsel %vm1247, %v3502, 0
        %v3562 = vsel %vm1247, %v3503, 0
        %v3565 = vsel %vm1247, %v3504, 0
        %v3568 = vsel %vm1247, %v3505, 0
        %3570 = vmatprep.subr.bf16.mxu0 0
        %3571 = vmatpush1.bf16.msra.mxu0 %v3543
        %3572 = vmatprep.subr.bf16.mxu0 0
        %3573 = vmatpush1.bf16.msra.mxu0 %v3544
        %3574 = vmatprep.subr.bf16.mxu0 0
        %3575 = vmatpush1.bf16.msra.mxu0 %v3545
        %3576 = vmatprep.subr.bf16.mxu0 0
        %3577 = vmatpush1.bf16.msra.mxu0 %v3546
        %3578 = vmatprep.subr.bf16.mxu0 0
        %3579 = vmatpush1.bf16.msra.mxu0 %v3547
        %3580 = vmatprep.subr.bf16.mxu0 0
        %3581 = vmatpush1.bf16.msra.mxu0 %v3548
        %3582 = vmatprep.subr.bf16.mxu0 0
        %3583 = vmatpush1.bf16.msra.mxu0 0
        %3584 = vmatprep.subr.bf16.mxu0 0
        %3585 = vmatpush1.bf16.msra.mxu0 0
        %3586 = vmatprep.subr.bf16.mxu0 0
        %3587 = vmatpush1.bf16.msra.mxu0 0
        %3588 = vmatprep.subr.bf16.mxu0 0
        %3589 = vmatpush1.bf16.msra.mxu0 0
        %3590 = vmatprep.subr.bf16.mxu0 0
        %3591 = vmatpush1.bf16.msra.mxu0 0
        %3592 = vmatprep.subr.bf16.mxu0 0
        %3593 = vmatpush1.bf16.msra.mxu0 0
        %3594 = vmatprep.subr.bf16.mxu0 0
        %3595 = vmatpush1.bf16.msra.mxu0 0
        %3596 = vmatprep.subr.bf16.mxu0 0
        %3597 = vmatpush1.bf16.msra.mxu0 0
        %3598 = vmatprep.subr.bf16.mxu0 0
        %3599 = vmatpush1.bf16.msra.mxu0 0
        %3600 = vmatprep.subr.bf16.mxu0 0
        %3601 = vmatpush1.bf16.msra.mxu0 0
        %3602 = vmatprep.mubr.bf16.mxu0 0
        %3603 = vmatmul.mubr.bf16.gmra.mrb[0].mxu0 %v3556
        %v3604 = vpop.f32.mrb[0].mxu0
        %v3605 = vadd.f32 0.0, %v3604
        %v3606 = vpop.f32.mrb[0].mxu0
        %v3607 = vpop.f32.mrb[0].mxu0
        %v3608 = vadd.f32 0.0, %v3607
        %v3609 = vpop.f32.mrb[0].mxu0
        %3610 = vmatprep.mubr.bf16.mxu0 0
        %3611 = vmatmul.mubr.bf16.gmra.mrb[0].mxu0 %v3559
        %v3612 = vpop.f32.mrb[0].mxu0
        %v3613 = vadd.f32 0.0, %v3612
        %v3614 = vpop.f32.mrb[0].mxu0
        %v3615 = vpop.f32.mrb[0].mxu0
        %v3616 = vadd.f32 0.0, %v3615
        %v3617 = vpop.f32.mrb[0].mxu0
        %3618 = vmatprep.mubr.bf16.mxu0 0
        %3619 = vmatmul.mubr.bf16.gmra.mrb[0].mxu0 %v3562
        %v3620 = vpop.f32.mrb[0].mxu0
        %v3621 = vadd.f32 0.0, %v3620
        %v3622 = vpop.f32.mrb[0].mxu0
        %v3623 = vpop.f32.mrb[0].mxu0
        %v3624 = vadd.f32 0.0, %v3623
        %v3625 = vpop.f32.mrb[0].mxu0
        %3626 = vmatprep.mubr.bf16.mxu0 0
        %3627 = vmatmul.mubr.bf16.gmra.mrb[0].mxu0 %v3565
        %v3628 = vpop.f32.mrb[0].mxu0
        %v3629 = vadd.f32 0.0, %v3628
        %v3630 = vpop.f32.mrb[0].mxu0
        %v3631 = vpop.f32.mrb[0].mxu0
        %v3632 = vadd.f32 0.0, %v3631
        %v3633 = vpop.f32.mrb[0].mxu0
        %3634 = vmatprep.mubr.bf16.mxu0 0
        %3635 = vmatmul.mubr.bf16.gmra.mrb[0].mxu0 %v3568
        %v3636 = vpop.f32.mrb[0].mxu0
        %v3637 = vadd.f32 0.0, %v3636
        %v3638 = vpop.f32.mrb[0].mxu0
        %v3639 = vpop.f32.mrb[0].mxu0
        %v3640 = vadd.f32 0.0, %v3639
        %v3641 = vpop.f32.mrb[0].mxu0
        %3642 = vdwg.mxu0
        %v3643 = vadd.f32 %v3481, %v3605
        %v3644 = vadd.f32 %v3482, %v3608
        %v3645 = vadd.f32 %v3483, %v3613
        %v3646 = vadd.f32 %v3484, %v3616
        %v3647 = vadd.f32 %v3485, %v3621
        %v3648 = vadd.f32 %v3486, %v3624
        %v3649 = vadd.f32 %v3487, %v3629
        %v3650 = vadd.f32 %v3488, %v3632
        %v3651 = vadd.f32 %v3489, %v3637
        %v3652 = vadd.f32 %v3490, %v3640
        %v3653 = vld [vmem:[#allocation2 + $0xc] sm:$0xff]
        %v3654 = vld [vmem:[#allocation2 + $0x14] sm:$0xff]
        %v3655 = vld [vmem:[#allocation2 + $0x1c] sm:$0xff]
        %v3656 = vld [vmem:[#allocation2 + $0x24] sm:$0xff]
        %v3657 = vld [vmem:[#allocation2 + $0x2c] sm:$0xff]
        %v3658 = vld [vmem:[#allocation2 + $0x34] sm:$0xff]
        %v3659 = vld [vmem:[#allocation2 + $0x3c] sm:$0xff]
        %v3660 = vld [vmem:[#allocation2 + $0x44] sm:$0xff]
        %v3661 = vld [vmem:[#allocation2 + $0x4c] sm:$0xff]
        %v3662 = vld [vmem:[#allocation2 + $0x54] sm:$0xff]
        %v3663 = vpack.c.bf16 %v3654, %v3653
        %v3664 = vpack.c.bf16 %v3656, %v3655
        %v3665 = vpack.c.bf16 %v3658, %v3657
        %v3666 = vpack.c.bf16 %v3660, %v3659
        %v3667 = vpack.c.bf16 %v3662, %v3661
        %s3668 = scalar_lea.vmem %s4, 672
        %v3669 = vld [vmem:[%s3668] sm:$0xf]
        %v3670 = vld [vmem:[%s3668 + $0x4] sm:$0xf]
        %v3671 = vld [vmem:[%s3668 + $0x8] sm:$0xf]
        %v3672 = vld [vmem:[%s3668 + $0xc] sm:$0xf]
        %v3673 = vld [vmem:[%s3668 + $0x10] sm:$0xf]
        %v3674 = vld [vmem:[%s3668 + $0x14] sm:$0xf]
        %v3675 = vld [vmem:[%s3668 + $0x18] sm:$0xf]
        %v3676 = vld [vmem:[%s3668 + $0x1c] sm:$0xf]
        %v3677 = vld [vmem:[%s3668 + $0x20] sm:$0xf]
        %v3678 = vld [vmem:[%s3668 + $0x24] sm:$0xf]
        %v3679 = vld [vmem:[%s3668 + $0x28] sm:$0xf]
        %v3680 = vld [vmem:[%s3668 + $0x2c] sm:$0xf]
        %v3693 = vunpack.c.l.b16 %v3669
        %v3694 = vunpack.c.l.b16 %v3670
        %v3695 = vunpack.c.l.b16 %v3671
        %v3696 = vunpack.c.l.b16 %v3672
        %v3697 = vunpack.c.l.b16 %v3673
        %v3698 = vunpack.c.l.b16 %v3674
        %v3699 = vunpack.c.l.b16 %v3675
        %v3700 = vunpack.c.l.b16 %v3676
        %v3701 = vunpack.c.l.b16 %v3677
        %v3702 = vunpack.c.l.b16 %v3678
        %v3703 = vunpack.c.l.b16 %v3679
        %v3704 = vunpack.c.l.b16 %v3680
        %v3705 = vpack.c.b16 %v3694, %v3693
        %v3706 = vpack.c.b16 %v3696, %v3695
        %v3707 = vpack.c.b16 %v3698, %v3697
        %v3708 = vpack.c.b16 %v3700, %v3699
        %v3709 = vpack.c.b16 %v3702, %v3701
        %v3710 = vpack.c.b16 %v3704, %v3703
        %v3718 = vsel %vm1247, %v3663, 0
        %v3721 = vsel %vm1247, %v3664, 0
        %v3724 = vsel %vm1247, %v3665, 0
        %v3727 = vsel %vm1247, %v3666, 0
        %v3730 = vsel %vm1247, %v3667, 0
        %3732 = vmatprep.subr.bf16.mxu0 0
        %3733 = vmatpush1.bf16.msra.mxu0 %v3705
        %3734 = vmatprep.subr.bf16.mxu0 0
        %3735 = vmatpush1.bf16.msra.mxu0 %v3706
        %3736 = vmatprep.subr.bf16.mxu0 0
        %3737 = vmatpush1.bf16.msra.mxu0 %v3707
        %3738 = vmatprep.subr.bf16.mxu0 0
        %3739 = vmatpush1.bf16.msra.mxu0 %v3708
        %3740 = vmatprep.subr.bf16.mxu0 0
        %3741 = vmatpush1.bf16.msra.mxu0 %v3709
        %3742 = vmatprep.subr.bf16.mxu0 0
        %3743 = vmatpush1.bf16.msra.mxu0 %v3710
        %3744 = vmatprep.subr.bf16.mxu0 0
        %3745 = vmatpush1.bf16.msra.mxu0 0
        %3746 = vmatprep.subr.bf16.mxu0 0
        %3747 = vmatpush1.bf16.msra.mxu0 0
        %3748 = vmatprep.subr.bf16.mxu0 0
        %3749 = vmatpush1.bf16.msra.mxu0 0
        %3750 = vmatprep.subr.bf16.mxu0 0
        %3751 = vmatpush1.bf16.msra.mxu0 0
        %3752 = vmatprep.subr.bf16.mxu0 0
        %3753 = vmatpush1.bf16.msra.mxu0 0
        %3754 = vmatprep.subr.bf16.mxu0 0
        %3755 = vmatpush1.bf16.msra.mxu0 0
        %3756 = vmatprep.subr.bf16.mxu0 0
        %3757 = vmatpush1.bf16.msra.mxu0 0
        %3758 = vmatprep.subr.bf16.mxu0 0
        %3759 = vmatpush1.bf16.msra.mxu0 0
        %3760 = vmatprep.subr.bf16.mxu0 0
        %3761 = vmatpush1.bf16.msra.mxu0 0
        %3762 = vmatprep.subr.bf16.mxu0 0
        %3763 = vmatpush1.bf16.msra.mxu0 0
        %3764 = vmatprep.mubr.bf16.mxu0 0
        %3765 = vmatmul.mubr.bf16.gmra.mrb[0].mxu0 %v3718
        %v3766 = vpop.f32.mrb[0].mxu0
        %v3767 = vadd.f32 0.0, %v3766
        %v3768 = vpop.f32.mrb[0].mxu0
        %v3769 = vpop.f32.mrb[0].mxu0
        %v3770 = vadd.f32 0.0, %v3769
        %v3771 = vpop.f32.mrb[0].mxu0
        %3772 = vmatprep.mubr.bf16.mxu0 0
        %3773 = vmatmul.mubr.bf16.gmra.mrb[0].mxu0 %v3721
        %v3774 = vpop.f32.mrb[0].mxu0
        %v3775 = vadd.f32 0.0, %v3774
        %v3776 = vpop.f32.mrb[0].mxu0
        %v3777 = vpop.f32.mrb[0].mxu0
        %v3778 = vadd.f32 0.0, %v3777
        %v3779 = vpop.f32.mrb[0].mxu0
        %3780 = vmatprep.mubr.bf16.mxu0 0
        %3781 = vmatmul.mubr.bf16.gmra.mrb[0].mxu0 %v3724
        %v3782 = vpop.f32.mrb[0].mxu0
        %v3783 = vadd.f32 0.0, %v3782
        %v3784 = vpop.f32.mrb[0].mxu0
        %v3785 = vpop.f32.mrb[0].mxu0
        %v3786 = vadd.f32 0.0, %v3785
        %v3787 = vpop.f32.mrb[0].mxu0
        %3788 = vmatprep.mubr.bf16.mxu0 0
        %3789 = vmatmul.mubr.bf16.gmra.mrb[0].mxu0 %v3727
        %v3790 = vpop.f32.mrb[0].mxu0
        %v3791 = vadd.f32 0.0, %v3790
        %v3792 = vpop.f32.mrb[0].mxu0
        %v3793 = vpop.f32.mrb[0].mxu0
        %v3794 = vadd.f32 0.0, %v3793
        %v3795 = vpop.f32.mrb[0].mxu0
        %3796 = vmatprep.mubr.bf16.mxu0 0
        %3797 = vmatmul.mubr.bf16.gmra.mrb[0].mxu0 %v3730
        %v3798 = vpop.f32.mrb[0].mxu0
        %v3799 = vadd.f32 0.0, %v3798
        %v3800 = vpop.f32.mrb[0].mxu0
        %v3801 = vpop.f32.mrb[0].mxu0
        %v3802 = vadd.f32 0.0, %v3801
        %v3803 = vpop.f32.mrb[0].mxu0
        %3804 = vdwg.mxu0
        %v3805 = vadd.f32 %v3643, %v3767
        %v3806 = vadd.f32 %v3644, %v3770
        %v3807 = vadd.f32 %v3645, %v3775
        %v3808 = vadd.f32 %v3646, %v3778
        %v3809 = vadd.f32 %v3647, %v3783
        %v3810 = vadd.f32 %v3648, %v3786
        %v3811 = vadd.f32 %v3649, %v3791
        %v3812 = vadd.f32 %v3650, %v3794
        %v3813 = vadd.f32 %v3651, %v3799
        %v3814 = vadd.f32 %v3652, %v3802
        %v3815 = vld [vmem:[#allocation2 + $0x14] sm:$0xff]
        %v3816 = vld [vmem:[#allocation2 + $0x1c] sm:$0xff]
        %v3817 = vld [vmem:[#allocation2 + $0x24] sm:$0xff]
        %v3818 = vld [vmem:[#allocation2 + $0x2c] sm:$0xff]
        %v3819 = vld [vmem:[#allocation2 + $0x34] sm:$0xff]
        %v3820 = vld [vmem:[#allocation2 + $0x3c] sm:$0xff]
        %v3821 = vld [vmem:[#allocation2 + $0x44] sm:$0xff]
        %v3822 = vld [vmem:[#allocation2 + $0x4c] sm:$0xff]
        %v3823 = vld [vmem:[#allocation2 + $0x54] sm:$0xff]
        %v3824 = vld [vmem:[#allocation2 + $0x5c] sm:$0xff]
        %v3825 = vpack.c.bf16 %v3816, %v3815
        %v3826 = vpack.c.bf16 %v3818, %v3817
        %v3827 = vpack.c.bf16 %v3820, %v3819
        %v3828 = vpack.c.bf16 %v3822, %v3821
        %v3829 = vpack.c.bf16 %v3824, %v3823
        %s3830 = scalar_lea.vmem %s4, 720
        %v3831 = vld [vmem:[%s3830] sm:$0xf]
        %v3832 = vld [vmem:[%s3830 + $0x4] sm:$0xf]
        %v3833 = vld [vmem:[%s3830 + $0x8] sm:$0xf]
        %v3834 = vld [vmem:[%s3830 + $0xc] sm:$0xf]
        %v3835 = vld [vmem:[%s3830 + $0x10] sm:$0xf]
        %v3836 = vld [vmem:[%s3830 + $0x14] sm:$0xf]
        %v3837 = vld [vmem:[%s3830 + $0x18] sm:$0xf]
        %v3838 = vld [vmem:[%s3830 + $0x1c] sm:$0xf]
        %v3839 = vld [vmem:[%s3830 + $0x20] sm:$0xf]
        %v3840 = vld [vmem:[%s3830 + $0x24] sm:$0xf]
        %v3841 = vld [vmem:[%s3830 + $0x28] sm:$0xf]
        %v3842 = vld [vmem:[%s3830 + $0x2c] sm:$0xf]
        %v3855 = vunpack.c.l.b16 %v3831
        %v3856 = vunpack.c.l.b16 %v3832
        %v3857 = vunpack.c.l.b16 %v3833
        %v3858 = vunpack.c.l.b16 %v3834
        %v3859 = vunpack.c.l.b16 %v3835
        %v3860 = vunpack.c.l.b16 %v3836
        %v3861 = vunpack.c.l.b16 %v3837
        %v3862 = vunpack.c.l.b16 %v3838
        %v3863 = vunpack.c.l.b16 %v3839
        %v3864 = vunpack.c.l.b16 %v3840
        %v3865 = vunpack.c.l.b16 %v3841
        %v3866 = vunpack.c.l.b16 %v3842
        %v3867 = vpack.c.b16 %v3856, %v3855
        %v3868 = vpack.c.b16 %v3858, %v3857
        %v3869 = vpack.c.b16 %v3860, %v3859
        %v3870 = vpack.c.b16 %v3862, %v3861
        %v3871 = vpack.c.b16 %v3864, %v3863
        %v3872 = vpack.c.b16 %v3866, %v3865
        %v3880 = vsel %vm1247, %v3825, 0
        %v3883 = vsel %vm1247, %v3826, 0
        %v3886 = vsel %vm1247, %v3827, 0
        %v3889 = vsel %vm1247, %v3828, 0
        %v3892 = vsel %vm1247, %v3829, 0
        %3894 = vmatprep.subr.bf16.mxu0 0
        %3895 = vmatpush1.bf16.msra.mxu0 %v3867
        %3896 = vmatprep.subr.bf16.mxu0 0
        %3897 = vmatpush1.bf16.msra.mxu0 %v3868
        %3898 = vmatprep.subr.bf16.mxu0 0
        %3899 = vmatpush1.bf16.msra.mxu0 %v3869
        %3900 = vmatprep.subr.bf16.mxu0 0
        %3901 = vmatpush1.bf16.msra.mxu0 %v3870
        %3902 = vmatprep.subr.bf16.mxu0 0
        %3903 = vmatpush1.bf16.msra.mxu0 %v3871
        %3904 = vmatprep.subr.bf16.mxu0 0
        %3905 = vmatpush1.bf16.msra.mxu0 %v3872
        %3906 = vmatprep.subr.bf16.mxu0 0
        %3907 = vmatpush1.bf16.msra.mxu0 0
        %3908 = vmatprep.subr.bf16.mxu0 0
        %3909 = vmatpush1.bf16.msra.mxu0 0
        %3910 = vmatprep.subr.bf16.mxu0 0
        %3911 = vmatpush1.bf16.msra.mxu0 0
        %3912 = vmatprep.subr.bf16.mxu0 0
        %3913 = vmatpush1.bf16.msra.mxu0 0
        %3914 = vmatprep.subr.bf16.mxu0 0
        %3915 = vmatpush1.bf16.msra.mxu0 0
        %3916 = vmatprep.subr.bf16.mxu0 0
        %3917 = vmatpush1.bf16.msra.mxu0 0
        %3918 = vmatprep.subr.bf16.mxu0 0
        %3919 = vmatpush1.bf16.msra.mxu0 0
        %3920 = vmatprep.subr.bf16.mxu0 0
        %3921 = vmatpush1.bf16.msra.mxu0 0
        %3922 = vmatprep.subr.bf16.mxu0 0
        %3923 = vmatpush1.bf16.msra.mxu0 0
        %3924 = vmatprep.subr.bf16.mxu0 0
        %3925 = vmatpush1.bf16.msra.mxu0 0
        %3926 = vmatprep.mubr.bf16.mxu0 0
        %3927 = vmatmul.mubr.bf16.gmra.mrb[0].mxu0 %v3880
        %v3928 = vpop.f32.mrb[0].mxu0
        %v3929 = vadd.f32 0.0, %v3928
        %v3930 = vpop.f32.mrb[0].mxu0
        %v3931 = vpop.f32.mrb[0].mxu0
        %v3932 = vadd.f32 0.0, %v3931
        %v3933 = vpop.f32.mrb[0].mxu0
        %3934 = vmatprep.mubr.bf16.mxu0 0
        %3935 = vmatmul.mubr.bf16.gmra.mrb[0].mxu0 %v3883
        %v3936 = vpop.f32.mrb[0].mxu0
        %v3937 = vadd.f32 0.0, %v3936
        %v3938 = vpop.f32.mrb[0].mxu0
        %v3939 = vpop.f32.mrb[0].mxu0
        %v3940 = vadd.f32 0.0, %v3939
        %v3941 = vpop.f32.mrb[0].mxu0
        %3942 = vmatprep.mubr.bf16.mxu0 0
        %3943 = vmatmul.mubr.bf16.gmra.mrb[0].mxu0 %v3886
        %v3944 = vpop.f32.mrb[0].mxu0
        %v3945 = vadd.f32 0.0, %v3944
        %v3946 = vpop.f32.mrb[0].mxu0
        %v3947 = vpop.f32.mrb[0].mxu0
        %v3948 = vadd.f32 0.0, %v3947
        %v3949 = vpop.f32.mrb[0].mxu0
        %3950 = vmatprep.mubr.bf16.mxu0 0
        %3951 = vmatmul.mubr.bf16.gmra.mrb[0].mxu0 %v3889
        %v3952 = vpop.f32.mrb[0].mxu0
        %v3953 = vadd.f32 0.0, %v3952
        %v3954 = vpop.f32.mrb[0].mxu0
        %v3955 = vpop.f32.mrb[0].mxu0
        %v3956 = vadd.f32 0.0, %v3955
        %v3957 = vpop.f32.mrb[0].mxu0
        %3958 = vmatprep.mubr.bf16.mxu0 0
        %3959 = vmatmul.mubr.bf16.gmra.mrb[0].mxu0 %v3892
        %v3960 = vpop.f32.mrb[0].mxu0
        %v3961 = vadd.f32 0.0, %v3960
        %v3962 = vpop.f32.mrb[0].mxu0
        %v3963 = vpop.f32.mrb[0].mxu0
        %v3964 = vadd.f32 0.0, %v3963
        %v3965 = vpop.f32.mrb[0].mxu0
        %3966 = vdwg.mxu0
        %v3967 = vadd.f32 %v3805, %v3929
        %v3968 = vadd.f32 %v3806, %v3932
        %v3969 = vadd.f32 %v3807, %v3937
        %v3970 = vadd.f32 %v3808, %v3940
        %v3971 = vadd.f32 %v3809, %v3945
        %v3972 = vadd.f32 %v3810, %v3948
        %v3973 = vadd.f32 %v3811, %v3953
        %v3974 = vadd.f32 %v3812, %v3956
        %v3975 = vadd.f32 %v3813, %v3961
        %v3976 = vadd.f32 %v3814, %v3964
        %v3977 = vld [vmem:[#allocation2 + $0x15] sm:$0xff]
        %v3978 = vld [vmem:[#allocation2 + $0x1d] sm:$0xff]
        %v3979 = vld [vmem:[#allocation2 + $0x25] sm:$0xff]
        %v3980 = vld [vmem:[#allocation2 + $0x2d] sm:$0xff]
        %v3981 = vld [vmem:[#allocation2 + $0x35] sm:$0xff]
        %v3982 = vld [vmem:[#allocation2 + $0x3d] sm:$0xff]
        %v3983 = vld [vmem:[#allocation2 + $0x45] sm:$0xff]
        %v3984 = vld [vmem:[#allocation2 + $0x4d] sm:$0xff]
        %v3985 = vld [vmem:[#allocation2 + $0x55] sm:$0xff]
        %v3986 = vld [vmem:[#allocation2 + $0x5d] sm:$0xff]
        %v3987 = vpack.c.bf16 %v3978, %v3977
        %v3988 = vpack.c.bf16 %v3980, %v3979
        %v3989 = vpack.c.bf16 %v3982, %v3981
        %v3990 = vpack.c.bf16 %v3984, %v3983
        %v3991 = vpack.c.bf16 %v3986, %v3985
        %s3992 = scalar_lea.vmem %s4, 768
        %v3993 = vld [vmem:[%s3992] sm:$0xf]
        %v3994 = vld [vmem:[%s3992 + $0x4] sm:$0xf]
        %v3995 = vld [vmem:[%s3992 + $0x8] sm:$0xf]
        %v3996 = vld [vmem:[%s3992 + $0xc] sm:$0xf]
        %v3997 = vld [vmem:[%s3992 + $0x10] sm:$0xf]
        %v3998 = vld [vmem:[%s3992 + $0x14] sm:$0xf]
        %v3999 = vld [vmem:[%s3992 + $0x18] sm:$0xf]
        %v4000 = vld [vmem:[%s3992 + $0x1c] sm:$0xf]
        %v4001 = vld [vmem:[%s3992 + $0x20] sm:$0xf]
        %v4002 = vld [vmem:[%s3992 + $0x24] sm:$0xf]
        %v4003 = vld [vmem:[%s3992 + $0x28] sm:$0xf]
        %v4004 = vld [vmem:[%s3992 + $0x2c] sm:$0xf]
        %v4017 = vunpack.c.l.b16 %v3993
        %v4018 = vunpack.c.l.b16 %v3994
        %v4019 = vunpack.c.l.b16 %v3995
        %v4020 = vunpack.c.l.b16 %v3996
        %v4021 = vunpack.c.l.b16 %v3997
        %v4022 = vunpack.c.l.b16 %v3998
        %v4023 = vunpack.c.l.b16 %v3999
        %v4024 = vunpack.c.l.b16 %v4000
        %v4025 = vunpack.c.l.b16 %v4001
        %v4026 = vunpack.c.l.b16 %v4002
        %v4027 = vunpack.c.l.b16 %v4003
        %v4028 = vunpack.c.l.b16 %v4004
        %v4029 = vpack.c.b16 %v4018, %v4017
        %v4030 = vpack.c.b16 %v4020, %v4019
        %v4031 = vpack.c.b16 %v4022, %v4021
        %v4032 = vpack.c.b16 %v4024, %v4023
        %v4033 = vpack.c.b16 %v4026, %v4025
        %v4034 = vpack.c.b16 %v4028, %v4027
        %v4042 = vsel %vm1247, %v3987, 0
        %v4045 = vsel %vm1247, %v3988, 0
        %v4048 = vsel %vm1247, %v3989, 0
        %v4051 = vsel %vm1247, %v3990, 0
        %v4054 = vsel %vm1247, %v3991, 0
        %4056 = vmatprep.subr.bf16.mxu0 0
        %4057 = vmatpush1.bf16.msra.mxu0 %v4029
        %4058 = vmatprep.subr.bf16.mxu0 0
        %4059 = vmatpush1.bf16.msra.mxu0 %v4030
        %4060 = vmatprep.subr.bf16.mxu0 0
        %4061 = vmatpush1.bf16.msra.mxu0 %v4031
        %4062 = vmatprep.subr.bf16.mxu0 0
        %4063 = vmatpush1.bf16.msra.mxu0 %v4032
        %4064 = vmatprep.subr.bf16.mxu0 0
        %4065 = vmatpush1.bf16.msra.mxu0 %v4033
        %4066 = vmatprep.subr.bf16.mxu0 0
        %4067 = vmatpush1.bf16.msra.mxu0 %v4034
        %4068 = vmatprep.subr.bf16.mxu0 0
        %4069 = vmatpush1.bf16.msra.mxu0 0
        %4070 = vmatprep.subr.bf16.mxu0 0
        %4071 = vmatpush1.bf16.msra.mxu0 0
        %4072 = vmatprep.subr.bf16.mxu0 0
        %4073 = vmatpush1.bf16.msra.mxu0 0
        %4074 = vmatprep.subr.bf16.mxu0 0
        %4075 = vmatpush1.bf16.msra.mxu0 0
        %4076 = vmatprep.subr.bf16.mxu0 0
        %4077 = vmatpush1.bf16.msra.mxu0 0
        %4078 = vmatprep.subr.bf16.mxu0 0
        %4079 = vmatpush1.bf16.msra.mxu0 0
        %4080 = vmatprep.subr.bf16.mxu0 0
        %4081 = vmatpush1.bf16.msra.mxu0 0
        %4082 = vmatprep.subr.bf16.mxu0 0
        %4083 = vmatpush1.bf16.msra.mxu0 0
        %4084 = vmatprep.subr.bf16.mxu0 0
        %4085 = vmatpush1.bf16.msra.mxu0 0
        %4086 = vmatprep.subr.bf16.mxu0 0
        %4087 = vmatpush1.bf16.msra.mxu0 0
        %4088 = vmatprep.mubr.bf16.mxu0 0
        %4089 = vmatmul.mubr.bf16.gmra.mrb[0].mxu0 %v4042
        %v4090 = vpop.f32.mrb[0].mxu0
        %v4091 = vadd.f32 0.0, %v4090
        %v4092 = vpop.f32.mrb[0].mxu0
        %v4093 = vpop.f32.mrb[0].mxu0
        %v4094 = vadd.f32 0.0, %v4093
        %v4095 = vpop.f32.mrb[0].mxu0
        %4096 = vmatprep.mubr.bf16.mxu0 0
        %4097 = vmatmul.mubr.bf16.gmra.mrb[0].mxu0 %v4045
        %v4098 = vpop.f32.mrb[0].mxu0
        %v4099 = vadd.f32 0.0, %v4098
        %v4100 = vpop.f32.mrb[0].mxu0
        %v4101 = vpop.f32.mrb[0].mxu0
        %v4102 = vadd.f32 0.0, %v4101
        %v4103 = vpop.f32.mrb[0].mxu0
        %4104 = vmatprep.mubr.bf16.mxu0 0
        %4105 = vmatmul.mubr.bf16.gmra.mrb[0].mxu0 %v4048
        %v4106 = vpop.f32.mrb[0].mxu0
        %v4107 = vadd.f32 0.0, %v4106
        %v4108 = vpop.f32.mrb[0].mxu0
        %v4109 = vpop.f32.mrb[0].mxu0
        %v4110 = vadd.f32 0.0, %v4109
        %v4111 = vpop.f32.mrb[0].mxu0
        %4112 = vmatprep.mubr.bf16.mxu0 0
        %4113 = vmatmul.mubr.bf16.gmra.mrb[0].mxu0 %v4051
        %v4114 = vpop.f32.mrb[0].mxu0
        %v4115 = vadd.f32 0.0, %v4114
        %v4116 = vpop.f32.mrb[0].mxu0
        %v4117 = vpop.f32.mrb[0].mxu0
        %v4118 = vadd.f32 0.0, %v4117
        %v4119 = vpop.f32.mrb[0].mxu0
        %4120 = vmatprep.mubr.bf16.mxu0 0
        %4121 = vmatmul.mubr.bf16.gmra.mrb[0].mxu0 %v4054
        %v4122 = vpop.f32.mrb[0].mxu0
        %v4123 = vadd.f32 0.0, %v4122
        %v4124 = vpop.f32.mrb[0].mxu0
        %v4125 = vpop.f32.mrb[0].mxu0
        %v4126 = vadd.f32 0.0, %v4125
        %v4127 = vpop.f32.mrb[0].mxu0
        %4128 = vdwg.mxu0
        %v4129 = vadd.f32 %v3967, %v4091
        %v4130 = vadd.f32 %v3968, %v4094
        %v4131 = vadd.f32 %v3969, %v4099
        %v4132 = vadd.f32 %v3970, %v4102
        %v4133 = vadd.f32 %v3971, %v4107
        %v4134 = vadd.f32 %v3972, %v4110
        %v4135 = vadd.f32 %v3973, %v4115
        %v4136 = vadd.f32 %v3974, %v4118
        %v4137 = vadd.f32 %v3975, %v4123
        %v4138 = vadd.f32 %v3976, %v4126
        %v4139 = vld [vmem:[#allocation2 + $0x16] sm:$0xff]
        %v4140 = vld [vmem:[#allocation2 + $0x1e] sm:$0xff]
        %v4141 = vld [vmem:[#allocation2 + $0x26] sm:$0xff]
        %v4142 = vld [vmem:[#allocation2 + $0x2e] sm:$0xff]
        %v4143 = vld [vmem:[#allocation2 + $0x36] sm:$0xff]
        %v4144 = vld [vmem:[#allocation2 + $0x3e] sm:$0xff]
        %v4145 = vld [vmem:[#allocation2 + $0x46] sm:$0xff]
        %v4146 = vld [vmem:[#allocation2 + $0x4e] sm:$0xff]
        %v4147 = vld [vmem:[#allocation2 + $0x56] sm:$0xff]
        %v4148 = vld [vmem:[#allocation2 + $0x5e] sm:$0xff]
        %v4149 = vpack.c.bf16 %v4140, %v4139
        %v4150 = vpack.c.bf16 %v4142, %v4141
        %v4151 = vpack.c.bf16 %v4144, %v4143
        %v4152 = vpack.c.bf16 %v4146, %v4145
        %v4153 = vpack.c.bf16 %v4148, %v4147
        %s4154 = scalar_lea.vmem %s4, 816
        %v4155 = vld [vmem:[%s4154] sm:$0xf]
        %v4156 = vld [vmem:[%s4154 + $0x4] sm:$0xf]
        %v4157 = vld [vmem:[%s4154 + $0x8] sm:$0xf]
        %v4158 = vld [vmem:[%s4154 + $0xc] sm:$0xf]
        %v4159 = vld [vmem:[%s4154 + $0x10] sm:$0xf]
        %v4160 = vld [vmem:[%s4154 + $0x14] sm:$0xf]
        %v4161 = vld [vmem:[%s4154 + $0x18] sm:$0xf]
        %v4162 = vld [vmem:[%s4154 + $0x1c] sm:$0xf]
        %v4163 = vld [vmem:[%s4154 + $0x20] sm:$0xf]
        %v4164 = vld [vmem:[%s4154 + $0x24] sm:$0xf]
        %v4165 = vld [vmem:[%s4154 + $0x28] sm:$0xf]
        %v4166 = vld [vmem:[%s4154 + $0x2c] sm:$0xf]
        %v4179 = vunpack.c.l.b16 %v4155
        %v4180 = vunpack.c.l.b16 %v4156
        %v4181 = vunpack.c.l.b16 %v4157
        %v4182 = vunpack.c.l.b16 %v4158
        %v4183 = vunpack.c.l.b16 %v4159
        %v4184 = vunpack.c.l.b16 %v4160
        %v4185 = vunpack.c.l.b16 %v4161
        %v4186 = vunpack.c.l.b16 %v4162
        %v4187 = vunpack.c.l.b16 %v4163
        %v4188 = vunpack.c.l.b16 %v4164
        %v4189 = vunpack.c.l.b16 %v4165
        %v4190 = vunpack.c.l.b16 %v4166
        %v4191 = vpack.c.b16 %v4180, %v4179
        %v4192 = vpack.c.b16 %v4182, %v4181
        %v4193 = vpack.c.b16 %v4184, %v4183
        %v4194 = vpack.c.b16 %v4186, %v4185
        %v4195 = vpack.c.b16 %v4188, %v4187
        %v4196 = vpack.c.b16 %v4190, %v4189
        %v4204 = vsel %vm1247, %v4149, 0
        %v4207 = vsel %vm1247, %v4150, 0
        %v4210 = vsel %vm1247, %v4151, 0
        %v4213 = vsel %vm1247, %v4152, 0
        %v4216 = vsel %vm1247, %v4153, 0
        %4218 = vmatprep.subr.bf16.mxu0 0
        %4219 = vmatpush1.bf16.msra.mxu0 %v4191
        %4220 = vmatprep.subr.bf16.mxu0 0
        %4221 = vmatpush1.bf16.msra.mxu0 %v4192
        %4222 = vmatprep.subr.bf16.mxu0 0
        %4223 = vmatpush1.bf16.msra.mxu0 %v4193
        %4224 = vmatprep.subr.bf16.mxu0 0
        %4225 = vmatpush1.bf16.msra.mxu0 %v4194
        %4226 = vmatprep.subr.bf16.mxu0 0
        %4227 = vmatpush1.bf16.msra.mxu0 %v4195
        %4228 = vmatprep.subr.bf16.mxu0 0
        %4229 = vmatpush1.bf16.msra.mxu0 %v4196
        %4230 = vmatprep.subr.bf16.mxu0 0
        %4231 = vmatpush1.bf16.msra.mxu0 0
        %4232 = vmatprep.subr.bf16.mxu0 0
        %4233 = vmatpush1.bf16.msra.mxu0 0
        %4234 = vmatprep.subr.bf16.mxu0 0
        %4235 = vmatpush1.bf16.msra.mxu0 0
        %4236 = vmatprep.subr.bf16.mxu0 0
        %4237 = vmatpush1.bf16.msra.mxu0 0
        %4238 = vmatprep.subr.bf16.mxu0 0
        %4239 = vmatpush1.bf16.msra.mxu0 0
        %4240 = vmatprep.subr.bf16.mxu0 0
        %4241 = vmatpush1.bf16.msra.mxu0 0
        %4242 = vmatprep.subr.bf16.mxu0 0
        %4243 = vmatpush1.bf16.msra.mxu0 0
        %4244 = vmatprep.subr.bf16.mxu0 0
        %4245 = vmatpush1.bf16.msra.mxu0 0
        %4246 = vmatprep.subr.bf16.mxu0 0
        %4247 = vmatpush1.bf16.msra.mxu0 0
        %4248 = vmatprep.subr.bf16.mxu0 0
        %4249 = vmatpush1.bf16.msra.mxu0 0
        %4250 = vmatprep.mubr.bf16.mxu0 0
        %4251 = vmatmul.mubr.bf16.gmra.mrb[0].mxu0 %v4204
        %v4252 = vpop.f32.mrb[0].mxu0
        %v4253 = vadd.f32 0.0, %v4252
        %v4254 = vpop.f32.mrb[0].mxu0
        %v4255 = vpop.f32.mrb[0].mxu0
        %v4256 = vadd.f32 0.0, %v4255
        %v4257 = vpop.f32.mrb[0].mxu0
        %4258 = vmatprep.mubr.bf16.mxu0 0
        %4259 = vmatmul.mubr.bf16.gmra.mrb[0].mxu0 %v4207
        %v4260 = vpop.f32.mrb[0].mxu0
        %v4261 = vadd.f32 0.0, %v4260
        %v4262 = vpop.f32.mrb[0].mxu0
        %v4263 = vpop.f32.mrb[0].mxu0
        %v4264 = vadd.f32 0.0, %v4263
        %v4265 = vpop.f32.mrb[0].mxu0
        %4266 = vmatprep.mubr.bf16.mxu0 0
        %4267 = vmatmul.mubr.bf16.gmra.mrb[0].mxu0 %v4210
        %v4268 = vpop.f32.mrb[0].mxu0
        %v4269 = vadd.f32 0.0, %v4268
        %v4270 = vpop.f32.mrb[0].mxu0
        %v4271 = vpop.f32.mrb[0].mxu0
        %v4272 = vadd.f32 0.0, %v4271
        %v4273 = vpop.f32.mrb[0].mxu0
        %4274 = vmatprep.mubr.bf16.mxu0 0
        %4275 = vmatmul.mubr.bf16.gmra.mrb[0].mxu0 %v4213
        %v4276 = vpop.f32.mrb[0].mxu0
        %v4277 = vadd.f32 0.0, %v4276
        %v4278 = vpop.f32.mrb[0].mxu0
        %v4279 = vpop.f32.mrb[0].mxu0
        %v4280 = vadd.f32 0.0, %v4279
        %v4281 = vpop.f32.mrb[0].mxu0
        %4282 = vmatprep.mubr.bf16.mxu0 0
        %4283 = vmatmul.mubr.bf16.gmra.mrb[0].mxu0 %v4216
        %v4284 = vpop.f32.mrb[0].mxu0
        %v4285 = vadd.f32 0.0, %v4284
        %v4286 = vpop.f32.mrb[0].mxu0
        %v4287 = vpop.f32.mrb[0].mxu0
        %v4288 = vadd.f32 0.0, %v4287
        %v4289 = vpop.f32.mrb[0].mxu0
        %4290 = vdwg.mxu0
        %v4291 = vadd.f32 %v4129, %v4253
        %v4292 = vadd.f32 %v4130, %v4256
        %v4293 = vadd.f32 %v4131, %v4261
        %v4294 = vadd.f32 %v4132, %v4264
        %v4295 = vadd.f32 %v4133, %v4269
        %v4296 = vadd.f32 %v4134, %v4272
        %v4297 = vadd.f32 %v4135, %v4277
        %v4298 = vadd.f32 %v4136, %v4280
        %v4299 = vadd.f32 %v4137, %v4285
        %v4300 = vadd.f32 %v4138, %v4288
        %s4301 = scalar_lea.vmem %s5, 1
        %v4302 = vld [vmem:[%s4301] sm:$0x1]
        %v4304 = vlaneseq
        %v4305 = vshrl.u32 %v4304, 7
        %v4306 = vsub.s32 0, %v4305
        %v4307 = vrot.slane %v4302, %v4306
        %v4309 = vmul.f32 %v4291, %v4307
        %v4310 = vmul.f32 %v4292, %v4307
        %v4311 = vmul.f32 %v4293, %v4307
        %v4312 = vmul.f32 %v4294, %v4307
        %v4313 = vmul.f32 %v4295, %v4307
        %v4314 = vmul.f32 %v4296, %v4307
        %v4315 = vmul.f32 %v4297, %v4307
        %v4316 = vmul.f32 %v4298, %v4307
        %v4317 = vmul.f32 %v4299, %v4307
        %v4318 = vmul.f32 %v4300, %v4307
        %s4319 = scalar_lea.vmem %s6, 1
        %v4320 = vld [vmem:[%s4319] sm:$0x1]
        %v4322 = vlaneseq
        %v4323 = vshrl.u32 %v4322, 7
        %v4324 = vsub.s32 0, %v4323
        %v4325 = vrot.slane %v4320, %v4324
        %v4327 = vadd.f32 %v4309, %v4325
        %v4328 = vadd.f32 %v4310, %v4325
        %v4329 = vadd.f32 %v4311, %v4325
        %v4330 = vadd.f32 %v4312, %v4325
        %v4331 = vadd.f32 %v4313, %v4325
        %v4332 = vadd.f32 %v4314, %v4325
        %v4333 = vadd.f32 %v4315, %v4325
        %v4334 = vadd.f32 %v4316, %v4325
        %v4335 = vadd.f32 %v4317, %v4325
        %v4336 = vadd.f32 %v4318, %v4325
        %v4337 = vmax.f32 %v4327, 0.0
        %v4338 = vmax.f32 %v4328, 0.0
        %v4339 = vmax.f32 %v4329, 0.0
        %v4340 = vmax.f32 %v4330, 0.0
        %v4341 = vmax.f32 %v4331, 0.0
        %v4342 = vmax.f32 %v4332, 0.0
        %v4343 = vmax.f32 %v4333, 0.0
        %v4344 = vmax.f32 %v4334, 0.0
        %v4345 = vmax.f32 %v4335, 0.0
        %v4346 = vmax.f32 %v4336, 0.0
        %v4347 = vld [vmem:[%s7] sm:$0xff]
        %v4348 = vld [vmem:[%s7 + $0x8] sm:$0xff]
        %v4349 = vld [vmem:[%s7 + $0x10] sm:$0xff]
        %v4350 = vld [vmem:[%s7 + $0x18] sm:$0xff]
        %v4351 = vld [vmem:[%s7 + $0x20] sm:$0xff]
        %v4352 = vld [vmem:[%s7 + $0x28] sm:$0xff]
        %v4353 = vld [vmem:[%s7 + $0x30] sm:$0xff]
        %v4354 = vld [vmem:[%s7 + $0x38] sm:$0xff]
        %v4355 = vld [vmem:[%s7 + $0x40] sm:$0xff]
        %v4356 = vld [vmem:[%s7 + $0x48] sm:$0xff]
        %4358 = vset.pattern.permute.xlu0 0
        %4359 = vperm.xlu0 %4358, %v4347
        %v4360 = vpop.permute.xlu0 %4359
        %4363 = vset.pattern.permute.xlu0 0
        %4364 = vperm.xlu0 %4363, %v4348
        %v4365 = vpop.permute.xlu0 %4364
        %4368 = vset.pattern.permute.xlu0 0
        %4369 = vperm.xlu0 %4368, %v4349
        %v4370 = vpop.permute.xlu0 %4369
        %4373 = vset.pattern.permute.xlu0 0
        %4374 = vperm.xlu0 %4373, %v4350
        %v4375 = vpop.permute.xlu0 %4374
        %4378 = vset.pattern.permute.xlu0 0
        %4379 = vperm.xlu0 %4378, %v4351
        %v4380 = vpop.permute.xlu0 %4379
        %4383 = vset.pattern.permute.xlu0 0
        %4384 = vperm.xlu0 %4383, %v4352
        %v4385 = vpop.permute.xlu0 %4384
        %4388 = vset.pattern.permute.xlu0 0
        %4389 = vperm.xlu0 %4388, %v4353
        %v4390 = vpop.permute.xlu0 %4389
        %4393 = vset.pattern.permute.xlu0 0
        %4394 = vperm.xlu0 %4393, %v4354
        %v4395 = vpop.permute.xlu0 %4394
        %4398 = vset.pattern.permute.xlu0 0
        %4399 = vperm.xlu0 %4398, %v4355
        %v4400 = vpop.permute.xlu0 %4399
        %4403 = vset.pattern.permute.xlu0 0
        %4404 = vperm.xlu0 %4403, %v4356
        %v4405 = vpop.permute.xlu0 %4404
        %v4407 = vmul.f32 %v4337, %v4360
        %v4408 = vmul.f32 %v4338, %v4365
        %v4409 = vmul.f32 %v4339, %v4370
        %v4410 = vmul.f32 %v4340, %v4375
        %v4411 = vmul.f32 %v4341, %v4380
        %v4412 = vmul.f32 %v4342, %v4385
        %v4413 = vmul.f32 %v4343, %v4390
        %v4414 = vmul.f32 %v4344, %v4395
        %v4415 = vmul.f32 %v4345, %v4400
        %v4416 = vmul.f32 %v4346, %v4405
        %4417 = vst.msk [vmem:[#allocation2] sm:$0xff] %vm1247, 0.0
        %4418 = vst.msk [vmem:[#allocation2 + $0x8] sm:$0xff] %vm1247, 0.0
        %4419 = vst.msk [vmem:[#allocation2 + $0x10] sm:$0xff] %vm1247, 0.0
        %4420 = vst.msk [vmem:[#allocation2 + $0x18] sm:$0xff] %vm1247, 0.0
        %4421 = vst.msk [vmem:[#allocation2 + $0x20] sm:$0xff] %vm1247, 0.0
        %4422 = vst.msk [vmem:[#allocation2 + $0x28] sm:$0xff] %vm1247, 0.0
        %4423 = vst.msk [vmem:[#allocation2 + $0x30] sm:$0xff] %vm1247, 0.0
        %4424 = vst.msk [vmem:[#allocation2 + $0x38] sm:$0xff] %vm1247, 0.0
        %4425 = vst.msk [vmem:[#allocation2 + $0x40] sm:$0xff] %vm1247, 0.0
        %4426 = vst.msk [vmem:[#allocation2 + $0x48] sm:$0xff] %vm1247, 0.0
        %4427 = vst.msk [vmem:[#allocation2 + $0x50] sm:$0xff] %vm1247, 0.0
        %4428 = vst.msk [vmem:[#allocation2 + $0x58] sm:$0xff] %vm1247, 0.0
        %4429 = vst.msk [vmem:[#allocation2 + $0x60] sm:$0xff] %vm1247, 0.0
        %4430 = vst.msk [vmem:[#allocation2 + $0x68] sm:$0xf] %vm1261, 0.0
        %4431 = vst.msk [vmem:[#allocation2 + $0xb] sm:$0xff] %vm1247, %v4407
        %4432 = vst.msk [vmem:[#allocation2 + $0x13] sm:$0xff] %vm1247, %v4408
        %4433 = vst.msk [vmem:[#allocation2 + $0x1b] sm:$0xff] %vm1247, %v4409
        %4434 = vst.msk [vmem:[#allocation2 + $0x23] sm:$0xff] %vm1247, %v4410
        %4435 = vst.msk [vmem:[#allocation2 + $0x2b] sm:$0xff] %vm1247, %v4411
        %4436 = vst.msk [vmem:[#allocation2 + $0x33] sm:$0xff] %vm1247, %v4412
        %4437 = vst.msk [vmem:[#allocation2 + $0x3b] sm:$0xff] %vm1247, %v4413
        %4438 = vst.msk [vmem:[#allocation2 + $0x43] sm:$0xff] %vm1247, %v4414
        %4439 = vst.msk [vmem:[#allocation2 + $0x4b] sm:$0xff] %vm1247, %v4415
        %4440 = vst.msk [vmem:[#allocation2 + $0x53] sm:$0xff] %vm1247, %v4416
        %v4441 = vld [vmem:[#allocation2] sm:$0xff]
        %v4442 = vld [vmem:[#allocation2 + $0x8] sm:$0xff]
        %v4443 = vld [vmem:[#allocation2 + $0x10] sm:$0xff]
        %v4444 = vld [vmem:[#allocation2 + $0x18] sm:$0xff]
        %v4445 = vld [vmem:[#allocation2 + $0x20] sm:$0xff]
        %v4446 = vld [vmem:[#allocation2 + $0x28] sm:$0xff]
        %v4447 = vld [vmem:[#allocation2 + $0x30] sm:$0xff]
        %v4448 = vld [vmem:[#allocation2 + $0x38] sm:$0xff]
        %v4449 = vld [vmem:[#allocation2 + $0x40] sm:$0xff]
        %v4450 = vld [vmem:[#allocation2 + $0x48] sm:$0xff]
        %v4451 = vpack.c.bf16 %v4442, %v4441
        %v4452 = vpack.c.bf16 %v4444, %v4443
        %v4453 = vpack.c.bf16 %v4446, %v4445
        %v4454 = vpack.c.bf16 %v4448, %v4447
        %v4455 = vpack.c.bf16 %v4450, %v4449
        %s4456 = scalar_lea.vmem %s4, 864
        %v4457 = vld [vmem:[%s4456] sm:$0xf]
        %v4458 = vld [vmem:[%s4456 + $0x4] sm:$0xf]
        %v4459 = vld [vmem:[%s4456 + $0x8] sm:$0xf]
        %v4460 = vld [vmem:[%s4456 + $0xc] sm:$0xf]
        %v4461 = vld [vmem:[%s4456 + $0x10] sm:$0xf]
        %v4462 = vld [vmem:[%s4456 + $0x14] sm:$0xf]
        %v4463 = vld [vmem:[%s4456 + $0x18] sm:$0xf]
        %v4464 = vld [vmem:[%s4456 + $0x1c] sm:$0xf]
        %v4465 = vld [vmem:[%s4456 + $0x20] sm:$0xf]
        %v4466 = vld [vmem:[%s4456 + $0x24] sm:$0xf]
        %v4467 = vld [vmem:[%s4456 + $0x28] sm:$0xf]
        %v4468 = vld [vmem:[%s4456 + $0x2c] sm:$0xf]
        %v4469 = vld [vmem:[#allocation2 + $0x1] sm:$0xff]
        %v4470 = vld [vmem:[#allocation2 + $0x9] sm:$0xff]
        %v4471 = vld [vmem:[#allocation2 + $0x11] sm:$0xff]
        %v4472 = vld [vmem:[#allocation2 + $0x19] sm:$0xff]
        %v4473 = vld [vmem:[#allocation2 + $0x21] sm:$0xff]
        %v4474 = vld [vmem:[#allocation2 + $0x29] sm:$0xff]
        %v4475 = vld [vmem:[#allocation2 + $0x31] sm:$0xff]
        %v4476 = vld [vmem:[#allocation2 + $0x39] sm:$0xff]
        %v4477 = vld [vmem:[#allocation2 + $0x41] sm:$0xff]
        %v4478 = vld [vmem:[#allocation2 + $0x49] sm:$0xff]
        %v4479 = vpack.c.bf16 %v4470, %v4469
        %v4480 = vpack.c.bf16 %v4472, %v4471
        %v4481 = vpack.c.bf16 %v4474, %v4473
        %v4482 = vpack.c.bf16 %v4476, %v4475
        %v4483 = vpack.c.bf16 %v4478, %v4477
        %s4484 = scalar_lea.vmem %s4, 912
        %v4485 = vld [vmem:[%s4484] sm:$0xf]
        %v4486 = vld [vmem:[%s4484 + $0x4] sm:$0xf]
        %v4487 = vld [vmem:[%s4484 + $0x8] sm:$0xf]
        %v4488 = vld [vmem:[%s4484 + $0xc] sm:$0xf]
        %v4489 = vld [vmem:[%s4484 + $0x10] sm:$0xf]
        %v4490 = vld [vmem:[%s4484 + $0x14] sm:$0xf]
        %v4491 = vld [vmem:[%s4484 + $0x18] sm:$0xf]
        %v4492 = vld [vmem:[%s4484 + $0x1c] sm:$0xf]
        %v4493 = vld [vmem:[%s4484 + $0x20] sm:$0xf]
        %v4494 = vld [vmem:[%s4484 + $0x24] sm:$0xf]
        %v4495 = vld [vmem:[%s4484 + $0x28] sm:$0xf]
        %v4496 = vld [vmem:[%s4484 + $0x2c] sm:$0xf]
        %v4509 = vunpack.c.l.b16 %v4485
        %v4510 = vunpack.c.l.b16 %v4486
        %v4511 = vunpack.c.l.b16 %v4487
        %v4512 = vunpack.c.l.b16 %v4488
        %v4513 = vunpack.c.l.b16 %v4489
        %v4514 = vunpack.c.l.b16 %v4490
        %v4515 = vunpack.c.l.b16 %v4491
        %v4516 = vunpack.c.l.b16 %v4492
        %v4517 = vunpack.c.l.b16 %v4493
        %v4518 = vunpack.c.l.b16 %v4494
        %v4519 = vunpack.c.l.b16 %v4495
        %v4520 = vunpack.c.l.b16 %v4496
        %v4521 = vpack.c.b16 %v4510, %v4509
        %v4522 = vpack.c.b16 %v4512, %v4511
        %v4523 = vpack.c.b16 %v4514, %v4513
        %v4524 = vpack.c.b16 %v4516, %v4515
        %v4525 = vpack.c.b16 %v4518, %v4517
        %v4526 = vpack.c.b16 %v4520, %v4519
        %v4534 = vsel %vm1247, %v4479, 0
        %v4537 = vsel %vm1247, %v4480, 0
        %v4540 = vsel %vm1247, %v4481, 0
        %v4543 = vsel %vm1247, %v4482, 0
        %v4546 = vsel %vm1247, %v4483, 0
        %4548 = vmatprep.subr.bf16.mxu0 0
        %4549 = vmatpush1.bf16.msra.mxu0 %v4521
        %4550 = vmatprep.subr.bf16.mxu0 0
        %4551 = vmatpush1.bf16.msra.mxu0 %v4522
        %4552 = vmatprep.subr.bf16.mxu0 0
        %4553 = vmatpush1.bf16.msra.mxu0 %v4523
        %4554 = vmatprep.subr.bf16.mxu0 0
        %4555 = vmatpush1.bf16.msra.mxu0 %v4524
        %4556 = vmatprep.subr.bf16.mxu0 0
        %4557 = vmatpush1.bf16.msra.mxu0 %v4525
        %4558 = vmatprep.subr.bf16.mxu0 0
        %4559 = vmatpush1.bf16.msra.mxu0 %v4526
        %4560 = vmatprep.subr.bf16.mxu0 0
        %4561 = vmatpush1.bf16.msra.mxu0 0
        %4562 = vmatprep.subr.bf16.mxu0 0
        %4563 = vmatpush1.bf16.msra.mxu0 0
        %4564 = vmatprep.subr.bf16.mxu0 0
        %4565 = vmatpush1.bf16.msra.mxu0 0
        %4566 = vmatprep.subr.bf16.mxu0 0
        %4567 = vmatpush1.bf16.msra.mxu0 0
        %4568 = vmatprep.subr.bf16.mxu0 0
        %4569 = vmatpush1.bf16.msra.mxu0 0
        %4570 = vmatprep.subr.bf16.mxu0 0
        %4571 = vmatpush1.bf16.msra.mxu0 0
        %4572 = vmatprep.subr.bf16.mxu0 0
        %4573 = vmatpush1.bf16.msra.mxu0 0
        %4574 = vmatprep.subr.bf16.mxu0 0
        %4575 = vmatpush1.bf16.msra.mxu0 0
        %4576 = vmatprep.subr.bf16.mxu0 0
        %4577 = vmatpush1.bf16.msra.mxu0 0
        %4578 = vmatprep.subr.bf16.mxu0 0
        %4579 = vmatpush1.bf16.msra.mxu0 0
        %4580 = vmatprep.mubr.bf16.mxu0 0
        %4581 = vmatmul.mubr.bf16.gmra.mrb[0].mxu0 %v4534
        %v4582 = vpop.f32.mrb[0].mxu0
        %v4583 = vadd.f32 0.0, %v4582
        %v4584 = vpop.f32.mrb[0].mxu0
        %v4585 = vpop.f32.mrb[0].mxu0
        %v4586 = vadd.f32 0.0, %v4585
        %v4587 = vpop.f32.mrb[0].mxu0
        %4588 = vmatprep.mubr.bf16.mxu0 0
        %4589 = vmatmul.mubr.bf16.gmra.mrb[0].mxu0 %v4537
        %v4590 = vpop.f32.mrb[0].mxu0
        %v4591 = vadd.f32 0.0, %v4590
        %v4592 = vpop.f32.mrb[0].mxu0
        %v4593 = vpop.f32.mrb[0].mxu0
        %v4594 = vadd.f32 0.0, %v4593
        %v4595 = vpop.f32.mrb[0].mxu0
        %4596 = vmatprep.mubr.bf16.mxu0 0
        %4597 = vmatmul.mubr.bf16.gmra.mrb[0].mxu0 %v4540
        %v4598 = vpop.f32.mrb[0].mxu0
        %v4599 = vadd.f32 0.0, %v4598
        %v4600 = vpop.f32.mrb[0].mxu0
        %v4601 = vpop.f32.mrb[0].mxu0
        %v4602 = vadd.f32 0.0, %v4601
        %v4603 = vpop.f32.mrb[0].mxu0
        %4604 = vmatprep.mubr.bf16.mxu0 0
        %4605 = vmatmul.mubr.bf16.gmra.mrb[0].mxu0 %v4543
        %v4606 = vpop.f32.mrb[0].mxu0
        %v4607 = vadd.f32 0.0, %v4606
        %v4608 = vpop.f32.mrb[0].mxu0
        %v4609 = vpop.f32.mrb[0].mxu0
        %v4610 = vadd.f32 0.0, %v4609
        %v4611 = vpop.f32.mrb[0].mxu0
        %4612 = vmatprep.mubr.bf16.mxu0 0
        %4613 = vmatmul.mubr.bf16.gmra.mrb[0].mxu0 %v4546
        %v4614 = vpop.f32.mrb[0].mxu0
        %v4615 = vadd.f32 0.0, %v4614
        %v4616 = vpop.f32.mrb[0].mxu0
        %v4617 = vpop.f32.mrb[0].mxu0
        %v4618 = vadd.f32 0.0, %v4617
        %v4619 = vpop.f32.mrb[0].mxu0
        %4620 = vdwg.mxu0
        %v4633 = vunpack.c.l.b16 %v4457
        %v4634 = vunpack.c.l.b16 %v4458
        %v4635 = vunpack.c.l.b16 %v4459
        %v4636 = vunpack.c.l.b16 %v4460
        %v4637 = vunpack.c.l.b16 %v4461
        %v4638 = vunpack.c.l.b16 %v4462
        %v4639 = vunpack.c.l.b16 %v4463
        %v4640 = vunpack.c.l.b16 %v4464
        %v4641 = vunpack.c.l.b16 %v4465
        %v4642 = vunpack.c.l.b16 %v4466
        %v4643 = vunpack.c.l.b16 %v4467
        %v4644 = vunpack.c.l.b16 %v4468
        %v4645 = vpack.c.b16 %v4634, %v4633
        %v4646 = vpack.c.b16 %v4636, %v4635
        %v4647 = vpack.c.b16 %v4638, %v4637
        %v4648 = vpack.c.b16 %v4640, %v4639
        %v4649 = vpack.c.b16 %v4642, %v4641
        %v4650 = vpack.c.b16 %v4644, %v4643
        %v4658 = vsel %vm1247, %v4451, 0
        %v4661 = vsel %vm1247, %v4452, 0
        %v4664 = vsel %vm1247, %v4453, 0
        %v4667 = vsel %vm1247, %v4454, 0
        %v4670 = vsel %vm1247, %v4455, 0
        %4672 = vmatprep.subr.bf16.mxu0 0
        %4673 = vmatpush1.bf16.msra.mxu0 %v4645
        %4674 = vmatprep.subr.bf16.mxu0 0
        %4675 = vmatpush1.bf16.msra.mxu0 %v4646
        %4676 = vmatprep.subr.bf16.mxu0 0
        %4677 = vmatpush1.bf16.msra.mxu0 %v4647
        %4678 = vmatprep.subr.bf16.mxu0 0
        %4679 = vmatpush1.bf16.msra.mxu0 %v4648
        %4680 = vmatprep.subr.bf16.mxu0 0
        %4681 = vmatpush1.bf16.msra.mxu0 %v4649
        %4682 = vmatprep.subr.bf16.mxu0 0
        %4683 = vmatpush1.bf16.msra.mxu0 %v4650
        %4684 = vmatprep.subr.bf16.mxu0 0
        %4685 = vmatpush1.bf16.msra.mxu0 0
        %4686 = vmatprep.subr.bf16.mxu0 0
        %4687 = vmatpush1.bf16.msra.mxu0 0
        %4688 = vmatprep.subr.bf16.mxu0 0
        %4689 = vmatpush1.bf16.msra.mxu0 0
        %4690 = vmatprep.subr.bf16.mxu0 0
        %4691 = vmatpush1.bf16.msra.mxu0 0
        %4692 = vmatprep.subr.bf16.mxu0 0
        %4693 = vmatpush1.bf16.msra.mxu0 0
        %4694 = vmatprep.subr.bf16.mxu0 0
        %4695 = vmatpush1.bf16.msra.mxu0 0
        %4696 = vmatprep.subr.bf16.mxu0 0
        %4697 = vmatpush1.bf16.msra.mxu0 0
        %4698 = vmatprep.subr.bf16.mxu0 0
        %4699 = vmatpush1.bf16.msra.mxu0 0
        %4700 = vmatprep.subr.bf16.mxu0 0
        %4701 = vmatpush1.bf16.msra.mxu0 0
        %4702 = vmatprep.subr.bf16.mxu0 0
        %4703 = vmatpush1.bf16.msra.mxu0 0
        %4704 = vmatprep.mubr.bf16.mxu0 0
        %4705 = vmatmul.mubr.bf16.gmra.mrb[0].mxu0 %v4658
        %v4706 = vpop.f32.mrb[0].mxu0
        %v4707 = vadd.f32 %v4583, %v4706
        %v4708 = vpop.f32.mrb[0].mxu0
        %v4709 = vpop.f32.mrb[0].mxu0
        %v4710 = vadd.f32 %v4586, %v4709
        %v4711 = vpop.f32.mrb[0].mxu0
        %4712 = vmatprep.mubr.bf16.mxu0 0
        %4713 = vmatmul.mubr.bf16.gmra.mrb[0].mxu0 %v4661
        %v4714 = vpop.f32.mrb[0].mxu0
        %v4715 = vadd.f32 %v4591, %v4714
        %v4716 = vpop.f32.mrb[0].mxu0
        %v4717 = vpop.f32.mrb[0].mxu0
        %v4718 = vadd.f32 %v4594, %v4717
        %v4719 = vpop.f32.mrb[0].mxu0
        %4720 = vmatprep.mubr.bf16.mxu0 0
        %4721 = vmatmul.mubr.bf16.gmra.mrb[0].mxu0 %v4664
        %v4722 = vpop.f32.mrb[0].mxu0
        %v4723 = vadd.f32 %v4599, %v4722
        %v4724 = vpop.f32.mrb[0].mxu0
        %v4725 = vpop.f32.mrb[0].mxu0
        %v4726 = vadd.f32 %v4602, %v4725
        %v4727 = vpop.f32.mrb[0].mxu0
        %4728 = vmatprep.mubr.bf16.mxu0 0
        %4729 = vmatmul.mubr.bf16.gmra.mrb[0].mxu0 %v4667
        %v4730 = vpop.f32.mrb[0].mxu0
        %v4731 = vadd.f32 %v4607, %v4730
        %v4732 = vpop.f32.mrb[0].mxu0
        %v4733 = vpop.f32.mrb[0].mxu0
        %v4734 = vadd.f32 %v4610, %v4733
        %v4735 = vpop.f32.mrb[0].mxu0
        %4736 = vmatprep.mubr.bf16.mxu0 0
        %4737 = vmatmul.mubr.bf16.gmra.mrb[0].mxu0 %v4670
        %v4738 = vpop.f32.mrb[0].mxu0
        %v4739 = vadd.f32 %v4615, %v4738
        %v4740 = vpop.f32.mrb[0].mxu0
        %v4741 = vpop.f32.mrb[0].mxu0
        %v4742 = vadd.f32 %v4618, %v4741
        %v4743 = vpop.f32.mrb[0].mxu0
        %4744 = vdwg.mxu0
        %v4745 = vld [vmem:[#allocation2 + $0x2] sm:$0xff]
        %v4746 = vld [vmem:[#allocation2 + $0xa] sm:$0xff]
        %v4747 = vld [vmem:[#allocation2 + $0x12] sm:$0xff]
        %v4748 = vld [vmem:[#allocation2 + $0x1a] sm:$0xff]
        %v4749 = vld [vmem:[#allocation2 + $0x22] sm:$0xff]
        %v4750 = vld [vmem:[#allocation2 + $0x2a] sm:$0xff]
        %v4751 = vld [vmem:[#allocation2 + $0x32] sm:$0xff]
        %v4752 = vld [vmem:[#allocation2 + $0x3a] sm:$0xff]
        %v4753 = vld [vmem:[#allocation2 + $0x42] sm:$0xff]
        %v4754 = vld [vmem:[#allocation2 + $0x4a] sm:$0xff]
        %v4755 = vpack.c.bf16 %v4746, %v4745
        %v4756 = vpack.c.bf16 %v4748, %v4747
        %v4757 = vpack.c.bf16 %v4750, %v4749
        %v4758 = vpack.c.bf16 %v4752, %v4751
        %v4759 = vpack.c.bf16 %v4754, %v4753
        %s4760 = scalar_lea.vmem %s4, 960
        %v4761 = vld [vmem:[%s4760] sm:$0xf]
        %v4762 = vld [vmem:[%s4760 + $0x4] sm:$0xf]
        %v4763 = vld [vmem:[%s4760 + $0x8] sm:$0xf]
        %v4764 = vld [vmem:[%s4760 + $0xc] sm:$0xf]
        %v4765 = vld [vmem:[%s4760 + $0x10] sm:$0xf]
        %v4766 = vld [vmem:[%s4760 + $0x14] sm:$0xf]
        %v4767 = vld [vmem:[%s4760 + $0x18] sm:$0xf]
        %v4768 = vld [vmem:[%s4760 + $0x1c] sm:$0xf]
        %v4769 = vld [vmem:[%s4760 + $0x20] sm:$0xf]
        %v4770 = vld [vmem:[%s4760 + $0x24] sm:$0xf]
        %v4771 = vld [vmem:[%s4760 + $0x28] sm:$0xf]
        %v4772 = vld [vmem:[%s4760 + $0x2c] sm:$0xf]
        %v4785 = vunpack.c.l.b16 %v4761
        %v4786 = vunpack.c.l.b16 %v4762
        %v4787 = vunpack.c.l.b16 %v4763
        %v4788 = vunpack.c.l.b16 %v4764
        %v4789 = vunpack.c.l.b16 %v4765
        %v4790 = vunpack.c.l.b16 %v4766
        %v4791 = vunpack.c.l.b16 %v4767
        %v4792 = vunpack.c.l.b16 %v4768
        %v4793 = vunpack.c.l.b16 %v4769
        %v4794 = vunpack.c.l.b16 %v4770
        %v4795 = vunpack.c.l.b16 %v4771
        %v4796 = vunpack.c.l.b16 %v4772
        %v4797 = vpack.c.b16 %v4786, %v4785
        %v4798 = vpack.c.b16 %v4788, %v4787
        %v4799 = vpack.c.b16 %v4790, %v4789
        %v4800 = vpack.c.b16 %v4792, %v4791
        %v4801 = vpack.c.b16 %v4794, %v4793
        %v4802 = vpack.c.b16 %v4796, %v4795
        %v4810 = vsel %vm1247, %v4755, 0
        %v4813 = vsel %vm1247, %v4756, 0
        %v4816 = vsel %vm1247, %v4757, 0
        %v4819 = vsel %vm1247, %v4758, 0
        %v4822 = vsel %vm1247, %v4759, 0
        %4824 = vmatprep.subr.bf16.mxu0 0
        %4825 = vmatpush1.bf16.msra.mxu0 %v4797
        %4826 = vmatprep.subr.bf16.mxu0 0
        %4827 = vmatpush1.bf16.msra.mxu0 %v4798
        %4828 = vmatprep.subr.bf16.mxu0 0
        %4829 = vmatpush1.bf16.msra.mxu0 %v4799
        %4830 = vmatprep.subr.bf16.mxu0 0
        %4831 = vmatpush1.bf16.msra.mxu0 %v4800
        %4832 = vmatprep.subr.bf16.mxu0 0
        %4833 = vmatpush1.bf16.msra.mxu0 %v4801
        %4834 = vmatprep.subr.bf16.mxu0 0
        %4835 = vmatpush1.bf16.msra.mxu0 %v4802
        %4836 = vmatprep.subr.bf16.mxu0 0
        %4837 = vmatpush1.bf16.msra.mxu0 0
        %4838 = vmatprep.subr.bf16.mxu0 0
        %4839 = vmatpush1.bf16.msra.mxu0 0
        %4840 = vmatprep.subr.bf16.mxu0 0
        %4841 = vmatpush1.bf16.msra.mxu0 0
        %4842 = vmatprep.subr.bf16.mxu0 0
        %4843 = vmatpush1.bf16.msra.mxu0 0
        %4844 = vmatprep.subr.bf16.mxu0 0
        %4845 = vmatpush1.bf16.msra.mxu0 0
        %4846 = vmatprep.subr.bf16.mxu0 0
        %4847 = vmatpush1.bf16.msra.mxu0 0
        %4848 = vmatprep.subr.bf16.mxu0 0
        %4849 = vmatpush1.bf16.msra.mxu0 0
        %4850 = vmatprep.subr.bf16.mxu0 0
        %4851 = vmatpush1.bf16.msra.mxu0 0
        %4852 = vmatprep.subr.bf16.mxu0 0
        %4853 = vmatpush1.bf16.msra.mxu0 0
        %4854 = vmatprep.subr.bf16.mxu0 0
        %4855 = vmatpush1.bf16.msra.mxu0 0
        %4856 = vmatprep.mubr.bf16.mxu0 0
        %4857 = vmatmul.mubr.bf16.gmra.mrb[0].mxu0 %v4810
        %v4858 = vpop.f32.mrb[0].mxu0
        %v4859 = vadd.f32 0.0, %v4858
        %v4860 = vpop.f32.mrb[0].mxu0
        %v4861 = vpop.f32.mrb[0].mxu0
        %v4862 = vadd.f32 0.0, %v4861
        %v4863 = vpop.f32.mrb[0].mxu0
        %4864 = vmatprep.mubr.bf16.mxu0 0
        %4865 = vmatmul.mubr.bf16.gmra.mrb[0].mxu0 %v4813
        %v4866 = vpop.f32.mrb[0].mxu0
        %v4867 = vadd.f32 0.0, %v4866
        %v4868 = vpop.f32.mrb[0].mxu0
        %v4869 = vpop.f32.mrb[0].mxu0
        %v4870 = vadd.f32 0.0, %v4869
        %v4871 = vpop.f32.mrb[0].mxu0
        %4872 = vmatprep.mubr.bf16.mxu0 0
        %4873 = vmatmul.mubr.bf16.gmra.mrb[0].mxu0 %v4816
        %v4874 = vpop.f32.mrb[0].mxu0
        %v4875 = vadd.f32 0.0, %v4874
        %v4876 = vpop.f32.mrb[0].mxu0
        %v4877 = vpop.f32.mrb[0].mxu0
        %v4878 = vadd.f32 0.0, %v4877
        %v4879 = vpop.f32.mrb[0].mxu0
        %4880 = vmatprep.mubr.bf16.mxu0 0
        %4881 = vmatmul.mubr.bf16.gmra.mrb[0].mxu0 %v4819
        %v4882 = vpop.f32.mrb[0].mxu0
        %v4883 = vadd.f32 0.0, %v4882
        %v4884 = vpop.f32.mrb[0].mxu0
        %v4885 = vpop.f32.mrb[0].mxu0
        %v4886 = vadd.f32 0.0, %v4885
        %v4887 = vpop.f32.mrb[0].mxu0
        %4888 = vmatprep.mubr.bf16.mxu0 0
        %4889 = vmatmul.mubr.bf16.gmra.mrb[0].mxu0 %v4822
        %v4890 = vpop.f32.mrb[0].mxu0
        %v4891 = vadd.f32 0.0, %v4890
        %v4892 = vpop.f32.mrb[0].mxu0
        %v4893 = vpop.f32.mrb[0].mxu0
        %v4894 = vadd.f32 0.0, %v4893
        %v4895 = vpop.f32.mrb[0].mxu0
        %4896 = vdwg.mxu0
        %v4897 = vadd.f32 %v4707, %v4859
        %v4898 = vadd.f32 %v4710, %v4862
        %v4899 = vadd.f32 %v4715, %v4867
        %v4900 = vadd.f32 %v4718, %v4870
        %v4901 = vadd.f32 %v4723, %v4875
        %v4902 = vadd.f32 %v4726, %v4878
        %v4903 = vadd.f32 %v4731, %v4883
        %v4904 = vadd.f32 %v4734, %v4886
        %v4905 = vadd.f32 %v4739, %v4891
        %v4906 = vadd.f32 %v4742, %v4894
        %v4907 = vld [vmem:[#allocation2 + $0xa] sm:$0xff]
        %v4908 = vld [vmem:[#allocation2 + $0x12] sm:$0xff]
        %v4909 = vld [vmem:[#allocation2 + $0x1a] sm:$0xff]
        %v4910 = vld [vmem:[#allocation2 + $0x22] sm:$0xff]
        %v4911 = vld [vmem:[#allocation2 + $0x2a] sm:$0xff]
        %v4912 = vld [vmem:[#allocation2 + $0x32] sm:$0xff]
        %v4913 = vld [vmem:[#allocation2 + $0x3a] sm:$0xff]
        %v4914 = vld [vmem:[#allocation2 + $0x42] sm:$0xff]
        %v4915 = vld [vmem:[#allocation2 + $0x4a] sm:$0xff]
        %v4916 = vld [vmem:[#allocation2 + $0x52] sm:$0xff]
        %v4917 = vpack.c.bf16 %v4908, %v4907
        %v4918 = vpack.c.bf16 %v4910, %v4909
        %v4919 = vpack.c.bf16 %v4912, %v4911
        %v4920 = vpack.c.bf16 %v4914, %v4913
        %v4921 = vpack.c.bf16 %v4916, %v4915
        %s4922 = scalar_lea.vmem %s4, 1008
        %v4923 = vld [vmem:[%s4922] sm:$0xf]
        %v4924 = vld [vmem:[%s4922 + $0x4] sm:$0xf]
        %v4925 = vld [vmem:[%s4922 + $0x8] sm:$0xf]
        %v4926 = vld [vmem:[%s4922 + $0xc] sm:$0xf]
        %v4927 = vld [vmem:[%s4922 + $0x10] sm:$0xf]
        %v4928 = vld [vmem:[%s4922 + $0x14] sm:$0xf]
        %v4929 = vld [vmem:[%s4922 + $0x18] sm:$0xf]
        %v4930 = vld [vmem:[%s4922 + $0x1c] sm:$0xf]
        %v4931 = vld [vmem:[%s4922 + $0x20] sm:$0xf]
        %v4932 = vld [vmem:[%s4922 + $0x24] sm:$0xf]
        %v4933 = vld [vmem:[%s4922 + $0x28] sm:$0xf]
        %v4934 = vld [vmem:[%s4922 + $0x2c] sm:$0xf]
        %v4947 = vunpack.c.l.b16 %v4923
        %v4948 = vunpack.c.l.b16 %v4924
        %v4949 = vunpack.c.l.b16 %v4925
        %v4950 = vunpack.c.l.b16 %v4926
        %v4951 = vunpack.c.l.b16 %v4927
        %v4952 = vunpack.c.l.b16 %v4928
        %v4953 = vunpack.c.l.b16 %v4929
        %v4954 = vunpack.c.l.b16 %v4930
        %v4955 = vunpack.c.l.b16 %v4931
        %v4956 = vunpack.c.l.b16 %v4932
        %v4957 = vunpack.c.l.b16 %v4933
        %v4958 = vunpack.c.l.b16 %v4934
        %v4959 = vpack.c.b16 %v4948, %v4947
        %v4960 = vpack.c.b16 %v4950, %v4949
        %v4961 = vpack.c.b16 %v4952, %v4951
        %v4962 = vpack.c.b16 %v4954, %v4953
        %v4963 = vpack.c.b16 %v4956, %v4955
        %v4964 = vpack.c.b16 %v4958, %v4957
        %v4972 = vsel %vm1247, %v4917, 0
        %v4975 = vsel %vm1247, %v4918, 0
        %v4978 = vsel %vm1247, %v4919, 0
        %v4981 = vsel %vm1247, %v4920, 0
        %v4984 = vsel %vm1247, %v4921, 0
        %4986 = vmatprep.subr.bf16.mxu0 0
        %4987 = vmatpush1.bf16.msra.mxu0 %v4959
        %4988 = vmatprep.subr.bf16.mxu0 0
        %4989 = vmatpush1.bf16.msra.mxu0 %v4960
        %4990 = vmatprep.subr.bf16.mxu0 0
        %4991 = vmatpush1.bf16.msra.mxu0 %v4961
        %4992 = vmatprep.subr.bf16.mxu0 0
        %4993 = vmatpush1.bf16.msra.mxu0 %v4962
        %4994 = vmatprep.subr.bf16.mxu0 0
        %4995 = vmatpush1.bf16.msra.mxu0 %v4963
        %4996 = vmatprep.subr.bf16.mxu0 0
        %4997 = vmatpush1.bf16.msra.mxu0 %v4964
        %4998 = vmatprep.subr.bf16.mxu0 0
        %4999 = vmatpush1.bf16.msra.mxu0 0
        %5000 = vmatprep.subr.bf16.mxu0 0
        %5001 = vmatpush1.bf16.msra.mxu0 0
        %5002 = vmatprep.subr.bf16.mxu0 0
        %5003 = vmatpush1.bf16.msra.mxu0 0
        %5004 = vmatprep.subr.bf16.mxu0 0
        %5005 = vmatpush1.bf16.msra.mxu0 0
        %5006 = vmatprep.subr.bf16.mxu0 0
        %5007 = vmatpush1.bf16.msra.mxu0 0
        %5008 = vmatprep.subr.bf16.mxu0 0
        %5009 = vmatpush1.bf16.msra.mxu0 0
        %5010 = vmatprep.subr.bf16.mxu0 0
        %5011 = vmatpush1.bf16.msra.mxu0 0
        %5012 = vmatprep.subr.bf16.mxu0 0
        %5013 = vmatpush1.bf16.msra.mxu0 0
        %5014 = vmatprep.subr.bf16.mxu0 0
        %5015 = vmatpush1.bf16.msra.mxu0 0
        %5016 = vmatprep.subr.bf16.mxu0 0
        %5017 = vmatpush1.bf16.msra.mxu0 0
        %5018 = vmatprep.mubr.bf16.mxu0 0
        %5019 = vmatmul.mubr.bf16.gmra.mrb[0].mxu0 %v4972
        %v5020 = vpop.f32.mrb[0].mxu0
        %v5021 = vadd.f32 0.0, %v5020
        %v5022 = vpop.f32.mrb[0].mxu0
        %v5023 = vpop.f32.mrb[0].mxu0
        %v5024 = vadd.f32 0.0, %v5023
        %v5025 = vpop.f32.mrb[0].mxu0
        %5026 = vmatprep.mubr.bf16.mxu0 0
        %5027 = vmatmul.mubr.bf16.gmra.mrb[0].mxu0 %v4975
        %v5028 = vpop.f32.mrb[0].mxu0
        %v5029 = vadd.f32 0.0, %v5028
        %v5030 = vpop.f32.mrb[0].mxu0
        %v5031 = vpop.f32.mrb[0].mxu0
        %v5032 = vadd.f32 0.0, %v5031
        %v5033 = vpop.f32.mrb[0].mxu0
        %5034 = vmatprep.mubr.bf16.mxu0 0
        %5035 = vmatmul.mubr.bf16.gmra.mrb[0].mxu0 %v4978
        %v5036 = vpop.f32.mrb[0].mxu0
        %v5037 = vadd.f32 0.0, %v5036
        %v5038 = vpop.f32.mrb[0].mxu0
        %v5039 = vpop.f32.mrb[0].mxu0
        %v5040 = vadd.f32 0.0, %v5039
        %v5041 = vpop.f32.mrb[0].mxu0
        %5042 = vmatprep.mubr.bf16.mxu0 0
        %5043 = vmatmul.mubr.bf16.gmra.mrb[0].mxu0 %v4981
        %v5044 = vpop.f32.mrb[0].mxu0
        %v5045 = vadd.f32 0.0, %v5044
        %v5046 = vpop.f32.mrb[0].mxu0
        %v5047 = vpop.f32.mrb[0].mxu0
        %v5048 = vadd.f32 0.0, %v5047
        %v5049 = vpop.f32.mrb[0].mxu0
        %5050 = vmatprep.mubr.bf16.mxu0 0
        %5051 = vmatmul.mubr.bf16.gmra.mrb[0].mxu0 %v4984
        %v5052 = vpop.f32.mrb[0].mxu0
        %v5053 = vadd.f32 0.0, %v5052
        %v5054 = vpop.f32.mrb[0].mxu0
        %v5055 = vpop.f32.mrb[0].mxu0
        %v5056 = vadd.f32 0.0, %v5055
        %v5057 = vpop.f32.mrb[0].mxu0
        %5058 = vdwg.mxu0
        %v5059 = vadd.f32 %v4897, %v5021
        %v5060 = vadd.f32 %v4898, %v5024
        %v5061 = vadd.f32 %v4899, %v5029
        %v5062 = vadd.f32 %v4900, %v5032
        %v5063 = vadd.f32 %v4901, %v5037
        %v5064 = vadd.f32 %v4902, %v5040
        %v5065 = vadd.f32 %v4903, %v5045
        %v5066 = vadd.f32 %v4904, %v5048
        %v5067 = vadd.f32 %v4905, %v5053
        %v5068 = vadd.f32 %v4906, %v5056
        %v5069 = vld [vmem:[#allocation2 + $0xb] sm:$0xff]
        %v5070 = vld [vmem:[#allocation2 + $0x13] sm:$0xff]
        %v5071 = vld [vmem:[#allocation2 + $0x1b] sm:$0xff]
        %v5072 = vld [vmem:[#allocation2 + $0x23] sm:$0xff]
        %v5073 = vld [vmem:[#allocation2 + $0x2b] sm:$0xff]
        %v5074 = vld [vmem:[#allocation2 + $0x33] sm:$0xff]
        %v5075 = vld [vmem:[#allocation2 + $0x3b] sm:$0xff]
        %v5076 = vld [vmem:[#allocation2 + $0x43] sm:$0xff]
        %v5077 = vld [vmem:[#allocation2 + $0x4b] sm:$0xff]
        %v5078 = vld [vmem:[#allocation2 + $0x53] sm:$0xff]
        %v5079 = vpack.c.bf16 %v5070, %v5069
        %v5080 = vpack.c.bf16 %v5072, %v5071
        %v5081 = vpack.c.bf16 %v5074, %v5073
        %v5082 = vpack.c.bf16 %v5076, %v5075
        %v5083 = vpack.c.bf16 %v5078, %v5077
        %s5084 = scalar_lea.vmem %s4, 1056
        %v5085 = vld [vmem:[%s5084] sm:$0xf]
        %v5086 = vld [vmem:[%s5084 + $0x4] sm:$0xf]
        %v5087 = vld [vmem:[%s5084 + $0x8] sm:$0xf]
        %v5088 = vld [vmem:[%s5084 + $0xc] sm:$0xf]
        %v5089 = vld [vmem:[%s5084 + $0x10] sm:$0xf]
        %v5090 = vld [vmem:[%s5084 + $0x14] sm:$0xf]
        %v5091 = vld [vmem:[%s5084 + $0x18] sm:$0xf]
        %v5092 = vld [vmem:[%s5084 + $0x1c] sm:$0xf]
        %v5093 = vld [vmem:[%s5084 + $0x20] sm:$0xf]
        %v5094 = vld [vmem:[%s5084 + $0x24] sm:$0xf]
        %v5095 = vld [vmem:[%s5084 + $0x28] sm:$0xf]
        %v5096 = vld [vmem:[%s5084 + $0x2c] sm:$0xf]
        %v5109 = vunpack.c.l.b16 %v5085
        %v5110 = vunpack.c.l.b16 %v5086
        %v5111 = vunpack.c.l.b16 %v5087
        %v5112 = vunpack.c.l.b16 %v5088
        %v5113 = vunpack.c.l.b16 %v5089
        %v5114 = vunpack.c.l.b16 %v5090
        %v5115 = vunpack.c.l.b16 %v5091
        %v5116 = vunpack.c.l.b16 %v5092
        %v5117 = vunpack.c.l.b16 %v5093
        %v5118 = vunpack.c.l.b16 %v5094
        %v5119 = vunpack.c.l.b16 %v5095
        %v5120 = vunpack.c.l.b16 %v5096
        %v5121 = vpack.c.b16 %v5110, %v5109
        %v5122 = vpack.c.b16 %v5112, %v5111
        %v5123 = vpack.c.b16 %v5114, %v5113
        %v5124 = vpack.c.b16 %v5116, %v5115
        %v5125 = vpack.c.b16 %v5118, %v5117
        %v5126 = vpack.c.b16 %v5120, %v5119
        %v5134 = vsel %vm1247, %v5079, 0
        %v5137 = vsel %vm1247, %v5080, 0
        %v5140 = vsel %vm1247, %v5081, 0
        %v5143 = vsel %vm1247, %v5082, 0
        %v5146 = vsel %vm1247, %v5083, 0
        %5148 = vmatprep.subr.bf16.mxu0 0
        %5149 = vmatpush1.bf16.msra.mxu0 %v5121
        %5150 = vmatprep.subr.bf16.mxu0 0
        %5151 = vmatpush1.bf16.msra.mxu0 %v5122
        %5152 = vmatprep.subr.bf16.mxu0 0
        %5153 = vmatpush1.bf16.msra.mxu0 %v5123
        %5154 = vmatprep.subr.bf16.mxu0 0
        %5155 = vmatpush1.bf16.msra.mxu0 %v5124
        %5156 = vmatprep.subr.bf16.mxu0 0
        %5157 = vmatpush1.bf16.msra.mxu0 %v5125
        %5158 = vmatprep.subr.bf16.mxu0 0
        %5159 = vmatpush1.bf16.msra.mxu0 %v5126
        %5160 = vmatprep.subr.bf16.mxu0 0
        %5161 = vmatpush1.bf16.msra.mxu0 0
        %5162 = vmatprep.subr.bf16.mxu0 0
        %5163 = vmatpush1.bf16.msra.mxu0 0
        %5164 = vmatprep.subr.bf16.mxu0 0
        %5165 = vmatpush1.bf16.msra.mxu0 0
        %5166 = vmatprep.subr.bf16.mxu0 0
        %5167 = vmatpush1.bf16.msra.mxu0 0
        %5168 = vmatprep.subr.bf16.mxu0 0
        %5169 = vmatpush1.bf16.msra.mxu0 0
        %5170 = vmatprep.subr.bf16.mxu0 0
        %5171 = vmatpush1.bf16.msra.mxu0 0
        %5172 = vmatprep.subr.bf16.mxu0 0
        %5173 = vmatpush1.bf16.msra.mxu0 0
        %5174 = vmatprep.subr.bf16.mxu0 0
        %5175 = vmatpush1.bf16.msra.mxu0 0
        %5176 = vmatprep.subr.bf16.mxu0 0
        %5177 = vmatpush1.bf16.msra.mxu0 0
        %5178 = vmatprep.subr.bf16.mxu0 0
        %5179 = vmatpush1.bf16.msra.mxu0 0
        %5180 = vmatprep.mubr.bf16.mxu0 0
        %5181 = vmatmul.mubr.bf16.gmra.mrb[0].mxu0 %v5134
        %v5182 = vpop.f32.mrb[0].mxu0
        %v5183 = vadd.f32 0.0, %v5182
        %v5184 = vpop.f32.mrb[0].mxu0
        %v5185 = vpop.f32.mrb[0].mxu0
        %v5186 = vadd.f32 0.0, %v5185
        %v5187 = vpop.f32.mrb[0].mxu0
        %5188 = vmatprep.mubr.bf16.mxu0 0
        %5189 = vmatmul.mubr.bf16.gmra.mrb[0].mxu0 %v5137
        %v5190 = vpop.f32.mrb[0].mxu0
        %v5191 = vadd.f32 0.0, %v5190
        %v5192 = vpop.f32.mrb[0].mxu0
        %v5193 = vpop.f32.mrb[0].mxu0
        %v5194 = vadd.f32 0.0, %v5193
        %v5195 = vpop.f32.mrb[0].mxu0
        %5196 = vmatprep.mubr.bf16.mxu0 0
        %5197 = vmatmul.mubr.bf16.gmra.mrb[0].mxu0 %v5140
        %v5198 = vpop.f32.mrb[0].mxu0
        %v5199 = vadd.f32 0.0, %v5198
        %v5200 = vpop.f32.mrb[0].mxu0
        %v5201 = vpop.f32.mrb[0].mxu0
        %v5202 = vadd.f32 0.0, %v5201
        %v5203 = vpop.f32.mrb[0].mxu0
        %5204 = vmatprep.mubr.bf16.mxu0 0
        %5205 = vmatmul.mubr.bf16.gmra.mrb[0].mxu0 %v5143
        %v5206 = vpop.f32.mrb[0].mxu0
        %v5207 = vadd.f32 0.0, %v5206
        %v5208 = vpop.f32.mrb[0].mxu0
        %v5209 = vpop.f32.mrb[0].mxu0
        %v5210 = vadd.f32 0.0, %v5209
        %v5211 = vpop.f32.mrb[0].mxu0
        %5212 = vmatprep.mubr.bf16.mxu0 0
        %5213 = vmatmul.mubr.bf16.gmra.mrb[0].mxu0 %v5146
        %v5214 = vpop.f32.mrb[0].mxu0
        %v5215 = vadd.f32 0.0, %v5214
        %v5216 = vpop.f32.mrb[0].mxu0
        %v5217 = vpop.f32.mrb[0].mxu0
        %v5218 = vadd.f32 0.0, %v5217
        %v5219 = vpop.f32.mrb[0].mxu0
        %5220 = vdwg.mxu0
        %v5221 = vadd.f32 %v5059, %v5183
        %v5222 = vadd.f32 %v5060, %v5186
        %v5223 = vadd.f32 %v5061, %v5191
        %v5224 = vadd.f32 %v5062, %v5194
        %v5225 = vadd.f32 %v5063, %v5199
        %v5226 = vadd.f32 %v5064, %v5202
        %v5227 = vadd.f32 %v5065, %v5207
        %v5228 = vadd.f32 %v5066, %v5210
        %v5229 = vadd.f32 %v5067, %v5215
        %v5230 = vadd.f32 %v5068, %v5218
        %v5231 = vld [vmem:[#allocation2 + $0xc] sm:$0xff]
        %v5232 = vld [vmem:[#allocation2 + $0x14] sm:$0xff]
        %v5233 = vld [vmem:[#allocation2 + $0x1c] sm:$0xff]
        %v5234 = vld [vmem:[#allocation2 + $0x24] sm:$0xff]
        %v5235 = vld [vmem:[#allocation2 + $0x2c] sm:$0xff]
        %v5236 = vld [vmem:[#allocation2 + $0x34] sm:$0xff]
        %v5237 = vld [vmem:[#allocation2 + $0x3c] sm:$0xff]
        %v5238 = vld [vmem:[#allocation2 + $0x44] sm:$0xff]
        %v5239 = vld [vmem:[#allocation2 + $0x4c] sm:$0xff]
        %v5240 = vld [vmem:[#allocation2 + $0x54] sm:$0xff]
        %v5241 = vpack.c.bf16 %v5232, %v5231
        %v5242 = vpack.c.bf16 %v5234, %v5233
        %v5243 = vpack.c.bf16 %v5236, %v5235
        %v5244 = vpack.c.bf16 %v5238, %v5237
        %v5245 = vpack.c.bf16 %v5240, %v5239
        %s5246 = scalar_lea.vmem %s4, 1104
        %v5247 = vld [vmem:[%s5246] sm:$0xf]
        %v5248 = vld [vmem:[%s5246 + $0x4] sm:$0xf]
        %v5249 = vld [vmem:[%s5246 + $0x8] sm:$0xf]
        %v5250 = vld [vmem:[%s5246 + $0xc] sm:$0xf]
        %v5251 = vld [vmem:[%s5246 + $0x10] sm:$0xf]
        %v5252 = vld [vmem:[%s5246 + $0x14] sm:$0xf]
        %v5253 = vld [vmem:[%s5246 + $0x18] sm:$0xf]
        %v5254 = vld [vmem:[%s5246 + $0x1c] sm:$0xf]
        %v5255 = vld [vmem:[%s5246 + $0x20] sm:$0xf]
        %v5256 = vld [vmem:[%s5246 + $0x24] sm:$0xf]
        %v5257 = vld [vmem:[%s5246 + $0x28] sm:$0xf]
        %v5258 = vld [vmem:[%s5246 + $0x2c] sm:$0xf]
        %v5271 = vunpack.c.l.b16 %v5247
        %v5272 = vunpack.c.l.b16 %v5248
        %v5273 = vunpack.c.l.b16 %v5249
        %v5274 = vunpack.c.l.b16 %v5250
        %v5275 = vunpack.c.l.b16 %v5251
        %v5276 = vunpack.c.l.b16 %v5252
        %v5277 = vunpack.c.l.b16 %v5253
        %v5278 = vunpack.c.l.b16 %v5254
        %v5279 = vunpack.c.l.b16 %v5255
        %v5280 = vunpack.c.l.b16 %v5256
        %v5281 = vunpack.c.l.b16 %v5257
        %v5282 = vunpack.c.l.b16 %v5258
        %v5283 = vpack.c.b16 %v5272, %v5271
        %v5284 = vpack.c.b16 %v5274, %v5273
        %v5285 = vpack.c.b16 %v5276, %v5275
        %v5286 = vpack.c.b16 %v5278, %v5277
        %v5287 = vpack.c.b16 %v5280, %v5279
        %v5288 = vpack.c.b16 %v5282, %v5281
        %v5296 = vsel %vm1247, %v5241, 0
        %v5299 = vsel %vm1247, %v5242, 0
        %v5302 = vsel %vm1247, %v5243, 0
        %v5305 = vsel %vm1247, %v5244, 0
        %v5308 = vsel %vm1247, %v5245, 0
        %5310 = vmatprep.subr.bf16.mxu0 0
        %5311 = vmatpush1.bf16.msra.mxu0 %v5283
        %5312 = vmatprep.subr.bf16.mxu0 0
        %5313 = vmatpush1.bf16.msra.mxu0 %v5284
        %5314 = vmatprep.subr.bf16.mxu0 0
        %5315 = vmatpush1.bf16.msra.mxu0 %v5285
        %5316 = vmatprep.subr.bf16.mxu0 0
        %5317 = vmatpush1.bf16.msra.mxu0 %v5286
        %5318 = vmatprep.subr.bf16.mxu0 0
        %5319 = vmatpush1.bf16.msra.mxu0 %v5287
        %5320 = vmatprep.subr.bf16.mxu0 0
        %5321 = vmatpush1.bf16.msra.mxu0 %v5288
        %5322 = vmatprep.subr.bf16.mxu0 0
        %5323 = vmatpush1.bf16.msra.mxu0 0
        %5324 = vmatprep.subr.bf16.mxu0 0
        %5325 = vmatpush1.bf16.msra.mxu0 0
        %5326 = vmatprep.subr.bf16.mxu0 0
        %5327 = vmatpush1.bf16.msra.mxu0 0
        %5328 = vmatprep.subr.bf16.mxu0 0
        %5329 = vmatpush1.bf16.msra.mxu0 0
        %5330 = vmatprep.subr.bf16.mxu0 0
        %5331 = vmatpush1.bf16.msra.mxu0 0
        %5332 = vmatprep.subr.bf16.mxu0 0
        %5333 = vmatpush1.bf16.msra.mxu0 0
        %5334 = vmatprep.subr.bf16.mxu0 0
        %5335 = vmatpush1.bf16.msra.mxu0 0
        %5336 = vmatprep.subr.bf16.mxu0 0
        %5337 = vmatpush1.bf16.msra.mxu0 0
        %5338 = vmatprep.subr.bf16.mxu0 0
        %5339 = vmatpush1.bf16.msra.mxu0 0
        %5340 = vmatprep.subr.bf16.mxu0 0
        %5341 = vmatpush1.bf16.msra.mxu0 0
        %5342 = vmatprep.mubr.bf16.mxu0 0
        %5343 = vmatmul.mubr.bf16.gmra.mrb[0].mxu0 %v5296
        %v5344 = vpop.f32.mrb[0].mxu0
        %v5345 = vadd.f32 0.0, %v5344
        %v5346 = vpop.f32.mrb[0].mxu0
        %v5347 = vpop.f32.mrb[0].mxu0
        %v5348 = vadd.f32 0.0, %v5347
        %v5349 = vpop.f32.mrb[0].mxu0
        %5350 = vmatprep.mubr.bf16.mxu0 0
        %5351 = vmatmul.mubr.bf16.gmra.mrb[0].mxu0 %v5299
        %v5352 = vpop.f32.mrb[0].mxu0
        %v5353 = vadd.f32 0.0, %v5352
        %v5354 = vpop.f32.mrb[0].mxu0
        %v5355 = vpop.f32.mrb[0].mxu0
        %v5356 = vadd.f32 0.0, %v5355
        %v5357 = vpop.f32.mrb[0].mxu0
        %5358 = vmatprep.mubr.bf16.mxu0 0
        %5359 = vmatmul.mubr.bf16.gmra.mrb[0].mxu0 %v5302
        %v5360 = vpop.f32.mrb[0].mxu0
        %v5361 = vadd.f32 0.0, %v5360
        %v5362 = vpop.f32.mrb[0].mxu0
        %v5363 = vpop.f32.mrb[0].mxu0
        %v5364 = vadd.f32 0.0, %v5363
        %v5365 = vpop.f32.mrb[0].mxu0
        %5366 = vmatprep.mubr.bf16.mxu0 0
        %5367 = vmatmul.mubr.bf16.gmra.mrb[0].mxu0 %v5305
        %v5368 = vpop.f32.mrb[0].mxu0
        %v5369 = vadd.f32 0.0, %v5368
        %v5370 = vpop.f32.mrb[0].mxu0
        %v5371 = vpop.f32.mrb[0].mxu0
        %v5372 = vadd.f32 0.0, %v5371
        %v5373 = vpop.f32.mrb[0].mxu0
        %5374 = vmatprep.mubr.bf16.mxu0 0
        %5375 = vmatmul.mubr.bf16.gmra.mrb[0].mxu0 %v5308
        %v5376 = vpop.f32.mrb[0].mxu0
        %v5377 = vadd.f32 0.0, %v5376
        %v5378 = vpop.f32.mrb[0].mxu0
        %v5379 = vpop.f32.mrb[0].mxu0
        %v5380 = vadd.f32 0.0, %v5379
        %v5381 = vpop.f32.mrb[0].mxu0
        %5382 = vdwg.mxu0
        %v5383 = vadd.f32 %v5221, %v5345
        %v5384 = vadd.f32 %v5222, %v5348
        %v5385 = vadd.f32 %v5223, %v5353
        %v5386 = vadd.f32 %v5224, %v5356
        %v5387 = vadd.f32 %v5225, %v5361
        %v5388 = vadd.f32 %v5226, %v5364
        %v5389 = vadd.f32 %v5227, %v5369
        %v5390 = vadd.f32 %v5228, %v5372
        %v5391 = vadd.f32 %v5229, %v5377
        %v5392 = vadd.f32 %v5230, %v5380
        %v5393 = vld [vmem:[#allocation2 + $0x14] sm:$0xff]
        %v5394 = vld [vmem:[#allocation2 + $0x1c] sm:$0xff]
        %v5395 = vld [vmem:[#allocation2 + $0x24] sm:$0xff]
        %v5396 = vld [vmem:[#allocation2 + $0x2c] sm:$0xff]
        %v5397 = vld [vmem:[#allocation2 + $0x34] sm:$0xff]
        %v5398 = vld [vmem:[#allocation2 + $0x3c] sm:$0xff]
        %v5399 = vld [vmem:[#allocation2 + $0x44] sm:$0xff]
        %v5400 = vld [vmem:[#allocation2 + $0x4c] sm:$0xff]
        %v5401 = vld [vmem:[#allocation2 + $0x54] sm:$0xff]
        %v5402 = vld [vmem:[#allocation2 + $0x5c] sm:$0xff]
        %v5403 = vpack.c.bf16 %v5394, %v5393
        %v5404 = vpack.c.bf16 %v5396, %v5395
        %v5405 = vpack.c.bf16 %v5398, %v5397
        %v5406 = vpack.c.bf16 %v5400, %v5399
        %v5407 = vpack.c.bf16 %v5402, %v5401
        %s5408 = scalar_lea.vmem %s4, 1152
        %v5409 = vld [vmem:[%s5408] sm:$0xf]
        %v5410 = vld [vmem:[%s5408 + $0x4] sm:$0xf]
        %v5411 = vld [vmem:[%s5408 + $0x8] sm:$0xf]
        %v5412 = vld [vmem:[%s5408 + $0xc] sm:$0xf]
        %v5413 = vld [vmem:[%s5408 + $0x10] sm:$0xf]
        %v5414 = vld [vmem:[%s5408 + $0x14] sm:$0xf]
        %v5415 = vld [vmem:[%s5408 + $0x18] sm:$0xf]
        %v5416 = vld [vmem:[%s5408 + $0x1c] sm:$0xf]
        %v5417 = vld [vmem:[%s5408 + $0x20] sm:$0xf]
        %v5418 = vld [vmem:[%s5408 + $0x24] sm:$0xf]
        %v5419 = vld [vmem:[%s5408 + $0x28] sm:$0xf]
        %v5420 = vld [vmem:[%s5408 + $0x2c] sm:$0xf]
        %v5433 = vunpack.c.l.b16 %v5409
        %v5434 = vunpack.c.l.b16 %v5410
        %v5435 = vunpack.c.l.b16 %v5411
        %v5436 = vunpack.c.l.b16 %v5412
        %v5437 = vunpack.c.l.b16 %v5413
        %v5438 = vunpack.c.l.b16 %v5414
        %v5439 = vunpack.c.l.b16 %v5415
        %v5440 = vunpack.c.l.b16 %v5416
        %v5441 = vunpack.c.l.b16 %v5417
        %v5442 = vunpack.c.l.b16 %v5418
        %v5443 = vunpack.c.l.b16 %v5419
        %v5444 = vunpack.c.l.b16 %v5420
        %v5445 = vpack.c.b16 %v5434, %v5433
        %v5446 = vpack.c.b16 %v5436, %v5435
        %v5447 = vpack.c.b16 %v5438, %v5437
        %v5448 = vpack.c.b16 %v5440, %v5439
        %v5449 = vpack.c.b16 %v5442, %v5441
        %v5450 = vpack.c.b16 %v5444, %v5443
        %v5458 = vsel %vm1247, %v5403, 0
        %v5461 = vsel %vm1247, %v5404, 0
        %v5464 = vsel %vm1247, %v5405, 0
        %v5467 = vsel %vm1247, %v5406, 0
        %v5470 = vsel %vm1247, %v5407, 0
        %5472 = vmatprep.subr.bf16.mxu0 0
        %5473 = vmatpush1.bf16.msra.mxu0 %v5445
        %5474 = vmatprep.subr.bf16.mxu0 0
        %5475 = vmatpush1.bf16.msra.mxu0 %v5446
        %5476 = vmatprep.subr.bf16.mxu0 0
        %5477 = vmatpush1.bf16.msra.mxu0 %v5447
        %5478 = vmatprep.subr.bf16.mxu0 0
        %5479 = vmatpush1.bf16.msra.mxu0 %v5448
        %5480 = vmatprep.subr.bf16.mxu0 0
        %5481 = vmatpush1.bf16.msra.mxu0 %v5449
        %5482 = vmatprep.subr.bf16.mxu0 0
        %5483 = vmatpush1.bf16.msra.mxu0 %v5450
        %5484 = vmatprep.subr.bf16.mxu0 0
        %5485 = vmatpush1.bf16.msra.mxu0 0
        %5486 = vmatprep.subr.bf16.mxu0 0
        %5487 = vmatpush1.bf16.msra.mxu0 0
        %5488 = vmatprep.subr.bf16.mxu0 0
        %5489 = vmatpush1.bf16.msra.mxu0 0
        %5490 = vmatprep.subr.bf16.mxu0 0
        %5491 = vmatpush1.bf16.msra.mxu0 0
        %5492 = vmatprep.subr.bf16.mxu0 0
        %5493 = vmatpush1.bf16.msra.mxu0 0
        %5494 = vmatprep.subr.bf16.mxu0 0
        %5495 = vmatpush1.bf16.msra.mxu0 0
        %5496 = vmatprep.subr.bf16.mxu0 0
        %5497 = vmatpush1.bf16.msra.mxu0 0
        %5498 = vmatprep.subr.bf16.mxu0 0
        %5499 = vmatpush1.bf16.msra.mxu0 0
        %5500 = vmatprep.subr.bf16.mxu0 0
        %5501 = vmatpush1.bf16.msra.mxu0 0
        %5502 = vmatprep.subr.bf16.mxu0 0
        %5503 = vmatpush1.bf16.msra.mxu0 0
        %5504 = vmatprep.mubr.bf16.mxu0 0
        %5505 = vmatmul.mubr.bf16.gmra.mrb[0].mxu0 %v5458
        %v5506 = vpop.f32.mrb[0].mxu0
        %v5507 = vadd.f32 0.0, %v5506
        %v5508 = vpop.f32.mrb[0].mxu0
        %v5509 = vpop.f32.mrb[0].mxu0
        %v5510 = vadd.f32 0.0, %v5509
        %v5511 = vpop.f32.mrb[0].mxu0
        %5512 = vmatprep.mubr.bf16.mxu0 0
        %5513 = vmatmul.mubr.bf16.gmra.mrb[0].mxu0 %v5461
        %v5514 = vpop.f32.mrb[0].mxu0
        %v5515 = vadd.f32 0.0, %v5514
        %v5516 = vpop.f32.mrb[0].mxu0
        %v5517 = vpop.f32.mrb[0].mxu0
        %v5518 = vadd.f32 0.0, %v5517
        %v5519 = vpop.f32.mrb[0].mxu0
        %5520 = vmatprep.mubr.bf16.mxu0 0
        %5521 = vmatmul.mubr.bf16.gmra.mrb[0].mxu0 %v5464
        %v5522 = vpop.f32.mrb[0].mxu0
        %v5523 = vadd.f32 0.0, %v5522
        %v5524 = vpop.f32.mrb[0].mxu0
        %v5525 = vpop.f32.mrb[0].mxu0
        %v5526 = vadd.f32 0.0, %v5525
        %v5527 = vpop.f32.mrb[0].mxu0
        %5528 = vmatprep.mubr.bf16.mxu0 0
        %5529 = vmatmul.mubr.bf16.gmra.mrb[0].mxu0 %v5467
        %v5530 = vpop.f32.mrb[0].mxu0
        %v5531 = vadd.f32 0.0, %v5530
        %v5532 = vpop.f32.mrb[0].mxu0
        %v5533 = vpop.f32.mrb[0].mxu0
        %v5534 = vadd.f32 0.0, %v5533
        %v5535 = vpop.f32.mrb[0].mxu0
        %5536 = vmatprep.mubr.bf16.mxu0 0
        %5537 = vmatmul.mubr.bf16.gmra.mrb[0].mxu0 %v5470
        %v5538 = vpop.f32.mrb[0].mxu0
        %v5539 = vadd.f32 0.0, %v5538
        %v5540 = vpop.f32.mrb[0].mxu0
        %v5541 = vpop.f32.mrb[0].mxu0
        %v5542 = vadd.f32 0.0, %v5541
        %v5543 = vpop.f32.mrb[0].mxu0
        %5544 = vdwg.mxu0
        %v5545 = vadd.f32 %v5383, %v5507
        %v5546 = vadd.f32 %v5384, %v5510
        %v5547 = vadd.f32 %v5385, %v5515
        %v5548 = vadd.f32 %v5386, %v5518
        %v5549 = vadd.f32 %v5387, %v5523
        %v5550 = vadd.f32 %v5388, %v5526
        %v5551 = vadd.f32 %v5389, %v5531
        %v5552 = vadd.f32 %v5390, %v5534
        %v5553 = vadd.f32 %v5391, %v5539
        %v5554 = vadd.f32 %v5392, %v5542
        %v5555 = vld [vmem:[#allocation2 + $0x15] sm:$0xff]
        %v5556 = vld [vmem:[#allocation2 + $0x1d] sm:$0xff]
        %v5557 = vld [vmem:[#allocation2 + $0x25] sm:$0xff]
        %v5558 = vld [vmem:[#allocation2 + $0x2d] sm:$0xff]
        %v5559 = vld [vmem:[#allocation2 + $0x35] sm:$0xff]
        %v5560 = vld [vmem:[#allocation2 + $0x3d] sm:$0xff]
        %v5561 = vld [vmem:[#allocation2 + $0x45] sm:$0xff]
        %v5562 = vld [vmem:[#allocation2 + $0x4d] sm:$0xff]
        %v5563 = vld [vmem:[#allocation2 + $0x55] sm:$0xff]
        %v5564 = vld [vmem:[#allocation2 + $0x5d] sm:$0xff]
        %v5565 = vpack.c.bf16 %v5556, %v5555
        %v5566 = vpack.c.bf16 %v5558, %v5557
        %v5567 = vpack.c.bf16 %v5560, %v5559
        %v5568 = vpack.c.bf16 %v5562, %v5561
        %v5569 = vpack.c.bf16 %v5564, %v5563
        %s5570 = scalar_lea.vmem %s4, 1200
        %v5571 = vld [vmem:[%s5570] sm:$0xf]
        %v5572 = vld [vmem:[%s5570 + $0x4] sm:$0xf]
        %v5573 = vld [vmem:[%s5570 + $0x8] sm:$0xf]
        %v5574 = vld [vmem:[%s5570 + $0xc] sm:$0xf]
        %v5575 = vld [vmem:[%s5570 + $0x10] sm:$0xf]
        %v5576 = vld [vmem:[%s5570 + $0x14] sm:$0xf]
        %v5577 = vld [vmem:[%s5570 + $0x18] sm:$0xf]
        %v5578 = vld [vmem:[%s5570 + $0x1c] sm:$0xf]
        %v5579 = vld [vmem:[%s5570 + $0x20] sm:$0xf]
        %v5580 = vld [vmem:[%s5570 + $0x24] sm:$0xf]
        %v5581 = vld [vmem:[%s5570 + $0x28] sm:$0xf]
        %v5582 = vld [vmem:[%s5570 + $0x2c] sm:$0xf]
        %v5595 = vunpack.c.l.b16 %v5571
        %v5596 = vunpack.c.l.b16 %v5572
        %v5597 = vunpack.c.l.b16 %v5573
        %v5598 = vunpack.c.l.b16 %v5574
        %v5599 = vunpack.c.l.b16 %v5575
        %v5600 = vunpack.c.l.b16 %v5576
        %v5601 = vunpack.c.l.b16 %v5577
        %v5602 = vunpack.c.l.b16 %v5578
        %v5603 = vunpack.c.l.b16 %v5579
        %v5604 = vunpack.c.l.b16 %v5580
        %v5605 = vunpack.c.l.b16 %v5581
        %v5606 = vunpack.c.l.b16 %v5582
        %v5607 = vpack.c.b16 %v5596, %v5595
        %v5608 = vpack.c.b16 %v5598, %v5597
        %v5609 = vpack.c.b16 %v5600, %v5599
        %v5610 = vpack.c.b16 %v5602, %v5601
        %v5611 = vpack.c.b16 %v5604, %v5603
        %v5612 = vpack.c.b16 %v5606, %v5605
        %v5620 = vsel %vm1247, %v5565, 0
        %v5623 = vsel %vm1247, %v5566, 0
        %v5626 = vsel %vm1247, %v5567, 0
        %v5629 = vsel %vm1247, %v5568, 0
        %v5632 = vsel %vm1247, %v5569, 0
        %5634 = vmatprep.subr.bf16.mxu0 0
        %5635 = vmatpush1.bf16.msra.mxu0 %v5607
        %5636 = vmatprep.subr.bf16.mxu0 0
        %5637 = vmatpush1.bf16.msra.mxu0 %v5608
        %5638 = vmatprep.subr.bf16.mxu0 0
        %5639 = vmatpush1.bf16.msra.mxu0 %v5609
        %5640 = vmatprep.subr.bf16.mxu0 0
        %5641 = vmatpush1.bf16.msra.mxu0 %v5610
        %5642 = vmatprep.subr.bf16.mxu0 0
        %5643 = vmatpush1.bf16.msra.mxu0 %v5611
        %5644 = vmatprep.subr.bf16.mxu0 0
        %5645 = vmatpush1.bf16.msra.mxu0 %v5612
        %5646 = vmatprep.subr.bf16.mxu0 0
        %5647 = vmatpush1.bf16.msra.mxu0 0
        %5648 = vmatprep.subr.bf16.mxu0 0
        %5649 = vmatpush1.bf16.msra.mxu0 0
        %5650 = vmatprep.subr.bf16.mxu0 0
        %5651 = vmatpush1.bf16.msra.mxu0 0
        %5652 = vmatprep.subr.bf16.mxu0 0
        %5653 = vmatpush1.bf16.msra.mxu0 0
        %5654 = vmatprep.subr.bf16.mxu0 0
        %5655 = vmatpush1.bf16.msra.mxu0 0
        %5656 = vmatprep.subr.bf16.mxu0 0
        %5657 = vmatpush1.bf16.msra.mxu0 0
        %5658 = vmatprep.subr.bf16.mxu0 0
        %5659 = vmatpush1.bf16.msra.mxu0 0
        %5660 = vmatprep.subr.bf16.mxu0 0
        %5661 = vmatpush1.bf16.msra.mxu0 0
        %5662 = vmatprep.subr.bf16.mxu0 0
        %5663 = vmatpush1.bf16.msra.mxu0 0
        %5664 = vmatprep.subr.bf16.mxu0 0
        %5665 = vmatpush1.bf16.msra.mxu0 0
        %5666 = vmatprep.mubr.bf16.mxu0 0
        %5667 = vmatmul.mubr.bf16.gmra.mrb[0].mxu0 %v5620
        %v5668 = vpop.f32.mrb[0].mxu0
        %v5669 = vadd.f32 0.0, %v5668
        %v5670 = vpop.f32.mrb[0].mxu0
        %v5671 = vpop.f32.mrb[0].mxu0
        %v5672 = vadd.f32 0.0, %v5671
        %v5673 = vpop.f32.mrb[0].mxu0
        %5674 = vmatprep.mubr.bf16.mxu0 0
        %5675 = vmatmul.mubr.bf16.gmra.mrb[0].mxu0 %v5623
        %v5676 = vpop.f32.mrb[0].mxu0
        %v5677 = vadd.f32 0.0, %v5676
        %v5678 = vpop.f32.mrb[0].mxu0
        %v5679 = vpop.f32.mrb[0].mxu0
        %v5680 = vadd.f32 0.0, %v5679
        %v5681 = vpop.f32.mrb[0].mxu0
        %5682 = vmatprep.mubr.bf16.mxu0 0
        %5683 = vmatmul.mubr.bf16.gmra.mrb[0].mxu0 %v5626
        %v5684 = vpop.f32.mrb[0].mxu0
        %v5685 = vadd.f32 0.0, %v5684
        %v5686 = vpop.f32.mrb[0].mxu0
        %v5687 = vpop.f32.mrb[0].mxu0
        %v5688 = vadd.f32 0.0, %v5687
        %v5689 = vpop.f32.mrb[0].mxu0
        %5690 = vmatprep.mubr.bf16.mxu0 0
        %5691 = vmatmul.mubr.bf16.gmra.mrb[0].mxu0 %v5629
        %v5692 = vpop.f32.mrb[0].mxu0
        %v5693 = vadd.f32 0.0, %v5692
        %v5694 = vpop.f32.mrb[0].mxu0
        %v5695 = vpop.f32.mrb[0].mxu0
        %v5696 = vadd.f32 0.0, %v5695
        %v5697 = vpop.f32.mrb[0].mxu0
        %5698 = vmatprep.mubr.bf16.mxu0 0
        %5699 = vmatmul.mubr.bf16.gmra.mrb[0].mxu0 %v5632
        %v5700 = vpop.f32.mrb[0].mxu0
        %v5701 = vadd.f32 0.0, %v5700
        %v5702 = vpop.f32.mrb[0].mxu0
        %v5703 = vpop.f32.mrb[0].mxu0
        %v5704 = vadd.f32 0.0, %v5703
        %v5705 = vpop.f32.mrb[0].mxu0
        %5706 = vdwg.mxu0
        %v5707 = vadd.f32 %v5545, %v5669
        %v5708 = vadd.f32 %v5546, %v5672
        %v5709 = vadd.f32 %v5547, %v5677
        %v5710 = vadd.f32 %v5548, %v5680
        %v5711 = vadd.f32 %v5549, %v5685
        %v5712 = vadd.f32 %v5550, %v5688
        %v5713 = vadd.f32 %v5551, %v5693
        %v5714 = vadd.f32 %v5552, %v5696
        %v5715 = vadd.f32 %v5553, %v5701
        %v5716 = vadd.f32 %v5554, %v5704
        %v5717 = vld [vmem:[#allocation2 + $0x16] sm:$0xff]
        %v5718 = vld [vmem:[#allocation2 + $0x1e] sm:$0xff]
        %v5719 = vld [vmem:[#allocation2 + $0x26] sm:$0xff]
        %v5720 = vld [vmem:[#allocation2 + $0x2e] sm:$0xff]
        %v5721 = vld [vmem:[#allocation2 + $0x36] sm:$0xff]
        %v5722 = vld [vmem:[#allocation2 + $0x3e] sm:$0xff]
        %v5723 = vld [vmem:[#allocation2 + $0x46] sm:$0xff]
        %v5724 = vld [vmem:[#allocation2 + $0x4e] sm:$0xff]
        %v5725 = vld [vmem:[#allocation2 + $0x56] sm:$0xff]
        %v5726 = vld [vmem:[#allocation2 + $0x5e] sm:$0xff]
        %v5727 = vpack.c.bf16 %v5718, %v5717
        %v5728 = vpack.c.bf16 %v5720, %v5719
        %v5729 = vpack.c.bf16 %v5722, %v5721
        %v5730 = vpack.c.bf16 %v5724, %v5723
        %v5731 = vpack.c.bf16 %v5726, %v5725
        %s5732 = scalar_lea.vmem %s4, 1248
        %v5733 = vld [vmem:[%s5732] sm:$0xf]
        %v5734 = vld [vmem:[%s5732 + $0x4] sm:$0xf]
        %v5735 = vld [vmem:[%s5732 + $0x8] sm:$0xf]
        %v5736 = vld [vmem:[%s5732 + $0xc] sm:$0xf]
        %v5737 = vld [vmem:[%s5732 + $0x10] sm:$0xf]
        %v5738 = vld [vmem:[%s5732 + $0x14] sm:$0xf]
        %v5739 = vld [vmem:[%s5732 + $0x18] sm:$0xf]
        %v5740 = vld [vmem:[%s5732 + $0x1c] sm:$0xf]
        %v5741 = vld [vmem:[%s5732 + $0x20] sm:$0xf]
        %v5742 = vld [vmem:[%s5732 + $0x24] sm:$0xf]
        %v5743 = vld [vmem:[%s5732 + $0x28] sm:$0xf]
        %v5744 = vld [vmem:[%s5732 + $0x2c] sm:$0xf]
        %v5757 = vunpack.c.l.b16 %v5733
        %v5758 = vunpack.c.l.b16 %v5734
        %v5759 = vunpack.c.l.b16 %v5735
        %v5760 = vunpack.c.l.b16 %v5736
        %v5761 = vunpack.c.l.b16 %v5737
        %v5762 = vunpack.c.l.b16 %v5738
        %v5763 = vunpack.c.l.b16 %v5739
        %v5764 = vunpack.c.l.b16 %v5740
        %v5765 = vunpack.c.l.b16 %v5741
        %v5766 = vunpack.c.l.b16 %v5742
        %v5767 = vunpack.c.l.b16 %v5743
        %v5768 = vunpack.c.l.b16 %v5744
        %v5769 = vpack.c.b16 %v5758, %v5757
        %v5770 = vpack.c.b16 %v5760, %v5759
        %v5771 = vpack.c.b16 %v5762, %v5761
        %v5772 = vpack.c.b16 %v5764, %v5763
        %v5773 = vpack.c.b16 %v5766, %v5765
        %v5774 = vpack.c.b16 %v5768, %v5767
        %v5782 = vsel %vm1247, %v5727, 0
        %v5785 = vsel %vm1247, %v5728, 0
        %v5788 = vsel %vm1247, %v5729, 0
        %v5791 = vsel %vm1247, %v5730, 0
        %v5794 = vsel %vm1247, %v5731, 0
        %5796 = vmatprep.subr.bf16.mxu0 0
        %5797 = vmatpush1.bf16.msra.mxu0 %v5769
        %5798 = vmatprep.subr.bf16.mxu0 0
        %5799 = vmatpush1.bf16.msra.mxu0 %v5770
        %5800 = vmatprep.subr.bf16.mxu0 0
        %5801 = vmatpush1.bf16.msra.mxu0 %v5771
        %5802 = vmatprep.subr.bf16.mxu0 0
        %5803 = vmatpush1.bf16.msra.mxu0 %v5772
        %5804 = vmatprep.subr.bf16.mxu0 0
        %5805 = vmatpush1.bf16.msra.mxu0 %v5773
        %5806 = vmatprep.subr.bf16.mxu0 0
        %5807 = vmatpush1.bf16.msra.mxu0 %v5774
        %5808 = vmatprep.subr.bf16.mxu0 0
        %5809 = vmatpush1.bf16.msra.mxu0 0
        %5810 = vmatprep.subr.bf16.mxu0 0
        %5811 = vmatpush1.bf16.msra.mxu0 0
        %5812 = vmatprep.subr.bf16.mxu0 0
        %5813 = vmatpush1.bf16.msra.mxu0 0
        %5814 = vmatprep.subr.bf16.mxu0 0
        %5815 = vmatpush1.bf16.msra.mxu0 0
        %5816 = vmatprep.subr.bf16.mxu0 0
        %5817 = vmatpush1.bf16.msra.mxu0 0
        %5818 = vmatprep.subr.bf16.mxu0 0
        %5819 = vmatpush1.bf16.msra.mxu0 0
        %5820 = vmatprep.subr.bf16.mxu0 0
        %5821 = vmatpush1.bf16.msra.mxu0 0
        %5822 = vmatprep.subr.bf16.mxu0 0
        %5823 = vmatpush1.bf16.msra.mxu0 0
        %5824 = vmatprep.subr.bf16.mxu0 0
        %5825 = vmatpush1.bf16.msra.mxu0 0
        %5826 = vmatprep.subr.bf16.mxu0 0
        %5827 = vmatpush1.bf16.msra.mxu0 0
        %5828 = vmatprep.mubr.bf16.mxu0 0
        %5829 = vmatmul.mubr.bf16.gmra.mrb[0].mxu0 %v5782
        %v5830 = vpop.f32.mrb[0].mxu0
        %v5831 = vadd.f32 0.0, %v5830
        %v5832 = vpop.f32.mrb[0].mxu0
        %v5833 = vpop.f32.mrb[0].mxu0
        %v5834 = vadd.f32 0.0, %v5833
        %v5835 = vpop.f32.mrb[0].mxu0
        %5836 = vmatprep.mubr.bf16.mxu0 0
        %5837 = vmatmul.mubr.bf16.gmra.mrb[0].mxu0 %v5785
        %v5838 = vpop.f32.mrb[0].mxu0
        %v5839 = vadd.f32 0.0, %v5838
        %v5840 = vpop.f32.mrb[0].mxu0
        %v5841 = vpop.f32.mrb[0].mxu0
        %v5842 = vadd.f32 0.0, %v5841
        %v5843 = vpop.f32.mrb[0].mxu0
        %5844 = vmatprep.mubr.bf16.mxu0 0
        %5845 = vmatmul.mubr.bf16.gmra.mrb[0].mxu0 %v5788
        %v5846 = vpop.f32.mrb[0].mxu0
        %v5847 = vadd.f32 0.0, %v5846
        %v5848 = vpop.f32.mrb[0].mxu0
        %v5849 = vpop.f32.mrb[0].mxu0
        %v5850 = vadd.f32 0.0, %v5849
        %v5851 = vpop.f32.mrb[0].mxu0
        %5852 = vmatprep.mubr.bf16.mxu0 0
        %5853 = vmatmul.mubr.bf16.gmra.mrb[0].mxu0 %v5791
        %v5854 = vpop.f32.mrb[0].mxu0
        %v5855 = vadd.f32 0.0, %v5854
        %v5856 = vpop.f32.mrb[0].mxu0
        %v5857 = vpop.f32.mrb[0].mxu0
        %v5858 = vadd.f32 0.0, %v5857
        %v5859 = vpop.f32.mrb[0].mxu0
        %5860 = vmatprep.mubr.bf16.mxu0 0
        %5861 = vmatmul.mubr.bf16.gmra.mrb[0].mxu0 %v5794
        %v5862 = vpop.f32.mrb[0].mxu0
        %v5863 = vadd.f32 0.0, %v5862
        %v5864 = vpop.f32.mrb[0].mxu0
        %v5865 = vpop.f32.mrb[0].mxu0
        %v5866 = vadd.f32 0.0, %v5865
        %v5867 = vpop.f32.mrb[0].mxu0
        %5868 = vdwg.mxu0
        %v5869 = vadd.f32 %v5707, %v5831
        %v5870 = vadd.f32 %v5708, %v5834
        %v5871 = vadd.f32 %v5709, %v5839
        %v5872 = vadd.f32 %v5710, %v5842
        %v5873 = vadd.f32 %v5711, %v5847
        %v5874 = vadd.f32 %v5712, %v5850
        %v5875 = vadd.f32 %v5713, %v5855
        %v5876 = vadd.f32 %v5714, %v5858
        %v5877 = vadd.f32 %v5715, %v5863
        %v5878 = vadd.f32 %v5716, %v5866
        %s5879 = scalar_lea.vmem %s5, 2
        %v5880 = vld [vmem:[%s5879] sm:$0x1]
        %v5882 = vlaneseq
        %v5883 = vshrl.u32 %v5882, 7
        %v5884 = vsub.s32 0, %v5883
        %v5885 = vrot.slane %v5880, %v5884
        %v5887 = vmul.f32 %v5869, %v5885
        %v5888 = vmul.f32 %v5870, %v5885
        %v5889 = vmul.f32 %v5871, %v5885
        %v5890 = vmul.f32 %v5872, %v5885
        %v5891 = vmul.f32 %v5873, %v5885
        %v5892 = vmul.f32 %v5874, %v5885
        %v5893 = vmul.f32 %v5875, %v5885
        %v5894 = vmul.f32 %v5876, %v5885
        %v5895 = vmul.f32 %v5877, %v5885
        %v5896 = vmul.f32 %v5878, %v5885
        %s5897 = scalar_lea.vmem %s6, 2
        %v5898 = vld [vmem:[%s5897] sm:$0x1]
        %v5900 = vlaneseq
        %v5901 = vshrl.u32 %v5900, 7
        %v5902 = vsub.s32 0, %v5901
        %v5903 = vrot.slane %v5898, %v5902
        %v5905 = vadd.f32 %v5887, %v5903
        %v5906 = vadd.f32 %v5888, %v5903
        %v5907 = vadd.f32 %v5889, %v5903
        %v5908 = vadd.f32 %v5890, %v5903
        %v5909 = vadd.f32 %v5891, %v5903
        %v5910 = vadd.f32 %v5892, %v5903
        %v5911 = vadd.f32 %v5893, %v5903
        %v5912 = vadd.f32 %v5894, %v5903
        %v5913 = vadd.f32 %v5895, %v5903
        %v5914 = vadd.f32 %v5896, %v5903
        %v5915 = vmax.f32 %v5905, 0.0
        %v5916 = vmax.f32 %v5906, 0.0
        %v5917 = vmax.f32 %v5907, 0.0
        %v5918 = vmax.f32 %v5908, 0.0
        %v5919 = vmax.f32 %v5909, 0.0
        %v5920 = vmax.f32 %v5910, 0.0
        %v5921 = vmax.f32 %v5911, 0.0
        %v5922 = vmax.f32 %v5912, 0.0
        %v5923 = vmax.f32 %v5913, 0.0
        %v5924 = vmax.f32 %v5914, 0.0
        %vm5927 = vcmask 1045504
        %v5928 = vrot.slane %v2808, 2
        %v5929 = vrot.slane %v2809, 2
        %v5930 = vsel %vm5927, %v5928, %v5929
        %vm5932 = vcmask 1043456
        %v5933 = vrot.slane %v2809, 4
        %v5934 = vrot.slane %v2810, 4
        %v5935 = vsel %vm5932, %v5933, %v5934
        %vm5937 = vcmask 1041408
        %v5938 = vrot.slane %v2810, 6
        %v5939 = vrot.slane %v2811, 6
        %v5940 = vsel %vm5937, %v5938, %v5939
        %v5943 = vrot.slane %v2813, 2
        %v5944 = vrot.slane %v2814, 2
        %v5945 = vsel %vm5927, %v5943, %v5944
        %v5947 = vrot.slane %v2814, 4
        %v5948 = vrot.slane %v2815, 4
        %v5949 = vsel %vm5932, %v5947, %v5948
        %v5951 = vrot.slane %v2815, 6
        %v5952 = vrot.slane %v2816, 6
        %v5953 = vsel %vm5937, %v5951, %v5952
        %v5956 = vrot.slane %v5916, 2
        %v5957 = vrot.slane %v5917, 2
        %v5958 = vsel %vm5927, %v5956, %v5957
        %v5960 = vrot.slane %v5917, 4
        %v5961 = vrot.slane %v5918, 4
        %v5962 = vsel %vm5932, %v5960, %v5961
        %v5964 = vrot.slane %v5918, 6
        %v5965 = vrot.slane %v5919, 6
        %v5966 = vsel %vm5937, %v5964, %v5965
        %v5969 = vrot.slane %v5921, 2
        %v5970 = vrot.slane %v5922, 2
        %v5971 = vsel %vm5927, %v5969, %v5970
        %v5973 = vrot.slane %v5922, 4
        %v5974 = vrot.slane %v5923, 4
        %v5975 = vsel %vm5932, %v5973, %v5974
        %v5977 = vrot.slane %v5923, 6
        %v5978 = vrot.slane %v5924, 6
        %v5979 = vsel %vm5937, %v5977, %v5978
        %5982 = vrot.lane.b32.xlu0 %v2807, 64
        %v5983 = vpop.permute.xlu0 %5982
        %5984 = vrot.lane.b32.xlu0 %v5930, 64
        %v5985 = vpop.permute.xlu0 %5984
        %5986 = vrot.lane.b32.xlu0 %v5935, 64
        %v5987 = vpop.permute.xlu0 %5986
        %5988 = vrot.lane.b32.xlu0 %v5940, 64
        %v5989 = vpop.permute.xlu0 %5988
        %5990 = vrot.lane.b32.xlu0 %v2812, 64
        %v5991 = vpop.permute.xlu0 %5990
        %5992 = vrot.lane.b32.xlu0 %v5945, 64
        %v5993 = vpop.permute.xlu0 %5992
        %5994 = vrot.lane.b32.xlu0 %v5949, 64
        %v5995 = vpop.permute.xlu0 %5994
        %5996 = vrot.lane.b32.xlu0 %v5953, 64
        %v5997 = vpop.permute.xlu0 %5996
        %6008 = vrot.lane.b32.xlu0 %v5915, 32
        %v6009 = vpop.permute.xlu0 %6008
        %6010 = vrot.lane.b32.xlu0 %v5958, 32
        %v6011 = vpop.permute.xlu0 %6010
        %6012 = vrot.lane.b32.xlu0 %v5962, 32
        %v6013 = vpop.permute.xlu0 %6012
        %6014 = vrot.lane.b32.xlu0 %v5966, 32
        %v6015 = vpop.permute.xlu0 %6014
        %6016 = vrot.lane.b32.xlu0 %v5920, 32
        %v6017 = vpop.permute.xlu0 %6016
        %6018 = vrot.lane.b32.xlu0 %v5971, 32
        %v6019 = vpop.permute.xlu0 %6018
        %6020 = vrot.lane.b32.xlu0 %v5975, 32
        %v6021 = vpop.permute.xlu0 %6020
        %6022 = vrot.lane.b32.xlu0 %v5979, 32
        %v6023 = vpop.permute.xlu0 %6022
        %v6032 = vsel %vm1269, %v1224, %v5983
        %v6033 = vsel %vm1269, %v1227, %v5985
        %v6034 = vsel %vm1269, %v1230, %v5987
        %v6035 = vsel %vm1269, %v1233, %v5989
        %v6036 = vsel %vm1269, %v1236, %v5991
        %v6037 = vsel %vm1269, %v1239, %v5993
        %v6038 = vsel %vm1269, %v1242, %v5995
        %v6039 = vsel %vm1269, %v1245, %v5997
        %vm6040 = vcmask 261120
        %v6041 = vsel %vm6040, %v5983, %v6009
        %v6042 = vsel %vm6040, %v5985, %v6011
        %v6043 = vsel %vm6040, %v5987, %v6013
        %v6044 = vsel %vm6040, %v5989, %v6015
        %v6045 = vsel %vm6040, %v5991, %v6017
        %v6046 = vsel %vm6040, %v5993, %v6019
        %v6047 = vsel %vm6040, %v5995, %v6021
        %v6048 = vsel %vm6040, %v5997, %v6023
        %6049 = vst [vmem:[%s298] sm:$0xff] %v1223
        %6050 = vst [vmem:[%s298 + $0x8] sm:$0xff] %v6032
        %6051 = vst [vmem:[%s298 + $0x10] sm:$0xff] %v6041
        %6052 = vst [vmem:[%s298 + $0x18] sm:$0xff] %v1226
        %6053 = vst [vmem:[%s298 + $0x20] sm:$0xff] %v6033
        %6054 = vst [vmem:[%s298 + $0x28] sm:$0xff] %v6042
        %6055 = vst [vmem:[%s298 + $0x30] sm:$0xff] %v1229
        %6056 = vst [vmem:[%s298 + $0x38] sm:$0xff] %v6034
        %6057 = vst [vmem:[%s298 + $0x40] sm:$0xff] %v6043
        %6058 = vst [vmem:[%s298 + $0x48] sm:$0xff] %v1232
        %6059 = vst [vmem:[%s298 + $0x50] sm:$0xff] %v6035
        %6060 = vst [vmem:[%s298 + $0x58] sm:$0xff] %v6044
        %6061 = vst [vmem:[%s298 + $0x60] sm:$0xff] %v1235
        %6062 = vst [vmem:[%s298 + $0x68] sm:$0xff] %v6036
        %6063 = vst [vmem:[%s298 + $0x70] sm:$0xff] %v6045
        %6064 = vst [vmem:[%s298 + $0x78] sm:$0xff] %v1238
        %6065 = vst [vmem:[%s298 + $0x80] sm:$0xff] %v6037
        %6066 = vst [vmem:[%s298 + $0x88] sm:$0xff] %v6046
        %6067 = vst [vmem:[%s298 + $0x90] sm:$0xff] %v1241
        %6068 = vst [vmem:[%s298 + $0x98] sm:$0xff] %v6038
        %6069 = vst [vmem:[%s298 + $0xa0] sm:$0xff] %v6047
        %6070 = vst [vmem:[%s298 + $0xa8] sm:$0xff] %v1244
        %6071 = vst [vmem:[%s298 + $0xb0] sm:$0xff] %v6039
        %6072 = vst [vmem:[%s298 + $0xb8] sm:$0xff] %v6048
        %s6073 = sand.u32 %s203, 1
        %s6074 = scalar_lea.sflag [#allocation4], %s6073
        %s6075 = sand.u32 %s203, 1
        %s6076 = smul.addr %s6075, 192
        %s6077 = scalar_lea.vmem [#allocation3], %s6076
        // Predicated region
        $region53: #{inception_a.1} parent=51 // pred_check
          %p6078 = pneg %p213
        $region54: #{inception_a.1} parent=51 // pred_check_branch
          %6080 = sbr.rel (%p6078) target = $region56
        $region55: #{inception_a.1} parent=51 // pred_region
          %s6082 = ssub.s32 3072, 3072
          %6083 = vsyncadd %s6074, %s6082
          %s6084 = smul.addr %s22, 24
          %s6085 = smul.addr %s6084, 128
          %s6086 = scalar_lea.hbm %s8, %s6085
          %s6087 = sshll.u32 %s6077, 4
          %s6088 = int_to_ptr.vmem [resolvable:$true] %s6087
          %6093 = dma.vmem_to_hbm [thread:$0]  %s6088, 3072, %s6086, %s6074, 384, 384, 24
        $region56: #{inception_a.1} parent=51 // pred_fallthru
          _
      $region52: #{inception_a.1} parent=5 // pred_fallthru
        _
      %p6094 = scmp.le.s32.totalorder 2, %s17
      // Predicated region
      $region57: #{inception_a.1} parent=5 // pred_check
        %p6095 = pneg %p6094
      $region58: #{inception_a.1} parent=5 // pred_check_branch
        %6097 = sbr.rel (%p6095) target = $region60
      $region59: #{inception_a.1} parent=5 // pred_region
        %s6098 = ssub.s32 %s17, 2
        // Predicated region
        $region61: #{inception_a.1} parent=59 // pred_check
          %p6099 = pneg %p219
        $region62: #{inception_a.1} parent=59 // pred_check_branch
          %6101 = sbr.rel (%p6099) target = $region64
        $region63: #{inception_a.1} parent=59 // pred_region
          %s6102 = sand.u32 %s204, 1
          %s6103 = scalar_lea.sflag [#allocation4], %s6102
          %s6104 = sand.u32 %s204, 1
          %s6105 = smul.addr %s6104, 192
          %s6106 = scalar_lea.vmem [#allocation3], %s6105
          %6107 = dma.done %s6103, 3072
        $region64: #{inception_a.1} parent=59 // pred_fallthru
          _
      $region60: #{inception_a.1} parent=5 // pred_fallthru
        _
    $region6: #{inception_a.1} parent=1 // loop_footer
      %s21 = sadd.s32 1, %s17
    $region7: #{inception_a.1} parent=1 // loop_footer_branch
      %16 = sbr.rel target = $region3
    $region8: #{inception_a.1} parent=1 // loop_exit
      _
    %6108 = vsyncpa [#allocation4], 1
    %s6109 = scalar_lea.sflag [#allocation4], 1
    %6110 = vsyncpa %s6109, 1

</llo_original>
